<compile_context>
chip_gen: v6e
topology: v6e:2x2x1
jax: 0.10.0
libtpu: 0.0.40
codegen_flags: <defaults>
</compile_context>

<pallas_src>
import math

import jax
import jax.numpy as jnp
from jax.experimental import pallas as pl
from jax.experimental.pallas import tpu as pltpu

# ---------------- config (stands in for g_conf / cil_params) ----------------
B = 16                            # PPO minibatch rows per call
TILE_B = 8                        # batch rows per grid step (B % TILE_B == 0)
S_FRAMES = 1                      # g_conf.ENCODER_INPUT_FRAMES_NUM
N_CAM = 1                         # len(g_conf.DATA_USED)
IMG_C, IMG_H, IMG_W = 3, 16, 16   # g_conf.IMAGE_SHAPE
PATCH = 4
N_PATCH = (IMG_H // PATCH) * (IMG_W // PATCH)   # 16 tokens / image
PATCH_DIM = IMG_C * PATCH * PATCH               # 48
D_MODEL = 32                      # cil_params['TxEncoder']['d_model'] == res_out_dim
N_HEADS = 4
HEAD_DIM = D_MODEL // N_HEADS
D_FF = 64
CMD_DIM = 4
ACTION_DIM = 2
ACTION_STD_INIT = 0.5
SEQ_LEN = S_FRAMES * N_CAM * N_PATCH            # 16 tokens
LN_EPS = 1e-5
LOG2PI = math.log(2.0 * math.pi)

LANES = 128                       # lane-dense packed width (params slab + output)
OUT_W = LANES                     # packed output: [value, logp, entropy, action_mean, 0...]
COL_VALUE, COL_LOGP, COL_ENT, COL_ACT = 0, 1, 2, 3

# ----- packed parameter slab layout: single (R_TOTAL, 128) f32 array, 1 DMA -----
R_WQKV   = 0                         # 32 rows, cols 0:128  (Q|K|V|zero-pad)
R_HEADW  = R_WQKV + D_MODEL          # 32 rows, cols 0:128  (value col 0, action cols 3:5)
R_PATCHW = R_HEADW + D_MODEL         # 48 rows, cols 0:32
R_POS    = R_PATCHW + PATCH_DIM      # 16 rows, cols 0:32
R_WO     = R_POS + SEQ_LEN           # 32 rows, cols 0:32
R_W1     = R_WO + D_MODEL            # 32 rows, cols 0:64
R_W2     = R_W1 + D_MODEL            # 64 rows, cols 0:32
R_CSW    = R_W2 + D_FF               # 5 rows  (cmd|speed fused), padded to 8
R_VEC    = R_CSW + 8                 # bias / LN / cov rows (one per row)
V_PATCH_B = R_VEC + 0
V_CS_B    = R_VEC + 1                # cmd_b + spd_b pre-summed
V_BQKV    = R_VEC + 2
V_BO      = R_VEC + 3
V_B1      = R_VEC + 4
V_B2      = R_VEC + 5
V_LN1_G   = R_VEC + 6
V_LN1_B   = R_VEC + 7
V_LN2_G   = R_VEC + 8
V_LN2_B   = R_VEC + 9
V_HEAD_B  = R_VEC + 10               # value_b at col 0, action_b at cols 3:5
V_COV     = R_VEC + 11               # cov_var at cols 0:ACTION_DIM
R_TOTAL   = R_VEC + 16               # 280 rows (multiple of 8)


# ----------------------------- fused Pallas kernel ----------------------------
def _actor_critic_kernel(patch_ref, cs_ref, act_ref, prm_ref, o_ref):
    f32 = jnp.float32
    tb = act_ref.shape[0]                  # batch rows in this tile
    bt = patch_ref.shape[0]                # tb * tokens
    t = bt // tb
    d = D_MODEL

    # ---- static slices of the packed parameter slab ----
    pw    = prm_ref[R_PATCHW:R_PATCHW + PATCH_DIM, 0:d]
    csw   = prm_ref[R_CSW:R_CSW + CMD_DIM + 1, 0:d]
    pos   = prm_ref[R_POS:R_POS + SEQ_LEN, 0:d]
    wqkv  = prm_ref[R_WQKV:R_WQKV + d, :]                  # (d, 128) lane-padded
    wo    = prm_ref[R_WO:R_WO + d, 0:d]
    w1    = prm_ref[R_W1:R_W1 + d, 0:D_FF]
    w2    = prm_ref[R_W2:R_W2 + D_FF, 0:d]
    headw = prm_ref[R_HEADW:R_HEADW + d, :]                # (d, 128) fused value+action

    patch_b = prm_ref[V_PATCH_B:V_PATCH_B + 1, 0:d]
    cs_b    = prm_ref[V_CS_B:V_CS_B + 1, 0:d]
    bqkv    = prm_ref[V_BQKV:V_BQKV + 1, :]
    bo      = prm_ref[V_BO:V_BO + 1, 0:d]
    b1      = prm_ref[V_B1:V_B1 + 1, 0:D_FF]
    b2      = prm_ref[V_B2:V_B2 + 1, 0:d]
    g1      = prm_ref[V_LN1_G:V_LN1_G + 1, 0:d]
    be1     = prm_ref[V_LN1_B:V_LN1_B + 1, 0:d]
    g2      = prm_ref[V_LN2_G:V_LN2_G + 1, 0:d]
    be2     = prm_ref[V_LN2_B:V_LN2_B + 1, 0:d]
    head_b  = prm_ref[V_HEAD_B:V_HEAD_B + 1, :]
    var     = prm_ref[V_COV:V_COV + 1, 0:ACTION_DIM]       # diag covariance (as in torch)

    # ---- embeddings: patch tokens + fused (command|speed) embedding + learnable PE ----
    tok = jnp.dot(patch_ref[...], pw, preferred_element_type=f32) + patch_b   # (bt, d)
    ecs = jnp.dot(cs_ref[...], csw, preferred_element_type=f32) + cs_b        # (tb, d)
    x = (tok.reshape(tb, t, d) + ecs[:, None, :] + pos[None, :, :]).reshape(bt, d)

    # ---- self-attention: one lane-padded QKV matmul; W_O folded per head (no concat) ----
    qkv = jnp.dot(x, wqkv, preferred_element_type=f32) + bqkv                 # (bt, 128)
    q = qkv[:, 0:d].reshape(tb, t, d)
    k = qkv[:, d:2 * d].reshape(tb, t, d)
    v = qkv[:, 2 * d:3 * d].reshape(tb, t, d)
    kt = jnp.transpose(k, (0, 2, 1))                                          # (tb, d, t)

    scale = 1.0 / math.sqrt(HEAD_DIM)
    ctx = jnp.zeros((bt, d), f32)
    for h in range(N_HEADS):                 # static unroll
        lo = h * HEAD_DIM
        qh = q[:, :, lo:lo + HEAD_DIM]                                        # (tb, t, hd)
        kh = kt[:, lo:lo + HEAD_DIM, :]                                       # (tb, hd, t)
        vh = v[:, :, lo:lo + HEAD_DIM]                                        # (tb, t, hd)
        s = jnp.einsum('bqh,bhk->bqk', qh, kh, preferred_element_type=f32) * scale
        s = s - jnp.max(s, axis=-1, keepdims=True)
        p = jnp.exp(s)
        p = p / jnp.sum(p, axis=-1, keepdims=True)          # exact softmax denom
        oh = jnp.einsum('bqk,bkh->bqh', p, vh, preferred_element_type=f32)
        ctx = ctx + jnp.dot(oh.reshape(bt, HEAD_DIM), wo[lo:lo + HEAD_DIM, :],
                            preferred_element_type=f32)
    attn = ctx + bo

    # ---- residual + LayerNorm 1 ----
    y = x + attn
    mu1 = jnp.mean(y, axis=-1, keepdims=True)
    var1 = jnp.mean((y - mu1) ** 2, axis=-1, keepdims=True)
    y = (y - mu1) * jax.lax.rsqrt(var1 + LN_EPS) * g1 + be1

    # ---- feed-forward ----
    h1 = jnp.maximum(jnp.dot(y, w1, preferred_element_type=f32) + b1, 0.0)
    ff = jnp.dot(h1, w2, preferred_element_type=f32) + b2

    # ---- residual + LayerNorm 2 ----
    z = y + ff
    mu2 = jnp.mean(z, axis=-1, keepdims=True)
    var2 = jnp.mean((z - mu2) ** 2, axis=-1, keepdims=True)
    mem = (z - mu2) * jax.lax.rsqrt(var2 + LN_EPS) * g2 + be2

    # ---- mean pool + fused value/action head directly at packed lane offsets ----
    shared = jnp.mean(mem.reshape(tb, t, d), axis=1)                          # (tb, d)
    head = jnp.dot(shared, headw, preferred_element_type=f32) + head_b        # (tb, 128)

    mu_full = jnp.tanh(head)
    mu_act = mu_full[:, COL_ACT:COL_ACT + ACTION_DIM]                         # (tb, A)

    # MultivariateNormal(mu, diag(cov_var)): log_prob + entropy
    diff = act_ref[...] - mu_act
    logp = -0.5 * jnp.sum(diff * diff / var + jnp.log(var) + LOG2PI,
                          axis=-1, keepdims=True)                             # (tb, 1)
    ent = 0.5 * jnp.sum(jnp.log(var) + LOG2PI + 1.0)                          # scalar

    # insert logp / entropy and apply tanh to action columns via lane-iota selects;
    # one full unmasked lane-dense (tb, 128) store.
    lane = jax.lax.broadcasted_iota(jnp.int32, (tb, OUT_W), 1)
    act_mask = (lane >= COL_ACT) & (lane < COL_ACT + ACTION_DIM)
    out = jnp.where(act_mask, mu_full, head)        # value col untouched, pads stay 0
    out = jnp.where(lane == COL_LOGP, logp, out)
    out = jnp.where(lane == COL_ENT, ent, out)
    o_ref[...] = out


def _cost_estimate(bb):
    t, d = SEQ_LEN, D_MODEL
    flops = 2 * bb * (
        t * PATCH_DIM * d          # patch embedding
        + (CMD_DIM + 1) * d        # fused cmd+speed embedding
        + t * d * LANES            # lane-padded QKV
        + 2 * t * t * d            # attention scores + context
        + t * d * d                # per-head output projection (folded W_O)
        + 2 * t * d * D_FF         # FFN
        + d * LANES)               # fused value+action head
    transcendentals = bb * (N_HEADS * t * t + LANES)
    bytes_accessed = 4 * (bb * t * PATCH_DIM + bb * (CMD_DIM + 1)
                          + bb * ACTION_DIM + R_TOTAL * LANES + bb * LANES)
    return pl.CostEstimate(flops=flops, transcendentals=transcendentals,
                           bytes_accessed=bytes_accessed)


def pallas_actor_critic(patches, cs, action, slab):
    bb = action.shape[0]
    assert bb % TILE_B == 0, "batch must be a multiple of TILE_B"
    n_tiles = bb // TILE_B
    return pl.pallas_call(
        _actor_critic_kernel,
        out_shape=jax.ShapeDtypeStruct((bb, OUT_W), jnp.float32),
        grid=(n_tiles,),
        in_specs=[
            pl.BlockSpec((TILE_B * SEQ_LEN, PATCH_DIM), lambda i: (i, 0)),
            pl.BlockSpec((TILE_B, CMD_DIM + 1), lambda i: (i, 0)),
            pl.BlockSpec((TILE_B, ACTION_DIM), lambda i: (i, 0)),
            pl.BlockSpec((R_TOTAL, LANES), lambda i: (0, 0)),   # resident params (1 DMA)
        ],
        out_specs=pl.BlockSpec((TILE_B, OUT_W), lambda i: (i, 0)),
        compiler_params=pltpu.CompilerParams(dimension_semantics=("parallel",)),
        cost_estimate=_cost_estimate(bb),
    )(patches, cs, action, slab)


# ----------------------------- parameter init & packing -----------------------
def _xavier_uniform(key, fan_in, fan_out):
    bound = math.sqrt(6.0 / (fan_in + fan_out))
    return jax.random.uniform(key, (fan_in, fan_out), jnp.float32, -bound, bound)


def init_params(key):
    ks = jax.random.split(key, 12)
    wq = _xavier_uniform(ks[3], D_MODEL, D_MODEL)
    wk = _xavier_uniform(ks[4], D_MODEL, D_MODEL)
    wv = _xavier_uniform(ks[5], D_MODEL, D_MODEL)
    return {
        "patch_w": _xavier_uniform(ks[0], PATCH_DIM, D_MODEL),
        "patch_b": jnp.zeros((D_MODEL,), jnp.float32),
        "cmd_w": _xavier_uniform(ks[1], CMD_DIM, D_MODEL),
        "cmd_b": jnp.zeros((D_MODEL,), jnp.float32),
        "spd_w": _xavier_uniform(ks[2], 1, D_MODEL),
        "spd_b": jnp.zeros((D_MODEL,), jnp.float32),
        "pos": 0.02 * jax.random.normal(ks[6], (SEQ_LEN, D_MODEL), jnp.float32),
        "wqkv": jnp.concatenate([wq, wk, wv], axis=1),          # (D, 3D)
        "bqkv": jnp.zeros((3 * D_MODEL,), jnp.float32),
        "wo": _xavier_uniform(ks[7], D_MODEL, D_MODEL),
        "bo": jnp.zeros((D_MODEL,), jnp.float32),
        "w1": _xavier_uniform(ks[8], D_MODEL, D_FF),
        "b1": jnp.zeros((D_FF,), jnp.float32),
        "w2": _xavier_uniform(ks[9], D_FF, D_MODEL),
        "b2": jnp.zeros((D_MODEL,), jnp.float32),
        "ln1_g": jnp.ones((D_MODEL,), jnp.float32),
        "ln1_b": jnp.zeros((D_MODEL,), jnp.float32),
        "ln2_g": jnp.ones((D_MODEL,), jnp.float32),
        "ln2_b": jnp.zeros((D_MODEL,), jnp.float32),
        # value_head: xavier_uniform weight, bias = 0.1 (as in ActorCritic.__init__)
        "value_w": _xavier_uniform(ks[10], D_MODEL, 1),
        "value_b": jnp.full((1,), 0.1, jnp.float32),
        "action_w": _xavier_uniform(ks[11], D_MODEL, ACTION_DIM),
        "action_b": jnp.zeros((ACTION_DIM,), jnp.float32),
        # cov_var = nn.Parameter(full((action_dim,), action_std_init)) — used as variance
        "cov_var": jnp.full((ACTION_DIM,), ACTION_STD_INIT, jnp.float32),
    }


def pack_params(p):
    """Pack every parameter into one lane-dense (R_TOTAL, 128) f32 slab (built once)."""
    slab = jnp.zeros((R_TOTAL, LANES), jnp.float32)
    # lane-padded fused QKV (96 -> 128 columns, zero pad)
    slab = slab.at[R_WQKV:R_WQKV + D_MODEL, 0:3 * D_MODEL].set(p["wqkv"])
    # fused value+action head, columns already at packed-output offsets
    headw = jnp.zeros((D_MODEL, LANES), jnp.float32)
    headw = headw.at[:, COL_VALUE:COL_VALUE + 1].set(p["value_w"])
    headw = headw.at[:, COL_ACT:COL_ACT + ACTION_DIM].set(p["action_w"])
    slab = slab.at[R_HEADW:R_HEADW + D_MODEL, :].set(headw)
    slab = slab.at[R_PATCHW:R_PATCHW + PATCH_DIM, 0:D_MODEL].set(p["patch_w"])
    slab = slab.at[R_POS:R_POS + SEQ_LEN, 0:D_MODEL].set(p["pos"])
    slab = slab.at[R_WO:R_WO + D_MODEL, 0:D_MODEL].set(p["wo"])
    slab = slab.at[R_W1:R_W1 + D_MODEL, 0:D_FF].set(p["w1"])
    slab = slab.at[R_W2:R_W2 + D_FF, 0:D_MODEL].set(p["w2"])
    # fused command|speed embedding weight
    csw = jnp.concatenate([p["cmd_w"], p["spd_w"]], axis=0)      # (5, D)
    slab = slab.at[R_CSW:R_CSW + CMD_DIM + 1, 0:D_MODEL].set(csw)
    # bias / LN / cov rows
    slab = slab.at[V_PATCH_B, 0:D_MODEL].set(p["patch_b"])
    slab = slab.at[V_CS_B, 0:D_MODEL].set(p["cmd_b"] + p["spd_b"])
    slab = slab.at[V_BQKV, 0:3 * D_MODEL].set(p["bqkv"])
    slab = slab.at[V_BO, 0:D_MODEL].set(p["bo"])
    slab = slab.at[V_B1, 0:D_FF].set(p["b1"])
    slab = slab.at[V_B2, 0:D_MODEL].set(p["b2"])
    slab = slab.at[V_LN1_G, 0:D_MODEL].set(p["ln1_g"])
    slab = slab.at[V_LN1_B, 0:D_MODEL].set(p["ln1_b"])
    slab = slab.at[V_LN2_G, 0:D_MODEL].set(p["ln2_g"])
    slab = slab.at[V_LN2_B, 0:D_MODEL].set(p["ln2_b"])
    headb = jnp.zeros((LANES,), jnp.float32)
    headb = headb.at[COL_VALUE].set(p["value_b"][0])
    headb = headb.at[COL_ACT:COL_ACT + ACTION_DIM].set(p["action_b"])
    slab = slab.at[V_HEAD_B, :].set(headb)
    slab = slab.at[V_COV, 0:ACTION_DIM].set(p["cov_var"])
    return slab


# ------------------------------ forward (evaluate) ----------------------------
def actor_critic_evaluate(slab, s_imgs, s_d, s_s, action):
    """Mirrors ActorCritic.evaluate(): returns (log_prob [B], values [B,1], entropy [B])."""
    bb = s_d.shape[0]
    # x = torch.stack(...).view(B*S*CAM, *IMAGE_SHAPE) + im2col patch extraction (glue)
    x = s_imgs.reshape(bb * S_FRAMES * N_CAM, IMG_C, IMG_H, IMG_W)
    x = x.reshape(-1, IMG_C, IMG_H // PATCH, PATCH, IMG_W // PATCH, PATCH)
    x = x.transpose(0, 2, 4, 1, 3, 5).reshape(bb * SEQ_LEN, PATCH_DIM)   # [B*T, 48]
    cs = jnp.concatenate([s_d, s_s], axis=-1)                            # [B, 5]

    packed = pallas_actor_critic(x, cs, action, slab)                    # (B, 128)
    values = packed[:, COL_VALUE:COL_VALUE + 1]
    logp = packed[:, COL_LOGP]
    ent = packed[:, COL_ENT]
    return logp, values, ent


# ----------------------------------- main -------------------------------------
if __name__ == "__main__":
    key = jax.random.PRNGKey(0)
    pkey, dkey = jax.random.split(key)
    raw_params = init_params(pkey)
    slab = pack_params(raw_params)          # built once, single resident DMA per call

    k1, k2, k3, k4 = jax.random.split(dkey, 4)
    s_imgs = jax.random.normal(
        k1, (B, S_FRAMES, N_CAM, IMG_C, IMG_H, IMG_W), jnp.float32)   # NCHW views
    s_d = jax.nn.one_hot(
        jax.random.randint(k2, (B,), 0, CMD_DIM), CMD_DIM, dtype=jnp.float32)
    s_s = jax.random.uniform(k3, (B, 1), dtype=jnp.float32)
    action = jax.random.normal(k4, (B, ACTION_DIM), jnp.float32)

    logp, values, ent = jax.jit(actor_critic_evaluate)(slab, s_imgs, s_d, s_s, action)
    jax.block_until_ready((logp, values, ent))

    assert logp.shape == (B,) and values.shape == (B, 1) and ent.shape == (B,)
    assert bool(jnp.all(jnp.isfinite(logp)))
    assert bool(jnp.all(jnp.isfinite(values)))
    assert bool(jnp.all(jnp.isfinite(ent)))
    print("KERNEL_OK")
</pallas_src>

<mosaic_0001>
module attributes {stable_mosaic.version = 11 : i64} {
  func.func @_actor_critic_kernel(%arg0: i32, %arg1: memref<128x48xf32, #tpu.memory_space<vmem>>, %arg2: memref<8x5xf32, #tpu.memory_space<vmem>>, %arg3: memref<8x2xf32, #tpu.memory_space<vmem>>, %arg4: memref<280x128xf32, #tpu.memory_space<vmem>>, %arg5: memref<8x128xf32, #tpu.memory_space<vmem>>) attributes {dimension_semantics = [#tpu.dimension_semantics<parallel>], iteration_bounds = array<i64: 2>, scalar_prefetch = 0 : i64, scratch_operands = 0 : i64, tpu.core_type = #tpu.core_type<tc>, window_params = [{transform_indices = @transform_0, window_bounds = array<i64: 128, 48>}, {transform_indices = @transform_1, window_bounds = array<i64: 8, 5>}, {transform_indices = @transform_2, window_bounds = array<i64: 8, 2>}, {pipeline_mode = #tpu.pipeline_mode<synchronous>, transform_indices = @transform_3, window_bounds = array<i64: 280, 128>}, {transform_indices = @transform_4, window_bounds = array<i64: 8, 128>}]} {
    %c64 = arith.constant 64 : index
    %c0 = arith.constant 0 : index
    %0 = vector.load %arg4[%c64, %c0] : memref<280x128xf32, #tpu.memory_space<vmem>>, vector<48x32xf32>
    %c256 = arith.constant 256 : index
    %c0_0 = arith.constant 0 : index
    %1 = vector.load %arg4[%c256, %c0_0] : memref<280x128xf32, #tpu.memory_space<vmem>>, vector<5x32xf32>
    %c112 = arith.constant 112 : index
    %c0_1 = arith.constant 0 : index
    %2 = vector.load %arg4[%c112, %c0_1] : memref<280x128xf32, #tpu.memory_space<vmem>>, vector<16x32xf32>
    %c0_2 = arith.constant 0 : index
    %c0_3 = arith.constant 0 : index
    %3 = vector.load %arg4[%c0_2, %c0_3] : memref<280x128xf32, #tpu.memory_space<vmem>>, vector<32x128xf32>
    %c128 = arith.constant 128 : index
    %c0_4 = arith.constant 0 : index
    %4 = vector.load %arg4[%c128, %c0_4] : memref<280x128xf32, #tpu.memory_space<vmem>>, vector<32x32xf32>
    %c160 = arith.constant 160 : index
    %c0_5 = arith.constant 0 : index
    %5 = vector.load %arg4[%c160, %c0_5] : memref<280x128xf32, #tpu.memory_space<vmem>>, vector<32x64xf32>
    %c192 = arith.constant 192 : index
    %c0_6 = arith.constant 0 : index
    %6 = vector.load %arg4[%c192, %c0_6] : memref<280x128xf32, #tpu.memory_space<vmem>>, vector<64x32xf32>
    %c32 = arith.constant 32 : index
    %c0_7 = arith.constant 0 : index
    %7 = vector.load %arg4[%c32, %c0_7] : memref<280x128xf32, #tpu.memory_space<vmem>>, vector<32x128xf32>
    %c264 = arith.constant 264 : index
    %c0_8 = arith.constant 0 : index
    %8 = vector.load %arg4[%c264, %c0_8] : memref<280x128xf32, #tpu.memory_space<vmem>>, vector<1x32xf32>
    %c265 = arith.constant 265 : index
    %c0_9 = arith.constant 0 : index
    %9 = vector.load %arg4[%c265, %c0_9] : memref<280x128xf32, #tpu.memory_space<vmem>>, vector<1x32xf32>
    %c266 = arith.constant 266 : index
    %c0_10 = arith.constant 0 : index
    %10 = vector.load %arg4[%c266, %c0_10] : memref<280x128xf32, #tpu.memory_space<vmem>>, vector<1x128xf32>
    %c267 = arith.constant 267 : index
    %c0_11 = arith.constant 0 : index
    %11 = vector.load %arg4[%c267, %c0_11] : memref<280x128xf32, #tpu.memory_space<vmem>>, vector<1x32xf32>
    %c268 = arith.constant 268 : index
    %c0_12 = arith.constant 0 : index
    %12 = vector.load %arg4[%c268, %c0_12] : memref<280x128xf32, #tpu.memory_space<vmem>>, vector<1x64xf32>
    %c269 = arith.constant 269 : index
    %c0_13 = arith.constant 0 : index
    %13 = vector.load %arg4[%c269, %c0_13] : memref<280x128xf32, #tpu.memory_space<vmem>>, vector<1x32xf32>
    %c270 = arith.constant 270 : index
    %c0_14 = arith.constant 0 : index
    %14 = vector.load %arg4[%c270, %c0_14] : memref<280x128xf32, #tpu.memory_space<vmem>>, vector<1x32xf32>
    %c271 = arith.constant 271 : index
    %c0_15 = arith.constant 0 : index
    %15 = vector.load %arg4[%c271, %c0_15] : memref<280x128xf32, #tpu.memory_space<vmem>>, vector<1x32xf32>
    %c272 = arith.constant 272 : index
    %c0_16 = arith.constant 0 : index
    %16 = vector.load %arg4[%c272, %c0_16] : memref<280x128xf32, #tpu.memory_space<vmem>>, vector<1x32xf32>
    %c273 = arith.constant 273 : index
    %c0_17 = arith.constant 0 : index
    %17 = vector.load %arg4[%c273, %c0_17] : memref<280x128xf32, #tpu.memory_space<vmem>>, vector<1x32xf32>
    %c274 = arith.constant 274 : index
    %c0_18 = arith.constant 0 : index
    %18 = vector.load %arg4[%c274, %c0_18] : memref<280x128xf32, #tpu.memory_space<vmem>>, vector<1x128xf32>
    %c275 = arith.constant 275 : index
    %c0_19 = arith.constant 0 : index
    %19 = vector.load %arg4[%c275, %c0_19] : memref<280x128xf32, #tpu.memory_space<vmem>>, vector<1x2xf32>
    %c0_20 = arith.constant 0 : index
    %c0_21 = arith.constant 0 : index
    %20 = vector.load %arg1[%c0_20, %c0_21] : memref<128x48xf32, #tpu.memory_space<vmem>>, vector<128x48xf32>
    %cst = arith.constant dense<0.000000e+00> : vector<128x32xf32>
    %21 = tpu.matmul %20, %0, %cst {dimension_numbers = #tpu.dot_dimension_numbers<[1], [0], [0], [1], [0, 0, 1, 1], [], []>} : vector<128x48xf32>, vector<48x32xf32>, vector<128x32xf32> -> vector<128x32xf32>
    %22 = vector.broadcast %8 : vector<1x32xf32> to vector<128x32xf32>
    %23 = arith.addf %21, %22 : vector<128x32xf32>
    %c0_22 = arith.constant 0 : index
    %c0_23 = arith.constant 0 : index
    %24 = vector.load %arg2[%c0_22, %c0_23] : memref<8x5xf32, #tpu.memory_space<vmem>>, vector<8x5xf32>
    %cst_24 = arith.constant dense<0.000000e+00> : vector<8x32xf32>
    %25 = tpu.matmul %24, %1, %cst_24 {dimension_numbers = #tpu.dot_dimension_numbers<[1], [0], [0], [1], [0, 0, 1, 1], [], []>} : vector<8x5xf32>, vector<5x32xf32>, vector<8x32xf32> -> vector<8x32xf32>
    %26 = vector.broadcast %9 : vector<1x32xf32> to vector<8x32xf32>
    %27 = arith.addf %25, %26 : vector<8x32xf32>
    %28 = vector.shape_cast %23 : vector<128x32xf32> to vector<8x16x32xf32>
    %29 = vector.shape_cast %27 : vector<8x32xf32> to vector<8x1x32xf32>
    %30 = vector.broadcast %29 : vector<8x1x32xf32> to vector<8x16x32xf32>
    %31 = arith.addf %28, %30 : vector<8x16x32xf32>
    %32 = vector.shape_cast %2 : vector<16x32xf32> to vector<1x16x32xf32>
    %33 = vector.broadcast %32 : vector<1x16x32xf32> to vector<8x16x32xf32>
    %34 = arith.addf %31, %33 : vector<8x16x32xf32>
    %35 = vector.shape_cast %34 : vector<8x16x32xf32> to vector<128x32xf32>
    %cst_25 = arith.constant dense<0.000000e+00> : vector<128x128xf32>
    %36 = tpu.matmul %35, %3, %cst_25 {dimension_numbers = #tpu.dot_dimension_numbers<[1], [0], [0], [1], [0, 0, 1, 1], [], []>} : vector<128x32xf32>, vector<32x128xf32>, vector<128x128xf32> -> vector<128x128xf32>
    %37 = vector.broadcast %10 : vector<1x128xf32> to vector<128x128xf32>
    %38 = arith.addf %36, %37 : vector<128x128xf32>
    %39 = vector.extract_strided_slice %38 {offsets = [0, 0], sizes = [128, 32], strides = [1, 1]} : vector<128x128xf32> to vector<128x32xf32>
    %40 = vector.shape_cast %39 : vector<128x32xf32> to vector<8x16x32xf32>
    %41 = vector.extract_strided_slice %38 {offsets = [0, 32], sizes = [128, 32], strides = [1, 1]} : vector<128x128xf32> to vector<128x32xf32>
    %42 = vector.shape_cast %41 : vector<128x32xf32> to vector<8x16x32xf32>
    %43 = vector.extract_strided_slice %38 {offsets = [0, 64], sizes = [128, 32], strides = [1, 1]} : vector<128x128xf32> to vector<128x32xf32>
    %44 = vector.shape_cast %43 : vector<128x32xf32> to vector<8x16x32xf32>
    %45 = tpu.transpose %42, [0, 2, 1] : vector<8x16x32xf32> -> vector<8x32x16xf32>
    %cst_26 = arith.constant 0.000000e+00 : f32
    %46 = vector.broadcast %cst_26 : f32 to vector<128x32xf32>
    %47 = vector.extract_strided_slice %40 {offsets = [0, 0, 0], sizes = [8, 16, 8], strides = [1, 1, 1]} : vector<8x16x32xf32> to vector<8x16x8xf32>
    %48 = vector.extract_strided_slice %45 {offsets = [0, 0, 0], sizes = [8, 8, 16], strides = [1, 1, 1]} : vector<8x32x16xf32> to vector<8x8x16xf32>
    %49 = vector.extract_strided_slice %44 {offsets = [0, 0, 0], sizes = [8, 16, 8], strides = [1, 1, 1]} : vector<8x16x32xf32> to vector<8x16x8xf32>
    "tpu.trace_start"() <{level = 10 : i32, message = "bqh,bhk->bqk"}> : () -> ()
    %cst_27 = arith.constant dense<0.000000e+00> : vector<8x16x16xf32>
    %50 = tpu.matmul %47, %48, %cst_27 {dimension_numbers = #tpu.dot_dimension_numbers<[2], [1], [1], [2], [0, 0, 0, 1, 1, 2], [0], [0]>} : vector<8x16x8xf32>, vector<8x8x16xf32>, vector<8x16x16xf32> -> vector<8x16x16xf32>
    "tpu.trace_stop"() : () -> ()
    %cst_28 = arith.constant 0.353553385 : f32
    %51 = vector.broadcast %cst_28 : f32 to vector<8x16x16xf32>
    %52 = arith.mulf %50, %51 : vector<8x16x16xf32>
    %cst_29 = arith.constant dense<0xFF800000> : vector<8x16xf32>
    %53 = vector.multi_reduction <maximumf>, %52, %cst_29 [2] : vector<8x16x16xf32> to vector<8x16xf32>
    %54 = vector.shape_cast %53 : vector<8x16xf32> to vector<8x16x1xf32>
    %55 = vector.broadcast %54 : vector<8x16x1xf32> to vector<8x16x16xf32>
    %56 = arith.subf %52, %55 : vector<8x16x16xf32>
    %57 = math.exp %56 : vector<8x16x16xf32>
    %cst_30 = arith.constant dense<0.000000e+00> : vector<8x16xf32>
    %58 = vector.multi_reduction <add>, %57, %cst_30 [2] : vector<8x16x16xf32> to vector<8x16xf32>
    %59 = vector.shape_cast %58 : vector<8x16xf32> to vector<8x16x1xf32>
    %60 = vector.broadcast %59 : vector<8x16x1xf32> to vector<8x16x16xf32>
    %61 = arith.divf %57, %60 : vector<8x16x16xf32>
    "tpu.trace_start"() <{level = 10 : i32, message = "bqk,bkh->bqh"}> : () -> ()
    %cst_31 = arith.constant dense<0.000000e+00> : vector<8x16x8xf32>
    %62 = tpu.matmul %61, %49, %cst_31 {dimension_numbers = #tpu.dot_dimension_numbers<[2], [1], [1], [2], [0, 0, 0, 1, 1, 2], [0], [0]>} : vector<8x16x16xf32>, vector<8x16x8xf32>, vector<8x16x8xf32> -> vector<8x16x8xf32>
    "tpu.trace_stop"() : () -> ()
    %63 = vector.shape_cast %62 : vector<8x16x8xf32> to vector<128x8xf32>
    %64 = vector.extract_strided_slice %4 {offsets = [0, 0], sizes = [8, 32], strides = [1, 1]} : vector<32x32xf32> to vector<8x32xf32>
    %cst_32 = arith.constant dense<0.000000e+00> : vector<128x32xf32>
    %65 = tpu.matmul %63, %64, %cst_32 {dimension_numbers = #tpu.dot_dimension_numbers<[1], [0], [0], [1], [0, 0, 1, 1], [], []>} : vector<128x8xf32>, vector<8x32xf32>, vector<128x32xf32> -> vector<128x32xf32>
    %66 = arith.addf %46, %65 : vector<128x32xf32>
    %67 = vector.extract_strided_slice %40 {offsets = [0, 0, 8], sizes = [8, 16, 8], strides = [1, 1, 1]} : vector<8x16x32xf32> to vector<8x16x8xf32>
    %68 = vector.extract_strided_slice %45 {offsets = [0, 8, 0], sizes = [8, 8, 16], strides = [1, 1, 1]} : vector<8x32x16xf32> to vector<8x8x16xf32>
    %69 = vector.extract_strided_slice %44 {offsets = [0, 0, 8], sizes = [8, 16, 8], strides = [1, 1, 1]} : vector<8x16x32xf32> to vector<8x16x8xf32>
    "tpu.trace_start"() <{level = 10 : i32, message = "bqh,bhk->bqk"}> : () -> ()
    %cst_33 = arith.constant dense<0.000000e+00> : vector<8x16x16xf32>
    %70 = tpu.matmul %67, %68, %cst_33 {dimension_numbers = #tpu.dot_dimension_numbers<[2], [1], [1], [2], [0, 0, 0, 1, 1, 2], [0], [0]>} : vector<8x16x8xf32>, vector<8x8x16xf32>, vector<8x16x16xf32> -> vector<8x16x16xf32>
    "tpu.trace_stop"() : () -> ()
    %cst_34 = arith.constant 0.353553385 : f32
    %71 = vector.broadcast %cst_34 : f32 to vector<8x16x16xf32>
    %72 = arith.mulf %70, %71 : vector<8x16x16xf32>
    %cst_35 = arith.constant dense<0xFF800000> : vector<8x16xf32>
    %73 = vector.multi_reduction <maximumf>, %72, %cst_35 [2] : vector<8x16x16xf32> to vector<8x16xf32>
    %74 = vector.shape_cast %73 : vector<8x16xf32> to vector<8x16x1xf32>
    %75 = vector.broadcast %74 : vector<8x16x1xf32> to vector<8x16x16xf32>
    %76 = arith.subf %72, %75 : vector<8x16x16xf32>
    %77 = math.exp %76 : vector<8x16x16xf32>
    %cst_36 = arith.constant dense<0.000000e+00> : vector<8x16xf32>
    %78 = vector.multi_reduction <add>, %77, %cst_36 [2] : vector<8x16x16xf32> to vector<8x16xf32>
    %79 = vector.shape_cast %78 : vector<8x16xf32> to vector<8x16x1xf32>
    %80 = vector.broadcast %79 : vector<8x16x1xf32> to vector<8x16x16xf32>
    %81 = arith.divf %77, %80 : vector<8x16x16xf32>
    "tpu.trace_start"() <{level = 10 : i32, message = "bqk,bkh->bqh"}> : () -> ()
    %cst_37 = arith.constant dense<0.000000e+00> : vector<8x16x8xf32>
    %82 = tpu.matmul %81, %69, %cst_37 {dimension_numbers = #tpu.dot_dimension_numbers<[2], [1], [1], [2], [0, 0, 0, 1, 1, 2], [0], [0]>} : vector<8x16x16xf32>, vector<8x16x8xf32>, vector<8x16x8xf32> -> vector<8x16x8xf32>
    "tpu.trace_stop"() : () -> ()
    %83 = vector.shape_cast %82 : vector<8x16x8xf32> to vector<128x8xf32>
    %84 = vector.extract_strided_slice %4 {offsets = [8, 0], sizes = [8, 32], strides = [1, 1]} : vector<32x32xf32> to vector<8x32xf32>
    %cst_38 = arith.constant dense<0.000000e+00> : vector<128x32xf32>
    %85 = tpu.matmul %83, %84, %cst_38 {dimension_numbers = #tpu.dot_dimension_numbers<[1], [0], [0], [1], [0, 0, 1, 1], [], []>} : vector<128x8xf32>, vector<8x32xf32>, vector<128x32xf32> -> vector<128x32xf32>
    %86 = arith.addf %66, %85 : vector<128x32xf32>
    %87 = vector.extract_strided_slice %40 {offsets = [0, 0, 16], sizes = [8, 16, 8], strides = [1, 1, 1]} : vector<8x16x32xf32> to vector<8x16x8xf32>
    %88 = vector.extract_strided_slice %45 {offsets = [0, 16, 0], sizes = [8, 8, 16], strides = [1, 1, 1]} : vector<8x32x16xf32> to vector<8x8x16xf32>
    %89 = vector.extract_strided_slice %44 {offsets = [0, 0, 16], sizes = [8, 16, 8], strides = [1, 1, 1]} : vector<8x16x32xf32> to vector<8x16x8xf32>
    "tpu.trace_start"() <{level = 10 : i32, message = "bqh,bhk->bqk"}> : () -> ()
    %cst_39 = arith.constant dense<0.000000e+00> : vector<8x16x16xf32>
    %90 = tpu.matmul %87, %88, %cst_39 {dimension_numbers = #tpu.dot_dimension_numbers<[2], [1], [1], [2], [0, 0, 0, 1, 1, 2], [0], [0]>} : vector<8x16x8xf32>, vector<8x8x16xf32>, vector<8x16x16xf32> -> vector<8x16x16xf32>
    "tpu.trace_stop"() : () -> ()
    %cst_40 = arith.constant 0.353553385 : f32
    %91 = vector.broadcast %cst_40 : f32 to vector<8x16x16xf32>
    %92 = arith.mulf %90, %91 : vector<8x16x16xf32>
    %cst_41 = arith.constant dense<0xFF800000> : vector<8x16xf32>
    %93 = vector.multi_reduction <maximumf>, %92, %cst_41 [2] : vector<8x16x16xf32> to vector<8x16xf32>
    %94 = vector.shape_cast %93 : vector<8x16xf32> to vector<8x16x1xf32>
    %95 = vector.broadcast %94 : vector<8x16x1xf32> to vector<8x16x16xf32>
    %96 = arith.subf %92, %95 : vector<8x16x16xf32>
    %97 = math.exp %96 : vector<8x16x16xf32>
    %cst_42 = arith.constant dense<0.000000e+00> : vector<8x16xf32>
    %98 = vector.multi_reduction <add>, %97, %cst_42 [2] : vector<8x16x16xf32> to vector<8x16xf32>
    %99 = vector.shape_cast %98 : vector<8x16xf32> to vector<8x16x1xf32>
    %100 = vector.broadcast %99 : vector<8x16x1xf32> to vector<8x16x16xf32>
    %101 = arith.divf %97, %100 : vector<8x16x16xf32>
    "tpu.trace_start"() <{level = 10 : i32, message = "bqk,bkh->bqh"}> : () -> ()
    %cst_43 = arith.constant dense<0.000000e+00> : vector<8x16x8xf32>
    %102 = tpu.matmul %101, %89, %cst_43 {dimension_numbers = #tpu.dot_dimension_numbers<[2], [1], [1], [2], [0, 0, 0, 1, 1, 2], [0], [0]>} : vector<8x16x16xf32>, vector<8x16x8xf32>, vector<8x16x8xf32> -> vector<8x16x8xf32>
    "tpu.trace_stop"() : () -> ()
    %103 = vector.shape_cast %102 : vector<8x16x8xf32> to vector<128x8xf32>
    %104 = vector.extract_strided_slice %4 {offsets = [16, 0], sizes = [8, 32], strides = [1, 1]} : vector<32x32xf32> to vector<8x32xf32>
    %cst_44 = arith.constant dense<0.000000e+00> : vector<128x32xf32>
    %105 = tpu.matmul %103, %104, %cst_44 {dimension_numbers = #tpu.dot_dimension_numbers<[1], [0], [0], [1], [0, 0, 1, 1], [], []>} : vector<128x8xf32>, vector<8x32xf32>, vector<128x32xf32> -> vector<128x32xf32>
    %106 = arith.addf %86, %105 : vector<128x32xf32>
    %107 = vector.extract_strided_slice %40 {offsets = [0, 0, 24], sizes = [8, 16, 8], strides = [1, 1, 1]} : vector<8x16x32xf32> to vector<8x16x8xf32>
    %108 = vector.extract_strided_slice %45 {offsets = [0, 24, 0], sizes = [8, 8, 16], strides = [1, 1, 1]} : vector<8x32x16xf32> to vector<8x8x16xf32>
    %109 = vector.extract_strided_slice %44 {offsets = [0, 0, 24], sizes = [8, 16, 8], strides = [1, 1, 1]} : vector<8x16x32xf32> to vector<8x16x8xf32>
    "tpu.trace_start"() <{level = 10 : i32, message = "bqh,bhk->bqk"}> : () -> ()
    %cst_45 = arith.constant dense<0.000000e+00> : vector<8x16x16xf32>
    %110 = tpu.matmul %107, %108, %cst_45 {dimension_numbers = #tpu.dot_dimension_numbers<[2], [1], [1], [2], [0, 0, 0, 1, 1, 2], [0], [0]>} : vector<8x16x8xf32>, vector<8x8x16xf32>, vector<8x16x16xf32> -> vector<8x16x16xf32>
    "tpu.trace_stop"() : () -> ()
    %cst_46 = arith.constant 0.353553385 : f32
    %111 = vector.broadcast %cst_46 : f32 to vector<8x16x16xf32>
    %112 = arith.mulf %110, %111 : vector<8x16x16xf32>
    %cst_47 = arith.constant dense<0xFF800000> : vector<8x16xf32>
    %113 = vector.multi_reduction <maximumf>, %112, %cst_47 [2] : vector<8x16x16xf32> to vector<8x16xf32>
    %114 = vector.shape_cast %113 : vector<8x16xf32> to vector<8x16x1xf32>
    %115 = vector.broadcast %114 : vector<8x16x1xf32> to vector<8x16x16xf32>
    %116 = arith.subf %112, %115 : vector<8x16x16xf32>
    %117 = math.exp %116 : vector<8x16x16xf32>
    %cst_48 = arith.constant dense<0.000000e+00> : vector<8x16xf32>
    %118 = vector.multi_reduction <add>, %117, %cst_48 [2] : vector<8x16x16xf32> to vector<8x16xf32>
    %119 = vector.shape_cast %118 : vector<8x16xf32> to vector<8x16x1xf32>
    %120 = vector.broadcast %119 : vector<8x16x1xf32> to vector<8x16x16xf32>
    %121 = arith.divf %117, %120 : vector<8x16x16xf32>
    "tpu.trace_start"() <{level = 10 : i32, message = "bqk,bkh->bqh"}> : () -> ()
    %cst_49 = arith.constant dense<0.000000e+00> : vector<8x16x8xf32>
    %122 = tpu.matmul %121, %109, %cst_49 {dimension_numbers = #tpu.dot_dimension_numbers<[2], [1], [1], [2], [0, 0, 0, 1, 1, 2], [0], [0]>} : vector<8x16x16xf32>, vector<8x16x8xf32>, vector<8x16x8xf32> -> vector<8x16x8xf32>
    "tpu.trace_stop"() : () -> ()
    %123 = vector.shape_cast %122 : vector<8x16x8xf32> to vector<128x8xf32>
    %124 = vector.extract_strided_slice %4 {offsets = [24, 0], sizes = [8, 32], strides = [1, 1]} : vector<32x32xf32> to vector<8x32xf32>
    %cst_50 = arith.constant dense<0.000000e+00> : vector<128x32xf32>
    %125 = tpu.matmul %123, %124, %cst_50 {dimension_numbers = #tpu.dot_dimension_numbers<[1], [0], [0], [1], [0, 0, 1, 1], [], []>} : vector<128x8xf32>, vector<8x32xf32>, vector<128x32xf32> -> vector<128x32xf32>
    %126 = arith.addf %106, %125 : vector<128x32xf32>
    %127 = vector.broadcast %11 : vector<1x32xf32> to vector<128x32xf32>
    %128 = arith.addf %126, %127 : vector<128x32xf32>
    %129 = arith.addf %35, %128 : vector<128x32xf32>
    %cst_51 = arith.constant dense<0.000000e+00> : vector<128xf32>
    %130 = vector.multi_reduction <add>, %129, %cst_51 [1] : vector<128x32xf32> to vector<128xf32>
    %131 = vector.shape_cast %130 : vector<128xf32> to vector<128x1xf32>
    %cst_52 = arith.constant 3.200000e+01 : f32
    %132 = vector.broadcast %cst_52 : f32 to vector<128x1xf32>
    %133 = arith.divf %131, %132 : vector<128x1xf32>
    %134 = vector.broadcast %133 : vector<128x1xf32> to vector<128x32xf32>
    %135 = arith.subf %129, %134 : vector<128x32xf32>
    %136 = arith.mulf %135, %135 : vector<128x32xf32>
    %cst_53 = arith.constant dense<0.000000e+00> : vector<128xf32>
    %137 = vector.multi_reduction <add>, %136, %cst_53 [1] : vector<128x32xf32> to vector<128xf32>
    %138 = vector.shape_cast %137 : vector<128xf32> to vector<128x1xf32>
    %cst_54 = arith.constant 3.200000e+01 : f32
    %139 = vector.broadcast %cst_54 : f32 to vector<128x1xf32>
    %140 = arith.divf %138, %139 : vector<128x1xf32>
    %141 = vector.broadcast %133 : vector<128x1xf32> to vector<128x32xf32>
    %142 = arith.subf %129, %141 : vector<128x32xf32>
    %cst_55 = arith.constant 9.99999974E-6 : f32
    %143 = vector.broadcast %cst_55 : f32 to vector<128x1xf32>
    %144 = arith.addf %140, %143 : vector<128x1xf32>
    %145 = math.rsqrt %144 : vector<128x1xf32>
    %146 = vector.broadcast %145 : vector<128x1xf32> to vector<128x32xf32>
    %147 = arith.mulf %142, %146 : vector<128x32xf32>
    %148 = vector.broadcast %14 : vector<1x32xf32> to vector<128x32xf32>
    %149 = arith.mulf %147, %148 : vector<128x32xf32>
    %150 = vector.broadcast %15 : vector<1x32xf32> to vector<128x32xf32>
    %151 = arith.addf %149, %150 : vector<128x32xf32>
    %cst_56 = arith.constant dense<0.000000e+00> : vector<128x64xf32>
    %152 = tpu.matmul %151, %5, %cst_56 {dimension_numbers = #tpu.dot_dimension_numbers<[1], [0], [0], [1], [0, 0, 1, 1], [], []>} : vector<128x32xf32>, vector<32x64xf32>, vector<128x64xf32> -> vector<128x64xf32>
    %153 = vector.broadcast %12 : vector<1x64xf32> to vector<128x64xf32>
    %154 = arith.addf %152, %153 : vector<128x64xf32>
    %cst_57 = arith.constant 0.000000e+00 : f32
    %155 = vector.broadcast %cst_57 : f32 to vector<128x64xf32>
    %156 = arith.maximumf %154, %155 : vector<128x64xf32>
    %cst_58 = arith.constant dense<0.000000e+00> : vector<128x32xf32>
    %157 = tpu.matmul %156, %6, %cst_58 {dimension_numbers = #tpu.dot_dimension_numbers<[1], [0], [0], [1], [0, 0, 1, 1], [], []>} : vector<128x64xf32>, vector<64x32xf32>, vector<128x32xf32> -> vector<128x32xf32>
    %158 = vector.broadcast %13 : vector<1x32xf32> to vector<128x32xf32>
    %159 = arith.addf %157, %158 : vector<128x32xf32>
    %160 = arith.addf %151, %159 : vector<128x32xf32>
    %cst_59 = arith.constant dense<0.000000e+00> : vector<128xf32>
    %161 = vector.multi_reduction <add>, %160, %cst_59 [1] : vector<128x32xf32> to vector<128xf32>
    %162 = vector.shape_cast %161 : vector<128xf32> to vector<128x1xf32>
    %cst_60 = arith.constant 3.200000e+01 : f32
    %163 = vector.broadcast %cst_60 : f32 to vector<128x1xf32>
    %164 = arith.divf %162, %163 : vector<128x1xf32>
    %165 = vector.broadcast %164 : vector<128x1xf32> to vector<128x32xf32>
    %166 = arith.subf %160, %165 : vector<128x32xf32>
    %167 = arith.mulf %166, %166 : vector<128x32xf32>
    %cst_61 = arith.constant dense<0.000000e+00> : vector<128xf32>
    %168 = vector.multi_reduction <add>, %167, %cst_61 [1] : vector<128x32xf32> to vector<128xf32>
    %169 = vector.shape_cast %168 : vector<128xf32> to vector<128x1xf32>
    %cst_62 = arith.constant 3.200000e+01 : f32
    %170 = vector.broadcast %cst_62 : f32 to vector<128x1xf32>
    %171 = arith.divf %169, %170 : vector<128x1xf32>
    %172 = vector.broadcast %164 : vector<128x1xf32> to vector<128x32xf32>
    %173 = arith.subf %160, %172 : vector<128x32xf32>
    %cst_63 = arith.constant 9.99999974E-6 : f32
    %174 = vector.broadcast %cst_63 : f32 to vector<128x1xf32>
    %175 = arith.addf %171, %174 : vector<128x1xf32>
    %176 = math.rsqrt %175 : vector<128x1xf32>
    %177 = vector.broadcast %176 : vector<128x1xf32> to vector<128x32xf32>
    %178 = arith.mulf %173, %177 : vector<128x32xf32>
    %179 = vector.broadcast %16 : vector<1x32xf32> to vector<128x32xf32>
    %180 = arith.mulf %178, %179 : vector<128x32xf32>
    %181 = vector.broadcast %17 : vector<1x32xf32> to vector<128x32xf32>
    %182 = arith.addf %180, %181 : vector<128x32xf32>
    %183 = vector.shape_cast %182 : vector<128x32xf32> to vector<8x16x32xf32>
    %cst_64 = arith.constant dense<0.000000e+00> : vector<8x32xf32>
    %184 = vector.multi_reduction <add>, %183, %cst_64 [1] : vector<8x16x32xf32> to vector<8x32xf32>
    %cst_65 = arith.constant 1.600000e+01 : f32
    %185 = vector.broadcast %cst_65 : f32 to vector<8x32xf32>
    %186 = arith.divf %184, %185 : vector<8x32xf32>
    %cst_66 = arith.constant dense<0.000000e+00> : vector<8x128xf32>
    %187 = tpu.matmul %186, %7, %cst_66 {dimension_numbers = #tpu.dot_dimension_numbers<[1], [0], [0], [1], [0, 0, 1, 1], [], []>} : vector<8x32xf32>, vector<32x128xf32>, vector<8x128xf32> -> vector<8x128xf32>
    %188 = vector.broadcast %18 : vector<1x128xf32> to vector<8x128xf32>
    %189 = arith.addf %187, %188 : vector<8x128xf32>
    %190 = math.tanh %189 : vector<8x128xf32>
    %191 = vector.extract_strided_slice %190 {offsets = [0, 3], sizes = [8, 2], strides = [1, 1]} : vector<8x128xf32> to vector<8x2xf32>
    %c0_67 = arith.constant 0 : index
    %c0_68 = arith.constant 0 : index
    %192 = vector.load %arg3[%c0_67, %c0_68] : memref<8x2xf32, #tpu.memory_space<vmem>>, vector<8x2xf32>
    %193 = arith.subf %192, %191 : vector<8x2xf32>
    %194 = arith.mulf %193, %193 : vector<8x2xf32>
    %195 = vector.broadcast %19 : vector<1x2xf32> to vector<8x2xf32>
    %196 = arith.divf %194, %195 : vector<8x2xf32>
    %197 = math.log %19 : vector<1x2xf32>
    %198 = vector.broadcast %197 : vector<1x2xf32> to vector<8x2xf32>
    %199 = arith.addf %196, %198 : vector<8x2xf32>
    %cst_69 = arith.constant 1.83787704 : f32
    %200 = vector.broadcast %cst_69 : f32 to vector<8x2xf32>
    %201 = arith.addf %199, %200 : vector<8x2xf32>
    %cst_70 = arith.constant dense<0.000000e+00> : vector<8xf32>
    %202 = vector.multi_reduction <add>, %201, %cst_70 [1] : vector<8x2xf32> to vector<8xf32>
    %203 = vector.shape_cast %202 : vector<8xf32> to vector<8x1xf32>
    %cst_71 = arith.constant -5.000000e-01 : f32
    %204 = vector.broadcast %cst_71 : f32 to vector<8x1xf32>
    %205 = arith.mulf %204, %203 : vector<8x1xf32>
    %206 = math.log %19 : vector<1x2xf32>
    %cst_72 = arith.constant 1.83787704 : f32
    %207 = vector.broadcast %cst_72 : f32 to vector<1x2xf32>
    %208 = arith.addf %206, %207 : vector<1x2xf32>
    %cst_73 = arith.constant 1.000000e+00 : f32
    %209 = vector.broadcast %cst_73 : f32 to vector<1x2xf32>
    %210 = arith.addf %208, %209 : vector<1x2xf32>
    %211 = vector.shape_cast %210 : vector<1x2xf32> to vector<1x1x2xf32>
    %cst_74 = arith.constant dense<0.000000e+00> : vector<1xf32>
    %212 = vector.multi_reduction <add>, %211, %cst_74 [1, 2] : vector<1x1x2xf32> to vector<1xf32>
    %213 = vector.shape_cast %212 : vector<1xf32> to vector<1x1x1xf32>
    %214 = vector.extract %213[0, 0, 0] : f32 from vector<1x1x1xf32>
    %cst_75 = arith.constant 5.000000e-01 : f32
    %215 = arith.mulf %cst_75, %214 : f32
    %216 = tpu.iota {dimensions = array<i32: 1>} : vector<8x128xi32>
    %c3_i32 = arith.constant 3 : i32
    %217 = vector.broadcast %c3_i32 : i32 to vector<8x128xi32>
    %218 = arith.cmpi sge, %216, %217 : vector<8x128xi32>
    %c5_i32 = arith.constant 5 : i32
    %219 = vector.broadcast %c5_i32 : i32 to vector<8x128xi32>
    %220 = arith.cmpi slt, %216, %219 : vector<8x128xi32>
    %221 = arith.andi %218, %220 : vector<8x128xi1>
    %222 = arith.select %221, %190, %189 : vector<8x128xi1>, vector<8x128xf32>
    %c1_i32 = arith.constant 1 : i32
    %223 = vector.broadcast %c1_i32 : i32 to vector<8x128xi32>
    %224 = arith.cmpi eq, %216, %223 : vector<8x128xi32>
    %225 = vector.shape_cast %205 : vector<8x1xf32> to vector<8x1xf32>
    %226 = vector.broadcast %225 : vector<8x1xf32> to vector<8x128xf32>
    %227 = arith.select %224, %226, %222 : vector<8x128xi1>, vector<8x128xf32>
    %c2_i32 = arith.constant 2 : i32
    %228 = vector.broadcast %c2_i32 : i32 to vector<8x128xi32>
    %229 = arith.cmpi eq, %216, %228 : vector<8x128xi32>
    %230 = vector.broadcast %215 : f32 to vector<8x128xf32>
    %231 = arith.select %229, %230, %227 : vector<8x128xi1>, vector<8x128xf32>
    %c0_76 = arith.constant 0 : index
    %c0_77 = arith.constant 0 : index
    %232 = vector.load %arg5[%c0_76, %c0_77] : memref<8x128xf32, #tpu.memory_space<vmem>>, vector<8x128xf32>
    tpu.vector_store %arg5[%c0_76, %c0_77], %231 {strides = array<i32>} : memref<8x128xf32, #tpu.memory_space<vmem>>, vector<8x128xf32>,
    return
  }
  func.func @transform_0(%arg0: i32) -> (i32, i32) {
    %c0_i32 = arith.constant 0 : i32
    %c0_i32_0 = arith.constant 0 : i32
    return %arg0, %c0_i32 : i32, i32
  }
  func.func @transform_1(%arg0: i32) -> (i32, i32) {
    %c0_i32 = arith.constant 0 : i32
    %c0_i32_0 = arith.constant 0 : i32
    return %arg0, %c0_i32 : i32, i32
  }
  func.func @transform_2(%arg0: i32) -> (i32, i32) {
    %c0_i32 = arith.constant 0 : i32
    %c0_i32_0 = arith.constant 0 : i32
    return %arg0, %c0_i32 : i32, i32
  }
  func.func @transform_3(%arg0: i32) -> (i32, i32) {
    %c0_i32 = arith.constant 0 : i32
    %c0_i32_0 = arith.constant 0 : i32
    %c0_i32_1 = arith.constant 0 : i32
    return %c0_i32, %c0_i32_0 : i32, i32
  }
  func.func @transform_4(%arg0: i32) -> (i32, i32) {
    %c0_i32 = arith.constant 0 : i32
    %c0_i32_0 = arith.constant 0 : i32
    return %arg0, %c0_i32 : i32, i32
  }
}

</mosaic_0001>

<llo_original>
// kernel: actor_critic_evaluate.1
$region0: #{actor_critic_evaluate.1}
  #allocation0 [shape = 'u32[]', space=smem, size = 0x4, offset = 0x4, fixed_abs, tag = 'smem constant byte address 0x4 - core index']
  #allocation1 [shape = 'u32[144,128]{1,0:T(1,128)}', space=vmem, size = 0x12000, scoped, tag = 'internal scratch']
  %s0 = inlined_call_operand.vmem [shape: f32[256,48], index: 0, kind: input, shape index: {}]
  %s1 = inlined_call_operand.vmem [shape: f32[16,5], index: 1, kind: input, shape index: {}]
  %s2 = inlined_call_operand.vmem [shape: f32[16,2], index: 2, kind: input, shape index: {}]
  %s3 = inlined_call_operand.vmem [shape: f32[280,128], index: 3, kind: input, shape index: {}]
  %s4 = inlined_call_operand.vmem [shape: f32[16,128], index: 4, kind: output, shape index: {}]
  %s5 = sld [smem:[#allocation0]]
  $region49: #{actor_critic_evaluate.1} parent=0
    _
  %s7 = ssub.s32 1, %s5
  %s8 = scalar_select 0, %s7, %s5
  loop: start=0, step=1, limit=4
  $region2: #{actor_critic_evaluate.1} parent=0 // loop_pre_header
    _
  $region3: #{actor_critic_evaluate.1} parent=0 // loop_header
    %s10 = sphi 0, %s14
    %p11 = scmp.ge.s32.totalorder %s10, 4
    %s20 = sphi 0, %s22
    %s23 = sphi 0, %s20
    %s24 = sphi 0, %s23
    %s40 = sphi 0, %s24
    %s46 = sphi 0, %s48
    %s49 = sphi 0, %s46
    %s50 = sphi 0, %s49
    %s66 = sphi 0, %s50
    %s72 = sphi 0, %s74
    %s75 = sphi 0, %s72
    %s76 = sphi 0, %s75
    %s92 = sphi 0, %s76
    %s96 = sphi 0, %s96
    %s98 = sphi 0, %s96
    %s99 = sphi 0, %s98
    %s113 = sphi 0, %s99
    %s119 = sphi 0, %s121
    %s122 = sphi 0, %s119
    %s123 = sphi 0, %s122
    %s139 = sphi 0, %s123
  $region4: #{actor_critic_evaluate.1} parent=0 // loop_header_branch
    %13 = sbr.rel (%p11) target = $region8
  $region5: #{actor_critic_evaluate.1} parent=0 // loop_body
    %s15 = ssub.s32 %s10, 1
    %s16 = ssub.s32 %s10, 2
    %s17 = sadd.s32 %s10, 1
    %s18 = ssub.s32 %s10, %s17
    %p19 = scmp.eq.s32.totalorder %s18, 0
    %s21 = sadd.s32 %s20, 1
    %s22 = scalar_select %p19, %s20, %s21
    %p25 = pneg %p19
    %p26 = scmp.eq.s32.totalorder %s10, 1
    %p27 = por %p25, %p26
    %p28 = scmp.ne.s32.totalorder %s20, %s23
    %p29 = scmp.eq.s32.totalorder %s10, 0
    %p30 = por %p28, %p29
    %p31 = scmp.ne.s32.totalorder %s20, %s23
    %p32 = scmp.eq.s32.totalorder %s15, 1
    %p33 = por %p31, %p32
    %p34 = scmp.ne.s32.totalorder %s23, %s24
    %p35 = scmp.eq.s32.totalorder %s15, 0
    %p36 = por %p34, %p35
    %p37 = scmp.ne.s32.totalorder %s23, %s24
    %p38 = scmp.eq.s32.totalorder %s16, 1
    %p39 = por %p37, %p38
    %p41 = scmp.ne.s32.totalorder %s24, %s40
    %p42 = scmp.eq.s32.totalorder %s16, 0
    %p43 = por %p41, %p42
    %s44 = ssub.s32 %s10, %s17
    %p45 = scmp.eq.s32.totalorder %s44, 0
    %s47 = sadd.s32 %s46, 1
    %s48 = scalar_select %p45, %s46, %s47
    %p51 = pneg %p45
    %p52 = scmp.eq.s32.totalorder %s10, 1
    %p53 = por %p51, %p52
    %p54 = scmp.ne.s32.totalorder %s46, %s49
    %p55 = scmp.eq.s32.totalorder %s10, 0
    %p56 = por %p54, %p55
    %p57 = scmp.ne.s32.totalorder %s46, %s49
    %p58 = scmp.eq.s32.totalorder %s15, 1
    %p59 = por %p57, %p58
    %p60 = scmp.ne.s32.totalorder %s49, %s50
    %p61 = scmp.eq.s32.totalorder %s15, 0
    %p62 = por %p60, %p61
    %p63 = scmp.ne.s32.totalorder %s49, %s50
    %p64 = scmp.eq.s32.totalorder %s16, 1
    %p65 = por %p63, %p64
    %p67 = scmp.ne.s32.totalorder %s50, %s66
    %p68 = scmp.eq.s32.totalorder %s16, 0
    %p69 = por %p67, %p68
    %s70 = ssub.s32 %s10, %s17
    %p71 = scmp.eq.s32.totalorder %s70, 0
    %s73 = sadd.s32 %s72, 1
    %s74 = scalar_select %p71, %s72, %s73
    %p77 = pneg %p71
    %p78 = scmp.eq.s32.totalorder %s10, 1
    %p79 = por %p77, %p78
    %p80 = scmp.ne.s32.totalorder %s72, %s75
    %p81 = scmp.eq.s32.totalorder %s10, 0
    %p82 = por %p80, %p81
    %p83 = scmp.ne.s32.totalorder %s72, %s75
    %p84 = scmp.eq.s32.totalorder %s15, 1
    %p85 = por %p83, %p84
    %p86 = scmp.ne.s32.totalorder %s75, %s76
    %p87 = scmp.eq.s32.totalorder %s15, 0
    %p88 = por %p86, %p87
    %p89 = scmp.ne.s32.totalorder %s75, %s76
    %p90 = scmp.eq.s32.totalorder %s16, 1
    %p91 = por %p89, %p90
    %p93 = scmp.ne.s32.totalorder %s76, %s92
    %p94 = scmp.eq.s32.totalorder %s16, 0
    %p95 = por %p93, %p94
    %s97 = sadd.s32 %s96, 1
    %p100 = scmp.eq.s32.totalorder %s10, 1
    %p101 = scmp.ne.s32.totalorder %s96, %s98
    %p102 = scmp.eq.s32.totalorder %s10, 0
    %p103 = por %p101, %p102
    %p104 = scmp.ne.s32.totalorder %s96, %s98
    %p105 = scmp.eq.s32.totalorder %s15, 1
    %p106 = por %p104, %p105
    %p107 = scmp.ne.s32.totalorder %s98, %s99
    %p108 = scmp.eq.s32.totalorder %s15, 0
    %p109 = por %p107, %p108
    %p110 = scmp.ne.s32.totalorder %s98, %s99
    %p111 = scmp.eq.s32.totalorder %s16, 1
    %p112 = por %p110, %p111
    %p114 = scmp.ne.s32.totalorder %s99, %s113
    %p115 = scmp.eq.s32.totalorder %s16, 0
    %p116 = por %p114, %p115
    %s117 = ssub.s32 %s10, %s17
    %p118 = scmp.eq.s32.totalorder %s117, 0
    %s120 = sadd.s32 %s119, 1
    %s121 = scalar_select %p118, %s119, %s120
    %p124 = pneg %p118
    %p125 = scmp.eq.s32.totalorder %s10, 1
    %p126 = por %p124, %p125
    %p127 = scmp.ne.s32.totalorder %s119, %s122
    %p128 = scmp.eq.s32.totalorder %s10, 0
    %p129 = por %p127, %p128
    %p130 = scmp.ne.s32.totalorder %s119, %s122
    %p131 = scmp.eq.s32.totalorder %s15, 1
    %p132 = por %p130, %p131
    %p133 = scmp.ne.s32.totalorder %s122, %s123
    %p134 = scmp.eq.s32.totalorder %s15, 0
    %p135 = por %p133, %p134
    %p136 = scmp.ne.s32.totalorder %s122, %s123
    %p137 = scmp.eq.s32.totalorder %s16, 1
    %p138 = por %p136, %p137
    %p140 = scmp.ne.s32.totalorder %s123, %s139
    %p141 = scmp.eq.s32.totalorder %s16, 0
    %p142 = por %p140, %p141
    %p143 = scmp.le.s32.totalorder 1, %s10
    %p144 = scmp.lt.s32.totalorder %s10, 3
    %p145 = pnand %p143, %p144
    %p146 = pneg %p145
    // Predicated region
    $region9: #{actor_critic_evaluate.1} parent=5 // pred_check
      _
    $region10: #{actor_critic_evaluate.1} parent=5 // pred_check_branch
      %148 = sbr.rel (%p145) target = $region12
    $region11: #{actor_critic_evaluate.1} parent=5 // pred_region
      %s149 = ssub.s32 %s10, 1
      // Predicated region
      $region13: #{actor_critic_evaluate.1} parent=11 // pred_check
        %p150 = pneg %p109
      $region14: #{actor_critic_evaluate.1} parent=11 // pred_check_branch
        %152 = sbr.rel (%p150) target = $region16
      $region15: #{actor_critic_evaluate.1} parent=11 // pred_region
        _
      $region16: #{actor_critic_evaluate.1} parent=11 // pred_fallthru
        _
    $region12: #{actor_critic_evaluate.1} parent=5 // pred_fallthru
      _
    %p153 = scmp.lt.s32.totalorder %s10, 2
    // Predicated region
    $region17: #{actor_critic_evaluate.1} parent=5 // pred_check
      %p154 = pneg %p153
    $region18: #{actor_critic_evaluate.1} parent=5 // pred_check_branch
      %156 = sbr.rel (%p154) target = $region20
    $region19: #{actor_critic_evaluate.1} parent=5 // pred_region
      // Predicated region
      $region21: #{actor_critic_evaluate.1} parent=19 // pred_check
        %p157 = pneg %p30
      $region22: #{actor_critic_evaluate.1} parent=19 // pred_check_branch
        %159 = sbr.rel (%p157) target = $region24
      $region23: #{actor_critic_evaluate.1} parent=19 // pred_region
        %s160 = smul.u32 16, %s10
        %p161 = scmp.lt.s32.totalorder %s160, 31
        %s162 = scalar_select %p161, %s160, 31
        %s163 = smul.addr %s162, 8
        %s164 = scalar_lea.vmem %s0, %s163
        %s165 = smul.u32 16, %s10
      $region24: #{actor_critic_evaluate.1} parent=19 // pred_fallthru
        _
      // Predicated region
      $region25: #{actor_critic_evaluate.1} parent=19 // pred_check
        %p166 = pneg %p56
      $region26: #{actor_critic_evaluate.1} parent=19 // pred_check_branch
        %168 = sbr.rel (%p166) target = $region28
      $region27: #{actor_critic_evaluate.1} parent=19 // pred_region
        %p169 = scmp.lt.s32.totalorder %s10, 1
        %s170 = scalar_select %p169, %s10, 1
        %s171 = smul.addr %s170, 8
        %s172 = scalar_lea.vmem %s1, %s171
      $region28: #{actor_critic_evaluate.1} parent=19 // pred_fallthru
        _
      // Predicated region
      $region29: #{actor_critic_evaluate.1} parent=19 // pred_check
        %p173 = pneg %p82
      $region30: #{actor_critic_evaluate.1} parent=19 // pred_check_branch
        %175 = sbr.rel (%p173) target = $region32
      $region31: #{actor_critic_evaluate.1} parent=19 // pred_region
        %p176 = scmp.lt.s32.totalorder %s10, 1
        %s177 = scalar_select %p176, %s10, 1
        %s178 = smul.addr %s177, 8
        %s179 = scalar_lea.vmem %s2, %s178
      $region32: #{actor_critic_evaluate.1} parent=19 // pred_fallthru
        _
    $region20: #{actor_critic_evaluate.1} parent=5 // pred_fallthru
      _
    %p180 = scmp.le.s32.totalorder 1, %s10
    %p181 = scmp.lt.s32.totalorder %s10, 3
    %p182 = pnand %p180, %p181
    %p183 = pneg %p182
    // Predicated region
    $region33: #{actor_critic_evaluate.1} parent=5 // pred_check
      _
    $region34: #{actor_critic_evaluate.1} parent=5 // pred_check_branch
      %185 = sbr.rel (%p182) target = $region36
    $region35: #{actor_critic_evaluate.1} parent=5 // pred_region
      %s186 = ssub.s32 %s10, 1
      %s187 = smul.u32 16, %s15
      %p188 = scmp.lt.s32.totalorder %s187, 31
      %s189 = scalar_select %p188, %s187, 31
      %s190 = smul.addr %s189, 8
      %s191 = scalar_lea.vmem %s0, %s190
      %p192 = pneg %p36
      %p193 = pneg %p33
      %p194 = scmp.lt.s32.totalorder %s15, 1
      %s195 = scalar_select %p194, %s15, 1
      %s196 = smul.addr %s195, 8
      %s197 = scalar_lea.vmem %s1, %s196
      %p198 = pneg %p62
      %p199 = pneg %p59
      %p200 = scmp.lt.s32.totalorder %s15, 1
      %s201 = scalar_select %p200, %s15, 1
      %s202 = smul.addr %s201, 8
      %s203 = scalar_lea.vmem %s2, %s202
      %p204 = pneg %p88
      %p205 = pneg %p85
      %p206 = pneg %p109
      %p207 = pneg %p106
      %p208 = pneg %p135
      %p209 = pneg %p132
      %p210 = scmp.lt.s32.totalorder %s15, 1
      %s211 = scalar_select %p210, %s15, 1
      %s212 = smul.addr %s211, 8
      %s213 = scalar_lea.vmem %s4, %s212
      %s214 = smul.u32 16, %s15
      %p215 = scmp.lt.s32.totalorder %s214, 31
      %s216 = scalar_select %p215, %s214, 31
      %s217 = smul.addr %s216, 8
      %s218 = scalar_lea.vmem %s0, %s217
      %s219 = smul.u32 16, %s15
      %p220 = scmp.lt.s32.totalorder %s15, 1
      %s221 = scalar_select %p220, %s15, 1
      %s222 = smul.addr %s221, 8
      %s223 = scalar_lea.vmem %s1, %s222
      %p224 = scmp.lt.s32.totalorder %s15, 1
      %s225 = scalar_select %p224, %s15, 1
      %s226 = smul.addr %s225, 8
      %s227 = scalar_lea.vmem %s2, %s226
      %p228 = scmp.lt.s32.totalorder %s15, 1
      %s229 = scalar_select %p228, %s15, 1
      %s230 = smul.addr %s229, 8
      %s231 = scalar_lea.vmem %s4, %s230
      %v232 = vld [vmem:[%s3 + $0x40] sm:$0xff]
      %v233 = vld [vmem:[%s3 + $0x48] sm:$0xff]
      %v234 = vld [vmem:[%s3 + $0x50] sm:$0xff]
      %v235 = vld [vmem:[%s3 + $0x58] sm:$0xff]
      %v236 = vld [vmem:[%s3 + $0x60] sm:$0xff]
      %v237 = vld [vmem:[%s3 + $0x68] sm:$0xff]
      %v238 = vld [vmem:[%s3 + $0x100] sm:$0x1f]
      %v239 = vld [vmem:[%s3 + $0x70] sm:$0xff]
      %v240 = vld [vmem:[%s3 + $0x78] sm:$0xff]
      %v241 = vld [vmem:[%s3] sm:$0xff]
      %v242 = vld [vmem:[%s3 + $0x8] sm:$0xff]
      %v243 = vld [vmem:[%s3 + $0x10] sm:$0xff]
      %v244 = vld [vmem:[%s3 + $0x18] sm:$0xff]
      %v245 = vld [vmem:[%s3 + $0x80] sm:$0xff]
      %v246 = vld [vmem:[%s3 + $0x88] sm:$0xff]
      %v247 = vld [vmem:[%s3 + $0x90] sm:$0xff]
      %v248 = vld [vmem:[%s3 + $0x98] sm:$0xff]
      %v249 = vld [vmem:[%s3 + $0xa0] sm:$0xff]
      %v250 = vld [vmem:[%s3 + $0xa8] sm:$0xff]
      %v251 = vld [vmem:[%s3 + $0xb0] sm:$0xff]
      %v252 = vld [vmem:[%s3 + $0xb8] sm:$0xff]
      %v253 = vld [vmem:[%s3 + $0xc0] sm:$0xff]
      %v254 = vld [vmem:[%s3 + $0xc8] sm:$0xff]
      %v255 = vld [vmem:[%s3 + $0xd0] sm:$0xff]
      %v256 = vld [vmem:[%s3 + $0xd8] sm:$0xff]
      %v257 = vld [vmem:[%s3 + $0xe0] sm:$0xff]
      %v258 = vld [vmem:[%s3 + $0xe8] sm:$0xff]
      %v259 = vld [vmem:[%s3 + $0xf0] sm:$0xff]
      %v260 = vld [vmem:[%s3 + $0xf8] sm:$0xff]
      %v261 = vld [vmem:[%s3 + $0x20] sm:$0xff]
      %v262 = vld [vmem:[%s3 + $0x28] sm:$0xff]
      %v263 = vld [vmem:[%s3 + $0x30] sm:$0xff]
      %v264 = vld [vmem:[%s3 + $0x38] sm:$0xff]
      %v265 = vld [vmem:[%s3 + $0x108] sm:$0x1]
      %v266 = vld [vmem:[%s3 + $0x109] sm:$0x1]
      %v267 = vld [vmem:[%s3 + $0x10a] sm:$0x1]
      %v268 = vld [vmem:[%s3 + $0x10b] sm:$0x1]
      %v269 = vld [vmem:[%s3 + $0x10c] sm:$0x1]
      %v270 = vld [vmem:[%s3 + $0x10d] sm:$0x1]
      %v271 = vld [vmem:[%s3 + $0x10e] sm:$0x1]
      %v272 = vld [vmem:[%s3 + $0x10f] sm:$0x1]
      %v273 = vld [vmem:[%s3 + $0x110] sm:$0x1]
      %v274 = vld [vmem:[%s3 + $0x111] sm:$0x1]
      %v275 = vld [vmem:[%s3 + $0x112] sm:$0x1]
      %v276 = vld [vmem:[%s3 + $0x113] sm:$0x1]
      %v277 = vld [vmem:[%s218] sm:$0xff]
      %v278 = vld [vmem:[%s218 + $0x8] sm:$0xff]
      %v279 = vld [vmem:[%s218 + $0x10] sm:$0xff]
      %v280 = vld [vmem:[%s218 + $0x18] sm:$0xff]
      %v281 = vld [vmem:[%s218 + $0x20] sm:$0xff]
      %v282 = vld [vmem:[%s218 + $0x28] sm:$0xff]
      %v283 = vld [vmem:[%s218 + $0x30] sm:$0xff]
      %v284 = vld [vmem:[%s218 + $0x38] sm:$0xff]
      %v285 = vld [vmem:[%s218 + $0x40] sm:$0xff]
      %v286 = vld [vmem:[%s218 + $0x48] sm:$0xff]
      %v287 = vld [vmem:[%s218 + $0x50] sm:$0xff]
      %v288 = vld [vmem:[%s218 + $0x58] sm:$0xff]
      %v289 = vld [vmem:[%s218 + $0x60] sm:$0xff]
      %v290 = vld [vmem:[%s218 + $0x68] sm:$0xff]
      %v291 = vld [vmem:[%s218 + $0x70] sm:$0xff]
      %v292 = vld [vmem:[%s218 + $0x78] sm:$0xff]
      %v293 = vlaneseq
      %v294 = vshrl.u32 %v293, 7
      %v295 = vsub.s32 0, %v294
      %v296 = vrot.slane %v265, %v295
      %vm297 = vcmask 392192
      %v299 = vsel %vm297, %v277, 0
      %v302 = vsel %vm297, %v278, 0
      %v305 = vsel %vm297, %v279, 0
      %v308 = vsel %vm297, %v280, 0
      %v311 = vsel %vm297, %v281, 0
      %v314 = vsel %vm297, %v282, 0
      %v317 = vsel %vm297, %v283, 0
      %v320 = vsel %vm297, %v284, 0
      %v323 = vsel %vm297, %v285, 0
      %v326 = vsel %vm297, %v286, 0
      %v329 = vsel %vm297, %v287, 0
      %v332 = vsel %vm297, %v288, 0
      %v335 = vsel %vm297, %v289, 0
      %v338 = vsel %vm297, %v290, 0
      %v341 = vsel %vm297, %v291, 0
      %v344 = vsel %vm297, %v292, 0
      %346 = vmatprep.subr.mxu0 0.0
      %347 = vmatpush1.msra.mxu0 0.0
      %348 = vmatprep.subr.mxu0 0.0
      %349 = vmatpush1.msra.mxu0 0.0
      %350 = vmatprep.subr.mxu0 0.0
      %351 = vmatpush1.msra.mxu0 0.0
      %352 = vmatprep.subr.mxu0 0.0
      %353 = vmatpush1.msra.mxu0 0.0
      %354 = vmatprep.subr.mxu0 0.0
      %355 = vmatpush1.msra.mxu0 0.0
      %356 = vmatprep.subr.mxu0 0.0
      %357 = vmatpush1.msra.mxu0 0.0
      %358 = vmatprep.subr.mxu0 0.0
      %359 = vmatpush1.msra.mxu0 0.0
      %360 = vmatprep.subr.mxu0 0.0
      %361 = vmatpush1.msra.mxu0 0.0
      %362 = vmatprep.subr.mxu0 0.0
      %363 = vmatpush1.msra.mxu0 0.0
      %364 = vmatprep.subr.mxu0 0.0
      %365 = vmatpush1.msra.mxu0 0.0
      %366 = vmatprep.subr.mxu0 0.0
      %367 = vmatpush1.msra.mxu0 %v237
      %368 = vmatprep.subr.mxu0 0.0
      %369 = vmatpush1.msra.mxu0 %v236
      %370 = vmatprep.subr.mxu0 0.0
      %371 = vmatpush1.msra.mxu0 %v235
      %372 = vmatprep.subr.mxu0 0.0
      %373 = vmatpush1.msra.mxu0 %v234
      %374 = vmatprep.subr.mxu0 0.0
      %375 = vmatpush1.msra.mxu0 %v233
      %376 = vmatprep.subr.mxu0 0.0
      %377 = vmatpush1.msra.mxu0 %v232
      %378 = vmatprep.subr.mxu0 0.0
      %379 = vmatpush2.msra.mxu0 0.0
      %380 = vmatprep.subr.mxu0 0.0
      %381 = vmatpush2.msra.mxu0 0.0
      %382 = vmatprep.subr.mxu0 0.0
      %383 = vmatpush2.msra.mxu0 0.0
      %384 = vmatprep.subr.mxu0 0.0
      %385 = vmatpush2.msra.mxu0 0.0
      %386 = vmatprep.subr.mxu0 0.0
      %387 = vmatpush2.msra.mxu0 0.0
      %388 = vmatprep.subr.mxu0 0.0
      %389 = vmatpush2.msra.mxu0 0.0
      %390 = vmatprep.subr.mxu0 0.0
      %391 = vmatpush2.msra.mxu0 0.0
      %392 = vmatprep.subr.mxu0 0.0
      %393 = vmatpush2.msra.mxu0 0.0
      %394 = vmatprep.subr.mxu0 0.0
      %395 = vmatpush2.msra.mxu0 0.0
      %396 = vmatprep.subr.mxu0 0.0
      %397 = vmatpush2.msra.mxu0 0.0
      %398 = vmatprep.subr.mxu0 0.0
      %399 = vmatpush2.msra.mxu0 0.0
      %400 = vmatprep.subr.mxu0 0.0
      %401 = vmatpush2.msra.mxu0 0.0
      %402 = vmatprep.subr.mxu0 0.0
      %403 = vmatpush2.msra.mxu0 0.0
      %404 = vmatprep.subr.mxu0 0.0
      %405 = vmatpush2.msra.mxu0 0.0
      %406 = vmatprep.subr.mxu0 0.0
      %407 = vmatpush2.msra.mxu0 0.0
      %408 = vmatprep.subr.mxu0 0.0
      %409 = vmatpush2.msra.mxu0 0.0
      %410 = vmatprep.mubr.f32.mxu0 0.0
      %411 = vmatmul.mubr.f32.gmra.mxu0 %v299
      %v412 = vpop.f32.mrf.mxu0
      %v413 = vadd.f32 %v296, %v412
      %v414 = vpop.f32.mrf.mxu0
      %415 = vmatprep.mubr.f32.mxu0 0.0
      %416 = vmatmul.mubr.f32.gmra.mxu0 %v302
      %v417 = vpop.f32.mrf.mxu0
      %v418 = vadd.f32 %v296, %v417
      %v419 = vpop.f32.mrf.mxu0
      %420 = vmatprep.mubr.f32.mxu0 0.0
      %421 = vmatmul.mubr.f32.gmra.mxu0 %v305
      %v422 = vpop.f32.mrf.mxu0
      %v423 = vadd.f32 %v296, %v422
      %v424 = vpop.f32.mrf.mxu0
      %425 = vmatprep.mubr.f32.mxu0 0.0
      %426 = vmatmul.mubr.f32.gmra.mxu0 %v308
      %v427 = vpop.f32.mrf.mxu0
      %v428 = vadd.f32 %v296, %v427
      %v429 = vpop.f32.mrf.mxu0
      %430 = vmatprep.mubr.f32.mxu0 0.0
      %431 = vmatmul.mubr.f32.gmra.mxu0 %v311
      %v432 = vpop.f32.mrf.mxu0
      %v433 = vadd.f32 %v296, %v432
      %v434 = vpop.f32.mrf.mxu0
      %435 = vmatprep.mubr.f32.mxu0 0.0
      %436 = vmatmul.mubr.f32.gmra.mxu0 %v314
      %v437 = vpop.f32.mrf.mxu0
      %v438 = vadd.f32 %v296, %v437
      %v439 = vpop.f32.mrf.mxu0
      %440 = vmatprep.mubr.f32.mxu0 0.0
      %441 = vmatmul.mubr.f32.gmra.mxu0 %v317
      %v442 = vpop.f32.mrf.mxu0
      %v443 = vadd.f32 %v296, %v442
      %v444 = vpop.f32.mrf.mxu0
      %445 = vmatprep.mubr.f32.mxu0 0.0
      %446 = vmatmul.mubr.f32.gmra.mxu0 %v320
      %v447 = vpop.f32.mrf.mxu0
      %v448 = vadd.f32 %v296, %v447
      %v449 = vpop.f32.mrf.mxu0
      %450 = vmatprep.mubr.f32.mxu0 0.0
      %451 = vmatmul.mubr.f32.gmra.mxu0 %v323
      %v452 = vpop.f32.mrf.mxu0
      %v453 = vadd.f32 %v296, %v452
      %v454 = vpop.f32.mrf.mxu0
      %455 = vmatprep.mubr.f32.mxu0 0.0
      %456 = vmatmul.mubr.f32.gmra.mxu0 %v326
      %v457 = vpop.f32.mrf.mxu0
      %v458 = vadd.f32 %v296, %v457
      %v459 = vpop.f32.mrf.mxu0
      %460 = vmatprep.mubr.f32.mxu0 0.0
      %461 = vmatmul.mubr.f32.gmra.mxu0 %v329
      %v462 = vpop.f32.mrf.mxu0
      %v463 = vadd.f32 %v296, %v462
      %v464 = vpop.f32.mrf.mxu0
      %465 = vmatprep.mubr.f32.mxu0 0.0
      %466 = vmatmul.mubr.f32.gmra.mxu0 %v332
      %v467 = vpop.f32.mrf.mxu0
      %v468 = vadd.f32 %v296, %v467
      %v469 = vpop.f32.mrf.mxu0
      %470 = vmatprep.mubr.f32.mxu0 0.0
      %471 = vmatmul.mubr.f32.gmra.mxu0 %v335
      %v472 = vpop.f32.mrf.mxu0
      %v473 = vadd.f32 %v296, %v472
      %v474 = vpop.f32.mrf.mxu0
      %475 = vmatprep.mubr.f32.mxu0 0.0
      %476 = vmatmul.mubr.f32.gmra.mxu0 %v338
      %v477 = vpop.f32.mrf.mxu0
      %v478 = vadd.f32 %v296, %v477
      %v479 = vpop.f32.mrf.mxu0
      %480 = vmatprep.mubr.f32.mxu0 0.0
      %481 = vmatmul.mubr.f32.gmra.mxu0 %v341
      %v482 = vpop.f32.mrf.mxu0
      %v483 = vadd.f32 %v296, %v482
      %v484 = vpop.f32.mrf.mxu0
      %485 = vmatprep.mubr.f32.mxu0 0.0
      %486 = vmatmul.mubr.f32.gmra.mxu0 %v344
      %v487 = vpop.f32.mrf.mxu0
      %v488 = vadd.f32 %v296, %v487
      %v489 = vpop.f32.mrf.mxu0
      %490 = vdwg.mxu0
      %v491 = vld [vmem:[%s223] sm:$0xff]
      %v492 = vlaneseq
      %v493 = vshrl.u32 %v492, 7
      %v494 = vsub.s32 0, %v493
      %v495 = vrot.slane %v266, %v494
      %vm496 = vcmask 39936
      %v498 = vsel %vm496, %v491, 0
      %vm500 = vcmask 1044480
      %v502 = vsel %vm500, %v238, 0
      %504 = vmatprep.subr.mxu0 0.0
      %505 = vmatpush1.msra.mxu0 0.0
      %506 = vmatprep.subr.mxu0 0.0
      %507 = vmatpush1.msra.mxu0 0.0
      %508 = vmatprep.subr.mxu0 0.0
      %509 = vmatpush1.msra.mxu0 0.0
      %510 = vmatprep.subr.mxu0 0.0
      %511 = vmatpush1.msra.mxu0 0.0
      %512 = vmatprep.subr.mxu0 0.0
      %513 = vmatpush1.msra.mxu0 0.0
      %514 = vmatprep.subr.mxu0 0.0
      %515 = vmatpush1.msra.mxu0 0.0
      %516 = vmatprep.subr.mxu0 0.0
      %517 = vmatpush1.msra.mxu0 0.0
      %518 = vmatprep.subr.mxu0 0.0
      %519 = vmatpush1.msra.mxu0 0.0
      %520 = vmatprep.subr.mxu0 0.0
      %521 = vmatpush1.msra.mxu0 0.0
      %522 = vmatprep.subr.mxu0 0.0
      %523 = vmatpush1.msra.mxu0 0.0
      %524 = vmatprep.subr.mxu0 0.0
      %525 = vmatpush1.msra.mxu0 0.0
      %526 = vmatprep.subr.mxu0 0.0
      %527 = vmatpush1.msra.mxu0 0.0
      %528 = vmatprep.subr.mxu0 0.0
      %529 = vmatpush1.msra.mxu0 0.0
      %530 = vmatprep.subr.mxu0 0.0
      %531 = vmatpush1.msra.mxu0 0.0
      %532 = vmatprep.subr.mxu0 0.0
      %533 = vmatpush1.msra.mxu0 0.0
      %534 = vmatprep.subr.mxu0 0.0
      %535 = vmatpush1.msra.mxu0 %v502
      %536 = vmatprep.subr.mxu0 0.0
      %537 = vmatpush2.msra.mxu0 0.0
      %538 = vmatprep.subr.mxu0 0.0
      %539 = vmatpush2.msra.mxu0 0.0
      %540 = vmatprep.subr.mxu0 0.0
      %541 = vmatpush2.msra.mxu0 0.0
      %542 = vmatprep.subr.mxu0 0.0
      %543 = vmatpush2.msra.mxu0 0.0
      %544 = vmatprep.subr.mxu0 0.0
      %545 = vmatpush2.msra.mxu0 0.0
      %546 = vmatprep.subr.mxu0 0.0
      %547 = vmatpush2.msra.mxu0 0.0
      %548 = vmatprep.subr.mxu0 0.0
      %549 = vmatpush2.msra.mxu0 0.0
      %550 = vmatprep.subr.mxu0 0.0
      %551 = vmatpush2.msra.mxu0 0.0
      %552 = vmatprep.subr.mxu0 0.0
      %553 = vmatpush2.msra.mxu0 0.0
      %554 = vmatprep.subr.mxu0 0.0
      %555 = vmatpush2.msra.mxu0 0.0
      %556 = vmatprep.subr.mxu0 0.0
      %557 = vmatpush2.msra.mxu0 0.0
      %558 = vmatprep.subr.mxu0 0.0
      %559 = vmatpush2.msra.mxu0 0.0
      %560 = vmatprep.subr.mxu0 0.0
      %561 = vmatpush2.msra.mxu0 0.0
      %562 = vmatprep.subr.mxu0 0.0
      %563 = vmatpush2.msra.mxu0 0.0
      %564 = vmatprep.subr.mxu0 0.0
      %565 = vmatpush2.msra.mxu0 0.0
      %566 = vmatprep.subr.mxu0 0.0
      %567 = vmatpush2.msra.mxu0 0.0
      %568 = vmatprep.mubr.f32.mxu0 0.0
      %569 = vmatmul.mubr.f32.gmra.mxu0 %v498
      %v570 = vpop.f32.mrf.mxu0
      %v571 = vadd.f32 %v495, %v570
      %v572 = vpop.f32.mrf.mxu0
      %573 = vdwg.mxu0
      %v575 = vcombine.high %v571, %v571
      %v577 = vunpack.c.l.s4 1966171168
      %v578 = vunpack.c.0.s8 %v577
      %v579 = vlaneseq
      %v580 = vshrl.u32 %v579, 7
      %v581 = vsub.s32 %v578, %v580
      %v582 = vrot.slane %v571, %v581
      %v584 = vunpack.c.l.s4 1966171168
      %v585 = vunpack.c.0.s8 %v584
      %v586 = vlaneseq
      %v587 = vshrl.u32 %v586, 7
      %v588 = vsub.s32 %v585, %v587
      %v589 = vrot.slane %v575, %v588
      %v590 = vcombine.high %v582, %v582
      %v591 = vcombine.high %v589, %v589
      %v593 = vunpack.c.l.s4 1966171168
      %v594 = vunpack.c.0.s8 %v593
      %v595 = vlaneseq
      %v596 = vshrl.u32 %v595, 7
      %v597 = vsub.s32 %v594, %v596
      %v598 = vrot.slane %v582, %v597
      %v600 = vunpack.c.l.s4 1966171168
      %v601 = vunpack.c.0.s8 %v600
      %v602 = vlaneseq
      %v603 = vshrl.u32 %v602, 7
      %v604 = vsub.s32 %v601, %v603
      %v605 = vrot.slane %v589, %v604
      %v607 = vunpack.c.l.s4 1966171168
      %v608 = vunpack.c.0.s8 %v607
      %v609 = vlaneseq
      %v610 = vshrl.u32 %v609, 7
      %v611 = vsub.s32 %v608, %v610
      %v612 = vrot.slane %v590, %v611
      %v614 = vunpack.c.l.s4 1966171168
      %v615 = vunpack.c.0.s8 %v614
      %v616 = vlaneseq
      %v617 = vshrl.u32 %v616, 7
      %v618 = vsub.s32 %v615, %v617
      %v619 = vrot.slane %v591, %v618
      %v620 = vcombine.high %v598, %v598
      %v621 = vcombine.high %v605, %v605
      %v622 = vcombine.high %v612, %v612
      %v623 = vcombine.high %v619, %v619
      %v624 = vlaneseq
      %v625 = vshrl.u32 %v624, 7
      %v626 = vsub.s32 0, %v625
      %v627 = vrot.slane %v598, %v626
      %v628 = vlaneseq
      %v629 = vshrl.u32 %v628, 7
      %v630 = vsub.s32 0, %v629
      %v631 = vrot.slane %v612, %v630
      %v632 = vlaneseq
      %v633 = vshrl.u32 %v632, 7
      %v634 = vsub.s32 0, %v633
      %v635 = vrot.slane %v620, %v634
      %v636 = vlaneseq
      %v637 = vshrl.u32 %v636, 7
      %v638 = vsub.s32 0, %v637
      %v639 = vrot.slane %v622, %v638
      %v640 = vlaneseq
      %v641 = vshrl.u32 %v640, 7
      %v642 = vsub.s32 0, %v641
      %v643 = vrot.slane %v605, %v642
      %v644 = vlaneseq
      %v645 = vshrl.u32 %v644, 7
      %v646 = vsub.s32 0, %v645
      %v647 = vrot.slane %v619, %v646
      %v648 = vlaneseq
      %v649 = vshrl.u32 %v648, 7
      %v650 = vsub.s32 0, %v649
      %v651 = vrot.slane %v621, %v650
      %v652 = vlaneseq
      %v653 = vshrl.u32 %v652, 7
      %v654 = vsub.s32 0, %v653
      %v655 = vrot.slane %v623, %v654
      %v664 = vadd.f32 %v413, %v627
      %v665 = vadd.f32 %v418, %v627
      %v666 = vadd.f32 %v423, %v631
      %v667 = vadd.f32 %v428, %v631
      %v668 = vadd.f32 %v433, %v635
      %v669 = vadd.f32 %v438, %v635
      %v670 = vadd.f32 %v443, %v639
      %v671 = vadd.f32 %v448, %v639
      %v672 = vadd.f32 %v453, %v643
      %v673 = vadd.f32 %v458, %v643
      %v674 = vadd.f32 %v463, %v647
      %v675 = vadd.f32 %v468, %v647
      %v676 = vadd.f32 %v473, %v651
      %v677 = vadd.f32 %v478, %v651
      %v678 = vadd.f32 %v483, %v655
      %v679 = vadd.f32 %v488, %v655
      %v680 = vadd.f32 %v664, %v239
      %v681 = vadd.f32 %v665, %v240
      %v682 = vadd.f32 %v666, %v239
      %v683 = vadd.f32 %v667, %v240
      %v684 = vadd.f32 %v668, %v239
      %v685 = vadd.f32 %v669, %v240
      %v686 = vadd.f32 %v670, %v239
      %v687 = vadd.f32 %v671, %v240
      %v688 = vadd.f32 %v672, %v239
      %v689 = vadd.f32 %v673, %v240
      %v690 = vadd.f32 %v674, %v239
      %v691 = vadd.f32 %v675, %v240
      %v692 = vadd.f32 %v676, %v239
      %v693 = vadd.f32 %v677, %v240
      %v694 = vadd.f32 %v678, %v239
      %v695 = vadd.f32 %v679, %v240
      %v696 = vlaneseq
      %v697 = vshrl.u32 %v696, 7
      %v698 = vsub.s32 0, %v697
      %v699 = vrot.slane %v267, %v698
      %vm700 = vcmask 261120
      %v702 = vsel %vm700, %v680, 0
      %v705 = vsel %vm700, %v681, 0
      %v708 = vsel %vm700, %v682, 0
      %v711 = vsel %vm700, %v683, 0
      %v714 = vsel %vm700, %v684, 0
      %v717 = vsel %vm700, %v685, 0
      %v720 = vsel %vm700, %v686, 0
      %v723 = vsel %vm700, %v687, 0
      %v726 = vsel %vm700, %v688, 0
      %v729 = vsel %vm700, %v689, 0
      %v732 = vsel %vm700, %v690, 0
      %v735 = vsel %vm700, %v691, 0
      %v738 = vsel %vm700, %v692, 0
      %v741 = vsel %vm700, %v693, 0
      %v744 = vsel %vm700, %v694, 0
      %v747 = vsel %vm700, %v695, 0
      %749 = vmatprep.subr.mxu0 0.0
      %750 = vmatpush1.msra.mxu0 0.0
      %751 = vmatprep.subr.mxu0 0.0
      %752 = vmatpush1.msra.mxu0 0.0
      %753 = vmatprep.subr.mxu0 0.0
      %754 = vmatpush1.msra.mxu0 0.0
      %755 = vmatprep.subr.mxu0 0.0
      %756 = vmatpush1.msra.mxu0 0.0
      %757 = vmatprep.subr.mxu0 0.0
      %758 = vmatpush1.msra.mxu0 0.0
      %759 = vmatprep.subr.mxu0 0.0
      %760 = vmatpush1.msra.mxu0 0.0
      %761 = vmatprep.subr.mxu0 0.0
      %762 = vmatpush1.msra.mxu0 0.0
      %763 = vmatprep.subr.mxu0 0.0
      %764 = vmatpush1.msra.mxu0 0.0
      %765 = vmatprep.subr.mxu0 0.0
      %766 = vmatpush1.msra.mxu0 0.0
      %767 = vmatprep.subr.mxu0 0.0
      %768 = vmatpush1.msra.mxu0 0.0
      %769 = vmatprep.subr.mxu0 0.0
      %770 = vmatpush1.msra.mxu0 0.0
      %771 = vmatprep.subr.mxu0 0.0
      %772 = vmatpush1.msra.mxu0 0.0
      %773 = vmatprep.subr.mxu0 0.0
      %774 = vmatpush1.msra.mxu0 %v244
      %775 = vmatprep.subr.mxu0 0.0
      %776 = vmatpush1.msra.mxu0 %v243
      %777 = vmatprep.subr.mxu0 0.0
      %778 = vmatpush1.msra.mxu0 %v242
      %779 = vmatprep.subr.mxu0 0.0
      %780 = vmatpush1.msra.mxu0 %v241
      %781 = vmatprep.subr.mxu0 0.0
      %782 = vmatpush2.msra.mxu0 0.0
      %783 = vmatprep.subr.mxu0 0.0
      %784 = vmatpush2.msra.mxu0 0.0
      %785 = vmatprep.subr.mxu0 0.0
      %786 = vmatpush2.msra.mxu0 0.0
      %787 = vmatprep.subr.mxu0 0.0
      %788 = vmatpush2.msra.mxu0 0.0
      %789 = vmatprep.subr.mxu0 0.0
      %790 = vmatpush2.msra.mxu0 0.0
      %791 = vmatprep.subr.mxu0 0.0
      %792 = vmatpush2.msra.mxu0 0.0
      %793 = vmatprep.subr.mxu0 0.0
      %794 = vmatpush2.msra.mxu0 0.0
      %795 = vmatprep.subr.mxu0 0.0
      %796 = vmatpush2.msra.mxu0 0.0
      %797 = vmatprep.subr.mxu0 0.0
      %798 = vmatpush2.msra.mxu0 0.0
      %799 = vmatprep.subr.mxu0 0.0
      %800 = vmatpush2.msra.mxu0 0.0
      %801 = vmatprep.subr.mxu0 0.0
      %802 = vmatpush2.msra.mxu0 0.0
      %803 = vmatprep.subr.mxu0 0.0
      %804 = vmatpush2.msra.mxu0 0.0
      %805 = vmatprep.subr.mxu0 0.0
      %806 = vmatpush2.msra.mxu0 0.0
      %807 = vmatprep.subr.mxu0 0.0
      %808 = vmatpush2.msra.mxu0 0.0
      %809 = vmatprep.subr.mxu0 0.0
      %810 = vmatpush2.msra.mxu0 0.0
      %811 = vmatprep.subr.mxu0 0.0
      %812 = vmatpush2.msra.mxu0 0.0
      %813 = vmatprep.mubr.f32.mxu0 0.0
      %814 = vmatmul.mubr.f32.gmra.mxu0 %v702
      %v815 = vpop.f32.mrf.mxu0
      %v816 = vadd.f32 %v699, %v815
      %v817 = vpop.f32.mrf.mxu0
      %818 = vmatprep.mubr.f32.mxu0 0.0
      %819 = vmatmul.mubr.f32.gmra.mxu0 %v705
      %v820 = vpop.f32.mrf.mxu0
      %v821 = vadd.f32 %v699, %v820
      %v822 = vpop.f32.mrf.mxu0
      %823 = vmatprep.mubr.f32.mxu0 0.0
      %824 = vmatmul.mubr.f32.gmra.mxu0 %v708
      %v825 = vpop.f32.mrf.mxu0
      %v826 = vadd.f32 %v699, %v825
      %v827 = vpop.f32.mrf.mxu0
      %828 = vmatprep.mubr.f32.mxu0 0.0
      %829 = vmatmul.mubr.f32.gmra.mxu0 %v711
      %v830 = vpop.f32.mrf.mxu0
      %v831 = vadd.f32 %v699, %v830
      %v832 = vpop.f32.mrf.mxu0
      %833 = vmatprep.mubr.f32.mxu0 0.0
      %834 = vmatmul.mubr.f32.gmra.mxu0 %v714
      %v835 = vpop.f32.mrf.mxu0
      %v836 = vadd.f32 %v699, %v835
      %v837 = vpop.f32.mrf.mxu0
      %838 = vmatprep.mubr.f32.mxu0 0.0
      %839 = vmatmul.mubr.f32.gmra.mxu0 %v717
      %v840 = vpop.f32.mrf.mxu0
      %v841 = vadd.f32 %v699, %v840
      %v842 = vpop.f32.mrf.mxu0
      %843 = vmatprep.mubr.f32.mxu0 0.0
      %844 = vmatmul.mubr.f32.gmra.mxu0 %v720
      %v845 = vpop.f32.mrf.mxu0
      %v846 = vadd.f32 %v699, %v845
      %v847 = vpop.f32.mrf.mxu0
      %848 = vmatprep.mubr.f32.mxu0 0.0
      %849 = vmatmul.mubr.f32.gmra.mxu0 %v723
      %v850 = vpop.f32.mrf.mxu0
      %v851 = vadd.f32 %v699, %v850
      %v852 = vpop.f32.mrf.mxu0
      %853 = vmatprep.mubr.f32.mxu0 0.0
      %854 = vmatmul.mubr.f32.gmra.mxu0 %v726
      %v855 = vpop.f32.mrf.mxu0
      %v856 = vadd.f32 %v699, %v855
      %v857 = vpop.f32.mrf.mxu0
      %858 = vmatprep.mubr.f32.mxu0 0.0
      %859 = vmatmul.mubr.f32.gmra.mxu0 %v729
      %v860 = vpop.f32.mrf.mxu0
      %v861 = vadd.f32 %v699, %v860
      %v862 = vpop.f32.mrf.mxu0
      %863 = vmatprep.mubr.f32.mxu0 0.0
      %864 = vmatmul.mubr.f32.gmra.mxu0 %v732
      %v865 = vpop.f32.mrf.mxu0
      %v866 = vadd.f32 %v699, %v865
      %v867 = vpop.f32.mrf.mxu0
      %868 = vmatprep.mubr.f32.mxu0 0.0
      %869 = vmatmul.mubr.f32.gmra.mxu0 %v735
      %v870 = vpop.f32.mrf.mxu0
      %v871 = vadd.f32 %v699, %v870
      %v872 = vpop.f32.mrf.mxu0
      %873 = vmatprep.mubr.f32.mxu0 0.0
      %874 = vmatmul.mubr.f32.gmra.mxu0 %v738
      %v875 = vpop.f32.mrf.mxu0
      %v876 = vadd.f32 %v699, %v875
      %v877 = vpop.f32.mrf.mxu0
      %878 = vmatprep.mubr.f32.mxu0 0.0
      %879 = vmatmul.mubr.f32.gmra.mxu0 %v741
      %v880 = vpop.f32.mrf.mxu0
      %v881 = vadd.f32 %v699, %v880
      %v882 = vpop.f32.mrf.mxu0
      %883 = vmatprep.mubr.f32.mxu0 0.0
      %884 = vmatmul.mubr.f32.gmra.mxu0 %v744
      %v885 = vpop.f32.mrf.mxu0
      %v886 = vadd.f32 %v699, %v885
      %v887 = vpop.f32.mrf.mxu0
      %888 = vmatprep.mubr.f32.mxu0 0.0
      %889 = vmatmul.mubr.f32.gmra.mxu0 %v747
      %v890 = vpop.f32.mrf.mxu0
      %v891 = vadd.f32 %v699, %v890
      %v892 = vpop.f32.mrf.mxu0
      %893 = vdwg.mxu0
      %896 = vrot.lane.b32.xlu0 %v816, 96
      %v897 = vpop.permute.xlu0 %896
      %898 = vrot.lane.b32.xlu0 %v821, 96
      %v899 = vpop.permute.xlu0 %898
      %vm900 = vcmask 64512
      %v901 = vsel %vm900, %v816, 0
      %v903 = vsel %vm900, %v821, 0
      %v905 = vsel %vm900, %v897, 0
      %v907 = vsel %vm900, %v899, 0
      %909 = vmatprep.subr.mxu0 0.0
      %910 = vmatpush1.xpose.msra.mxu0 0.0
      %911 = vmatprep.subr.mxu0 0.0
      %912 = vmatpush1.xpose.msra.mxu0 0.0
      %913 = vmatprep.subr.mxu0 0.0
      %914 = vmatpush1.xpose.msra.mxu0 0.0
      %915 = vmatprep.subr.mxu0 0.0
      %916 = vmatpush1.xpose.msra.mxu0 0.0
      %917 = vmatprep.subr.mxu0 0.0
      %918 = vmatpush1.xpose.msra.mxu0 0.0
      %919 = vmatprep.subr.mxu0 0.0
      %920 = vmatpush1.xpose.msra.mxu0 0.0
      %921 = vmatprep.subr.mxu0 0.0
      %922 = vmatpush1.xpose.msra.mxu0 0.0
      %923 = vmatprep.subr.mxu0 0.0
      %924 = vmatpush1.xpose.msra.mxu0 0.0
      %925 = vmatprep.subr.mxu0 0.0
      %926 = vmatpush1.xpose.msra.mxu0 0.0
      %927 = vmatprep.subr.mxu0 0.0
      %928 = vmatpush1.xpose.msra.mxu0 0.0
      %929 = vmatprep.subr.mxu0 0.0
      %930 = vmatpush1.xpose.msra.mxu0 0.0
      %931 = vmatprep.subr.mxu0 0.0
      %932 = vmatpush1.xpose.msra.mxu0 0.0
      %933 = vmatprep.subr.mxu0 0.0
      %934 = vmatpush1.xpose.msra.mxu0 0.0
      %935 = vmatprep.subr.mxu0 0.0
      %936 = vmatpush1.xpose.msra.mxu0 0.0
      %937 = vmatprep.subr.mxu0 0.0
      %938 = vmatpush1.xpose.msra.mxu0 %v907
      %939 = vmatprep.subr.mxu0 0.0
      %940 = vmatpush1.xpose.msra.mxu0 %v905
      %941 = vmatprep.subr.mxu0 0.0
      %942 = vmatpush2.xpose.msra.mxu0 0.0
      %943 = vmatprep.subr.mxu0 0.0
      %944 = vmatpush2.xpose.msra.mxu0 0.0
      %945 = vmatprep.subr.mxu0 0.0
      %946 = vmatpush2.xpose.msra.mxu0 0.0
      %947 = vmatprep.subr.mxu0 0.0
      %948 = vmatpush2.xpose.msra.mxu0 0.0
      %949 = vmatprep.subr.mxu0 0.0
      %950 = vmatpush2.xpose.msra.mxu0 0.0
      %951 = vmatprep.subr.mxu0 0.0
      %952 = vmatpush2.xpose.msra.mxu0 0.0
      %953 = vmatprep.subr.mxu0 0.0
      %954 = vmatpush2.xpose.msra.mxu0 0.0
      %955 = vmatprep.subr.mxu0 0.0
      %956 = vmatpush2.xpose.msra.mxu0 0.0
      %957 = vmatprep.subr.mxu0 0.0
      %958 = vmatpush2.xpose.msra.mxu0 0.0
      %959 = vmatprep.subr.mxu0 0.0
      %960 = vmatpush2.xpose.msra.mxu0 0.0
      %961 = vmatprep.subr.mxu0 0.0
      %962 = vmatpush2.xpose.msra.mxu0 0.0
      %963 = vmatprep.subr.mxu0 0.0
      %964 = vmatpush2.xpose.msra.mxu0 0.0
      %965 = vmatprep.subr.mxu0 0.0
      %966 = vmatpush2.xpose.msra.mxu0 0.0
      %967 = vmatprep.subr.mxu0 0.0
      %968 = vmatpush2.xpose.msra.mxu0 0.0
      %969 = vmatprep.subr.mxu0 0.0
      %970 = vmatpush2.xpose.msra.mxu0 0.0
      %971 = vmatprep.subr.mxu0 0.0
      %972 = vmatpush2.xpose.msra.mxu0 0.0
      %973 = vmatprep.mubr.f32.mxu0 0.0
      %974 = vmatmul.mubr.f32.gmra.mxu0 %v901
      %v975 = vpop.f32.mrf.mxu0
      %v976 = vadd.f32 0.0, %v975
      %v977 = vpop.f32.mrf.mxu0
      %978 = vmatprep.mubr.f32.mxu0 0.0
      %979 = vmatmul.mubr.f32.gmra.mxu0 %v903
      %v980 = vpop.f32.mrf.mxu0
      %v981 = vadd.f32 0.0, %v980
      %v982 = vpop.f32.mrf.mxu0
      %983 = vdwg.mxu0
      %986 = vrot.lane.b32.xlu0 %v826, 96
      %v987 = vpop.permute.xlu0 %986
      %988 = vrot.lane.b32.xlu0 %v831, 96
      %v989 = vpop.permute.xlu0 %988
      %v990 = vsel %vm900, %v826, 0
      %v992 = vsel %vm900, %v831, 0
      %v994 = vsel %vm900, %v987, 0
      %v996 = vsel %vm900, %v989, 0
      %998 = vmatprep.subr.mxu0 0.0
      %999 = vmatpush1.xpose.msra.mxu0 0.0
      %1000 = vmatprep.subr.mxu0 0.0
      %1001 = vmatpush1.xpose.msra.mxu0 0.0
      %1002 = vmatprep.subr.mxu0 0.0
      %1003 = vmatpush1.xpose.msra.mxu0 0.0
      %1004 = vmatprep.subr.mxu0 0.0
      %1005 = vmatpush1.xpose.msra.mxu0 0.0
      %1006 = vmatprep.subr.mxu0 0.0
      %1007 = vmatpush1.xpose.msra.mxu0 0.0
      %1008 = vmatprep.subr.mxu0 0.0
      %1009 = vmatpush1.xpose.msra.mxu0 0.0
      %1010 = vmatprep.subr.mxu0 0.0
      %1011 = vmatpush1.xpose.msra.mxu0 0.0
      %1012 = vmatprep.subr.mxu0 0.0
      %1013 = vmatpush1.xpose.msra.mxu0 0.0
      %1014 = vmatprep.subr.mxu0 0.0
      %1015 = vmatpush1.xpose.msra.mxu0 0.0
      %1016 = vmatprep.subr.mxu0 0.0
      %1017 = vmatpush1.xpose.msra.mxu0 0.0
      %1018 = vmatprep.subr.mxu0 0.0
      %1019 = vmatpush1.xpose.msra.mxu0 0.0
      %1020 = vmatprep.subr.mxu0 0.0
      %1021 = vmatpush1.xpose.msra.mxu0 0.0
      %1022 = vmatprep.subr.mxu0 0.0
      %1023 = vmatpush1.xpose.msra.mxu0 0.0
      %1024 = vmatprep.subr.mxu0 0.0
      %1025 = vmatpush1.xpose.msra.mxu0 0.0
      %1026 = vmatprep.subr.mxu0 0.0
      %1027 = vmatpush1.xpose.msra.mxu0 %v996
      %1028 = vmatprep.subr.mxu0 0.0
      %1029 = vmatpush1.xpose.msra.mxu0 %v994
      %1030 = vmatprep.subr.mxu0 0.0
      %1031 = vmatpush2.xpose.msra.mxu0 0.0
      %1032 = vmatprep.subr.mxu0 0.0
      %1033 = vmatpush2.xpose.msra.mxu0 0.0
      %1034 = vmatprep.subr.mxu0 0.0
      %1035 = vmatpush2.xpose.msra.mxu0 0.0
      %1036 = vmatprep.subr.mxu0 0.0
      %1037 = vmatpush2.xpose.msra.mxu0 0.0
      %1038 = vmatprep.subr.mxu0 0.0
      %1039 = vmatpush2.xpose.msra.mxu0 0.0
      %1040 = vmatprep.subr.mxu0 0.0
      %1041 = vmatpush2.xpose.msra.mxu0 0.0
      %1042 = vmatprep.subr.mxu0 0.0
      %1043 = vmatpush2.xpose.msra.mxu0 0.0
      %1044 = vmatprep.subr.mxu0 0.0
      %1045 = vmatpush2.xpose.msra.mxu0 0.0
      %1046 = vmatprep.subr.mxu0 0.0
      %1047 = vmatpush2.xpose.msra.mxu0 0.0
      %1048 = vmatprep.subr.mxu0 0.0
      %1049 = vmatpush2.xpose.msra.mxu0 0.0
      %1050 = vmatprep.subr.mxu0 0.0
      %1051 = vmatpush2.xpose.msra.mxu0 0.0
      %1052 = vmatprep.subr.mxu0 0.0
      %1053 = vmatpush2.xpose.msra.mxu0 0.0
      %1054 = vmatprep.subr.mxu0 0.0
      %1055 = vmatpush2.xpose.msra.mxu0 0.0
      %1056 = vmatprep.subr.mxu0 0.0
      %1057 = vmatpush2.xpose.msra.mxu0 0.0
      %1058 = vmatprep.subr.mxu0 0.0
      %1059 = vmatpush2.xpose.msra.mxu0 0.0
      %1060 = vmatprep.subr.mxu0 0.0
      %1061 = vmatpush2.xpose.msra.mxu0 0.0
      %1062 = vmatprep.mubr.f32.mxu0 0.0
      %1063 = vmatmul.mubr.f32.gmra.mxu0 %v990
      %v1064 = vpop.f32.mrf.mxu0
      %v1065 = vadd.f32 0.0, %v1064
      %v1066 = vpop.f32.mrf.mxu0
      %1067 = vmatprep.mubr.f32.mxu0 0.0
      %1068 = vmatmul.mubr.f32.gmra.mxu0 %v992
      %v1069 = vpop.f32.mrf.mxu0
      %v1070 = vadd.f32 0.0, %v1069
      %v1071 = vpop.f32.mrf.mxu0
      %1072 = vdwg.mxu0
      %1075 = vrot.lane.b32.xlu0 %v836, 96
      %v1076 = vpop.permute.xlu0 %1075
      %1077 = vrot.lane.b32.xlu0 %v841, 96
      %v1078 = vpop.permute.xlu0 %1077
      %v1079 = vsel %vm900, %v836, 0
      %v1081 = vsel %vm900, %v841, 0
      %v1083 = vsel %vm900, %v1076, 0
      %v1085 = vsel %vm900, %v1078, 0
      %1087 = vmatprep.subr.mxu0 0.0
      %1088 = vmatpush1.xpose.msra.mxu0 0.0
      %1089 = vmatprep.subr.mxu0 0.0
      %1090 = vmatpush1.xpose.msra.mxu0 0.0
      %1091 = vmatprep.subr.mxu0 0.0
      %1092 = vmatpush1.xpose.msra.mxu0 0.0
      %1093 = vmatprep.subr.mxu0 0.0
      %1094 = vmatpush1.xpose.msra.mxu0 0.0
      %1095 = vmatprep.subr.mxu0 0.0
      %1096 = vmatpush1.xpose.msra.mxu0 0.0
      %1097 = vmatprep.subr.mxu0 0.0
      %1098 = vmatpush1.xpose.msra.mxu0 0.0
      %1099 = vmatprep.subr.mxu0 0.0
      %1100 = vmatpush1.xpose.msra.mxu0 0.0
      %1101 = vmatprep.subr.mxu0 0.0
      %1102 = vmatpush1.xpose.msra.mxu0 0.0
      %1103 = vmatprep.subr.mxu0 0.0
      %1104 = vmatpush1.xpose.msra.mxu0 0.0
      %1105 = vmatprep.subr.mxu0 0.0
      %1106 = vmatpush1.xpose.msra.mxu0 0.0
      %1107 = vmatprep.subr.mxu0 0.0
      %1108 = vmatpush1.xpose.msra.mxu0 0.0
      %1109 = vmatprep.subr.mxu0 0.0
      %1110 = vmatpush1.xpose.msra.mxu0 0.0
      %1111 = vmatprep.subr.mxu0 0.0
      %1112 = vmatpush1.xpose.msra.mxu0 0.0
      %1113 = vmatprep.subr.mxu0 0.0
      %1114 = vmatpush1.xpose.msra.mxu0 0.0
      %1115 = vmatprep.subr.mxu0 0.0
      %1116 = vmatpush1.xpose.msra.mxu0 %v1085
      %1117 = vmatprep.subr.mxu0 0.0
      %1118 = vmatpush1.xpose.msra.mxu0 %v1083
      %1119 = vmatprep.subr.mxu0 0.0
      %1120 = vmatpush2.xpose.msra.mxu0 0.0
      %1121 = vmatprep.subr.mxu0 0.0
      %1122 = vmatpush2.xpose.msra.mxu0 0.0
      %1123 = vmatprep.subr.mxu0 0.0
      %1124 = vmatpush2.xpose.msra.mxu0 0.0
      %1125 = vmatprep.subr.mxu0 0.0
      %1126 = vmatpush2.xpose.msra.mxu0 0.0
      %1127 = vmatprep.subr.mxu0 0.0
      %1128 = vmatpush2.xpose.msra.mxu0 0.0
      %1129 = vmatprep.subr.mxu0 0.0
      %1130 = vmatpush2.xpose.msra.mxu0 0.0
      %1131 = vmatprep.subr.mxu0 0.0
      %1132 = vmatpush2.xpose.msra.mxu0 0.0
      %1133 = vmatprep.subr.mxu0 0.0
      %1134 = vmatpush2.xpose.msra.mxu0 0.0
      %1135 = vmatprep.subr.mxu0 0.0
      %1136 = vmatpush2.xpose.msra.mxu0 0.0
      %1137 = vmatprep.subr.mxu0 0.0
      %1138 = vmatpush2.xpose.msra.mxu0 0.0
      %1139 = vmatprep.subr.mxu0 0.0
      %1140 = vmatpush2.xpose.msra.mxu0 0.0
      %1141 = vmatprep.subr.mxu0 0.0
      %1142 = vmatpush2.xpose.msra.mxu0 0.0
      %1143 = vmatprep.subr.mxu0 0.0
      %1144 = vmatpush2.xpose.msra.mxu0 0.0
      %1145 = vmatprep.subr.mxu0 0.0
      %1146 = vmatpush2.xpose.msra.mxu0 0.0
      %1147 = vmatprep.subr.mxu0 0.0
      %1148 = vmatpush2.xpose.msra.mxu0 0.0
      %1149 = vmatprep.subr.mxu0 0.0
      %1150 = vmatpush2.xpose.msra.mxu0 0.0
      %1151 = vmatprep.mubr.f32.mxu0 0.0
      %1152 = vmatmul.mubr.f32.gmra.mxu0 %v1079
      %v1153 = vpop.f32.mrf.mxu0
      %v1154 = vadd.f32 0.0, %v1153
      %v1155 = vpop.f32.mrf.mxu0
      %1156 = vmatprep.mubr.f32.mxu0 0.0
      %1157 = vmatmul.mubr.f32.gmra.mxu0 %v1081
      %v1158 = vpop.f32.mrf.mxu0
      %v1159 = vadd.f32 0.0, %v1158
      %v1160 = vpop.f32.mrf.mxu0
      %1161 = vdwg.mxu0
      %1164 = vrot.lane.b32.xlu0 %v846, 96
      %v1165 = vpop.permute.xlu0 %1164
      %1166 = vrot.lane.b32.xlu0 %v851, 96
      %v1167 = vpop.permute.xlu0 %1166
      %v1168 = vsel %vm900, %v846, 0
      %v1170 = vsel %vm900, %v851, 0
      %v1172 = vsel %vm900, %v1165, 0
      %v1174 = vsel %vm900, %v1167, 0
      %1176 = vmatprep.subr.mxu0 0.0
      %1177 = vmatpush1.xpose.msra.mxu0 0.0
      %1178 = vmatprep.subr.mxu0 0.0
      %1179 = vmatpush1.xpose.msra.mxu0 0.0
      %1180 = vmatprep.subr.mxu0 0.0
      %1181 = vmatpush1.xpose.msra.mxu0 0.0
      %1182 = vmatprep.subr.mxu0 0.0
      %1183 = vmatpush1.xpose.msra.mxu0 0.0
      %1184 = vmatprep.subr.mxu0 0.0
      %1185 = vmatpush1.xpose.msra.mxu0 0.0
      %1186 = vmatprep.subr.mxu0 0.0
      %1187 = vmatpush1.xpose.msra.mxu0 0.0
      %1188 = vmatprep.subr.mxu0 0.0
      %1189 = vmatpush1.xpose.msra.mxu0 0.0
      %1190 = vmatprep.subr.mxu0 0.0
      %1191 = vmatpush1.xpose.msra.mxu0 0.0
      %1192 = vmatprep.subr.mxu0 0.0
      %1193 = vmatpush1.xpose.msra.mxu0 0.0
      %1194 = vmatprep.subr.mxu0 0.0
      %1195 = vmatpush1.xpose.msra.mxu0 0.0
      %1196 = vmatprep.subr.mxu0 0.0
      %1197 = vmatpush1.xpose.msra.mxu0 0.0
      %1198 = vmatprep.subr.mxu0 0.0
      %1199 = vmatpush1.xpose.msra.mxu0 0.0
      %1200 = vmatprep.subr.mxu0 0.0
      %1201 = vmatpush1.xpose.msra.mxu0 0.0
      %1202 = vmatprep.subr.mxu0 0.0
      %1203 = vmatpush1.xpose.msra.mxu0 0.0
      %1204 = vmatprep.subr.mxu0 0.0
      %1205 = vmatpush1.xpose.msra.mxu0 %v1174
      %1206 = vmatprep.subr.mxu0 0.0
      %1207 = vmatpush1.xpose.msra.mxu0 %v1172
      %1208 = vmatprep.subr.mxu0 0.0
      %1209 = vmatpush2.xpose.msra.mxu0 0.0
      %1210 = vmatprep.subr.mxu0 0.0
      %1211 = vmatpush2.xpose.msra.mxu0 0.0
      %1212 = vmatprep.subr.mxu0 0.0
      %1213 = vmatpush2.xpose.msra.mxu0 0.0
      %1214 = vmatprep.subr.mxu0 0.0
      %1215 = vmatpush2.xpose.msra.mxu0 0.0
      %1216 = vmatprep.subr.mxu0 0.0
      %1217 = vmatpush2.xpose.msra.mxu0 0.0
      %1218 = vmatprep.subr.mxu0 0.0
      %1219 = vmatpush2.xpose.msra.mxu0 0.0
      %1220 = vmatprep.subr.mxu0 0.0
      %1221 = vmatpush2.xpose.msra.mxu0 0.0
      %1222 = vmatprep.subr.mxu0 0.0
      %1223 = vmatpush2.xpose.msra.mxu0 0.0
      %1224 = vmatprep.subr.mxu0 0.0
      %1225 = vmatpush2.xpose.msra.mxu0 0.0
      %1226 = vmatprep.subr.mxu0 0.0
      %1227 = vmatpush2.xpose.msra.mxu0 0.0
      %1228 = vmatprep.subr.mxu0 0.0
      %1229 = vmatpush2.xpose.msra.mxu0 0.0
      %1230 = vmatprep.subr.mxu0 0.0
      %1231 = vmatpush2.xpose.msra.mxu0 0.0
      %1232 = vmatprep.subr.mxu0 0.0
      %1233 = vmatpush2.xpose.msra.mxu0 0.0
      %1234 = vmatprep.subr.mxu0 0.0
      %1235 = vmatpush2.xpose.msra.mxu0 0.0
      %1236 = vmatprep.subr.mxu0 0.0
      %1237 = vmatpush2.xpose.msra.mxu0 0.0
      %1238 = vmatprep.subr.mxu0 0.0
      %1239 = vmatpush2.xpose.msra.mxu0 0.0
      %1240 = vmatprep.mubr.f32.mxu0 0.0
      %1241 = vmatmul.mubr.f32.gmra.mxu0 %v1168
      %v1242 = vpop.f32.mrf.mxu0
      %v1243 = vadd.f32 0.0, %v1242
      %v1244 = vpop.f32.mrf.mxu0
      %1245 = vmatprep.mubr.f32.mxu0 0.0
      %1246 = vmatmul.mubr.f32.gmra.mxu0 %v1170
      %v1247 = vpop.f32.mrf.mxu0
      %v1248 = vadd.f32 0.0, %v1247
      %v1249 = vpop.f32.mrf.mxu0
      %1250 = vdwg.mxu0
      %1253 = vrot.lane.b32.xlu0 %v856, 96
      %v1254 = vpop.permute.xlu0 %1253
      %1255 = vrot.lane.b32.xlu0 %v861, 96
      %v1256 = vpop.permute.xlu0 %1255
      %v1257 = vsel %vm900, %v856, 0
      %v1259 = vsel %vm900, %v861, 0
      %v1261 = vsel %vm900, %v1254, 0
      %v1263 = vsel %vm900, %v1256, 0
      %1265 = vmatprep.subr.mxu0 0.0
      %1266 = vmatpush1.xpose.msra.mxu0 0.0
      %1267 = vmatprep.subr.mxu0 0.0
      %1268 = vmatpush1.xpose.msra.mxu0 0.0
      %1269 = vmatprep.subr.mxu0 0.0
      %1270 = vmatpush1.xpose.msra.mxu0 0.0
      %1271 = vmatprep.subr.mxu0 0.0
      %1272 = vmatpush1.xpose.msra.mxu0 0.0
      %1273 = vmatprep.subr.mxu0 0.0
      %1274 = vmatpush1.xpose.msra.mxu0 0.0
      %1275 = vmatprep.subr.mxu0 0.0
      %1276 = vmatpush1.xpose.msra.mxu0 0.0
      %1277 = vmatprep.subr.mxu0 0.0
      %1278 = vmatpush1.xpose.msra.mxu0 0.0
      %1279 = vmatprep.subr.mxu0 0.0
      %1280 = vmatpush1.xpose.msra.mxu0 0.0
      %1281 = vmatprep.subr.mxu0 0.0
      %1282 = vmatpush1.xpose.msra.mxu0 0.0
      %1283 = vmatprep.subr.mxu0 0.0
      %1284 = vmatpush1.xpose.msra.mxu0 0.0
      %1285 = vmatprep.subr.mxu0 0.0
      %1286 = vmatpush1.xpose.msra.mxu0 0.0
      %1287 = vmatprep.subr.mxu0 0.0
      %1288 = vmatpush1.xpose.msra.mxu0 0.0
      %1289 = vmatprep.subr.mxu0 0.0
      %1290 = vmatpush1.xpose.msra.mxu0 0.0
      %1291 = vmatprep.subr.mxu0 0.0
      %1292 = vmatpush1.xpose.msra.mxu0 0.0
      %1293 = vmatprep.subr.mxu0 0.0
      %1294 = vmatpush1.xpose.msra.mxu0 %v1263
      %1295 = vmatprep.subr.mxu0 0.0
      %1296 = vmatpush1.xpose.msra.mxu0 %v1261
      %1297 = vmatprep.subr.mxu0 0.0
      %1298 = vmatpush2.xpose.msra.mxu0 0.0
      %1299 = vmatprep.subr.mxu0 0.0
      %1300 = vmatpush2.xpose.msra.mxu0 0.0
      %1301 = vmatprep.subr.mxu0 0.0
      %1302 = vmatpush2.xpose.msra.mxu0 0.0
      %1303 = vmatprep.subr.mxu0 0.0
      %1304 = vmatpush2.xpose.msra.mxu0 0.0
      %1305 = vmatprep.subr.mxu0 0.0
      %1306 = vmatpush2.xpose.msra.mxu0 0.0
      %1307 = vmatprep.subr.mxu0 0.0
      %1308 = vmatpush2.xpose.msra.mxu0 0.0
      %1309 = vmatprep.subr.mxu0 0.0
      %1310 = vmatpush2.xpose.msra.mxu0 0.0
      %1311 = vmatprep.subr.mxu0 0.0
      %1312 = vmatpush2.xpose.msra.mxu0 0.0
      %1313 = vmatprep.subr.mxu0 0.0
      %1314 = vmatpush2.xpose.msra.mxu0 0.0
      %1315 = vmatprep.subr.mxu0 0.0
      %1316 = vmatpush2.xpose.msra.mxu0 0.0
      %1317 = vmatprep.subr.mxu0 0.0
      %1318 = vmatpush2.xpose.msra.mxu0 0.0
      %1319 = vmatprep.subr.mxu0 0.0
      %1320 = vmatpush2.xpose.msra.mxu0 0.0
      %1321 = vmatprep.subr.mxu0 0.0
      %1322 = vmatpush2.xpose.msra.mxu0 0.0
      %1323 = vmatprep.subr.mxu0 0.0
      %1324 = vmatpush2.xpose.msra.mxu0 0.0
      %1325 = vmatprep.subr.mxu0 0.0
      %1326 = vmatpush2.xpose.msra.mxu0 0.0
      %1327 = vmatprep.subr.mxu0 0.0
      %1328 = vmatpush2.xpose.msra.mxu0 0.0
      %1329 = vmatprep.mubr.f32.mxu0 0.0
      %1330 = vmatmul.mubr.f32.gmra.mxu0 %v1257
      %v1331 = vpop.f32.mrf.mxu0
      %v1332 = vadd.f32 0.0, %v1331
      %v1333 = vpop.f32.mrf.mxu0
      %1334 = vmatprep.mubr.f32.mxu0 0.0
      %1335 = vmatmul.mubr.f32.gmra.mxu0 %v1259
      %v1336 = vpop.f32.mrf.mxu0
      %v1337 = vadd.f32 0.0, %v1336
      %v1338 = vpop.f32.mrf.mxu0
      %1339 = vdwg.mxu0
      %1342 = vrot.lane.b32.xlu0 %v866, 96
      %v1343 = vpop.permute.xlu0 %1342
      %1344 = vrot.lane.b32.xlu0 %v871, 96
      %v1345 = vpop.permute.xlu0 %1344
      %v1346 = vsel %vm900, %v866, 0
      %v1348 = vsel %vm900, %v871, 0
      %v1350 = vsel %vm900, %v1343, 0
      %v1352 = vsel %vm900, %v1345, 0
      %1354 = vmatprep.subr.mxu0 0.0
      %1355 = vmatpush1.xpose.msra.mxu0 0.0
      %1356 = vmatprep.subr.mxu0 0.0
      %1357 = vmatpush1.xpose.msra.mxu0 0.0
      %1358 = vmatprep.subr.mxu0 0.0
      %1359 = vmatpush1.xpose.msra.mxu0 0.0
      %1360 = vmatprep.subr.mxu0 0.0
      %1361 = vmatpush1.xpose.msra.mxu0 0.0
      %1362 = vmatprep.subr.mxu0 0.0
      %1363 = vmatpush1.xpose.msra.mxu0 0.0
      %1364 = vmatprep.subr.mxu0 0.0
      %1365 = vmatpush1.xpose.msra.mxu0 0.0
      %1366 = vmatprep.subr.mxu0 0.0
      %1367 = vmatpush1.xpose.msra.mxu0 0.0
      %1368 = vmatprep.subr.mxu0 0.0
      %1369 = vmatpush1.xpose.msra.mxu0 0.0
      %1370 = vmatprep.subr.mxu0 0.0
      %1371 = vmatpush1.xpose.msra.mxu0 0.0
      %1372 = vmatprep.subr.mxu0 0.0
      %1373 = vmatpush1.xpose.msra.mxu0 0.0
      %1374 = vmatprep.subr.mxu0 0.0
      %1375 = vmatpush1.xpose.msra.mxu0 0.0
      %1376 = vmatprep.subr.mxu0 0.0
      %1377 = vmatpush1.xpose.msra.mxu0 0.0
      %1378 = vmatprep.subr.mxu0 0.0
      %1379 = vmatpush1.xpose.msra.mxu0 0.0
      %1380 = vmatprep.subr.mxu0 0.0
      %1381 = vmatpush1.xpose.msra.mxu0 0.0
      %1382 = vmatprep.subr.mxu0 0.0
      %1383 = vmatpush1.xpose.msra.mxu0 %v1352
      %1384 = vmatprep.subr.mxu0 0.0
      %1385 = vmatpush1.xpose.msra.mxu0 %v1350
      %1386 = vmatprep.subr.mxu0 0.0
      %1387 = vmatpush2.xpose.msra.mxu0 0.0
      %1388 = vmatprep.subr.mxu0 0.0
      %1389 = vmatpush2.xpose.msra.mxu0 0.0
      %1390 = vmatprep.subr.mxu0 0.0
      %1391 = vmatpush2.xpose.msra.mxu0 0.0
      %1392 = vmatprep.subr.mxu0 0.0
      %1393 = vmatpush2.xpose.msra.mxu0 0.0
      %1394 = vmatprep.subr.mxu0 0.0
      %1395 = vmatpush2.xpose.msra.mxu0 0.0
      %1396 = vmatprep.subr.mxu0 0.0
      %1397 = vmatpush2.xpose.msra.mxu0 0.0
      %1398 = vmatprep.subr.mxu0 0.0
      %1399 = vmatpush2.xpose.msra.mxu0 0.0
      %1400 = vmatprep.subr.mxu0 0.0
      %1401 = vmatpush2.xpose.msra.mxu0 0.0
      %1402 = vmatprep.subr.mxu0 0.0
      %1403 = vmatpush2.xpose.msra.mxu0 0.0
      %1404 = vmatprep.subr.mxu0 0.0
      %1405 = vmatpush2.xpose.msra.mxu0 0.0
      %1406 = vmatprep.subr.mxu0 0.0
      %1407 = vmatpush2.xpose.msra.mxu0 0.0
      %1408 = vmatprep.subr.mxu0 0.0
      %1409 = vmatpush2.xpose.msra.mxu0 0.0
      %1410 = vmatprep.subr.mxu0 0.0
      %1411 = vmatpush2.xpose.msra.mxu0 0.0
      %1412 = vmatprep.subr.mxu0 0.0
      %1413 = vmatpush2.xpose.msra.mxu0 0.0
      %1414 = vmatprep.subr.mxu0 0.0
      %1415 = vmatpush2.xpose.msra.mxu0 0.0
      %1416 = vmatprep.subr.mxu0 0.0
      %1417 = vmatpush2.xpose.msra.mxu0 0.0
      %1418 = vmatprep.mubr.f32.mxu0 0.0
      %1419 = vmatmul.mubr.f32.gmra.mxu0 %v1346
      %v1420 = vpop.f32.mrf.mxu0
      %v1421 = vadd.f32 0.0, %v1420
      %v1422 = vpop.f32.mrf.mxu0
      %1423 = vmatprep.mubr.f32.mxu0 0.0
      %1424 = vmatmul.mubr.f32.gmra.mxu0 %v1348
      %v1425 = vpop.f32.mrf.mxu0
      %v1426 = vadd.f32 0.0, %v1425
      %v1427 = vpop.f32.mrf.mxu0
      %1428 = vdwg.mxu0
      %1431 = vrot.lane.b32.xlu0 %v876, 96
      %v1432 = vpop.permute.xlu0 %1431
      %1433 = vrot.lane.b32.xlu0 %v881, 96
      %v1434 = vpop.permute.xlu0 %1433
      %v1435 = vsel %vm900, %v876, 0
      %v1437 = vsel %vm900, %v881, 0
      %v1439 = vsel %vm900, %v1432, 0
      %v1441 = vsel %vm900, %v1434, 0
      %1443 = vmatprep.subr.mxu0 0.0
      %1444 = vmatpush1.xpose.msra.mxu0 0.0
      %1445 = vmatprep.subr.mxu0 0.0
      %1446 = vmatpush1.xpose.msra.mxu0 0.0
      %1447 = vmatprep.subr.mxu0 0.0
      %1448 = vmatpush1.xpose.msra.mxu0 0.0
      %1449 = vmatprep.subr.mxu0 0.0
      %1450 = vmatpush1.xpose.msra.mxu0 0.0
      %1451 = vmatprep.subr.mxu0 0.0
      %1452 = vmatpush1.xpose.msra.mxu0 0.0
      %1453 = vmatprep.subr.mxu0 0.0
      %1454 = vmatpush1.xpose.msra.mxu0 0.0
      %1455 = vmatprep.subr.mxu0 0.0
      %1456 = vmatpush1.xpose.msra.mxu0 0.0
      %1457 = vmatprep.subr.mxu0 0.0
      %1458 = vmatpush1.xpose.msra.mxu0 0.0
      %1459 = vmatprep.subr.mxu0 0.0
      %1460 = vmatpush1.xpose.msra.mxu0 0.0
      %1461 = vmatprep.subr.mxu0 0.0
      %1462 = vmatpush1.xpose.msra.mxu0 0.0
      %1463 = vmatprep.subr.mxu0 0.0
      %1464 = vmatpush1.xpose.msra.mxu0 0.0
      %1465 = vmatprep.subr.mxu0 0.0
      %1466 = vmatpush1.xpose.msra.mxu0 0.0
      %1467 = vmatprep.subr.mxu0 0.0
      %1468 = vmatpush1.xpose.msra.mxu0 0.0
      %1469 = vmatprep.subr.mxu0 0.0
      %1470 = vmatpush1.xpose.msra.mxu0 0.0
      %1471 = vmatprep.subr.mxu0 0.0
      %1472 = vmatpush1.xpose.msra.mxu0 %v1441
      %1473 = vmatprep.subr.mxu0 0.0
      %1474 = vmatpush1.xpose.msra.mxu0 %v1439
      %1475 = vmatprep.subr.mxu0 0.0
      %1476 = vmatpush2.xpose.msra.mxu0 0.0
      %1477 = vmatprep.subr.mxu0 0.0
      %1478 = vmatpush2.xpose.msra.mxu0 0.0
      %1479 = vmatprep.subr.mxu0 0.0
      %1480 = vmatpush2.xpose.msra.mxu0 0.0
      %1481 = vmatprep.subr.mxu0 0.0
      %1482 = vmatpush2.xpose.msra.mxu0 0.0
      %1483 = vmatprep.subr.mxu0 0.0
      %1484 = vmatpush2.xpose.msra.mxu0 0.0
      %1485 = vmatprep.subr.mxu0 0.0
      %1486 = vmatpush2.xpose.msra.mxu0 0.0
      %1487 = vmatprep.subr.mxu0 0.0
      %1488 = vmatpush2.xpose.msra.mxu0 0.0
      %1489 = vmatprep.subr.mxu0 0.0
      %1490 = vmatpush2.xpose.msra.mxu0 0.0
      %1491 = vmatprep.subr.mxu0 0.0
      %1492 = vmatpush2.xpose.msra.mxu0 0.0
      %1493 = vmatprep.subr.mxu0 0.0
      %1494 = vmatpush2.xpose.msra.mxu0 0.0
      %1495 = vmatprep.subr.mxu0 0.0
      %1496 = vmatpush2.xpose.msra.mxu0 0.0
      %1497 = vmatprep.subr.mxu0 0.0
      %1498 = vmatpush2.xpose.msra.mxu0 0.0
      %1499 = vmatprep.subr.mxu0 0.0
      %1500 = vmatpush2.xpose.msra.mxu0 0.0
      %1501 = vmatprep.subr.mxu0 0.0
      %1502 = vmatpush2.xpose.msra.mxu0 0.0
      %1503 = vmatprep.subr.mxu0 0.0
      %1504 = vmatpush2.xpose.msra.mxu0 0.0
      %1505 = vmatprep.subr.mxu0 0.0
      %1506 = vmatpush2.xpose.msra.mxu0 0.0
      %1507 = vmatprep.mubr.f32.mxu0 0.0
      %1508 = vmatmul.mubr.f32.gmra.mxu0 %v1435
      %v1509 = vpop.f32.mrf.mxu0
      %v1510 = vadd.f32 0.0, %v1509
      %v1511 = vpop.f32.mrf.mxu0
      %1512 = vmatprep.mubr.f32.mxu0 0.0
      %1513 = vmatmul.mubr.f32.gmra.mxu0 %v1437
      %v1514 = vpop.f32.mrf.mxu0
      %v1515 = vadd.f32 0.0, %v1514
      %v1516 = vpop.f32.mrf.mxu0
      %1517 = vdwg.mxu0
      %1520 = vrot.lane.b32.xlu0 %v886, 96
      %v1521 = vpop.permute.xlu0 %1520
      %1522 = vrot.lane.b32.xlu0 %v891, 96
      %v1523 = vpop.permute.xlu0 %1522
      %v1524 = vsel %vm900, %v886, 0
      %v1526 = vsel %vm900, %v891, 0
      %v1528 = vsel %vm900, %v1521, 0
      %v1530 = vsel %vm900, %v1523, 0
      %1532 = vmatprep.subr.mxu0 0.0
      %1533 = vmatpush1.xpose.msra.mxu0 0.0
      %1534 = vmatprep.subr.mxu0 0.0
      %1535 = vmatpush1.xpose.msra.mxu0 0.0
      %1536 = vmatprep.subr.mxu0 0.0
      %1537 = vmatpush1.xpose.msra.mxu0 0.0
      %1538 = vmatprep.subr.mxu0 0.0
      %1539 = vmatpush1.xpose.msra.mxu0 0.0
      %1540 = vmatprep.subr.mxu0 0.0
      %1541 = vmatpush1.xpose.msra.mxu0 0.0
      %1542 = vmatprep.subr.mxu0 0.0
      %1543 = vmatpush1.xpose.msra.mxu0 0.0
      %1544 = vmatprep.subr.mxu0 0.0
      %1545 = vmatpush1.xpose.msra.mxu0 0.0
      %1546 = vmatprep.subr.mxu0 0.0
      %1547 = vmatpush1.xpose.msra.mxu0 0.0
      %1548 = vmatprep.subr.mxu0 0.0
      %1549 = vmatpush1.xpose.msra.mxu0 0.0
      %1550 = vmatprep.subr.mxu0 0.0
      %1551 = vmatpush1.xpose.msra.mxu0 0.0
      %1552 = vmatprep.subr.mxu0 0.0
      %1553 = vmatpush1.xpose.msra.mxu0 0.0
      %1554 = vmatprep.subr.mxu0 0.0
      %1555 = vmatpush1.xpose.msra.mxu0 0.0
      %1556 = vmatprep.subr.mxu0 0.0
      %1557 = vmatpush1.xpose.msra.mxu0 0.0
      %1558 = vmatprep.subr.mxu0 0.0
      %1559 = vmatpush1.xpose.msra.mxu0 0.0
      %1560 = vmatprep.subr.mxu0 0.0
      %1561 = vmatpush1.xpose.msra.mxu0 %v1530
      %1562 = vmatprep.subr.mxu0 0.0
      %1563 = vmatpush1.xpose.msra.mxu0 %v1528
      %1564 = vmatprep.subr.mxu0 0.0
      %1565 = vmatpush2.xpose.msra.mxu0 0.0
      %1566 = vmatprep.subr.mxu0 0.0
      %1567 = vmatpush2.xpose.msra.mxu0 0.0
      %1568 = vmatprep.subr.mxu0 0.0
      %1569 = vmatpush2.xpose.msra.mxu0 0.0
      %1570 = vmatprep.subr.mxu0 0.0
      %1571 = vmatpush2.xpose.msra.mxu0 0.0
      %1572 = vmatprep.subr.mxu0 0.0
      %1573 = vmatpush2.xpose.msra.mxu0 0.0
      %1574 = vmatprep.subr.mxu0 0.0
      %1575 = vmatpush2.xpose.msra.mxu0 0.0
      %1576 = vmatprep.subr.mxu0 0.0
      %1577 = vmatpush2.xpose.msra.mxu0 0.0
      %1578 = vmatprep.subr.mxu0 0.0
      %1579 = vmatpush2.xpose.msra.mxu0 0.0
      %1580 = vmatprep.subr.mxu0 0.0
      %1581 = vmatpush2.xpose.msra.mxu0 0.0
      %1582 = vmatprep.subr.mxu0 0.0
      %1583 = vmatpush2.xpose.msra.mxu0 0.0
      %1584 = vmatprep.subr.mxu0 0.0
      %1585 = vmatpush2.xpose.msra.mxu0 0.0
      %1586 = vmatprep.subr.mxu0 0.0
      %1587 = vmatpush2.xpose.msra.mxu0 0.0
      %1588 = vmatprep.subr.mxu0 0.0
      %1589 = vmatpush2.xpose.msra.mxu0 0.0
      %1590 = vmatprep.subr.mxu0 0.0
      %1591 = vmatpush2.xpose.msra.mxu0 0.0
      %1592 = vmatprep.subr.mxu0 0.0
      %1593 = vmatpush2.xpose.msra.mxu0 0.0
      %1594 = vmatprep.subr.mxu0 0.0
      %1595 = vmatpush2.xpose.msra.mxu0 0.0
      %1596 = vmatprep.mubr.f32.mxu0 0.0
      %1597 = vmatmul.mubr.f32.gmra.mxu0 %v1524
      %v1598 = vpop.f32.mrf.mxu0
      %v1599 = vadd.f32 0.0, %v1598
      %v1600 = vpop.f32.mrf.mxu0
      %1601 = vmatprep.mubr.f32.mxu0 0.0
      %1602 = vmatmul.mubr.f32.gmra.mxu0 %v1526
      %v1603 = vpop.f32.mrf.mxu0
      %v1604 = vadd.f32 0.0, %v1603
      %v1605 = vpop.f32.mrf.mxu0
      %1606 = vdwg.mxu0
      %v1607 = vmul.f32 %v976, 0.35355338
      %v1608 = vmul.f32 %v981, 0.35355338
      %v1609 = vmul.f32 %v1065, 0.35355338
      %v1610 = vmul.f32 %v1070, 0.35355338
      %v1611 = vmul.f32 %v1154, 0.35355338
      %v1612 = vmul.f32 %v1159, 0.35355338
      %v1613 = vmul.f32 %v1243, 0.35355338
      %v1614 = vmul.f32 %v1248, 0.35355338
      %v1615 = vmul.f32 %v1332, 0.35355338
      %v1616 = vmul.f32 %v1337, 0.35355338
      %v1617 = vmul.f32 %v1421, 0.35355338
      %v1618 = vmul.f32 %v1426, 0.35355338
      %v1619 = vmul.f32 %v1510, 0.35355338
      %v1620 = vmul.f32 %v1515, 0.35355338
      %v1621 = vmul.f32 %v1599, 0.35355338
      %v1622 = vmul.f32 %v1604, 0.35355338
      %vm1623 = vcmask 130048
      %v1624 = vsel %vm1623, %v1607, -inf
      %1625 = vmax.xlane.f32.xlu0 %v1624
      %v1626 = vpop.xlane.xlu0 %1625
      %v1627 = vsel %vm1623, %v1608, -inf
      %1628 = vmax.xlane.f32.xlu0 %v1627
      %v1629 = vpop.xlane.xlu0 %1628
      %v1630 = vsel %vm1623, %v1609, -inf
      %1631 = vmax.xlane.f32.xlu0 %v1630
      %v1632 = vpop.xlane.xlu0 %1631
      %v1633 = vsel %vm1623, %v1610, -inf
      %1634 = vmax.xlane.f32.xlu0 %v1633
      %v1635 = vpop.xlane.xlu0 %1634
      %v1636 = vsel %vm1623, %v1611, -inf
      %1637 = vmax.xlane.f32.xlu0 %v1636
      %v1638 = vpop.xlane.xlu0 %1637
      %v1639 = vsel %vm1623, %v1612, -inf
      %1640 = vmax.xlane.f32.xlu0 %v1639
      %v1641 = vpop.xlane.xlu0 %1640
      %v1642 = vsel %vm1623, %v1613, -inf
      %1643 = vmax.xlane.f32.xlu0 %v1642
      %v1644 = vpop.xlane.xlu0 %1643
      %v1645 = vsel %vm1623, %v1614, -inf
      %1646 = vmax.xlane.f32.xlu0 %v1645
      %v1647 = vpop.xlane.xlu0 %1646
      %v1648 = vsel %vm1623, %v1615, -inf
      %1649 = vmax.xlane.f32.xlu0 %v1648
      %v1650 = vpop.xlane.xlu0 %1649
      %v1651 = vsel %vm1623, %v1616, -inf
      %1652 = vmax.xlane.f32.xlu0 %v1651
      %v1653 = vpop.xlane.xlu0 %1652
      %v1654 = vsel %vm1623, %v1617, -inf
      %1655 = vmax.xlane.f32.xlu0 %v1654
      %v1656 = vpop.xlane.xlu0 %1655
      %v1657 = vsel %vm1623, %v1618, -inf
      %1658 = vmax.xlane.f32.xlu0 %v1657
      %v1659 = vpop.xlane.xlu0 %1658
      %v1660 = vsel %vm1623, %v1619, -inf
      %1661 = vmax.xlane.f32.xlu0 %v1660
      %v1662 = vpop.xlane.xlu0 %1661
      %v1663 = vsel %vm1623, %v1620, -inf
      %1664 = vmax.xlane.f32.xlu0 %v1663
      %v1665 = vpop.xlane.xlu0 %1664
      %v1666 = vsel %vm1623, %v1621, -inf
      %1667 = vmax.xlane.f32.xlu0 %v1666
      %v1668 = vpop.xlane.xlu0 %1667
      %v1669 = vsel %vm1623, %v1622, -inf
      %1670 = vmax.xlane.f32.xlu0 %v1669
      %v1671 = vpop.xlane.xlu0 %1670
      %v1672 = vsub.f32 %v1607, %v1626
      %v1673 = vsub.f32 %v1608, %v1629
      %v1674 = vsub.f32 %v1609, %v1632
      %v1675 = vsub.f32 %v1610, %v1635
      %v1676 = vsub.f32 %v1611, %v1638
      %v1677 = vsub.f32 %v1612, %v1641
      %v1678 = vsub.f32 %v1613, %v1644
      %v1679 = vsub.f32 %v1614, %v1647
      %v1680 = vsub.f32 %v1615, %v1650
      %v1681 = vsub.f32 %v1616, %v1653
      %v1682 = vsub.f32 %v1617, %v1656
      %v1683 = vsub.f32 %v1618, %v1659
      %v1684 = vsub.f32 %v1619, %v1662
      %v1685 = vsub.f32 %v1620, %v1665
      %v1686 = vsub.f32 %v1621, %v1668
      %v1687 = vsub.f32 %v1622, %v1671
      %v1688 = vmul.f32 %v1672, 1.442695
      %v1689 = vpow.pop %v1688
      %v1690 = vmul.f32 %v1673, 1.442695
      %v1691 = vpow.pop %v1690
      %v1692 = vmul.f32 %v1674, 1.442695
      %v1693 = vpow.pop %v1692
      %v1694 = vmul.f32 %v1675, 1.442695
      %v1695 = vpow.pop %v1694
      %v1696 = vmul.f32 %v1676, 1.442695
      %v1697 = vpow.pop %v1696
      %v1698 = vmul.f32 %v1677, 1.442695
      %v1699 = vpow.pop %v1698
      %v1700 = vmul.f32 %v1678, 1.442695
      %v1701 = vpow.pop %v1700
      %v1702 = vmul.f32 %v1679, 1.442695
      %v1703 = vpow.pop %v1702
      %v1704 = vmul.f32 %v1680, 1.442695
      %v1705 = vpow.pop %v1704
      %v1706 = vmul.f32 %v1681, 1.442695
      %v1707 = vpow.pop %v1706
      %v1708 = vmul.f32 %v1682, 1.442695
      %v1709 = vpow.pop %v1708
      %v1710 = vmul.f32 %v1683, 1.442695
      %v1711 = vpow.pop %v1710
      %v1712 = vmul.f32 %v1684, 1.442695
      %v1713 = vpow.pop %v1712
      %v1714 = vmul.f32 %v1685, 1.442695
      %v1715 = vpow.pop %v1714
      %v1716 = vmul.f32 %v1686, 1.442695
      %v1717 = vpow.pop %v1716
      %v1718 = vmul.f32 %v1687, 1.442695
      %v1719 = vpow.pop %v1718
      %v1720 = vsel %vm1623, %v1689, 0.0
      %1721 = vadd.xlane.f32.xlu0 %v1720
      %v1722 = vpop.xlane.xlu0 %1721
      %v1723 = vsel %vm1623, %v1691, 0.0
      %1724 = vadd.xlane.f32.xlu0 %v1723
      %v1725 = vpop.xlane.xlu0 %1724
      %v1726 = vsel %vm1623, %v1693, 0.0
      %1727 = vadd.xlane.f32.xlu0 %v1726
      %v1728 = vpop.xlane.xlu0 %1727
      %v1729 = vsel %vm1623, %v1695, 0.0
      %1730 = vadd.xlane.f32.xlu0 %v1729
      %v1731 = vpop.xlane.xlu0 %1730
      %v1732 = vsel %vm1623, %v1697, 0.0
      %1733 = vadd.xlane.f32.xlu0 %v1732
      %v1734 = vpop.xlane.xlu0 %1733
      %v1735 = vsel %vm1623, %v1699, 0.0
      %1736 = vadd.xlane.f32.xlu0 %v1735
      %v1737 = vpop.xlane.xlu0 %1736
      %v1738 = vsel %vm1623, %v1701, 0.0
      %1739 = vadd.xlane.f32.xlu0 %v1738
      %v1740 = vpop.xlane.xlu0 %1739
      %v1741 = vsel %vm1623, %v1703, 0.0
      %1742 = vadd.xlane.f32.xlu0 %v1741
      %v1743 = vpop.xlane.xlu0 %1742
      %v1744 = vsel %vm1623, %v1705, 0.0
      %1745 = vadd.xlane.f32.xlu0 %v1744
      %v1746 = vpop.xlane.xlu0 %1745
      %v1747 = vsel %vm1623, %v1707, 0.0
      %1748 = vadd.xlane.f32.xlu0 %v1747
      %v1749 = vpop.xlane.xlu0 %1748
      %v1750 = vsel %vm1623, %v1709, 0.0
      %1751 = vadd.xlane.f32.xlu0 %v1750
      %v1752 = vpop.xlane.xlu0 %1751
      %v1753 = vsel %vm1623, %v1711, 0.0
      %1754 = vadd.xlane.f32.xlu0 %v1753
      %v1755 = vpop.xlane.xlu0 %1754
      %v1756 = vsel %vm1623, %v1713, 0.0
      %1757 = vadd.xlane.f32.xlu0 %v1756
      %v1758 = vpop.xlane.xlu0 %1757
      %v1759 = vsel %vm1623, %v1715, 0.0
      %1760 = vadd.xlane.f32.xlu0 %v1759
      %v1761 = vpop.xlane.xlu0 %1760
      %v1762 = vsel %vm1623, %v1717, 0.0
      %1763 = vadd.xlane.f32.xlu0 %v1762
      %v1764 = vpop.xlane.xlu0 %1763
      %v1765 = vsel %vm1623, %v1719, 0.0
      %1766 = vadd.xlane.f32.xlu0 %v1765
      %v1767 = vpop.xlane.xlu0 %1766
      %v1768 = vrcp.pop %v1722
      %v1769 = vmul.f32 %v1689, %v1768
      %v1770 = vrcp.pop %v1725
      %v1771 = vmul.f32 %v1691, %v1770
      %v1772 = vrcp.pop %v1728
      %v1773 = vmul.f32 %v1693, %v1772
      %v1774 = vrcp.pop %v1731
      %v1775 = vmul.f32 %v1695, %v1774
      %v1776 = vrcp.pop %v1734
      %v1777 = vmul.f32 %v1697, %v1776
      %v1778 = vrcp.pop %v1737
      %v1779 = vmul.f32 %v1699, %v1778
      %v1780 = vrcp.pop %v1740
      %v1781 = vmul.f32 %v1701, %v1780
      %v1782 = vrcp.pop %v1743
      %v1783 = vmul.f32 %v1703, %v1782
      %v1784 = vrcp.pop %v1746
      %v1785 = vmul.f32 %v1705, %v1784
      %v1786 = vrcp.pop %v1749
      %v1787 = vmul.f32 %v1707, %v1786
      %v1788 = vrcp.pop %v1752
      %v1789 = vmul.f32 %v1709, %v1788
      %v1790 = vrcp.pop %v1755
      %v1791 = vmul.f32 %v1711, %v1790
      %v1792 = vrcp.pop %v1758
      %v1793 = vmul.f32 %v1713, %v1792
      %v1794 = vrcp.pop %v1761
      %v1795 = vmul.f32 %v1715, %v1794
      %v1796 = vrcp.pop %v1764
      %v1797 = vmul.f32 %v1717, %v1796
      %v1798 = vrcp.pop %v1767
      %v1799 = vmul.f32 %v1719, %v1798
      %1800 = vrot.lane.b32.xlu0 %v816, 64
      %v1801 = vpop.permute.xlu0 %1800
      %1802 = vrot.lane.b32.xlu0 %v821, 64
      %v1803 = vpop.permute.xlu0 %1802
      %v1807 = vsel %vm1623, %v1769, 0
      %v1810 = vsel %vm1623, %v1771, 0
      %1812 = vmatprep.subr.mxu0 0.0
      %1813 = vmatpush1.msra.mxu0 0.0
      %1814 = vmatprep.subr.mxu0 0.0
      %1815 = vmatpush1.msra.mxu0 0.0
      %1816 = vmatprep.subr.mxu0 0.0
      %1817 = vmatpush1.msra.mxu0 0.0
      %1818 = vmatprep.subr.mxu0 0.0
      %1819 = vmatpush1.msra.mxu0 0.0
      %1820 = vmatprep.subr.mxu0 0.0
      %1821 = vmatpush1.msra.mxu0 0.0
      %1822 = vmatprep.subr.mxu0 0.0
      %1823 = vmatpush1.msra.mxu0 0.0
      %1824 = vmatprep.subr.mxu0 0.0
      %1825 = vmatpush1.msra.mxu0 0.0
      %1826 = vmatprep.subr.mxu0 0.0
      %1827 = vmatpush1.msra.mxu0 0.0
      %1828 = vmatprep.subr.mxu0 0.0
      %1829 = vmatpush1.msra.mxu0 0.0
      %1830 = vmatprep.subr.mxu0 0.0
      %1831 = vmatpush1.msra.mxu0 0.0
      %1832 = vmatprep.subr.mxu0 0.0
      %1833 = vmatpush1.msra.mxu0 0.0
      %1834 = vmatprep.subr.mxu0 0.0
      %1835 = vmatpush1.msra.mxu0 0.0
      %1836 = vmatprep.subr.mxu0 0.0
      %1837 = vmatpush1.msra.mxu0 0.0
      %1838 = vmatprep.subr.mxu0 0.0
      %1839 = vmatpush1.msra.mxu0 0.0
      %1840 = vmatprep.subr.mxu0 0.0
      %1841 = vmatpush1.msra.mxu0 %v1803
      %1842 = vmatprep.subr.mxu0 0.0
      %1843 = vmatpush1.msra.mxu0 %v1801
      %1844 = vmatprep.subr.mxu0 0.0
      %1845 = vmatpush2.msra.mxu0 0.0
      %1846 = vmatprep.subr.mxu0 0.0
      %1847 = vmatpush2.msra.mxu0 0.0
      %1848 = vmatprep.subr.mxu0 0.0
      %1849 = vmatpush2.msra.mxu0 0.0
      %1850 = vmatprep.subr.mxu0 0.0
      %1851 = vmatpush2.msra.mxu0 0.0
      %1852 = vmatprep.subr.mxu0 0.0
      %1853 = vmatpush2.msra.mxu0 0.0
      %1854 = vmatprep.subr.mxu0 0.0
      %1855 = vmatpush2.msra.mxu0 0.0
      %1856 = vmatprep.subr.mxu0 0.0
      %1857 = vmatpush2.msra.mxu0 0.0
      %1858 = vmatprep.subr.mxu0 0.0
      %1859 = vmatpush2.msra.mxu0 0.0
      %1860 = vmatprep.subr.mxu0 0.0
      %1861 = vmatpush2.msra.mxu0 0.0
      %1862 = vmatprep.subr.mxu0 0.0
      %1863 = vmatpush2.msra.mxu0 0.0
      %1864 = vmatprep.subr.mxu0 0.0
      %1865 = vmatpush2.msra.mxu0 0.0
      %1866 = vmatprep.subr.mxu0 0.0
      %1867 = vmatpush2.msra.mxu0 0.0
      %1868 = vmatprep.subr.mxu0 0.0
      %1869 = vmatpush2.msra.mxu0 0.0
      %1870 = vmatprep.subr.mxu0 0.0
      %1871 = vmatpush2.msra.mxu0 0.0
      %1872 = vmatprep.subr.mxu0 0.0
      %1873 = vmatpush2.msra.mxu0 0.0
      %1874 = vmatprep.subr.mxu0 0.0
      %1875 = vmatpush2.msra.mxu0 0.0
      %1876 = vmatprep.mubr.f32.mxu0 0.0
      %1877 = vmatmul.mubr.f32.gmra.mxu0 %v1807
      %v1878 = vpop.f32.mrf.mxu0
      %v1879 = vadd.f32 0.0, %v1878
      %v1880 = vpop.f32.mrf.mxu0
      %1881 = vmatprep.mubr.f32.mxu0 0.0
      %1882 = vmatmul.mubr.f32.gmra.mxu0 %v1810
      %v1883 = vpop.f32.mrf.mxu0
      %v1884 = vadd.f32 0.0, %v1883
      %v1885 = vpop.f32.mrf.mxu0
      %1886 = vdwg.mxu0
      %1887 = vrot.lane.b32.xlu0 %v826, 64
      %v1888 = vpop.permute.xlu0 %1887
      %1889 = vrot.lane.b32.xlu0 %v831, 64
      %v1890 = vpop.permute.xlu0 %1889
      %v1894 = vsel %vm1623, %v1773, 0
      %v1897 = vsel %vm1623, %v1775, 0
      %1899 = vmatprep.subr.mxu0 0.0
      %1900 = vmatpush1.msra.mxu0 0.0
      %1901 = vmatprep.subr.mxu0 0.0
      %1902 = vmatpush1.msra.mxu0 0.0
      %1903 = vmatprep.subr.mxu0 0.0
      %1904 = vmatpush1.msra.mxu0 0.0
      %1905 = vmatprep.subr.mxu0 0.0
      %1906 = vmatpush1.msra.mxu0 0.0
      %1907 = vmatprep.subr.mxu0 0.0
      %1908 = vmatpush1.msra.mxu0 0.0
      %1909 = vmatprep.subr.mxu0 0.0
      %1910 = vmatpush1.msra.mxu0 0.0
      %1911 = vmatprep.subr.mxu0 0.0
      %1912 = vmatpush1.msra.mxu0 0.0
      %1913 = vmatprep.subr.mxu0 0.0
      %1914 = vmatpush1.msra.mxu0 0.0
      %1915 = vmatprep.subr.mxu0 0.0
      %1916 = vmatpush1.msra.mxu0 0.0
      %1917 = vmatprep.subr.mxu0 0.0
      %1918 = vmatpush1.msra.mxu0 0.0
      %1919 = vmatprep.subr.mxu0 0.0
      %1920 = vmatpush1.msra.mxu0 0.0
      %1921 = vmatprep.subr.mxu0 0.0
      %1922 = vmatpush1.msra.mxu0 0.0
      %1923 = vmatprep.subr.mxu0 0.0
      %1924 = vmatpush1.msra.mxu0 0.0
      %1925 = vmatprep.subr.mxu0 0.0
      %1926 = vmatpush1.msra.mxu0 0.0
      %1927 = vmatprep.subr.mxu0 0.0
      %1928 = vmatpush1.msra.mxu0 %v1890
      %1929 = vmatprep.subr.mxu0 0.0
      %1930 = vmatpush1.msra.mxu0 %v1888
      %1931 = vmatprep.subr.mxu0 0.0
      %1932 = vmatpush2.msra.mxu0 0.0
      %1933 = vmatprep.subr.mxu0 0.0
      %1934 = vmatpush2.msra.mxu0 0.0
      %1935 = vmatprep.subr.mxu0 0.0
      %1936 = vmatpush2.msra.mxu0 0.0
      %1937 = vmatprep.subr.mxu0 0.0
      %1938 = vmatpush2.msra.mxu0 0.0
      %1939 = vmatprep.subr.mxu0 0.0
      %1940 = vmatpush2.msra.mxu0 0.0
      %1941 = vmatprep.subr.mxu0 0.0
      %1942 = vmatpush2.msra.mxu0 0.0
      %1943 = vmatprep.subr.mxu0 0.0
      %1944 = vmatpush2.msra.mxu0 0.0
      %1945 = vmatprep.subr.mxu0 0.0
      %1946 = vmatpush2.msra.mxu0 0.0
      %1947 = vmatprep.subr.mxu0 0.0
      %1948 = vmatpush2.msra.mxu0 0.0
      %1949 = vmatprep.subr.mxu0 0.0
      %1950 = vmatpush2.msra.mxu0 0.0
      %1951 = vmatprep.subr.mxu0 0.0
      %1952 = vmatpush2.msra.mxu0 0.0
      %1953 = vmatprep.subr.mxu0 0.0
      %1954 = vmatpush2.msra.mxu0 0.0
      %1955 = vmatprep.subr.mxu0 0.0
      %1956 = vmatpush2.msra.mxu0 0.0
      %1957 = vmatprep.subr.mxu0 0.0
      %1958 = vmatpush2.msra.mxu0 0.0
      %1959 = vmatprep.subr.mxu0 0.0
      %1960 = vmatpush2.msra.mxu0 0.0
      %1961 = vmatprep.subr.mxu0 0.0
      %1962 = vmatpush2.msra.mxu0 0.0
      %1963 = vmatprep.mubr.f32.mxu0 0.0
      %1964 = vmatmul.mubr.f32.gmra.mxu0 %v1894
      %v1965 = vpop.f32.mrf.mxu0
      %v1966 = vadd.f32 0.0, %v1965
      %v1967 = vpop.f32.mrf.mxu0
      %1968 = vmatprep.mubr.f32.mxu0 0.0
      %1969 = vmatmul.mubr.f32.gmra.mxu0 %v1897
      %v1970 = vpop.f32.mrf.mxu0
      %v1971 = vadd.f32 0.0, %v1970
      %v1972 = vpop.f32.mrf.mxu0
      %1973 = vdwg.mxu0
      %1974 = vrot.lane.b32.xlu0 %v836, 64
      %v1975 = vpop.permute.xlu0 %1974
      %1976 = vrot.lane.b32.xlu0 %v841, 64
      %v1977 = vpop.permute.xlu0 %1976
      %v1981 = vsel %vm1623, %v1777, 0
      %v1984 = vsel %vm1623, %v1779, 0
      %1986 = vmatprep.subr.mxu0 0.0
      %1987 = vmatpush1.msra.mxu0 0.0
      %1988 = vmatprep.subr.mxu0 0.0
      %1989 = vmatpush1.msra.mxu0 0.0
      %1990 = vmatprep.subr.mxu0 0.0
      %1991 = vmatpush1.msra.mxu0 0.0
      %1992 = vmatprep.subr.mxu0 0.0
      %1993 = vmatpush1.msra.mxu0 0.0
      %1994 = vmatprep.subr.mxu0 0.0
      %1995 = vmatpush1.msra.mxu0 0.0
      %1996 = vmatprep.subr.mxu0 0.0
      %1997 = vmatpush1.msra.mxu0 0.0
      %1998 = vmatprep.subr.mxu0 0.0
      %1999 = vmatpush1.msra.mxu0 0.0
      %2000 = vmatprep.subr.mxu0 0.0
      %2001 = vmatpush1.msra.mxu0 0.0
      %2002 = vmatprep.subr.mxu0 0.0
      %2003 = vmatpush1.msra.mxu0 0.0
      %2004 = vmatprep.subr.mxu0 0.0
      %2005 = vmatpush1.msra.mxu0 0.0
      %2006 = vmatprep.subr.mxu0 0.0
      %2007 = vmatpush1.msra.mxu0 0.0
      %2008 = vmatprep.subr.mxu0 0.0
      %2009 = vmatpush1.msra.mxu0 0.0
      %2010 = vmatprep.subr.mxu0 0.0
      %2011 = vmatpush1.msra.mxu0 0.0
      %2012 = vmatprep.subr.mxu0 0.0
      %2013 = vmatpush1.msra.mxu0 0.0
      %2014 = vmatprep.subr.mxu0 0.0
      %2015 = vmatpush1.msra.mxu0 %v1977
      %2016 = vmatprep.subr.mxu0 0.0
      %2017 = vmatpush1.msra.mxu0 %v1975
      %2018 = vmatprep.subr.mxu0 0.0
      %2019 = vmatpush2.msra.mxu0 0.0
      %2020 = vmatprep.subr.mxu0 0.0
      %2021 = vmatpush2.msra.mxu0 0.0
      %2022 = vmatprep.subr.mxu0 0.0
      %2023 = vmatpush2.msra.mxu0 0.0
      %2024 = vmatprep.subr.mxu0 0.0
      %2025 = vmatpush2.msra.mxu0 0.0
      %2026 = vmatprep.subr.mxu0 0.0
      %2027 = vmatpush2.msra.mxu0 0.0
      %2028 = vmatprep.subr.mxu0 0.0
      %2029 = vmatpush2.msra.mxu0 0.0
      %2030 = vmatprep.subr.mxu0 0.0
      %2031 = vmatpush2.msra.mxu0 0.0
      %2032 = vmatprep.subr.mxu0 0.0
      %2033 = vmatpush2.msra.mxu0 0.0
      %2034 = vmatprep.subr.mxu0 0.0
      %2035 = vmatpush2.msra.mxu0 0.0
      %2036 = vmatprep.subr.mxu0 0.0
      %2037 = vmatpush2.msra.mxu0 0.0
      %2038 = vmatprep.subr.mxu0 0.0
      %2039 = vmatpush2.msra.mxu0 0.0
      %2040 = vmatprep.subr.mxu0 0.0
      %2041 = vmatpush2.msra.mxu0 0.0
      %2042 = vmatprep.subr.mxu0 0.0
      %2043 = vmatpush2.msra.mxu0 0.0
      %2044 = vmatprep.subr.mxu0 0.0
      %2045 = vmatpush2.msra.mxu0 0.0
      %2046 = vmatprep.subr.mxu0 0.0
      %2047 = vmatpush2.msra.mxu0 0.0
      %2048 = vmatprep.subr.mxu0 0.0
      %2049 = vmatpush2.msra.mxu0 0.0
      %2050 = vmatprep.mubr.f32.mxu0 0.0
      %2051 = vmatmul.mubr.f32.gmra.mxu0 %v1981
      %v2052 = vpop.f32.mrf.mxu0
      %v2053 = vadd.f32 0.0, %v2052
      %v2054 = vpop.f32.mrf.mxu0
      %2055 = vmatprep.mubr.f32.mxu0 0.0
      %2056 = vmatmul.mubr.f32.gmra.mxu0 %v1984
      %v2057 = vpop.f32.mrf.mxu0
      %v2058 = vadd.f32 0.0, %v2057
      %v2059 = vpop.f32.mrf.mxu0
      %2060 = vdwg.mxu0
      %2061 = vrot.lane.b32.xlu0 %v846, 64
      %v2062 = vpop.permute.xlu0 %2061
      %2063 = vrot.lane.b32.xlu0 %v851, 64
      %v2064 = vpop.permute.xlu0 %2063
      %v2068 = vsel %vm1623, %v1781, 0
      %v2071 = vsel %vm1623, %v1783, 0
      %2073 = vmatprep.subr.mxu0 0.0
      %2074 = vmatpush1.msra.mxu0 0.0
      %2075 = vmatprep.subr.mxu0 0.0
      %2076 = vmatpush1.msra.mxu0 0.0
      %2077 = vmatprep.subr.mxu0 0.0
      %2078 = vmatpush1.msra.mxu0 0.0
      %2079 = vmatprep.subr.mxu0 0.0
      %2080 = vmatpush1.msra.mxu0 0.0
      %2081 = vmatprep.subr.mxu0 0.0
      %2082 = vmatpush1.msra.mxu0 0.0
      %2083 = vmatprep.subr.mxu0 0.0
      %2084 = vmatpush1.msra.mxu0 0.0
      %2085 = vmatprep.subr.mxu0 0.0
      %2086 = vmatpush1.msra.mxu0 0.0
      %2087 = vmatprep.subr.mxu0 0.0
      %2088 = vmatpush1.msra.mxu0 0.0
      %2089 = vmatprep.subr.mxu0 0.0
      %2090 = vmatpush1.msra.mxu0 0.0
      %2091 = vmatprep.subr.mxu0 0.0
      %2092 = vmatpush1.msra.mxu0 0.0
      %2093 = vmatprep.subr.mxu0 0.0
      %2094 = vmatpush1.msra.mxu0 0.0
      %2095 = vmatprep.subr.mxu0 0.0
      %2096 = vmatpush1.msra.mxu0 0.0
      %2097 = vmatprep.subr.mxu0 0.0
      %2098 = vmatpush1.msra.mxu0 0.0
      %2099 = vmatprep.subr.mxu0 0.0
      %2100 = vmatpush1.msra.mxu0 0.0
      %2101 = vmatprep.subr.mxu0 0.0
      %2102 = vmatpush1.msra.mxu0 %v2064
      %2103 = vmatprep.subr.mxu0 0.0
      %2104 = vmatpush1.msra.mxu0 %v2062
      %2105 = vmatprep.subr.mxu0 0.0
      %2106 = vmatpush2.msra.mxu0 0.0
      %2107 = vmatprep.subr.mxu0 0.0
      %2108 = vmatpush2.msra.mxu0 0.0
      %2109 = vmatprep.subr.mxu0 0.0
      %2110 = vmatpush2.msra.mxu0 0.0
      %2111 = vmatprep.subr.mxu0 0.0
      %2112 = vmatpush2.msra.mxu0 0.0
      %2113 = vmatprep.subr.mxu0 0.0
      %2114 = vmatpush2.msra.mxu0 0.0
      %2115 = vmatprep.subr.mxu0 0.0
      %2116 = vmatpush2.msra.mxu0 0.0
      %2117 = vmatprep.subr.mxu0 0.0
      %2118 = vmatpush2.msra.mxu0 0.0
      %2119 = vmatprep.subr.mxu0 0.0
      %2120 = vmatpush2.msra.mxu0 0.0
      %2121 = vmatprep.subr.mxu0 0.0
      %2122 = vmatpush2.msra.mxu0 0.0
      %2123 = vmatprep.subr.mxu0 0.0
      %2124 = vmatpush2.msra.mxu0 0.0
      %2125 = vmatprep.subr.mxu0 0.0
      %2126 = vmatpush2.msra.mxu0 0.0
      %2127 = vmatprep.subr.mxu0 0.0
      %2128 = vmatpush2.msra.mxu0 0.0
      %2129 = vmatprep.subr.mxu0 0.0
      %2130 = vmatpush2.msra.mxu0 0.0
      %2131 = vmatprep.subr.mxu0 0.0
      %2132 = vmatpush2.msra.mxu0 0.0
      %2133 = vmatprep.subr.mxu0 0.0
      %2134 = vmatpush2.msra.mxu0 0.0
      %2135 = vmatprep.subr.mxu0 0.0
      %2136 = vmatpush2.msra.mxu0 0.0
      %2137 = vmatprep.mubr.f32.mxu0 0.0
      %2138 = vmatmul.mubr.f32.gmra.mxu0 %v2068
      %v2139 = vpop.f32.mrf.mxu0
      %v2140 = vadd.f32 0.0, %v2139
      %v2141 = vpop.f32.mrf.mxu0
      %2142 = vmatprep.mubr.f32.mxu0 0.0
      %2143 = vmatmul.mubr.f32.gmra.mxu0 %v2071
      %v2144 = vpop.f32.mrf.mxu0
      %v2145 = vadd.f32 0.0, %v2144
      %v2146 = vpop.f32.mrf.mxu0
      %2147 = vdwg.mxu0
      %2148 = vrot.lane.b32.xlu0 %v856, 64
      %v2149 = vpop.permute.xlu0 %2148
      %2150 = vrot.lane.b32.xlu0 %v861, 64
      %v2151 = vpop.permute.xlu0 %2150
      %v2155 = vsel %vm1623, %v1785, 0
      %v2158 = vsel %vm1623, %v1787, 0
      %2160 = vmatprep.subr.mxu0 0.0
      %2161 = vmatpush1.msra.mxu0 0.0
      %2162 = vmatprep.subr.mxu0 0.0
      %2163 = vmatpush1.msra.mxu0 0.0
      %2164 = vmatprep.subr.mxu0 0.0
      %2165 = vmatpush1.msra.mxu0 0.0
      %2166 = vmatprep.subr.mxu0 0.0
      %2167 = vmatpush1.msra.mxu0 0.0
      %2168 = vmatprep.subr.mxu0 0.0
      %2169 = vmatpush1.msra.mxu0 0.0
      %2170 = vmatprep.subr.mxu0 0.0
      %2171 = vmatpush1.msra.mxu0 0.0
      %2172 = vmatprep.subr.mxu0 0.0
      %2173 = vmatpush1.msra.mxu0 0.0
      %2174 = vmatprep.subr.mxu0 0.0
      %2175 = vmatpush1.msra.mxu0 0.0
      %2176 = vmatprep.subr.mxu0 0.0
      %2177 = vmatpush1.msra.mxu0 0.0
      %2178 = vmatprep.subr.mxu0 0.0
      %2179 = vmatpush1.msra.mxu0 0.0
      %2180 = vmatprep.subr.mxu0 0.0
      %2181 = vmatpush1.msra.mxu0 0.0
      %2182 = vmatprep.subr.mxu0 0.0
      %2183 = vmatpush1.msra.mxu0 0.0
      %2184 = vmatprep.subr.mxu0 0.0
      %2185 = vmatpush1.msra.mxu0 0.0
      %2186 = vmatprep.subr.mxu0 0.0
      %2187 = vmatpush1.msra.mxu0 0.0
      %2188 = vmatprep.subr.mxu0 0.0
      %2189 = vmatpush1.msra.mxu0 %v2151
      %2190 = vmatprep.subr.mxu0 0.0
      %2191 = vmatpush1.msra.mxu0 %v2149
      %2192 = vmatprep.subr.mxu0 0.0
      %2193 = vmatpush2.msra.mxu0 0.0
      %2194 = vmatprep.subr.mxu0 0.0
      %2195 = vmatpush2.msra.mxu0 0.0
      %2196 = vmatprep.subr.mxu0 0.0
      %2197 = vmatpush2.msra.mxu0 0.0
      %2198 = vmatprep.subr.mxu0 0.0
      %2199 = vmatpush2.msra.mxu0 0.0
      %2200 = vmatprep.subr.mxu0 0.0
      %2201 = vmatpush2.msra.mxu0 0.0
      %2202 = vmatprep.subr.mxu0 0.0
      %2203 = vmatpush2.msra.mxu0 0.0
      %2204 = vmatprep.subr.mxu0 0.0
      %2205 = vmatpush2.msra.mxu0 0.0
      %2206 = vmatprep.subr.mxu0 0.0
      %2207 = vmatpush2.msra.mxu0 0.0
      %2208 = vmatprep.subr.mxu0 0.0
      %2209 = vmatpush2.msra.mxu0 0.0
      %2210 = vmatprep.subr.mxu0 0.0
      %2211 = vmatpush2.msra.mxu0 0.0
      %2212 = vmatprep.subr.mxu0 0.0
      %2213 = vmatpush2.msra.mxu0 0.0
      %2214 = vmatprep.subr.mxu0 0.0
      %2215 = vmatpush2.msra.mxu0 0.0
      %2216 = vmatprep.subr.mxu0 0.0
      %2217 = vmatpush2.msra.mxu0 0.0
      %2218 = vmatprep.subr.mxu0 0.0
      %2219 = vmatpush2.msra.mxu0 0.0
      %2220 = vmatprep.subr.mxu0 0.0
      %2221 = vmatpush2.msra.mxu0 0.0
      %2222 = vmatprep.subr.mxu0 0.0
      %2223 = vmatpush2.msra.mxu0 0.0
      %2224 = vmatprep.mubr.f32.mxu0 0.0
      %2225 = vmatmul.mubr.f32.gmra.mxu0 %v2155
      %v2226 = vpop.f32.mrf.mxu0
      %v2227 = vadd.f32 0.0, %v2226
      %v2228 = vpop.f32.mrf.mxu0
      %2229 = vmatprep.mubr.f32.mxu0 0.0
      %2230 = vmatmul.mubr.f32.gmra.mxu0 %v2158
      %v2231 = vpop.f32.mrf.mxu0
      %v2232 = vadd.f32 0.0, %v2231
      %v2233 = vpop.f32.mrf.mxu0
      %2234 = vdwg.mxu0
      %2235 = vrot.lane.b32.xlu0 %v866, 64
      %v2236 = vpop.permute.xlu0 %2235
      %2237 = vrot.lane.b32.xlu0 %v871, 64
      %v2238 = vpop.permute.xlu0 %2237
      %v2242 = vsel %vm1623, %v1789, 0
      %v2245 = vsel %vm1623, %v1791, 0
      %2247 = vmatprep.subr.mxu0 0.0
      %2248 = vmatpush1.msra.mxu0 0.0
      %2249 = vmatprep.subr.mxu0 0.0
      %2250 = vmatpush1.msra.mxu0 0.0
      %2251 = vmatprep.subr.mxu0 0.0
      %2252 = vmatpush1.msra.mxu0 0.0
      %2253 = vmatprep.subr.mxu0 0.0
      %2254 = vmatpush1.msra.mxu0 0.0
      %2255 = vmatprep.subr.mxu0 0.0
      %2256 = vmatpush1.msra.mxu0 0.0
      %2257 = vmatprep.subr.mxu0 0.0
      %2258 = vmatpush1.msra.mxu0 0.0
      %2259 = vmatprep.subr.mxu0 0.0
      %2260 = vmatpush1.msra.mxu0 0.0
      %2261 = vmatprep.subr.mxu0 0.0
      %2262 = vmatpush1.msra.mxu0 0.0
      %2263 = vmatprep.subr.mxu0 0.0
      %2264 = vmatpush1.msra.mxu0 0.0
      %2265 = vmatprep.subr.mxu0 0.0
      %2266 = vmatpush1.msra.mxu0 0.0
      %2267 = vmatprep.subr.mxu0 0.0
      %2268 = vmatpush1.msra.mxu0 0.0
      %2269 = vmatprep.subr.mxu0 0.0
      %2270 = vmatpush1.msra.mxu0 0.0
      %2271 = vmatprep.subr.mxu0 0.0
      %2272 = vmatpush1.msra.mxu0 0.0
      %2273 = vmatprep.subr.mxu0 0.0
      %2274 = vmatpush1.msra.mxu0 0.0
      %2275 = vmatprep.subr.mxu0 0.0
      %2276 = vmatpush1.msra.mxu0 %v2238
      %2277 = vmatprep.subr.mxu0 0.0
      %2278 = vmatpush1.msra.mxu0 %v2236
      %2279 = vmatprep.subr.mxu0 0.0
      %2280 = vmatpush2.msra.mxu0 0.0
      %2281 = vmatprep.subr.mxu0 0.0
      %2282 = vmatpush2.msra.mxu0 0.0
      %2283 = vmatprep.subr.mxu0 0.0
      %2284 = vmatpush2.msra.mxu0 0.0
      %2285 = vmatprep.subr.mxu0 0.0
      %2286 = vmatpush2.msra.mxu0 0.0
      %2287 = vmatprep.subr.mxu0 0.0
      %2288 = vmatpush2.msra.mxu0 0.0
      %2289 = vmatprep.subr.mxu0 0.0
      %2290 = vmatpush2.msra.mxu0 0.0
      %2291 = vmatprep.subr.mxu0 0.0
      %2292 = vmatpush2.msra.mxu0 0.0
      %2293 = vmatprep.subr.mxu0 0.0
      %2294 = vmatpush2.msra.mxu0 0.0
      %2295 = vmatprep.subr.mxu0 0.0
      %2296 = vmatpush2.msra.mxu0 0.0
      %2297 = vmatprep.subr.mxu0 0.0
      %2298 = vmatpush2.msra.mxu0 0.0
      %2299 = vmatprep.subr.mxu0 0.0
      %2300 = vmatpush2.msra.mxu0 0.0
      %2301 = vmatprep.subr.mxu0 0.0
      %2302 = vmatpush2.msra.mxu0 0.0
      %2303 = vmatprep.subr.mxu0 0.0
      %2304 = vmatpush2.msra.mxu0 0.0
      %2305 = vmatprep.subr.mxu0 0.0
      %2306 = vmatpush2.msra.mxu0 0.0
      %2307 = vmatprep.subr.mxu0 0.0
      %2308 = vmatpush2.msra.mxu0 0.0
      %2309 = vmatprep.subr.mxu0 0.0
      %2310 = vmatpush2.msra.mxu0 0.0
      %2311 = vmatprep.mubr.f32.mxu0 0.0
      %2312 = vmatmul.mubr.f32.gmra.mxu0 %v2242
      %v2313 = vpop.f32.mrf.mxu0
      %v2314 = vadd.f32 0.0, %v2313
      %v2315 = vpop.f32.mrf.mxu0
      %2316 = vmatprep.mubr.f32.mxu0 0.0
      %2317 = vmatmul.mubr.f32.gmra.mxu0 %v2245
      %v2318 = vpop.f32.mrf.mxu0
      %v2319 = vadd.f32 0.0, %v2318
      %v2320 = vpop.f32.mrf.mxu0
      %2321 = vdwg.mxu0
      %2322 = vrot.lane.b32.xlu0 %v876, 64
      %v2323 = vpop.permute.xlu0 %2322
      %2324 = vrot.lane.b32.xlu0 %v881, 64
      %v2325 = vpop.permute.xlu0 %2324
      %v2329 = vsel %vm1623, %v1793, 0
      %v2332 = vsel %vm1623, %v1795, 0
      %2334 = vmatprep.subr.mxu0 0.0
      %2335 = vmatpush1.msra.mxu0 0.0
      %2336 = vmatprep.subr.mxu0 0.0
      %2337 = vmatpush1.msra.mxu0 0.0
      %2338 = vmatprep.subr.mxu0 0.0
      %2339 = vmatpush1.msra.mxu0 0.0
      %2340 = vmatprep.subr.mxu0 0.0
      %2341 = vmatpush1.msra.mxu0 0.0
      %2342 = vmatprep.subr.mxu0 0.0
      %2343 = vmatpush1.msra.mxu0 0.0
      %2344 = vmatprep.subr.mxu0 0.0
      %2345 = vmatpush1.msra.mxu0 0.0
      %2346 = vmatprep.subr.mxu0 0.0
      %2347 = vmatpush1.msra.mxu0 0.0
      %2348 = vmatprep.subr.mxu0 0.0
      %2349 = vmatpush1.msra.mxu0 0.0
      %2350 = vmatprep.subr.mxu0 0.0
      %2351 = vmatpush1.msra.mxu0 0.0
      %2352 = vmatprep.subr.mxu0 0.0
      %2353 = vmatpush1.msra.mxu0 0.0
      %2354 = vmatprep.subr.mxu0 0.0
      %2355 = vmatpush1.msra.mxu0 0.0
      %2356 = vmatprep.subr.mxu0 0.0
      %2357 = vmatpush1.msra.mxu0 0.0
      %2358 = vmatprep.subr.mxu0 0.0
      %2359 = vmatpush1.msra.mxu0 0.0
      %2360 = vmatprep.subr.mxu0 0.0
      %2361 = vmatpush1.msra.mxu0 0.0
      %2362 = vmatprep.subr.mxu0 0.0
      %2363 = vmatpush1.msra.mxu0 %v2325
      %2364 = vmatprep.subr.mxu0 0.0
      %2365 = vmatpush1.msra.mxu0 %v2323
      %2366 = vmatprep.subr.mxu0 0.0
      %2367 = vmatpush2.msra.mxu0 0.0
      %2368 = vmatprep.subr.mxu0 0.0
      %2369 = vmatpush2.msra.mxu0 0.0
      %2370 = vmatprep.subr.mxu0 0.0
      %2371 = vmatpush2.msra.mxu0 0.0
      %2372 = vmatprep.subr.mxu0 0.0
      %2373 = vmatpush2.msra.mxu0 0.0
      %2374 = vmatprep.subr.mxu0 0.0
      %2375 = vmatpush2.msra.mxu0 0.0
      %2376 = vmatprep.subr.mxu0 0.0
      %2377 = vmatpush2.msra.mxu0 0.0
      %2378 = vmatprep.subr.mxu0 0.0
      %2379 = vmatpush2.msra.mxu0 0.0
      %2380 = vmatprep.subr.mxu0 0.0
      %2381 = vmatpush2.msra.mxu0 0.0
      %2382 = vmatprep.subr.mxu0 0.0
      %2383 = vmatpush2.msra.mxu0 0.0
      %2384 = vmatprep.subr.mxu0 0.0
      %2385 = vmatpush2.msra.mxu0 0.0
      %2386 = vmatprep.subr.mxu0 0.0
      %2387 = vmatpush2.msra.mxu0 0.0
      %2388 = vmatprep.subr.mxu0 0.0
      %2389 = vmatpush2.msra.mxu0 0.0
      %2390 = vmatprep.subr.mxu0 0.0
      %2391 = vmatpush2.msra.mxu0 0.0
      %2392 = vmatprep.subr.mxu0 0.0
      %2393 = vmatpush2.msra.mxu0 0.0
      %2394 = vmatprep.subr.mxu0 0.0
      %2395 = vmatpush2.msra.mxu0 0.0
      %2396 = vmatprep.subr.mxu0 0.0
      %2397 = vmatpush2.msra.mxu0 0.0
      %2398 = vmatprep.mubr.f32.mxu0 0.0
      %2399 = vmatmul.mubr.f32.gmra.mxu0 %v2329
      %v2400 = vpop.f32.mrf.mxu0
      %v2401 = vadd.f32 0.0, %v2400
      %v2402 = vpop.f32.mrf.mxu0
      %2403 = vmatprep.mubr.f32.mxu0 0.0
      %2404 = vmatmul.mubr.f32.gmra.mxu0 %v2332
      %v2405 = vpop.f32.mrf.mxu0
      %v2406 = vadd.f32 0.0, %v2405
      %v2407 = vpop.f32.mrf.mxu0
      %2408 = vdwg.mxu0
      %2409 = vrot.lane.b32.xlu0 %v886, 64
      %v2410 = vpop.permute.xlu0 %2409
      %2411 = vrot.lane.b32.xlu0 %v891, 64
      %v2412 = vpop.permute.xlu0 %2411
      %v2416 = vsel %vm1623, %v1797, 0
      %v2419 = vsel %vm1623, %v1799, 0
      %2421 = vmatprep.subr.mxu0 0.0
      %2422 = vmatpush1.msra.mxu0 0.0
      %2423 = vmatprep.subr.mxu0 0.0
      %2424 = vmatpush1.msra.mxu0 0.0
      %2425 = vmatprep.subr.mxu0 0.0
      %2426 = vmatpush1.msra.mxu0 0.0
      %2427 = vmatprep.subr.mxu0 0.0
      %2428 = vmatpush1.msra.mxu0 0.0
      %2429 = vmatprep.subr.mxu0 0.0
      %2430 = vmatpush1.msra.mxu0 0.0
      %2431 = vmatprep.subr.mxu0 0.0
      %2432 = vmatpush1.msra.mxu0 0.0
      %2433 = vmatprep.subr.mxu0 0.0
      %2434 = vmatpush1.msra.mxu0 0.0
      %2435 = vmatprep.subr.mxu0 0.0
      %2436 = vmatpush1.msra.mxu0 0.0
      %2437 = vmatprep.subr.mxu0 0.0
      %2438 = vmatpush1.msra.mxu0 0.0
      %2439 = vmatprep.subr.mxu0 0.0
      %2440 = vmatpush1.msra.mxu0 0.0
      %2441 = vmatprep.subr.mxu0 0.0
      %2442 = vmatpush1.msra.mxu0 0.0
      %2443 = vmatprep.subr.mxu0 0.0
      %2444 = vmatpush1.msra.mxu0 0.0
      %2445 = vmatprep.subr.mxu0 0.0
      %2446 = vmatpush1.msra.mxu0 0.0
      %2447 = vmatprep.subr.mxu0 0.0
      %2448 = vmatpush1.msra.mxu0 0.0
      %2449 = vmatprep.subr.mxu0 0.0
      %2450 = vmatpush1.msra.mxu0 %v2412
      %2451 = vmatprep.subr.mxu0 0.0
      %2452 = vmatpush1.msra.mxu0 %v2410
      %2453 = vmatprep.subr.mxu0 0.0
      %2454 = vmatpush2.msra.mxu0 0.0
      %2455 = vmatprep.subr.mxu0 0.0
      %2456 = vmatpush2.msra.mxu0 0.0
      %2457 = vmatprep.subr.mxu0 0.0
      %2458 = vmatpush2.msra.mxu0 0.0
      %2459 = vmatprep.subr.mxu0 0.0
      %2460 = vmatpush2.msra.mxu0 0.0
      %2461 = vmatprep.subr.mxu0 0.0
      %2462 = vmatpush2.msra.mxu0 0.0
      %2463 = vmatprep.subr.mxu0 0.0
      %2464 = vmatpush2.msra.mxu0 0.0
      %2465 = vmatprep.subr.mxu0 0.0
      %2466 = vmatpush2.msra.mxu0 0.0
      %2467 = vmatprep.subr.mxu0 0.0
      %2468 = vmatpush2.msra.mxu0 0.0
      %2469 = vmatprep.subr.mxu0 0.0
      %2470 = vmatpush2.msra.mxu0 0.0
      %2471 = vmatprep.subr.mxu0 0.0
      %2472 = vmatpush2.msra.mxu0 0.0
      %2473 = vmatprep.subr.mxu0 0.0
      %2474 = vmatpush2.msra.mxu0 0.0
      %2475 = vmatprep.subr.mxu0 0.0
      %2476 = vmatpush2.msra.mxu0 0.0
      %2477 = vmatprep.subr.mxu0 0.0
      %2478 = vmatpush2.msra.mxu0 0.0
      %2479 = vmatprep.subr.mxu0 0.0
      %2480 = vmatpush2.msra.mxu0 0.0
      %2481 = vmatprep.subr.mxu0 0.0
      %2482 = vmatpush2.msra.mxu0 0.0
      %2483 = vmatprep.subr.mxu0 0.0
      %2484 = vmatpush2.msra.mxu0 0.0
      %2485 = vmatprep.mubr.f32.mxu0 0.0
      %2486 = vmatmul.mubr.f32.gmra.mxu0 %v2416
      %v2487 = vpop.f32.mrf.mxu0
      %v2488 = vadd.f32 0.0, %v2487
      %v2489 = vpop.f32.mrf.mxu0
      %2490 = vmatprep.mubr.f32.mxu0 0.0
      %2491 = vmatmul.mubr.f32.gmra.mxu0 %v2419
      %v2492 = vpop.f32.mrf.mxu0
      %v2493 = vadd.f32 0.0, %v2492
      %v2494 = vpop.f32.mrf.mxu0
      %2495 = vdwg.mxu0
      %2496 = vrot.lane.b32.xlu0 %v816, 120
      %v2497 = vpop.permute.xlu0 %2496
      %2498 = vrot.lane.b32.xlu0 %v821, 120
      %v2499 = vpop.permute.xlu0 %2498
      %2500 = vrot.lane.b32.xlu0 %v816, 88
      %v2501 = vpop.permute.xlu0 %2500
      %2502 = vrot.lane.b32.xlu0 %v821, 88
      %v2503 = vpop.permute.xlu0 %2502
      %v2504 = vsel %vm900, %v2497, 0
      %v2506 = vsel %vm900, %v2499, 0
      %v2508 = vsel %vm900, %v2501, 0
      %v2510 = vsel %vm900, %v2503, 0
      %2512 = vmatprep.subr.mxu0 0.0
      %2513 = vmatpush1.xpose.msra.mxu0 0.0
      %2514 = vmatprep.subr.mxu0 0.0
      %2515 = vmatpush1.xpose.msra.mxu0 0.0
      %2516 = vmatprep.subr.mxu0 0.0
      %2517 = vmatpush1.xpose.msra.mxu0 0.0
      %2518 = vmatprep.subr.mxu0 0.0
      %2519 = vmatpush1.xpose.msra.mxu0 0.0
      %2520 = vmatprep.subr.mxu0 0.0
      %2521 = vmatpush1.xpose.msra.mxu0 0.0
      %2522 = vmatprep.subr.mxu0 0.0
      %2523 = vmatpush1.xpose.msra.mxu0 0.0
      %2524 = vmatprep.subr.mxu0 0.0
      %2525 = vmatpush1.xpose.msra.mxu0 0.0
      %2526 = vmatprep.subr.mxu0 0.0
      %2527 = vmatpush1.xpose.msra.mxu0 0.0
      %2528 = vmatprep.subr.mxu0 0.0
      %2529 = vmatpush1.xpose.msra.mxu0 0.0
      %2530 = vmatprep.subr.mxu0 0.0
      %2531 = vmatpush1.xpose.msra.mxu0 0.0
      %2532 = vmatprep.subr.mxu0 0.0
      %2533 = vmatpush1.xpose.msra.mxu0 0.0
      %2534 = vmatprep.subr.mxu0 0.0
      %2535 = vmatpush1.xpose.msra.mxu0 0.0
      %2536 = vmatprep.subr.mxu0 0.0
      %2537 = vmatpush1.xpose.msra.mxu0 0.0
      %2538 = vmatprep.subr.mxu0 0.0
      %2539 = vmatpush1.xpose.msra.mxu0 0.0
      %2540 = vmatprep.subr.mxu0 0.0
      %2541 = vmatpush1.xpose.msra.mxu0 %v2510
      %2542 = vmatprep.subr.mxu0 0.0
      %2543 = vmatpush1.xpose.msra.mxu0 %v2508
      %2544 = vmatprep.subr.mxu0 0.0
      %2545 = vmatpush2.xpose.msra.mxu0 0.0
      %2546 = vmatprep.subr.mxu0 0.0
      %2547 = vmatpush2.xpose.msra.mxu0 0.0
      %2548 = vmatprep.subr.mxu0 0.0
      %2549 = vmatpush2.xpose.msra.mxu0 0.0
      %2550 = vmatprep.subr.mxu0 0.0
      %2551 = vmatpush2.xpose.msra.mxu0 0.0
      %2552 = vmatprep.subr.mxu0 0.0
      %2553 = vmatpush2.xpose.msra.mxu0 0.0
      %2554 = vmatprep.subr.mxu0 0.0
      %2555 = vmatpush2.xpose.msra.mxu0 0.0
      %2556 = vmatprep.subr.mxu0 0.0
      %2557 = vmatpush2.xpose.msra.mxu0 0.0
      %2558 = vmatprep.subr.mxu0 0.0
      %2559 = vmatpush2.xpose.msra.mxu0 0.0
      %2560 = vmatprep.subr.mxu0 0.0
      %2561 = vmatpush2.xpose.msra.mxu0 0.0
      %2562 = vmatprep.subr.mxu0 0.0
      %2563 = vmatpush2.xpose.msra.mxu0 0.0
      %2564 = vmatprep.subr.mxu0 0.0
      %2565 = vmatpush2.xpose.msra.mxu0 0.0
      %2566 = vmatprep.subr.mxu0 0.0
      %2567 = vmatpush2.xpose.msra.mxu0 0.0
      %2568 = vmatprep.subr.mxu0 0.0
      %2569 = vmatpush2.xpose.msra.mxu0 0.0
      %2570 = vmatprep.subr.mxu0 0.0
      %2571 = vmatpush2.xpose.msra.mxu0 0.0
      %2572 = vmatprep.subr.mxu0 0.0
      %2573 = vmatpush2.xpose.msra.mxu0 0.0
      %2574 = vmatprep.subr.mxu0 0.0
      %2575 = vmatpush2.xpose.msra.mxu0 0.0
      %2576 = vmatprep.mubr.f32.mxu0 0.0
      %2577 = vmatmul.mubr.f32.gmra.mxu0 %v2504
      %v2578 = vpop.f32.mrf.mxu0
      %v2579 = vadd.f32 0.0, %v2578
      %v2580 = vpop.f32.mrf.mxu0
      %2581 = vmatprep.mubr.f32.mxu0 0.0
      %2582 = vmatmul.mubr.f32.gmra.mxu0 %v2506
      %v2583 = vpop.f32.mrf.mxu0
      %v2584 = vadd.f32 0.0, %v2583
      %v2585 = vpop.f32.mrf.mxu0
      %2586 = vdwg.mxu0
      %2587 = vrot.lane.b32.xlu0 %v826, 120
      %v2588 = vpop.permute.xlu0 %2587
      %2589 = vrot.lane.b32.xlu0 %v831, 120
      %v2590 = vpop.permute.xlu0 %2589
      %2591 = vrot.lane.b32.xlu0 %v826, 88
      %v2592 = vpop.permute.xlu0 %2591
      %2593 = vrot.lane.b32.xlu0 %v831, 88
      %v2594 = vpop.permute.xlu0 %2593
      %v2595 = vsel %vm900, %v2588, 0
      %v2597 = vsel %vm900, %v2590, 0
      %v2599 = vsel %vm900, %v2592, 0
      %v2601 = vsel %vm900, %v2594, 0
      %2603 = vmatprep.subr.mxu0 0.0
      %2604 = vmatpush1.xpose.msra.mxu0 0.0
      %2605 = vmatprep.subr.mxu0 0.0
      %2606 = vmatpush1.xpose.msra.mxu0 0.0
      %2607 = vmatprep.subr.mxu0 0.0
      %2608 = vmatpush1.xpose.msra.mxu0 0.0
      %2609 = vmatprep.subr.mxu0 0.0
      %2610 = vmatpush1.xpose.msra.mxu0 0.0
      %2611 = vmatprep.subr.mxu0 0.0
      %2612 = vmatpush1.xpose.msra.mxu0 0.0
      %2613 = vmatprep.subr.mxu0 0.0
      %2614 = vmatpush1.xpose.msra.mxu0 0.0
      %2615 = vmatprep.subr.mxu0 0.0
      %2616 = vmatpush1.xpose.msra.mxu0 0.0
      %2617 = vmatprep.subr.mxu0 0.0
      %2618 = vmatpush1.xpose.msra.mxu0 0.0
      %2619 = vmatprep.subr.mxu0 0.0
      %2620 = vmatpush1.xpose.msra.mxu0 0.0
      %2621 = vmatprep.subr.mxu0 0.0
      %2622 = vmatpush1.xpose.msra.mxu0 0.0
      %2623 = vmatprep.subr.mxu0 0.0
      %2624 = vmatpush1.xpose.msra.mxu0 0.0
      %2625 = vmatprep.subr.mxu0 0.0
      %2626 = vmatpush1.xpose.msra.mxu0 0.0
      %2627 = vmatprep.subr.mxu0 0.0
      %2628 = vmatpush1.xpose.msra.mxu0 0.0
      %2629 = vmatprep.subr.mxu0 0.0
      %2630 = vmatpush1.xpose.msra.mxu0 0.0
      %2631 = vmatprep.subr.mxu0 0.0
      %2632 = vmatpush1.xpose.msra.mxu0 %v2601
      %2633 = vmatprep.subr.mxu0 0.0
      %2634 = vmatpush1.xpose.msra.mxu0 %v2599
      %2635 = vmatprep.subr.mxu0 0.0
      %2636 = vmatpush2.xpose.msra.mxu0 0.0
      %2637 = vmatprep.subr.mxu0 0.0
      %2638 = vmatpush2.xpose.msra.mxu0 0.0
      %2639 = vmatprep.subr.mxu0 0.0
      %2640 = vmatpush2.xpose.msra.mxu0 0.0
      %2641 = vmatprep.subr.mxu0 0.0
      %2642 = vmatpush2.xpose.msra.mxu0 0.0
      %2643 = vmatprep.subr.mxu0 0.0
      %2644 = vmatpush2.xpose.msra.mxu0 0.0
      %2645 = vmatprep.subr.mxu0 0.0
      %2646 = vmatpush2.xpose.msra.mxu0 0.0
      %2647 = vmatprep.subr.mxu0 0.0
      %2648 = vmatpush2.xpose.msra.mxu0 0.0
      %2649 = vmatprep.subr.mxu0 0.0
      %2650 = vmatpush2.xpose.msra.mxu0 0.0
      %2651 = vmatprep.subr.mxu0 0.0
      %2652 = vmatpush2.xpose.msra.mxu0 0.0
      %2653 = vmatprep.subr.mxu0 0.0
      %2654 = vmatpush2.xpose.msra.mxu0 0.0
      %2655 = vmatprep.subr.mxu0 0.0
      %2656 = vmatpush2.xpose.msra.mxu0 0.0
      %2657 = vmatprep.subr.mxu0 0.0
      %2658 = vmatpush2.xpose.msra.mxu0 0.0
      %2659 = vmatprep.subr.mxu0 0.0
      %2660 = vmatpush2.xpose.msra.mxu0 0.0
      %2661 = vmatprep.subr.mxu0 0.0
      %2662 = vmatpush2.xpose.msra.mxu0 0.0
      %2663 = vmatprep.subr.mxu0 0.0
      %2664 = vmatpush2.xpose.msra.mxu0 0.0
      %2665 = vmatprep.subr.mxu0 0.0
      %2666 = vmatpush2.xpose.msra.mxu0 0.0
      %2667 = vmatprep.mubr.f32.mxu0 0.0
      %2668 = vmatmul.mubr.f32.gmra.mxu0 %v2595
      %v2669 = vpop.f32.mrf.mxu0
      %v2670 = vadd.f32 0.0, %v2669
      %v2671 = vpop.f32.mrf.mxu0
      %2672 = vmatprep.mubr.f32.mxu0 0.0
      %2673 = vmatmul.mubr.f32.gmra.mxu0 %v2597
      %v2674 = vpop.f32.mrf.mxu0
      %v2675 = vadd.f32 0.0, %v2674
      %v2676 = vpop.f32.mrf.mxu0
      %2677 = vdwg.mxu0
      %2678 = vrot.lane.b32.xlu0 %v836, 120
      %v2679 = vpop.permute.xlu0 %2678
      %2680 = vrot.lane.b32.xlu0 %v841, 120
      %v2681 = vpop.permute.xlu0 %2680
      %2682 = vrot.lane.b32.xlu0 %v836, 88
      %v2683 = vpop.permute.xlu0 %2682
      %2684 = vrot.lane.b32.xlu0 %v841, 88
      %v2685 = vpop.permute.xlu0 %2684
      %v2686 = vsel %vm900, %v2679, 0
      %v2688 = vsel %vm900, %v2681, 0
      %v2690 = vsel %vm900, %v2683, 0
      %v2692 = vsel %vm900, %v2685, 0
      %2694 = vmatprep.subr.mxu0 0.0
      %2695 = vmatpush1.xpose.msra.mxu0 0.0
      %2696 = vmatprep.subr.mxu0 0.0
      %2697 = vmatpush1.xpose.msra.mxu0 0.0
      %2698 = vmatprep.subr.mxu0 0.0
      %2699 = vmatpush1.xpose.msra.mxu0 0.0
      %2700 = vmatprep.subr.mxu0 0.0
      %2701 = vmatpush1.xpose.msra.mxu0 0.0
      %2702 = vmatprep.subr.mxu0 0.0
      %2703 = vmatpush1.xpose.msra.mxu0 0.0
      %2704 = vmatprep.subr.mxu0 0.0
      %2705 = vmatpush1.xpose.msra.mxu0 0.0
      %2706 = vmatprep.subr.mxu0 0.0
      %2707 = vmatpush1.xpose.msra.mxu0 0.0
      %2708 = vmatprep.subr.mxu0 0.0
      %2709 = vmatpush1.xpose.msra.mxu0 0.0
      %2710 = vmatprep.subr.mxu0 0.0
      %2711 = vmatpush1.xpose.msra.mxu0 0.0
      %2712 = vmatprep.subr.mxu0 0.0
      %2713 = vmatpush1.xpose.msra.mxu0 0.0
      %2714 = vmatprep.subr.mxu0 0.0
      %2715 = vmatpush1.xpose.msra.mxu0 0.0
      %2716 = vmatprep.subr.mxu0 0.0
      %2717 = vmatpush1.xpose.msra.mxu0 0.0
      %2718 = vmatprep.subr.mxu0 0.0
      %2719 = vmatpush1.xpose.msra.mxu0 0.0
      %2720 = vmatprep.subr.mxu0 0.0
      %2721 = vmatpush1.xpose.msra.mxu0 0.0
      %2722 = vmatprep.subr.mxu0 0.0
      %2723 = vmatpush1.xpose.msra.mxu0 %v2692
      %2724 = vmatprep.subr.mxu0 0.0
      %2725 = vmatpush1.xpose.msra.mxu0 %v2690
      %2726 = vmatprep.subr.mxu0 0.0
      %2727 = vmatpush2.xpose.msra.mxu0 0.0
      %2728 = vmatprep.subr.mxu0 0.0
      %2729 = vmatpush2.xpose.msra.mxu0 0.0
      %2730 = vmatprep.subr.mxu0 0.0
      %2731 = vmatpush2.xpose.msra.mxu0 0.0
      %2732 = vmatprep.subr.mxu0 0.0
      %2733 = vmatpush2.xpose.msra.mxu0 0.0
      %2734 = vmatprep.subr.mxu0 0.0
      %2735 = vmatpush2.xpose.msra.mxu0 0.0
      %2736 = vmatprep.subr.mxu0 0.0
      %2737 = vmatpush2.xpose.msra.mxu0 0.0
      %2738 = vmatprep.subr.mxu0 0.0
      %2739 = vmatpush2.xpose.msra.mxu0 0.0
      %2740 = vmatprep.subr.mxu0 0.0
      %2741 = vmatpush2.xpose.msra.mxu0 0.0
      %2742 = vmatprep.subr.mxu0 0.0
      %2743 = vmatpush2.xpose.msra.mxu0 0.0
      %2744 = vmatprep.subr.mxu0 0.0
      %2745 = vmatpush2.xpose.msra.mxu0 0.0
      %2746 = vmatprep.subr.mxu0 0.0
      %2747 = vmatpush2.xpose.msra.mxu0 0.0
      %2748 = vmatprep.subr.mxu0 0.0
      %2749 = vmatpush2.xpose.msra.mxu0 0.0
      %2750 = vmatprep.subr.mxu0 0.0
      %2751 = vmatpush2.xpose.msra.mxu0 0.0
      %2752 = vmatprep.subr.mxu0 0.0
      %2753 = vmatpush2.xpose.msra.mxu0 0.0
      %2754 = vmatprep.subr.mxu0 0.0
      %2755 = vmatpush2.xpose.msra.mxu0 0.0
      %2756 = vmatprep.subr.mxu0 0.0
      %2757 = vmatpush2.xpose.msra.mxu0 0.0
      %2758 = vmatprep.mubr.f32.mxu0 0.0
      %2759 = vmatmul.mubr.f32.gmra.mxu0 %v2686
      %v2760 = vpop.f32.mrf.mxu0
      %v2761 = vadd.f32 0.0, %v2760
      %v2762 = vpop.f32.mrf.mxu0
      %2763 = vmatprep.mubr.f32.mxu0 0.0
      %2764 = vmatmul.mubr.f32.gmra.mxu0 %v2688
      %v2765 = vpop.f32.mrf.mxu0
      %v2766 = vadd.f32 0.0, %v2765
      %v2767 = vpop.f32.mrf.mxu0
      %2768 = vdwg.mxu0
      %2769 = vrot.lane.b32.xlu0 %v846, 120
      %v2770 = vpop.permute.xlu0 %2769
      %2771 = vrot.lane.b32.xlu0 %v851, 120
      %v2772 = vpop.permute.xlu0 %2771
      %2773 = vrot.lane.b32.xlu0 %v846, 88
      %v2774 = vpop.permute.xlu0 %2773
      %2775 = vrot.lane.b32.xlu0 %v851, 88
      %v2776 = vpop.permute.xlu0 %2775
      %v2777 = vsel %vm900, %v2770, 0
      %v2779 = vsel %vm900, %v2772, 0
      %v2781 = vsel %vm900, %v2774, 0
      %v2783 = vsel %vm900, %v2776, 0
      %2785 = vmatprep.subr.mxu0 0.0
      %2786 = vmatpush1.xpose.msra.mxu0 0.0
      %2787 = vmatprep.subr.mxu0 0.0
      %2788 = vmatpush1.xpose.msra.mxu0 0.0
      %2789 = vmatprep.subr.mxu0 0.0
      %2790 = vmatpush1.xpose.msra.mxu0 0.0
      %2791 = vmatprep.subr.mxu0 0.0
      %2792 = vmatpush1.xpose.msra.mxu0 0.0
      %2793 = vmatprep.subr.mxu0 0.0
      %2794 = vmatpush1.xpose.msra.mxu0 0.0
      %2795 = vmatprep.subr.mxu0 0.0
      %2796 = vmatpush1.xpose.msra.mxu0 0.0
      %2797 = vmatprep.subr.mxu0 0.0
      %2798 = vmatpush1.xpose.msra.mxu0 0.0
      %2799 = vmatprep.subr.mxu0 0.0
      %2800 = vmatpush1.xpose.msra.mxu0 0.0
      %2801 = vmatprep.subr.mxu0 0.0
      %2802 = vmatpush1.xpose.msra.mxu0 0.0
      %2803 = vmatprep.subr.mxu0 0.0
      %2804 = vmatpush1.xpose.msra.mxu0 0.0
      %2805 = vmatprep.subr.mxu0 0.0
      %2806 = vmatpush1.xpose.msra.mxu0 0.0
      %2807 = vmatprep.subr.mxu0 0.0
      %2808 = vmatpush1.xpose.msra.mxu0 0.0
      %2809 = vmatprep.subr.mxu0 0.0
      %2810 = vmatpush1.xpose.msra.mxu0 0.0
      %2811 = vmatprep.subr.mxu0 0.0
      %2812 = vmatpush1.xpose.msra.mxu0 0.0
      %2813 = vmatprep.subr.mxu0 0.0
      %2814 = vmatpush1.xpose.msra.mxu0 %v2783
      %2815 = vmatprep.subr.mxu0 0.0
      %2816 = vmatpush1.xpose.msra.mxu0 %v2781
      %2817 = vmatprep.subr.mxu0 0.0
      %2818 = vmatpush2.xpose.msra.mxu0 0.0
      %2819 = vmatprep.subr.mxu0 0.0
      %2820 = vmatpush2.xpose.msra.mxu0 0.0
      %2821 = vmatprep.subr.mxu0 0.0
      %2822 = vmatpush2.xpose.msra.mxu0 0.0
      %2823 = vmatprep.subr.mxu0 0.0
      %2824 = vmatpush2.xpose.msra.mxu0 0.0
      %2825 = vmatprep.subr.mxu0 0.0
      %2826 = vmatpush2.xpose.msra.mxu0 0.0
      %2827 = vmatprep.subr.mxu0 0.0
      %2828 = vmatpush2.xpose.msra.mxu0 0.0
      %2829 = vmatprep.subr.mxu0 0.0
      %2830 = vmatpush2.xpose.msra.mxu0 0.0
      %2831 = vmatprep.subr.mxu0 0.0
      %2832 = vmatpush2.xpose.msra.mxu0 0.0
      %2833 = vmatprep.subr.mxu0 0.0
      %2834 = vmatpush2.xpose.msra.mxu0 0.0
      %2835 = vmatprep.subr.mxu0 0.0
      %2836 = vmatpush2.xpose.msra.mxu0 0.0
      %2837 = vmatprep.subr.mxu0 0.0
      %2838 = vmatpush2.xpose.msra.mxu0 0.0
      %2839 = vmatprep.subr.mxu0 0.0
      %2840 = vmatpush2.xpose.msra.mxu0 0.0
      %2841 = vmatprep.subr.mxu0 0.0
      %2842 = vmatpush2.xpose.msra.mxu0 0.0
      %2843 = vmatprep.subr.mxu0 0.0
      %2844 = vmatpush2.xpose.msra.mxu0 0.0
      %2845 = vmatprep.subr.mxu0 0.0
      %2846 = vmatpush2.xpose.msra.mxu0 0.0
      %2847 = vmatprep.subr.mxu0 0.0
      %2848 = vmatpush2.xpose.msra.mxu0 0.0
      %2849 = vmatprep.mubr.f32.mxu0 0.0
      %2850 = vmatmul.mubr.f32.gmra.mxu0 %v2777
      %v2851 = vpop.f32.mrf.mxu0
      %v2852 = vadd.f32 0.0, %v2851
      %v2853 = vpop.f32.mrf.mxu0
      %2854 = vmatprep.mubr.f32.mxu0 0.0
      %2855 = vmatmul.mubr.f32.gmra.mxu0 %v2779
      %v2856 = vpop.f32.mrf.mxu0
      %v2857 = vadd.f32 0.0, %v2856
      %v2858 = vpop.f32.mrf.mxu0
      %2859 = vdwg.mxu0
      %2860 = vrot.lane.b32.xlu0 %v856, 120
      %v2861 = vpop.permute.xlu0 %2860
      %2862 = vrot.lane.b32.xlu0 %v861, 120
      %v2863 = vpop.permute.xlu0 %2862
      %2864 = vrot.lane.b32.xlu0 %v856, 88
      %v2865 = vpop.permute.xlu0 %2864
      %2866 = vrot.lane.b32.xlu0 %v861, 88
      %v2867 = vpop.permute.xlu0 %2866
      %v2868 = vsel %vm900, %v2861, 0
      %v2870 = vsel %vm900, %v2863, 0
      %v2872 = vsel %vm900, %v2865, 0
      %v2874 = vsel %vm900, %v2867, 0
      %2876 = vmatprep.subr.mxu0 0.0
      %2877 = vmatpush1.xpose.msra.mxu0 0.0
      %2878 = vmatprep.subr.mxu0 0.0
      %2879 = vmatpush1.xpose.msra.mxu0 0.0
      %2880 = vmatprep.subr.mxu0 0.0
      %2881 = vmatpush1.xpose.msra.mxu0 0.0
      %2882 = vmatprep.subr.mxu0 0.0
      %2883 = vmatpush1.xpose.msra.mxu0 0.0
      %2884 = vmatprep.subr.mxu0 0.0
      %2885 = vmatpush1.xpose.msra.mxu0 0.0
      %2886 = vmatprep.subr.mxu0 0.0
      %2887 = vmatpush1.xpose.msra.mxu0 0.0
      %2888 = vmatprep.subr.mxu0 0.0
      %2889 = vmatpush1.xpose.msra.mxu0 0.0
      %2890 = vmatprep.subr.mxu0 0.0
      %2891 = vmatpush1.xpose.msra.mxu0 0.0
      %2892 = vmatprep.subr.mxu0 0.0
      %2893 = vmatpush1.xpose.msra.mxu0 0.0
      %2894 = vmatprep.subr.mxu0 0.0
      %2895 = vmatpush1.xpose.msra.mxu0 0.0
      %2896 = vmatprep.subr.mxu0 0.0
      %2897 = vmatpush1.xpose.msra.mxu0 0.0
      %2898 = vmatprep.subr.mxu0 0.0
      %2899 = vmatpush1.xpose.msra.mxu0 0.0
      %2900 = vmatprep.subr.mxu0 0.0
      %2901 = vmatpush1.xpose.msra.mxu0 0.0
      %2902 = vmatprep.subr.mxu0 0.0
      %2903 = vmatpush1.xpose.msra.mxu0 0.0
      %2904 = vmatprep.subr.mxu0 0.0
      %2905 = vmatpush1.xpose.msra.mxu0 %v2874
      %2906 = vmatprep.subr.mxu0 0.0
      %2907 = vmatpush1.xpose.msra.mxu0 %v2872
      %2908 = vmatprep.subr.mxu0 0.0
      %2909 = vmatpush2.xpose.msra.mxu0 0.0
      %2910 = vmatprep.subr.mxu0 0.0
      %2911 = vmatpush2.xpose.msra.mxu0 0.0
      %2912 = vmatprep.subr.mxu0 0.0
      %2913 = vmatpush2.xpose.msra.mxu0 0.0
      %2914 = vmatprep.subr.mxu0 0.0
      %2915 = vmatpush2.xpose.msra.mxu0 0.0
      %2916 = vmatprep.subr.mxu0 0.0
      %2917 = vmatpush2.xpose.msra.mxu0 0.0
      %2918 = vmatprep.subr.mxu0 0.0
      %2919 = vmatpush2.xpose.msra.mxu0 0.0
      %2920 = vmatprep.subr.mxu0 0.0
      %2921 = vmatpush2.xpose.msra.mxu0 0.0
      %2922 = vmatprep.subr.mxu0 0.0
      %2923 = vmatpush2.xpose.msra.mxu0 0.0
      %2924 = vmatprep.subr.mxu0 0.0
      %2925 = vmatpush2.xpose.msra.mxu0 0.0
      %2926 = vmatprep.subr.mxu0 0.0
      %2927 = vmatpush2.xpose.msra.mxu0 0.0
      %2928 = vmatprep.subr.mxu0 0.0
      %2929 = vmatpush2.xpose.msra.mxu0 0.0
      %2930 = vmatprep.subr.mxu0 0.0
      %2931 = vmatpush2.xpose.msra.mxu0 0.0
      %2932 = vmatprep.subr.mxu0 0.0
      %2933 = vmatpush2.xpose.msra.mxu0 0.0
      %2934 = vmatprep.subr.mxu0 0.0
      %2935 = vmatpush2.xpose.msra.mxu0 0.0
      %2936 = vmatprep.subr.mxu0 0.0
      %2937 = vmatpush2.xpose.msra.mxu0 0.0
      %2938 = vmatprep.subr.mxu0 0.0
      %2939 = vmatpush2.xpose.msra.mxu0 0.0
      %2940 = vmatprep.mubr.f32.mxu0 0.0
      %2941 = vmatmul.mubr.f32.gmra.mxu0 %v2868
      %v2942 = vpop.f32.mrf.mxu0
      %v2943 = vadd.f32 0.0, %v2942
      %v2944 = vpop.f32.mrf.mxu0
      %2945 = vmatprep.mubr.f32.mxu0 0.0
      %2946 = vmatmul.mubr.f32.gmra.mxu0 %v2870
      %v2947 = vpop.f32.mrf.mxu0
      %v2948 = vadd.f32 0.0, %v2947
      %v2949 = vpop.f32.mrf.mxu0
      %2950 = vdwg.mxu0
      %2951 = vrot.lane.b32.xlu0 %v866, 120
      %v2952 = vpop.permute.xlu0 %2951
      %2953 = vrot.lane.b32.xlu0 %v871, 120
      %v2954 = vpop.permute.xlu0 %2953
      %2955 = vrot.lane.b32.xlu0 %v866, 88
      %v2956 = vpop.permute.xlu0 %2955
      %2957 = vrot.lane.b32.xlu0 %v871, 88
      %v2958 = vpop.permute.xlu0 %2957
      %v2959 = vsel %vm900, %v2952, 0
      %v2961 = vsel %vm900, %v2954, 0
      %v2963 = vsel %vm900, %v2956, 0
      %v2965 = vsel %vm900, %v2958, 0
      %2967 = vmatprep.subr.mxu0 0.0
      %2968 = vmatpush1.xpose.msra.mxu0 0.0
      %2969 = vmatprep.subr.mxu0 0.0
      %2970 = vmatpush1.xpose.msra.mxu0 0.0
      %2971 = vmatprep.subr.mxu0 0.0
      %2972 = vmatpush1.xpose.msra.mxu0 0.0
      %2973 = vmatprep.subr.mxu0 0.0
      %2974 = vmatpush1.xpose.msra.mxu0 0.0
      %2975 = vmatprep.subr.mxu0 0.0
      %2976 = vmatpush1.xpose.msra.mxu0 0.0
      %2977 = vmatprep.subr.mxu0 0.0
      %2978 = vmatpush1.xpose.msra.mxu0 0.0
      %2979 = vmatprep.subr.mxu0 0.0
      %2980 = vmatpush1.xpose.msra.mxu0 0.0
      %2981 = vmatprep.subr.mxu0 0.0
      %2982 = vmatpush1.xpose.msra.mxu0 0.0
      %2983 = vmatprep.subr.mxu0 0.0
      %2984 = vmatpush1.xpose.msra.mxu0 0.0
      %2985 = vmatprep.subr.mxu0 0.0
      %2986 = vmatpush1.xpose.msra.mxu0 0.0
      %2987 = vmatprep.subr.mxu0 0.0
      %2988 = vmatpush1.xpose.msra.mxu0 0.0
      %2989 = vmatprep.subr.mxu0 0.0
      %2990 = vmatpush1.xpose.msra.mxu0 0.0
      %2991 = vmatprep.subr.mxu0 0.0
      %2992 = vmatpush1.xpose.msra.mxu0 0.0
      %2993 = vmatprep.subr.mxu0 0.0
      %2994 = vmatpush1.xpose.msra.mxu0 0.0
      %2995 = vmatprep.subr.mxu0 0.0
      %2996 = vmatpush1.xpose.msra.mxu0 %v2965
      %2997 = vmatprep.subr.mxu0 0.0
      %2998 = vmatpush1.xpose.msra.mxu0 %v2963
      %2999 = vmatprep.subr.mxu0 0.0
      %3000 = vmatpush2.xpose.msra.mxu0 0.0
      %3001 = vmatprep.subr.mxu0 0.0
      %3002 = vmatpush2.xpose.msra.mxu0 0.0
      %3003 = vmatprep.subr.mxu0 0.0
      %3004 = vmatpush2.xpose.msra.mxu0 0.0
      %3005 = vmatprep.subr.mxu0 0.0
      %3006 = vmatpush2.xpose.msra.mxu0 0.0
      %3007 = vmatprep.subr.mxu0 0.0
      %3008 = vmatpush2.xpose.msra.mxu0 0.0
      %3009 = vmatprep.subr.mxu0 0.0
      %3010 = vmatpush2.xpose.msra.mxu0 0.0
      %3011 = vmatprep.subr.mxu0 0.0
      %3012 = vmatpush2.xpose.msra.mxu0 0.0
      %3013 = vmatprep.subr.mxu0 0.0
      %3014 = vmatpush2.xpose.msra.mxu0 0.0
      %3015 = vmatprep.subr.mxu0 0.0
      %3016 = vmatpush2.xpose.msra.mxu0 0.0
      %3017 = vmatprep.subr.mxu0 0.0
      %3018 = vmatpush2.xpose.msra.mxu0 0.0
      %3019 = vmatprep.subr.mxu0 0.0
      %3020 = vmatpush2.xpose.msra.mxu0 0.0
      %3021 = vmatprep.subr.mxu0 0.0
      %3022 = vmatpush2.xpose.msra.mxu0 0.0
      %3023 = vmatprep.subr.mxu0 0.0
      %3024 = vmatpush2.xpose.msra.mxu0 0.0
      %3025 = vmatprep.subr.mxu0 0.0
      %3026 = vmatpush2.xpose.msra.mxu0 0.0
      %3027 = vmatprep.subr.mxu0 0.0
      %3028 = vmatpush2.xpose.msra.mxu0 0.0
      %3029 = vmatprep.subr.mxu0 0.0
      %3030 = vmatpush2.xpose.msra.mxu0 0.0
      %3031 = vmatprep.mubr.f32.mxu0 0.0
      %3032 = vmatmul.mubr.f32.gmra.mxu0 %v2959
      %v3033 = vpop.f32.mrf.mxu0
      %v3034 = vadd.f32 0.0, %v3033
      %v3035 = vpop.f32.mrf.mxu0
      %3036 = vmatprep.mubr.f32.mxu0 0.0
      %3037 = vmatmul.mubr.f32.gmra.mxu0 %v2961
      %v3038 = vpop.f32.mrf.mxu0
      %v3039 = vadd.f32 0.0, %v3038
      %v3040 = vpop.f32.mrf.mxu0
      %3041 = vdwg.mxu0
      %3042 = vrot.lane.b32.xlu0 %v876, 120
      %v3043 = vpop.permute.xlu0 %3042
      %3044 = vrot.lane.b32.xlu0 %v881, 120
      %v3045 = vpop.permute.xlu0 %3044
      %3046 = vrot.lane.b32.xlu0 %v876, 88
      %v3047 = vpop.permute.xlu0 %3046
      %3048 = vrot.lane.b32.xlu0 %v881, 88
      %v3049 = vpop.permute.xlu0 %3048
      %v3050 = vsel %vm900, %v3043, 0
      %v3052 = vsel %vm900, %v3045, 0
      %v3054 = vsel %vm900, %v3047, 0
      %v3056 = vsel %vm900, %v3049, 0
      %3058 = vmatprep.subr.mxu0 0.0
      %3059 = vmatpush1.xpose.msra.mxu0 0.0
      %3060 = vmatprep.subr.mxu0 0.0
      %3061 = vmatpush1.xpose.msra.mxu0 0.0
      %3062 = vmatprep.subr.mxu0 0.0
      %3063 = vmatpush1.xpose.msra.mxu0 0.0
      %3064 = vmatprep.subr.mxu0 0.0
      %3065 = vmatpush1.xpose.msra.mxu0 0.0
      %3066 = vmatprep.subr.mxu0 0.0
      %3067 = vmatpush1.xpose.msra.mxu0 0.0
      %3068 = vmatprep.subr.mxu0 0.0
      %3069 = vmatpush1.xpose.msra.mxu0 0.0
      %3070 = vmatprep.subr.mxu0 0.0
      %3071 = vmatpush1.xpose.msra.mxu0 0.0
      %3072 = vmatprep.subr.mxu0 0.0
      %3073 = vmatpush1.xpose.msra.mxu0 0.0
      %3074 = vmatprep.subr.mxu0 0.0
      %3075 = vmatpush1.xpose.msra.mxu0 0.0
      %3076 = vmatprep.subr.mxu0 0.0
      %3077 = vmatpush1.xpose.msra.mxu0 0.0
      %3078 = vmatprep.subr.mxu0 0.0
      %3079 = vmatpush1.xpose.msra.mxu0 0.0
      %3080 = vmatprep.subr.mxu0 0.0
      %3081 = vmatpush1.xpose.msra.mxu0 0.0
      %3082 = vmatprep.subr.mxu0 0.0
      %3083 = vmatpush1.xpose.msra.mxu0 0.0
      %3084 = vmatprep.subr.mxu0 0.0
      %3085 = vmatpush1.xpose.msra.mxu0 0.0
      %3086 = vmatprep.subr.mxu0 0.0
      %3087 = vmatpush1.xpose.msra.mxu0 %v3056
      %3088 = vmatprep.subr.mxu0 0.0
      %3089 = vmatpush1.xpose.msra.mxu0 %v3054
      %3090 = vmatprep.subr.mxu0 0.0
      %3091 = vmatpush2.xpose.msra.mxu0 0.0
      %3092 = vmatprep.subr.mxu0 0.0
      %3093 = vmatpush2.xpose.msra.mxu0 0.0
      %3094 = vmatprep.subr.mxu0 0.0
      %3095 = vmatpush2.xpose.msra.mxu0 0.0
      %3096 = vmatprep.subr.mxu0 0.0
      %3097 = vmatpush2.xpose.msra.mxu0 0.0
      %3098 = vmatprep.subr.mxu0 0.0
      %3099 = vmatpush2.xpose.msra.mxu0 0.0
      %3100 = vmatprep.subr.mxu0 0.0
      %3101 = vmatpush2.xpose.msra.mxu0 0.0
      %3102 = vmatprep.subr.mxu0 0.0
      %3103 = vmatpush2.xpose.msra.mxu0 0.0
      %3104 = vmatprep.subr.mxu0 0.0
      %3105 = vmatpush2.xpose.msra.mxu0 0.0
      %3106 = vmatprep.subr.mxu0 0.0
      %3107 = vmatpush2.xpose.msra.mxu0 0.0
      %3108 = vmatprep.subr.mxu0 0.0
      %3109 = vmatpush2.xpose.msra.mxu0 0.0
      %3110 = vmatprep.subr.mxu0 0.0
      %3111 = vmatpush2.xpose.msra.mxu0 0.0
      %3112 = vmatprep.subr.mxu0 0.0
      %3113 = vmatpush2.xpose.msra.mxu0 0.0
      %3114 = vmatprep.subr.mxu0 0.0
      %3115 = vmatpush2.xpose.msra.mxu0 0.0
      %3116 = vmatprep.subr.mxu0 0.0
      %3117 = vmatpush2.xpose.msra.mxu0 0.0
      %3118 = vmatprep.subr.mxu0 0.0
      %3119 = vmatpush2.xpose.msra.mxu0 0.0
      %3120 = vmatprep.subr.mxu0 0.0
      %3121 = vmatpush2.xpose.msra.mxu0 0.0
      %3122 = vmatprep.mubr.f32.mxu0 0.0
      %3123 = vmatmul.mubr.f32.gmra.mxu0 %v3050
      %v3124 = vpop.f32.mrf.mxu0
      %v3125 = vadd.f32 0.0, %v3124
      %v3126 = vpop.f32.mrf.mxu0
      %3127 = vmatprep.mubr.f32.mxu0 0.0
      %3128 = vmatmul.mubr.f32.gmra.mxu0 %v3052
      %v3129 = vpop.f32.mrf.mxu0
      %v3130 = vadd.f32 0.0, %v3129
      %v3131 = vpop.f32.mrf.mxu0
      %3132 = vdwg.mxu0
      %3133 = vrot.lane.b32.xlu0 %v886, 120
      %v3134 = vpop.permute.xlu0 %3133
      %3135 = vrot.lane.b32.xlu0 %v891, 120
      %v3136 = vpop.permute.xlu0 %3135
      %3137 = vrot.lane.b32.xlu0 %v886, 88
      %v3138 = vpop.permute.xlu0 %3137
      %3139 = vrot.lane.b32.xlu0 %v891, 88
      %v3140 = vpop.permute.xlu0 %3139
      %v3141 = vsel %vm900, %v3134, 0
      %v3143 = vsel %vm900, %v3136, 0
      %v3145 = vsel %vm900, %v3138, 0
      %v3147 = vsel %vm900, %v3140, 0
      %3149 = vmatprep.subr.mxu0 0.0
      %3150 = vmatpush1.xpose.msra.mxu0 0.0
      %3151 = vmatprep.subr.mxu0 0.0
      %3152 = vmatpush1.xpose.msra.mxu0 0.0
      %3153 = vmatprep.subr.mxu0 0.0
      %3154 = vmatpush1.xpose.msra.mxu0 0.0
      %3155 = vmatprep.subr.mxu0 0.0
      %3156 = vmatpush1.xpose.msra.mxu0 0.0
      %3157 = vmatprep.subr.mxu0 0.0
      %3158 = vmatpush1.xpose.msra.mxu0 0.0
      %3159 = vmatprep.subr.mxu0 0.0
      %3160 = vmatpush1.xpose.msra.mxu0 0.0
      %3161 = vmatprep.subr.mxu0 0.0
      %3162 = vmatpush1.xpose.msra.mxu0 0.0
      %3163 = vmatprep.subr.mxu0 0.0
      %3164 = vmatpush1.xpose.msra.mxu0 0.0
      %3165 = vmatprep.subr.mxu0 0.0
      %3166 = vmatpush1.xpose.msra.mxu0 0.0
      %3167 = vmatprep.subr.mxu0 0.0
      %3168 = vmatpush1.xpose.msra.mxu0 0.0
      %3169 = vmatprep.subr.mxu0 0.0
      %3170 = vmatpush1.xpose.msra.mxu0 0.0
      %3171 = vmatprep.subr.mxu0 0.0
      %3172 = vmatpush1.xpose.msra.mxu0 0.0
      %3173 = vmatprep.subr.mxu0 0.0
      %3174 = vmatpush1.xpose.msra.mxu0 0.0
      %3175 = vmatprep.subr.mxu0 0.0
      %3176 = vmatpush1.xpose.msra.mxu0 0.0
      %3177 = vmatprep.subr.mxu0 0.0
      %3178 = vmatpush1.xpose.msra.mxu0 %v3147
      %3179 = vmatprep.subr.mxu0 0.0
      %3180 = vmatpush1.xpose.msra.mxu0 %v3145
      %3181 = vmatprep.subr.mxu0 0.0
      %3182 = vmatpush2.xpose.msra.mxu0 0.0
      %3183 = vmatprep.subr.mxu0 0.0
      %3184 = vmatpush2.xpose.msra.mxu0 0.0
      %3185 = vmatprep.subr.mxu0 0.0
      %3186 = vmatpush2.xpose.msra.mxu0 0.0
      %3187 = vmatprep.subr.mxu0 0.0
      %3188 = vmatpush2.xpose.msra.mxu0 0.0
      %3189 = vmatprep.subr.mxu0 0.0
      %3190 = vmatpush2.xpose.msra.mxu0 0.0
      %3191 = vmatprep.subr.mxu0 0.0
      %3192 = vmatpush2.xpose.msra.mxu0 0.0
      %3193 = vmatprep.subr.mxu0 0.0
      %3194 = vmatpush2.xpose.msra.mxu0 0.0
      %3195 = vmatprep.subr.mxu0 0.0
      %3196 = vmatpush2.xpose.msra.mxu0 0.0
      %3197 = vmatprep.subr.mxu0 0.0
      %3198 = vmatpush2.xpose.msra.mxu0 0.0
      %3199 = vmatprep.subr.mxu0 0.0
      %3200 = vmatpush2.xpose.msra.mxu0 0.0
      %3201 = vmatprep.subr.mxu0 0.0
      %3202 = vmatpush2.xpose.msra.mxu0 0.0
      %3203 = vmatprep.subr.mxu0 0.0
      %3204 = vmatpush2.xpose.msra.mxu0 0.0
      %3205 = vmatprep.subr.mxu0 0.0
      %3206 = vmatpush2.xpose.msra.mxu0 0.0
      %3207 = vmatprep.subr.mxu0 0.0
      %3208 = vmatpush2.xpose.msra.mxu0 0.0
      %3209 = vmatprep.subr.mxu0 0.0
      %3210 = vmatpush2.xpose.msra.mxu0 0.0
      %3211 = vmatprep.subr.mxu0 0.0
      %3212 = vmatpush2.xpose.msra.mxu0 0.0
      %3213 = vmatprep.mubr.f32.mxu0 0.0
      %3214 = vmatmul.mubr.f32.gmra.mxu0 %v3141
      %v3215 = vpop.f32.mrf.mxu0
      %v3216 = vadd.f32 0.0, %v3215
      %v3217 = vpop.f32.mrf.mxu0
      %3218 = vmatprep.mubr.f32.mxu0 0.0
      %3219 = vmatmul.mubr.f32.gmra.mxu0 %v3143
      %v3220 = vpop.f32.mrf.mxu0
      %v3221 = vadd.f32 0.0, %v3220
      %v3222 = vpop.f32.mrf.mxu0
      %3223 = vdwg.mxu0
      %v3224 = vmul.f32 %v2579, 0.35355338
      %v3225 = vmul.f32 %v2584, 0.35355338
      %v3226 = vmul.f32 %v2670, 0.35355338
      %v3227 = vmul.f32 %v2675, 0.35355338
      %v3228 = vmul.f32 %v2761, 0.35355338
      %v3229 = vmul.f32 %v2766, 0.35355338
      %v3230 = vmul.f32 %v2852, 0.35355338
      %v3231 = vmul.f32 %v2857, 0.35355338
      %v3232 = vmul.f32 %v2943, 0.35355338
      %v3233 = vmul.f32 %v2948, 0.35355338
      %v3234 = vmul.f32 %v3034, 0.35355338
      %v3235 = vmul.f32 %v3039, 0.35355338
      %v3236 = vmul.f32 %v3125, 0.35355338
      %v3237 = vmul.f32 %v3130, 0.35355338
      %v3238 = vmul.f32 %v3216, 0.35355338
      %v3239 = vmul.f32 %v3221, 0.35355338
      %v3240 = vsel %vm1623, %v3224, -inf
      %3241 = vmax.xlane.f32.xlu0 %v3240
      %v3242 = vpop.xlane.xlu0 %3241
      %v3243 = vsel %vm1623, %v3225, -inf
      %3244 = vmax.xlane.f32.xlu0 %v3243
      %v3245 = vpop.xlane.xlu0 %3244
      %v3246 = vsel %vm1623, %v3226, -inf
      %3247 = vmax.xlane.f32.xlu0 %v3246
      %v3248 = vpop.xlane.xlu0 %3247
      %v3249 = vsel %vm1623, %v3227, -inf
      %3250 = vmax.xlane.f32.xlu0 %v3249
      %v3251 = vpop.xlane.xlu0 %3250
      %v3252 = vsel %vm1623, %v3228, -inf
      %3253 = vmax.xlane.f32.xlu0 %v3252
      %v3254 = vpop.xlane.xlu0 %3253
      %v3255 = vsel %vm1623, %v3229, -inf
      %3256 = vmax.xlane.f32.xlu0 %v3255
      %v3257 = vpop.xlane.xlu0 %3256
      %v3258 = vsel %vm1623, %v3230, -inf
      %3259 = vmax.xlane.f32.xlu0 %v3258
      %v3260 = vpop.xlane.xlu0 %3259
      %v3261 = vsel %vm1623, %v3231, -inf
      %3262 = vmax.xlane.f32.xlu0 %v3261
      %v3263 = vpop.xlane.xlu0 %3262
      %v3264 = vsel %vm1623, %v3232, -inf
      %3265 = vmax.xlane.f32.xlu0 %v3264
      %v3266 = vpop.xlane.xlu0 %3265
      %v3267 = vsel %vm1623, %v3233, -inf
      %3268 = vmax.xlane.f32.xlu0 %v3267
      %v3269 = vpop.xlane.xlu0 %3268
      %v3270 = vsel %vm1623, %v3234, -inf
      %3271 = vmax.xlane.f32.xlu0 %v3270
      %v3272 = vpop.xlane.xlu0 %3271
      %v3273 = vsel %vm1623, %v3235, -inf
      %3274 = vmax.xlane.f32.xlu0 %v3273
      %v3275 = vpop.xlane.xlu0 %3274
      %v3276 = vsel %vm1623, %v3236, -inf
      %3277 = vmax.xlane.f32.xlu0 %v3276
      %v3278 = vpop.xlane.xlu0 %3277
      %v3279 = vsel %vm1623, %v3237, -inf
      %3280 = vmax.xlane.f32.xlu0 %v3279
      %v3281 = vpop.xlane.xlu0 %3280
      %v3282 = vsel %vm1623, %v3238, -inf
      %3283 = vmax.xlane.f32.xlu0 %v3282
      %v3284 = vpop.xlane.xlu0 %3283
      %v3285 = vsel %vm1623, %v3239, -inf
      %3286 = vmax.xlane.f32.xlu0 %v3285
      %v3287 = vpop.xlane.xlu0 %3286
      %v3288 = vsub.f32 %v3224, %v3242
      %v3289 = vsub.f32 %v3225, %v3245
      %v3290 = vsub.f32 %v3226, %v3248
      %v3291 = vsub.f32 %v3227, %v3251
      %v3292 = vsub.f32 %v3228, %v3254
      %v3293 = vsub.f32 %v3229, %v3257
      %v3294 = vsub.f32 %v3230, %v3260
      %v3295 = vsub.f32 %v3231, %v3263
      %v3296 = vsub.f32 %v3232, %v3266
      %v3297 = vsub.f32 %v3233, %v3269
      %v3298 = vsub.f32 %v3234, %v3272
      %v3299 = vsub.f32 %v3235, %v3275
      %v3300 = vsub.f32 %v3236, %v3278
      %v3301 = vsub.f32 %v3237, %v3281
      %v3302 = vsub.f32 %v3238, %v3284
      %v3303 = vsub.f32 %v3239, %v3287
      %v3304 = vmul.f32 %v3288, 1.442695
      %v3305 = vpow.pop %v3304
      %v3306 = vmul.f32 %v3289, 1.442695
      %v3307 = vpow.pop %v3306
      %v3308 = vmul.f32 %v3290, 1.442695
      %v3309 = vpow.pop %v3308
      %v3310 = vmul.f32 %v3291, 1.442695
      %v3311 = vpow.pop %v3310
      %v3312 = vmul.f32 %v3292, 1.442695
      %v3313 = vpow.pop %v3312
      %v3314 = vmul.f32 %v3293, 1.442695
      %v3315 = vpow.pop %v3314
      %v3316 = vmul.f32 %v3294, 1.442695
      %v3317 = vpow.pop %v3316
      %v3318 = vmul.f32 %v3295, 1.442695
      %v3319 = vpow.pop %v3318
      %v3320 = vmul.f32 %v3296, 1.442695
      %v3321 = vpow.pop %v3320
      %v3322 = vmul.f32 %v3297, 1.442695
      %v3323 = vpow.pop %v3322
      %v3324 = vmul.f32 %v3298, 1.442695
      %v3325 = vpow.pop %v3324
      %v3326 = vmul.f32 %v3299, 1.442695
      %v3327 = vpow.pop %v3326
      %v3328 = vmul.f32 %v3300, 1.442695
      %v3329 = vpow.pop %v3328
      %v3330 = vmul.f32 %v3301, 1.442695
      %v3331 = vpow.pop %v3330
      %v3332 = vmul.f32 %v3302, 1.442695
      %v3333 = vpow.pop %v3332
      %v3334 = vmul.f32 %v3303, 1.442695
      %v3335 = vpow.pop %v3334
      %v3336 = vsel %vm1623, %v3305, 0.0
      %3337 = vadd.xlane.f32.xlu0 %v3336
      %v3338 = vpop.xlane.xlu0 %3337
      %v3339 = vsel %vm1623, %v3307, 0.0
      %3340 = vadd.xlane.f32.xlu0 %v3339
      %v3341 = vpop.xlane.xlu0 %3340
      %v3342 = vsel %vm1623, %v3309, 0.0
      %3343 = vadd.xlane.f32.xlu0 %v3342
      %v3344 = vpop.xlane.xlu0 %3343
      %v3345 = vsel %vm1623, %v3311, 0.0
      %3346 = vadd.xlane.f32.xlu0 %v3345
      %v3347 = vpop.xlane.xlu0 %3346
      %v3348 = vsel %vm1623, %v3313, 0.0
      %3349 = vadd.xlane.f32.xlu0 %v3348
      %v3350 = vpop.xlane.xlu0 %3349
      %v3351 = vsel %vm1623, %v3315, 0.0
      %3352 = vadd.xlane.f32.xlu0 %v3351
      %v3353 = vpop.xlane.xlu0 %3352
      %v3354 = vsel %vm1623, %v3317, 0.0
      %3355 = vadd.xlane.f32.xlu0 %v3354
      %v3356 = vpop.xlane.xlu0 %3355
      %v3357 = vsel %vm1623, %v3319, 0.0
      %3358 = vadd.xlane.f32.xlu0 %v3357
      %v3359 = vpop.xlane.xlu0 %3358
      %v3360 = vsel %vm1623, %v3321, 0.0
      %3361 = vadd.xlane.f32.xlu0 %v3360
      %v3362 = vpop.xlane.xlu0 %3361
      %v3363 = vsel %vm1623, %v3323, 0.0
      %3364 = vadd.xlane.f32.xlu0 %v3363
      %v3365 = vpop.xlane.xlu0 %3364
      %v3366 = vsel %vm1623, %v3325, 0.0
      %3367 = vadd.xlane.f32.xlu0 %v3366
      %v3368 = vpop.xlane.xlu0 %3367
      %v3369 = vsel %vm1623, %v3327, 0.0
      %3370 = vadd.xlane.f32.xlu0 %v3369
      %v3371 = vpop.xlane.xlu0 %3370
      %v3372 = vsel %vm1623, %v3329, 0.0
      %3373 = vadd.xlane.f32.xlu0 %v3372
      %v3374 = vpop.xlane.xlu0 %3373
      %v3375 = vsel %vm1623, %v3331, 0.0
      %3376 = vadd.xlane.f32.xlu0 %v3375
      %v3377 = vpop.xlane.xlu0 %3376
      %v3378 = vsel %vm1623, %v3333, 0.0
      %3379 = vadd.xlane.f32.xlu0 %v3378
      %v3380 = vpop.xlane.xlu0 %3379
      %v3381 = vsel %vm1623, %v3335, 0.0
      %3382 = vadd.xlane.f32.xlu0 %v3381
      %v3383 = vpop.xlane.xlu0 %3382
      %v3384 = vrcp.pop %v3338
      %v3385 = vmul.f32 %v3305, %v3384
      %v3386 = vrcp.pop %v3341
      %v3387 = vmul.f32 %v3307, %v3386
      %v3388 = vrcp.pop %v3344
      %v3389 = vmul.f32 %v3309, %v3388
      %v3390 = vrcp.pop %v3347
      %v3391 = vmul.f32 %v3311, %v3390
      %v3392 = vrcp.pop %v3350
      %v3393 = vmul.f32 %v3313, %v3392
      %v3394 = vrcp.pop %v3353
      %v3395 = vmul.f32 %v3315, %v3394
      %v3396 = vrcp.pop %v3356
      %v3397 = vmul.f32 %v3317, %v3396
      %v3398 = vrcp.pop %v3359
      %v3399 = vmul.f32 %v3319, %v3398
      %v3400 = vrcp.pop %v3362
      %v3401 = vmul.f32 %v3321, %v3400
      %v3402 = vrcp.pop %v3365
      %v3403 = vmul.f32 %v3323, %v3402
      %v3404 = vrcp.pop %v3368
      %v3405 = vmul.f32 %v3325, %v3404
      %v3406 = vrcp.pop %v3371
      %v3407 = vmul.f32 %v3327, %v3406
      %v3408 = vrcp.pop %v3374
      %v3409 = vmul.f32 %v3329, %v3408
      %v3410 = vrcp.pop %v3377
      %v3411 = vmul.f32 %v3331, %v3410
      %v3412 = vrcp.pop %v3380
      %v3413 = vmul.f32 %v3333, %v3412
      %v3414 = vrcp.pop %v3383
      %v3415 = vmul.f32 %v3335, %v3414
      %3416 = vrot.lane.b32.xlu0 %v816, 56
      %v3417 = vpop.permute.xlu0 %3416
      %3418 = vrot.lane.b32.xlu0 %v821, 56
      %v3419 = vpop.permute.xlu0 %3418
      %v3423 = vsel %vm1623, %v3385, 0
      %v3426 = vsel %vm1623, %v3387, 0
      %3428 = vmatprep.subr.mxu0 0.0
      %3429 = vmatpush1.msra.mxu0 0.0
      %3430 = vmatprep.subr.mxu0 0.0
      %3431 = vmatpush1.msra.mxu0 0.0
      %3432 = vmatprep.subr.mxu0 0.0
      %3433 = vmatpush1.msra.mxu0 0.0
      %3434 = vmatprep.subr.mxu0 0.0
      %3435 = vmatpush1.msra.mxu0 0.0
      %3436 = vmatprep.subr.mxu0 0.0
      %3437 = vmatpush1.msra.mxu0 0.0
      %3438 = vmatprep.subr.mxu0 0.0
      %3439 = vmatpush1.msra.mxu0 0.0
      %3440 = vmatprep.subr.mxu0 0.0
      %3441 = vmatpush1.msra.mxu0 0.0
      %3442 = vmatprep.subr.mxu0 0.0
      %3443 = vmatpush1.msra.mxu0 0.0
      %3444 = vmatprep.subr.mxu0 0.0
      %3445 = vmatpush1.msra.mxu0 0.0
      %3446 = vmatprep.subr.mxu0 0.0
      %3447 = vmatpush1.msra.mxu0 0.0
      %3448 = vmatprep.subr.mxu0 0.0
      %3449 = vmatpush1.msra.mxu0 0.0
      %3450 = vmatprep.subr.mxu0 0.0
      %3451 = vmatpush1.msra.mxu0 0.0
      %3452 = vmatprep.subr.mxu0 0.0
      %3453 = vmatpush1.msra.mxu0 0.0
      %3454 = vmatprep.subr.mxu0 0.0
      %3455 = vmatpush1.msra.mxu0 0.0
      %3456 = vmatprep.subr.mxu0 0.0
      %3457 = vmatpush1.msra.mxu0 %v3419
      %3458 = vmatprep.subr.mxu0 0.0
      %3459 = vmatpush1.msra.mxu0 %v3417
      %3460 = vmatprep.subr.mxu0 0.0
      %3461 = vmatpush2.msra.mxu0 0.0
      %3462 = vmatprep.subr.mxu0 0.0
      %3463 = vmatpush2.msra.mxu0 0.0
      %3464 = vmatprep.subr.mxu0 0.0
      %3465 = vmatpush2.msra.mxu0 0.0
      %3466 = vmatprep.subr.mxu0 0.0
      %3467 = vmatpush2.msra.mxu0 0.0
      %3468 = vmatprep.subr.mxu0 0.0
      %3469 = vmatpush2.msra.mxu0 0.0
      %3470 = vmatprep.subr.mxu0 0.0
      %3471 = vmatpush2.msra.mxu0 0.0
      %3472 = vmatprep.subr.mxu0 0.0
      %3473 = vmatpush2.msra.mxu0 0.0
      %3474 = vmatprep.subr.mxu0 0.0
      %3475 = vmatpush2.msra.mxu0 0.0
      %3476 = vmatprep.subr.mxu0 0.0
      %3477 = vmatpush2.msra.mxu0 0.0
      %3478 = vmatprep.subr.mxu0 0.0
      %3479 = vmatpush2.msra.mxu0 0.0
      %3480 = vmatprep.subr.mxu0 0.0
      %3481 = vmatpush2.msra.mxu0 0.0
      %3482 = vmatprep.subr.mxu0 0.0
      %3483 = vmatpush2.msra.mxu0 0.0
      %3484 = vmatprep.subr.mxu0 0.0
      %3485 = vmatpush2.msra.mxu0 0.0
      %3486 = vmatprep.subr.mxu0 0.0
      %3487 = vmatpush2.msra.mxu0 0.0
      %3488 = vmatprep.subr.mxu0 0.0
      %3489 = vmatpush2.msra.mxu0 0.0
      %3490 = vmatprep.subr.mxu0 0.0
      %3491 = vmatpush2.msra.mxu0 0.0
      %3492 = vmatprep.mubr.f32.mxu0 0.0
      %3493 = vmatmul.mubr.f32.gmra.mxu0 %v3423
      %v3494 = vpop.f32.mrf.mxu0
      %v3495 = vadd.f32 0.0, %v3494
      %v3496 = vpop.f32.mrf.mxu0
      %3497 = vmatprep.mubr.f32.mxu0 0.0
      %3498 = vmatmul.mubr.f32.gmra.mxu0 %v3426
      %v3499 = vpop.f32.mrf.mxu0
      %v3500 = vadd.f32 0.0, %v3499
      %v3501 = vpop.f32.mrf.mxu0
      %3502 = vdwg.mxu0
      %3503 = vrot.lane.b32.xlu0 %v826, 56
      %v3504 = vpop.permute.xlu0 %3503
      %3505 = vrot.lane.b32.xlu0 %v831, 56
      %v3506 = vpop.permute.xlu0 %3505
      %v3510 = vsel %vm1623, %v3389, 0
      %v3513 = vsel %vm1623, %v3391, 0
      %3515 = vmatprep.subr.mxu0 0.0
      %3516 = vmatpush1.msra.mxu0 0.0
      %3517 = vmatprep.subr.mxu0 0.0
      %3518 = vmatpush1.msra.mxu0 0.0
      %3519 = vmatprep.subr.mxu0 0.0
      %3520 = vmatpush1.msra.mxu0 0.0
      %3521 = vmatprep.subr.mxu0 0.0
      %3522 = vmatpush1.msra.mxu0 0.0
      %3523 = vmatprep.subr.mxu0 0.0
      %3524 = vmatpush1.msra.mxu0 0.0
      %3525 = vmatprep.subr.mxu0 0.0
      %3526 = vmatpush1.msra.mxu0 0.0
      %3527 = vmatprep.subr.mxu0 0.0
      %3528 = vmatpush1.msra.mxu0 0.0
      %3529 = vmatprep.subr.mxu0 0.0
      %3530 = vmatpush1.msra.mxu0 0.0
      %3531 = vmatprep.subr.mxu0 0.0
      %3532 = vmatpush1.msra.mxu0 0.0
      %3533 = vmatprep.subr.mxu0 0.0
      %3534 = vmatpush1.msra.mxu0 0.0
      %3535 = vmatprep.subr.mxu0 0.0
      %3536 = vmatpush1.msra.mxu0 0.0
      %3537 = vmatprep.subr.mxu0 0.0
      %3538 = vmatpush1.msra.mxu0 0.0
      %3539 = vmatprep.subr.mxu0 0.0
      %3540 = vmatpush1.msra.mxu0 0.0
      %3541 = vmatprep.subr.mxu0 0.0
      %3542 = vmatpush1.msra.mxu0 0.0
      %3543 = vmatprep.subr.mxu0 0.0
      %3544 = vmatpush1.msra.mxu0 %v3506
      %3545 = vmatprep.subr.mxu0 0.0
      %3546 = vmatpush1.msra.mxu0 %v3504
      %3547 = vmatprep.subr.mxu0 0.0
      %3548 = vmatpush2.msra.mxu0 0.0
      %3549 = vmatprep.subr.mxu0 0.0
      %3550 = vmatpush2.msra.mxu0 0.0
      %3551 = vmatprep.subr.mxu0 0.0
      %3552 = vmatpush2.msra.mxu0 0.0
      %3553 = vmatprep.subr.mxu0 0.0
      %3554 = vmatpush2.msra.mxu0 0.0
      %3555 = vmatprep.subr.mxu0 0.0
      %3556 = vmatpush2.msra.mxu0 0.0
      %3557 = vmatprep.subr.mxu0 0.0
      %3558 = vmatpush2.msra.mxu0 0.0
      %3559 = vmatprep.subr.mxu0 0.0
      %3560 = vmatpush2.msra.mxu0 0.0
      %3561 = vmatprep.subr.mxu0 0.0
      %3562 = vmatpush2.msra.mxu0 0.0
      %3563 = vmatprep.subr.mxu0 0.0
      %3564 = vmatpush2.msra.mxu0 0.0
      %3565 = vmatprep.subr.mxu0 0.0
      %3566 = vmatpush2.msra.mxu0 0.0
      %3567 = vmatprep.subr.mxu0 0.0
      %3568 = vmatpush2.msra.mxu0 0.0
      %3569 = vmatprep.subr.mxu0 0.0
      %3570 = vmatpush2.msra.mxu0 0.0
      %3571 = vmatprep.subr.mxu0 0.0
      %3572 = vmatpush2.msra.mxu0 0.0
      %3573 = vmatprep.subr.mxu0 0.0
      %3574 = vmatpush2.msra.mxu0 0.0
      %3575 = vmatprep.subr.mxu0 0.0
      %3576 = vmatpush2.msra.mxu0 0.0
      %3577 = vmatprep.subr.mxu0 0.0
      %3578 = vmatpush2.msra.mxu0 0.0
      %3579 = vmatprep.mubr.f32.mxu0 0.0
      %3580 = vmatmul.mubr.f32.gmra.mxu0 %v3510
      %v3581 = vpop.f32.mrf.mxu0
      %v3582 = vadd.f32 0.0, %v3581
      %v3583 = vpop.f32.mrf.mxu0
      %3584 = vmatprep.mubr.f32.mxu0 0.0
      %3585 = vmatmul.mubr.f32.gmra.mxu0 %v3513
      %v3586 = vpop.f32.mrf.mxu0
      %v3587 = vadd.f32 0.0, %v3586
      %v3588 = vpop.f32.mrf.mxu0
      %3589 = vdwg.mxu0
      %3590 = vrot.lane.b32.xlu0 %v836, 56
      %v3591 = vpop.permute.xlu0 %3590
      %3592 = vrot.lane.b32.xlu0 %v841, 56
      %v3593 = vpop.permute.xlu0 %3592
      %v3597 = vsel %vm1623, %v3393, 0
      %v3600 = vsel %vm1623, %v3395, 0
      %3602 = vmatprep.subr.mxu0 0.0
      %3603 = vmatpush1.msra.mxu0 0.0
      %3604 = vmatprep.subr.mxu0 0.0
      %3605 = vmatpush1.msra.mxu0 0.0
      %3606 = vmatprep.subr.mxu0 0.0
      %3607 = vmatpush1.msra.mxu0 0.0
      %3608 = vmatprep.subr.mxu0 0.0
      %3609 = vmatpush1.msra.mxu0 0.0
      %3610 = vmatprep.subr.mxu0 0.0
      %3611 = vmatpush1.msra.mxu0 0.0
      %3612 = vmatprep.subr.mxu0 0.0
      %3613 = vmatpush1.msra.mxu0 0.0
      %3614 = vmatprep.subr.mxu0 0.0
      %3615 = vmatpush1.msra.mxu0 0.0
      %3616 = vmatprep.subr.mxu0 0.0
      %3617 = vmatpush1.msra.mxu0 0.0
      %3618 = vmatprep.subr.mxu0 0.0
      %3619 = vmatpush1.msra.mxu0 0.0
      %3620 = vmatprep.subr.mxu0 0.0
      %3621 = vmatpush1.msra.mxu0 0.0
      %3622 = vmatprep.subr.mxu0 0.0
      %3623 = vmatpush1.msra.mxu0 0.0
      %3624 = vmatprep.subr.mxu0 0.0
      %3625 = vmatpush1.msra.mxu0 0.0
      %3626 = vmatprep.subr.mxu0 0.0
      %3627 = vmatpush1.msra.mxu0 0.0
      %3628 = vmatprep.subr.mxu0 0.0
      %3629 = vmatpush1.msra.mxu0 0.0
      %3630 = vmatprep.subr.mxu0 0.0
      %3631 = vmatpush1.msra.mxu0 %v3593
      %3632 = vmatprep.subr.mxu0 0.0
      %3633 = vmatpush1.msra.mxu0 %v3591
      %3634 = vmatprep.subr.mxu0 0.0
      %3635 = vmatpush2.msra.mxu0 0.0
      %3636 = vmatprep.subr.mxu0 0.0
      %3637 = vmatpush2.msra.mxu0 0.0
      %3638 = vmatprep.subr.mxu0 0.0
      %3639 = vmatpush2.msra.mxu0 0.0
      %3640 = vmatprep.subr.mxu0 0.0
      %3641 = vmatpush2.msra.mxu0 0.0
      %3642 = vmatprep.subr.mxu0 0.0
      %3643 = vmatpush2.msra.mxu0 0.0
      %3644 = vmatprep.subr.mxu0 0.0
      %3645 = vmatpush2.msra.mxu0 0.0
      %3646 = vmatprep.subr.mxu0 0.0
      %3647 = vmatpush2.msra.mxu0 0.0
      %3648 = vmatprep.subr.mxu0 0.0
      %3649 = vmatpush2.msra.mxu0 0.0
      %3650 = vmatprep.subr.mxu0 0.0
      %3651 = vmatpush2.msra.mxu0 0.0
      %3652 = vmatprep.subr.mxu0 0.0
      %3653 = vmatpush2.msra.mxu0 0.0
      %3654 = vmatprep.subr.mxu0 0.0
      %3655 = vmatpush2.msra.mxu0 0.0
      %3656 = vmatprep.subr.mxu0 0.0
      %3657 = vmatpush2.msra.mxu0 0.0
      %3658 = vmatprep.subr.mxu0 0.0
      %3659 = vmatpush2.msra.mxu0 0.0
      %3660 = vmatprep.subr.mxu0 0.0
      %3661 = vmatpush2.msra.mxu0 0.0
      %3662 = vmatprep.subr.mxu0 0.0
      %3663 = vmatpush2.msra.mxu0 0.0
      %3664 = vmatprep.subr.mxu0 0.0
      %3665 = vmatpush2.msra.mxu0 0.0
      %3666 = vmatprep.mubr.f32.mxu0 0.0
      %3667 = vmatmul.mubr.f32.gmra.mxu0 %v3597
      %v3668 = vpop.f32.mrf.mxu0
      %v3669 = vadd.f32 0.0, %v3668
      %v3670 = vpop.f32.mrf.mxu0
      %3671 = vmatprep.mubr.f32.mxu0 0.0
      %3672 = vmatmul.mubr.f32.gmra.mxu0 %v3600
      %v3673 = vpop.f32.mrf.mxu0
      %v3674 = vadd.f32 0.0, %v3673
      %v3675 = vpop.f32.mrf.mxu0
      %3676 = vdwg.mxu0
      %3677 = vrot.lane.b32.xlu0 %v846, 56
      %v3678 = vpop.permute.xlu0 %3677
      %3679 = vrot.lane.b32.xlu0 %v851, 56
      %v3680 = vpop.permute.xlu0 %3679
      %v3684 = vsel %vm1623, %v3397, 0
      %v3687 = vsel %vm1623, %v3399, 0
      %3689 = vmatprep.subr.mxu0 0.0
      %3690 = vmatpush1.msra.mxu0 0.0
      %3691 = vmatprep.subr.mxu0 0.0
      %3692 = vmatpush1.msra.mxu0 0.0
      %3693 = vmatprep.subr.mxu0 0.0
      %3694 = vmatpush1.msra.mxu0 0.0
      %3695 = vmatprep.subr.mxu0 0.0
      %3696 = vmatpush1.msra.mxu0 0.0
      %3697 = vmatprep.subr.mxu0 0.0
      %3698 = vmatpush1.msra.mxu0 0.0
      %3699 = vmatprep.subr.mxu0 0.0
      %3700 = vmatpush1.msra.mxu0 0.0
      %3701 = vmatprep.subr.mxu0 0.0
      %3702 = vmatpush1.msra.mxu0 0.0
      %3703 = vmatprep.subr.mxu0 0.0
      %3704 = vmatpush1.msra.mxu0 0.0
      %3705 = vmatprep.subr.mxu0 0.0
      %3706 = vmatpush1.msra.mxu0 0.0
      %3707 = vmatprep.subr.mxu0 0.0
      %3708 = vmatpush1.msra.mxu0 0.0
      %3709 = vmatprep.subr.mxu0 0.0
      %3710 = vmatpush1.msra.mxu0 0.0
      %3711 = vmatprep.subr.mxu0 0.0
      %3712 = vmatpush1.msra.mxu0 0.0
      %3713 = vmatprep.subr.mxu0 0.0
      %3714 = vmatpush1.msra.mxu0 0.0
      %3715 = vmatprep.subr.mxu0 0.0
      %3716 = vmatpush1.msra.mxu0 0.0
      %3717 = vmatprep.subr.mxu0 0.0
      %3718 = vmatpush1.msra.mxu0 %v3680
      %3719 = vmatprep.subr.mxu0 0.0
      %3720 = vmatpush1.msra.mxu0 %v3678
      %3721 = vmatprep.subr.mxu0 0.0
      %3722 = vmatpush2.msra.mxu0 0.0
      %3723 = vmatprep.subr.mxu0 0.0
      %3724 = vmatpush2.msra.mxu0 0.0
      %3725 = vmatprep.subr.mxu0 0.0
      %3726 = vmatpush2.msra.mxu0 0.0
      %3727 = vmatprep.subr.mxu0 0.0
      %3728 = vmatpush2.msra.mxu0 0.0
      %3729 = vmatprep.subr.mxu0 0.0
      %3730 = vmatpush2.msra.mxu0 0.0
      %3731 = vmatprep.subr.mxu0 0.0
      %3732 = vmatpush2.msra.mxu0 0.0
      %3733 = vmatprep.subr.mxu0 0.0
      %3734 = vmatpush2.msra.mxu0 0.0
      %3735 = vmatprep.subr.mxu0 0.0
      %3736 = vmatpush2.msra.mxu0 0.0
      %3737 = vmatprep.subr.mxu0 0.0
      %3738 = vmatpush2.msra.mxu0 0.0
      %3739 = vmatprep.subr.mxu0 0.0
      %3740 = vmatpush2.msra.mxu0 0.0
      %3741 = vmatprep.subr.mxu0 0.0
      %3742 = vmatpush2.msra.mxu0 0.0
      %3743 = vmatprep.subr.mxu0 0.0
      %3744 = vmatpush2.msra.mxu0 0.0
      %3745 = vmatprep.subr.mxu0 0.0
      %3746 = vmatpush2.msra.mxu0 0.0
      %3747 = vmatprep.subr.mxu0 0.0
      %3748 = vmatpush2.msra.mxu0 0.0
      %3749 = vmatprep.subr.mxu0 0.0
      %3750 = vmatpush2.msra.mxu0 0.0
      %3751 = vmatprep.subr.mxu0 0.0
      %3752 = vmatpush2.msra.mxu0 0.0
      %3753 = vmatprep.mubr.f32.mxu0 0.0
      %3754 = vmatmul.mubr.f32.gmra.mxu0 %v3684
      %v3755 = vpop.f32.mrf.mxu0
      %v3756 = vadd.f32 0.0, %v3755
      %v3757 = vpop.f32.mrf.mxu0
      %3758 = vmatprep.mubr.f32.mxu0 0.0
      %3759 = vmatmul.mubr.f32.gmra.mxu0 %v3687
      %v3760 = vpop.f32.mrf.mxu0
      %v3761 = vadd.f32 0.0, %v3760
      %v3762 = vpop.f32.mrf.mxu0
      %3763 = vdwg.mxu0
      %3764 = vrot.lane.b32.xlu0 %v856, 56
      %v3765 = vpop.permute.xlu0 %3764
      %3766 = vrot.lane.b32.xlu0 %v861, 56
      %v3767 = vpop.permute.xlu0 %3766
      %v3771 = vsel %vm1623, %v3401, 0
      %v3774 = vsel %vm1623, %v3403, 0
      %3776 = vmatprep.subr.mxu0 0.0
      %3777 = vmatpush1.msra.mxu0 0.0
      %3778 = vmatprep.subr.mxu0 0.0
      %3779 = vmatpush1.msra.mxu0 0.0
      %3780 = vmatprep.subr.mxu0 0.0
      %3781 = vmatpush1.msra.mxu0 0.0
      %3782 = vmatprep.subr.mxu0 0.0
      %3783 = vmatpush1.msra.mxu0 0.0
      %3784 = vmatprep.subr.mxu0 0.0
      %3785 = vmatpush1.msra.mxu0 0.0
      %3786 = vmatprep.subr.mxu0 0.0
      %3787 = vmatpush1.msra.mxu0 0.0
      %3788 = vmatprep.subr.mxu0 0.0
      %3789 = vmatpush1.msra.mxu0 0.0
      %3790 = vmatprep.subr.mxu0 0.0
      %3791 = vmatpush1.msra.mxu0 0.0
      %3792 = vmatprep.subr.mxu0 0.0
      %3793 = vmatpush1.msra.mxu0 0.0
      %3794 = vmatprep.subr.mxu0 0.0
      %3795 = vmatpush1.msra.mxu0 0.0
      %3796 = vmatprep.subr.mxu0 0.0
      %3797 = vmatpush1.msra.mxu0 0.0
      %3798 = vmatprep.subr.mxu0 0.0
      %3799 = vmatpush1.msra.mxu0 0.0
      %3800 = vmatprep.subr.mxu0 0.0
      %3801 = vmatpush1.msra.mxu0 0.0
      %3802 = vmatprep.subr.mxu0 0.0
      %3803 = vmatpush1.msra.mxu0 0.0
      %3804 = vmatprep.subr.mxu0 0.0
      %3805 = vmatpush1.msra.mxu0 %v3767
      %3806 = vmatprep.subr.mxu0 0.0
      %3807 = vmatpush1.msra.mxu0 %v3765
      %3808 = vmatprep.subr.mxu0 0.0
      %3809 = vmatpush2.msra.mxu0 0.0
      %3810 = vmatprep.subr.mxu0 0.0
      %3811 = vmatpush2.msra.mxu0 0.0
      %3812 = vmatprep.subr.mxu0 0.0
      %3813 = vmatpush2.msra.mxu0 0.0
      %3814 = vmatprep.subr.mxu0 0.0
      %3815 = vmatpush2.msra.mxu0 0.0
      %3816 = vmatprep.subr.mxu0 0.0
      %3817 = vmatpush2.msra.mxu0 0.0
      %3818 = vmatprep.subr.mxu0 0.0
      %3819 = vmatpush2.msra.mxu0 0.0
      %3820 = vmatprep.subr.mxu0 0.0
      %3821 = vmatpush2.msra.mxu0 0.0
      %3822 = vmatprep.subr.mxu0 0.0
      %3823 = vmatpush2.msra.mxu0 0.0
      %3824 = vmatprep.subr.mxu0 0.0
      %3825 = vmatpush2.msra.mxu0 0.0
      %3826 = vmatprep.subr.mxu0 0.0
      %3827 = vmatpush2.msra.mxu0 0.0
      %3828 = vmatprep.subr.mxu0 0.0
      %3829 = vmatpush2.msra.mxu0 0.0
      %3830 = vmatprep.subr.mxu0 0.0
      %3831 = vmatpush2.msra.mxu0 0.0
      %3832 = vmatprep.subr.mxu0 0.0
      %3833 = vmatpush2.msra.mxu0 0.0
      %3834 = vmatprep.subr.mxu0 0.0
      %3835 = vmatpush2.msra.mxu0 0.0
      %3836 = vmatprep.subr.mxu0 0.0
      %3837 = vmatpush2.msra.mxu0 0.0
      %3838 = vmatprep.subr.mxu0 0.0
      %3839 = vmatpush2.msra.mxu0 0.0
      %3840 = vmatprep.mubr.f32.mxu0 0.0
      %3841 = vmatmul.mubr.f32.gmra.mxu0 %v3771
      %v3842 = vpop.f32.mrf.mxu0
      %v3843 = vadd.f32 0.0, %v3842
      %v3844 = vpop.f32.mrf.mxu0
      %3845 = vmatprep.mubr.f32.mxu0 0.0
      %3846 = vmatmul.mubr.f32.gmra.mxu0 %v3774
      %v3847 = vpop.f32.mrf.mxu0
      %v3848 = vadd.f32 0.0, %v3847
      %v3849 = vpop.f32.mrf.mxu0
      %3850 = vdwg.mxu0
      %3851 = vrot.lane.b32.xlu0 %v866, 56
      %v3852 = vpop.permute.xlu0 %3851
      %3853 = vrot.lane.b32.xlu0 %v871, 56
      %v3854 = vpop.permute.xlu0 %3853
      %v3858 = vsel %vm1623, %v3405, 0
      %v3861 = vsel %vm1623, %v3407, 0
      %3863 = vmatprep.subr.mxu0 0.0
      %3864 = vmatpush1.msra.mxu0 0.0
      %3865 = vmatprep.subr.mxu0 0.0
      %3866 = vmatpush1.msra.mxu0 0.0
      %3867 = vmatprep.subr.mxu0 0.0
      %3868 = vmatpush1.msra.mxu0 0.0
      %3869 = vmatprep.subr.mxu0 0.0
      %3870 = vmatpush1.msra.mxu0 0.0
      %3871 = vmatprep.subr.mxu0 0.0
      %3872 = vmatpush1.msra.mxu0 0.0
      %3873 = vmatprep.subr.mxu0 0.0
      %3874 = vmatpush1.msra.mxu0 0.0
      %3875 = vmatprep.subr.mxu0 0.0
      %3876 = vmatpush1.msra.mxu0 0.0
      %3877 = vmatprep.subr.mxu0 0.0
      %3878 = vmatpush1.msra.mxu0 0.0
      %3879 = vmatprep.subr.mxu0 0.0
      %3880 = vmatpush1.msra.mxu0 0.0
      %3881 = vmatprep.subr.mxu0 0.0
      %3882 = vmatpush1.msra.mxu0 0.0
      %3883 = vmatprep.subr.mxu0 0.0
      %3884 = vmatpush1.msra.mxu0 0.0
      %3885 = vmatprep.subr.mxu0 0.0
      %3886 = vmatpush1.msra.mxu0 0.0
      %3887 = vmatprep.subr.mxu0 0.0
      %3888 = vmatpush1.msra.mxu0 0.0
      %3889 = vmatprep.subr.mxu0 0.0
      %3890 = vmatpush1.msra.mxu0 0.0
      %3891 = vmatprep.subr.mxu0 0.0
      %3892 = vmatpush1.msra.mxu0 %v3854
      %3893 = vmatprep.subr.mxu0 0.0
      %3894 = vmatpush1.msra.mxu0 %v3852
      %3895 = vmatprep.subr.mxu0 0.0
      %3896 = vmatpush2.msra.mxu0 0.0
      %3897 = vmatprep.subr.mxu0 0.0
      %3898 = vmatpush2.msra.mxu0 0.0
      %3899 = vmatprep.subr.mxu0 0.0
      %3900 = vmatpush2.msra.mxu0 0.0
      %3901 = vmatprep.subr.mxu0 0.0
      %3902 = vmatpush2.msra.mxu0 0.0
      %3903 = vmatprep.subr.mxu0 0.0
      %3904 = vmatpush2.msra.mxu0 0.0
      %3905 = vmatprep.subr.mxu0 0.0
      %3906 = vmatpush2.msra.mxu0 0.0
      %3907 = vmatprep.subr.mxu0 0.0
      %3908 = vmatpush2.msra.mxu0 0.0
      %3909 = vmatprep.subr.mxu0 0.0
      %3910 = vmatpush2.msra.mxu0 0.0
      %3911 = vmatprep.subr.mxu0 0.0
      %3912 = vmatpush2.msra.mxu0 0.0
      %3913 = vmatprep.subr.mxu0 0.0
      %3914 = vmatpush2.msra.mxu0 0.0
      %3915 = vmatprep.subr.mxu0 0.0
      %3916 = vmatpush2.msra.mxu0 0.0
      %3917 = vmatprep.subr.mxu0 0.0
      %3918 = vmatpush2.msra.mxu0 0.0
      %3919 = vmatprep.subr.mxu0 0.0
      %3920 = vmatpush2.msra.mxu0 0.0
      %3921 = vmatprep.subr.mxu0 0.0
      %3922 = vmatpush2.msra.mxu0 0.0
      %3923 = vmatprep.subr.mxu0 0.0
      %3924 = vmatpush2.msra.mxu0 0.0
      %3925 = vmatprep.subr.mxu0 0.0
      %3926 = vmatpush2.msra.mxu0 0.0
      %3927 = vmatprep.mubr.f32.mxu0 0.0
      %3928 = vmatmul.mubr.f32.gmra.mxu0 %v3858
      %v3929 = vpop.f32.mrf.mxu0
      %v3930 = vadd.f32 0.0, %v3929
      %v3931 = vpop.f32.mrf.mxu0
      %3932 = vmatprep.mubr.f32.mxu0 0.0
      %3933 = vmatmul.mubr.f32.gmra.mxu0 %v3861
      %v3934 = vpop.f32.mrf.mxu0
      %v3935 = vadd.f32 0.0, %v3934
      %v3936 = vpop.f32.mrf.mxu0
      %3937 = vdwg.mxu0
      %3938 = vrot.lane.b32.xlu0 %v876, 56
      %v3939 = vpop.permute.xlu0 %3938
      %3940 = vrot.lane.b32.xlu0 %v881, 56
      %v3941 = vpop.permute.xlu0 %3940
      %v3945 = vsel %vm1623, %v3409, 0
      %v3948 = vsel %vm1623, %v3411, 0
      %3950 = vmatprep.subr.mxu0 0.0
      %3951 = vmatpush1.msra.mxu0 0.0
      %3952 = vmatprep.subr.mxu0 0.0
      %3953 = vmatpush1.msra.mxu0 0.0
      %3954 = vmatprep.subr.mxu0 0.0
      %3955 = vmatpush1.msra.mxu0 0.0
      %3956 = vmatprep.subr.mxu0 0.0
      %3957 = vmatpush1.msra.mxu0 0.0
      %3958 = vmatprep.subr.mxu0 0.0
      %3959 = vmatpush1.msra.mxu0 0.0
      %3960 = vmatprep.subr.mxu0 0.0
      %3961 = vmatpush1.msra.mxu0 0.0
      %3962 = vmatprep.subr.mxu0 0.0
      %3963 = vmatpush1.msra.mxu0 0.0
      %3964 = vmatprep.subr.mxu0 0.0
      %3965 = vmatpush1.msra.mxu0 0.0
      %3966 = vmatprep.subr.mxu0 0.0
      %3967 = vmatpush1.msra.mxu0 0.0
      %3968 = vmatprep.subr.mxu0 0.0
      %3969 = vmatpush1.msra.mxu0 0.0
      %3970 = vmatprep.subr.mxu0 0.0
      %3971 = vmatpush1.msra.mxu0 0.0
      %3972 = vmatprep.subr.mxu0 0.0
      %3973 = vmatpush1.msra.mxu0 0.0
      %3974 = vmatprep.subr.mxu0 0.0
      %3975 = vmatpush1.msra.mxu0 0.0
      %3976 = vmatprep.subr.mxu0 0.0
      %3977 = vmatpush1.msra.mxu0 0.0
      %3978 = vmatprep.subr.mxu0 0.0
      %3979 = vmatpush1.msra.mxu0 %v3941
      %3980 = vmatprep.subr.mxu0 0.0
      %3981 = vmatpush1.msra.mxu0 %v3939
      %3982 = vmatprep.subr.mxu0 0.0
      %3983 = vmatpush2.msra.mxu0 0.0
      %3984 = vmatprep.subr.mxu0 0.0
      %3985 = vmatpush2.msra.mxu0 0.0
      %3986 = vmatprep.subr.mxu0 0.0
      %3987 = vmatpush2.msra.mxu0 0.0
      %3988 = vmatprep.subr.mxu0 0.0
      %3989 = vmatpush2.msra.mxu0 0.0
      %3990 = vmatprep.subr.mxu0 0.0
      %3991 = vmatpush2.msra.mxu0 0.0
      %3992 = vmatprep.subr.mxu0 0.0
      %3993 = vmatpush2.msra.mxu0 0.0
      %3994 = vmatprep.subr.mxu0 0.0
      %3995 = vmatpush2.msra.mxu0 0.0
      %3996 = vmatprep.subr.mxu0 0.0
      %3997 = vmatpush2.msra.mxu0 0.0
      %3998 = vmatprep.subr.mxu0 0.0
      %3999 = vmatpush2.msra.mxu0 0.0
      %4000 = vmatprep.subr.mxu0 0.0
      %4001 = vmatpush2.msra.mxu0 0.0
      %4002 = vmatprep.subr.mxu0 0.0
      %4003 = vmatpush2.msra.mxu0 0.0
      %4004 = vmatprep.subr.mxu0 0.0
      %4005 = vmatpush2.msra.mxu0 0.0
      %4006 = vmatprep.subr.mxu0 0.0
      %4007 = vmatpush2.msra.mxu0 0.0
      %4008 = vmatprep.subr.mxu0 0.0
      %4009 = vmatpush2.msra.mxu0 0.0
      %4010 = vmatprep.subr.mxu0 0.0
      %4011 = vmatpush2.msra.mxu0 0.0
      %4012 = vmatprep.subr.mxu0 0.0
      %4013 = vmatpush2.msra.mxu0 0.0
      %4014 = vmatprep.mubr.f32.mxu0 0.0
      %4015 = vmatmul.mubr.f32.gmra.mxu0 %v3945
      %v4016 = vpop.f32.mrf.mxu0
      %v4017 = vadd.f32 0.0, %v4016
      %v4018 = vpop.f32.mrf.mxu0
      %4019 = vmatprep.mubr.f32.mxu0 0.0
      %4020 = vmatmul.mubr.f32.gmra.mxu0 %v3948
      %v4021 = vpop.f32.mrf.mxu0
      %v4022 = vadd.f32 0.0, %v4021
      %v4023 = vpop.f32.mrf.mxu0
      %4024 = vdwg.mxu0
      %4025 = vrot.lane.b32.xlu0 %v886, 56
      %v4026 = vpop.permute.xlu0 %4025
      %4027 = vrot.lane.b32.xlu0 %v891, 56
      %v4028 = vpop.permute.xlu0 %4027
      %v4032 = vsel %vm1623, %v3413, 0
      %v4035 = vsel %vm1623, %v3415, 0
      %4037 = vmatprep.subr.mxu0 0.0
      %4038 = vmatpush1.msra.mxu0 0.0
      %4039 = vmatprep.subr.mxu0 0.0
      %4040 = vmatpush1.msra.mxu0 0.0
      %4041 = vmatprep.subr.mxu0 0.0
      %4042 = vmatpush1.msra.mxu0 0.0
      %4043 = vmatprep.subr.mxu0 0.0
      %4044 = vmatpush1.msra.mxu0 0.0
      %4045 = vmatprep.subr.mxu0 0.0
      %4046 = vmatpush1.msra.mxu0 0.0
      %4047 = vmatprep.subr.mxu0 0.0
      %4048 = vmatpush1.msra.mxu0 0.0
      %4049 = vmatprep.subr.mxu0 0.0
      %4050 = vmatpush1.msra.mxu0 0.0
      %4051 = vmatprep.subr.mxu0 0.0
      %4052 = vmatpush1.msra.mxu0 0.0
      %4053 = vmatprep.subr.mxu0 0.0
      %4054 = vmatpush1.msra.mxu0 0.0
      %4055 = vmatprep.subr.mxu0 0.0
      %4056 = vmatpush1.msra.mxu0 0.0
      %4057 = vmatprep.subr.mxu0 0.0
      %4058 = vmatpush1.msra.mxu0 0.0
      %4059 = vmatprep.subr.mxu0 0.0
      %4060 = vmatpush1.msra.mxu0 0.0
      %4061 = vmatprep.subr.mxu0 0.0
      %4062 = vmatpush1.msra.mxu0 0.0
      %4063 = vmatprep.subr.mxu0 0.0
      %4064 = vmatpush1.msra.mxu0 0.0
      %4065 = vmatprep.subr.mxu0 0.0
      %4066 = vmatpush1.msra.mxu0 %v4028
      %4067 = vmatprep.subr.mxu0 0.0
      %4068 = vmatpush1.msra.mxu0 %v4026
      %4069 = vmatprep.subr.mxu0 0.0
      %4070 = vmatpush2.msra.mxu0 0.0
      %4071 = vmatprep.subr.mxu0 0.0
      %4072 = vmatpush2.msra.mxu0 0.0
      %4073 = vmatprep.subr.mxu0 0.0
      %4074 = vmatpush2.msra.mxu0 0.0
      %4075 = vmatprep.subr.mxu0 0.0
      %4076 = vmatpush2.msra.mxu0 0.0
      %4077 = vmatprep.subr.mxu0 0.0
      %4078 = vmatpush2.msra.mxu0 0.0
      %4079 = vmatprep.subr.mxu0 0.0
      %4080 = vmatpush2.msra.mxu0 0.0
      %4081 = vmatprep.subr.mxu0 0.0
      %4082 = vmatpush2.msra.mxu0 0.0
      %4083 = vmatprep.subr.mxu0 0.0
      %4084 = vmatpush2.msra.mxu0 0.0
      %4085 = vmatprep.subr.mxu0 0.0
      %4086 = vmatpush2.msra.mxu0 0.0
      %4087 = vmatprep.subr.mxu0 0.0
      %4088 = vmatpush2.msra.mxu0 0.0
      %4089 = vmatprep.subr.mxu0 0.0
      %4090 = vmatpush2.msra.mxu0 0.0
      %4091 = vmatprep.subr.mxu0 0.0
      %4092 = vmatpush2.msra.mxu0 0.0
      %4093 = vmatprep.subr.mxu0 0.0
      %4094 = vmatpush2.msra.mxu0 0.0
      %4095 = vmatprep.subr.mxu0 0.0
      %4096 = vmatpush2.msra.mxu0 0.0
      %4097 = vmatprep.subr.mxu0 0.0
      %4098 = vmatpush2.msra.mxu0 0.0
      %4099 = vmatprep.subr.mxu0 0.0
      %4100 = vmatpush2.msra.mxu0 0.0
      %4101 = vmatprep.mubr.f32.mxu0 0.0
      %4102 = vmatmul.mubr.f32.gmra.mxu0 %v4032
      %v4103 = vpop.f32.mrf.mxu0
      %v4104 = vadd.f32 0.0, %v4103
      %v4105 = vpop.f32.mrf.mxu0
      %4106 = vmatprep.mubr.f32.mxu0 0.0
      %4107 = vmatmul.mubr.f32.gmra.mxu0 %v4035
      %v4108 = vpop.f32.mrf.mxu0
      %v4109 = vadd.f32 0.0, %v4108
      %v4110 = vpop.f32.mrf.mxu0
      %4111 = vdwg.mxu0
      %v4113 = vsel %vm900, %v3495, 0
      %v4116 = vsel %vm900, %v3500, 0
      %v4119 = vsel %vm900, %v3582, 0
      %v4122 = vsel %vm900, %v3587, 0
      %v4125 = vsel %vm900, %v3669, 0
      %v4128 = vsel %vm900, %v3674, 0
      %v4131 = vsel %vm900, %v3756, 0
      %v4134 = vsel %vm900, %v3761, 0
      %v4137 = vsel %vm900, %v3843, 0
      %v4140 = vsel %vm900, %v3848, 0
      %v4143 = vsel %vm900, %v3930, 0
      %v4146 = vsel %vm900, %v3935, 0
      %v4149 = vsel %vm900, %v4017, 0
      %v4152 = vsel %vm900, %v4022, 0
      %v4155 = vsel %vm900, %v4104, 0
      %v4158 = vsel %vm900, %v4109, 0
      %4160 = vmatprep.subr.mxu0 0.0
      %4161 = vmatpush1.msra.mxu0 0.0
      %4162 = vmatprep.subr.mxu0 0.0
      %4163 = vmatpush1.msra.mxu0 0.0
      %4164 = vmatprep.subr.mxu0 0.0
      %4165 = vmatpush1.msra.mxu0 0.0
      %4166 = vmatprep.subr.mxu0 0.0
      %4167 = vmatpush1.msra.mxu0 0.0
      %4168 = vmatprep.subr.mxu0 0.0
      %4169 = vmatpush1.msra.mxu0 0.0
      %4170 = vmatprep.subr.mxu0 0.0
      %4171 = vmatpush1.msra.mxu0 0.0
      %4172 = vmatprep.subr.mxu0 0.0
      %4173 = vmatpush1.msra.mxu0 0.0
      %4174 = vmatprep.subr.mxu0 0.0
      %4175 = vmatpush1.msra.mxu0 0.0
      %4176 = vmatprep.subr.mxu0 0.0
      %4177 = vmatpush1.msra.mxu0 0.0
      %4178 = vmatprep.subr.mxu0 0.0
      %4179 = vmatpush1.msra.mxu0 0.0
      %4180 = vmatprep.subr.mxu0 0.0
      %4181 = vmatpush1.msra.mxu0 0.0
      %4182 = vmatprep.subr.mxu0 0.0
      %4183 = vmatpush1.msra.mxu0 0.0
      %4184 = vmatprep.subr.mxu0 0.0
      %4185 = vmatpush1.msra.mxu0 0.0
      %4186 = vmatprep.subr.mxu0 0.0
      %4187 = vmatpush1.msra.mxu0 0.0
      %4188 = vmatprep.subr.mxu0 0.0
      %4189 = vmatpush1.msra.mxu0 0.0
      %4190 = vmatprep.subr.mxu0 0.0
      %4191 = vmatpush1.msra.mxu0 %v246
      %4192 = vmatprep.subr.mxu0 0.0
      %4193 = vmatpush2.msra.mxu0 0.0
      %4194 = vmatprep.subr.mxu0 0.0
      %4195 = vmatpush2.msra.mxu0 0.0
      %4196 = vmatprep.subr.mxu0 0.0
      %4197 = vmatpush2.msra.mxu0 0.0
      %4198 = vmatprep.subr.mxu0 0.0
      %4199 = vmatpush2.msra.mxu0 0.0
      %4200 = vmatprep.subr.mxu0 0.0
      %4201 = vmatpush2.msra.mxu0 0.0
      %4202 = vmatprep.subr.mxu0 0.0
      %4203 = vmatpush2.msra.mxu0 0.0
      %4204 = vmatprep.subr.mxu0 0.0
      %4205 = vmatpush2.msra.mxu0 0.0
      %4206 = vmatprep.subr.mxu0 0.0
      %4207 = vmatpush2.msra.mxu0 0.0
      %4208 = vmatprep.subr.mxu0 0.0
      %4209 = vmatpush2.msra.mxu0 0.0
      %4210 = vmatprep.subr.mxu0 0.0
      %4211 = vmatpush2.msra.mxu0 0.0
      %4212 = vmatprep.subr.mxu0 0.0
      %4213 = vmatpush2.msra.mxu0 0.0
      %4214 = vmatprep.subr.mxu0 0.0
      %4215 = vmatpush2.msra.mxu0 0.0
      %4216 = vmatprep.subr.mxu0 0.0
      %4217 = vmatpush2.msra.mxu0 0.0
      %4218 = vmatprep.subr.mxu0 0.0
      %4219 = vmatpush2.msra.mxu0 0.0
      %4220 = vmatprep.subr.mxu0 0.0
      %4221 = vmatpush2.msra.mxu0 0.0
      %4222 = vmatprep.subr.mxu0 0.0
      %4223 = vmatpush2.msra.mxu0 0.0
      %4224 = vmatprep.mubr.f32.mxu0 0.0
      %4225 = vmatmul.mubr.f32.gmra.mxu0 %v4113
      %v4226 = vpop.f32.mrf.mxu0
      %v4227 = vadd.f32 0.0, %v4226
      %v4228 = vpop.f32.mrf.mxu0
      %4229 = vmatprep.mubr.f32.mxu0 0.0
      %4230 = vmatmul.mubr.f32.gmra.mxu0 %v4116
      %v4231 = vpop.f32.mrf.mxu0
      %v4232 = vadd.f32 0.0, %v4231
      %v4233 = vpop.f32.mrf.mxu0
      %4234 = vmatprep.mubr.f32.mxu0 0.0
      %4235 = vmatmul.mubr.f32.gmra.mxu0 %v4119
      %v4236 = vpop.f32.mrf.mxu0
      %v4237 = vadd.f32 0.0, %v4236
      %v4238 = vpop.f32.mrf.mxu0
      %4239 = vmatprep.mubr.f32.mxu0 0.0
      %4240 = vmatmul.mubr.f32.gmra.mxu0 %v4122
      %v4241 = vpop.f32.mrf.mxu0
      %v4242 = vadd.f32 0.0, %v4241
      %v4243 = vpop.f32.mrf.mxu0
      %4244 = vmatprep.mubr.f32.mxu0 0.0
      %4245 = vmatmul.mubr.f32.gmra.mxu0 %v4125
      %v4246 = vpop.f32.mrf.mxu0
      %v4247 = vadd.f32 0.0, %v4246
      %v4248 = vpop.f32.mrf.mxu0
      %4249 = vmatprep.mubr.f32.mxu0 0.0
      %4250 = vmatmul.mubr.f32.gmra.mxu0 %v4128
      %v4251 = vpop.f32.mrf.mxu0
      %v4252 = vadd.f32 0.0, %v4251
      %v4253 = vpop.f32.mrf.mxu0
      %4254 = vmatprep.mubr.f32.mxu0 0.0
      %4255 = vmatmul.mubr.f32.gmra.mxu0 %v4131
      %v4256 = vpop.f32.mrf.mxu0
      %v4257 = vadd.f32 0.0, %v4256
      %v4258 = vpop.f32.mrf.mxu0
      %4259 = vmatprep.mubr.f32.mxu0 0.0
      %4260 = vmatmul.mubr.f32.gmra.mxu0 %v4134
      %v4261 = vpop.f32.mrf.mxu0
      %v4262 = vadd.f32 0.0, %v4261
      %v4263 = vpop.f32.mrf.mxu0
      %4264 = vmatprep.mubr.f32.mxu0 0.0
      %4265 = vmatmul.mubr.f32.gmra.mxu0 %v4137
      %v4266 = vpop.f32.mrf.mxu0
      %v4267 = vadd.f32 0.0, %v4266
      %v4268 = vpop.f32.mrf.mxu0
      %4269 = vmatprep.mubr.f32.mxu0 0.0
      %4270 = vmatmul.mubr.f32.gmra.mxu0 %v4140
      %v4271 = vpop.f32.mrf.mxu0
      %v4272 = vadd.f32 0.0, %v4271
      %v4273 = vpop.f32.mrf.mxu0
      %4274 = vmatprep.mubr.f32.mxu0 0.0
      %4275 = vmatmul.mubr.f32.gmra.mxu0 %v4143
      %v4276 = vpop.f32.mrf.mxu0
      %v4277 = vadd.f32 0.0, %v4276
      %v4278 = vpop.f32.mrf.mxu0
      %4279 = vmatprep.mubr.f32.mxu0 0.0
      %4280 = vmatmul.mubr.f32.gmra.mxu0 %v4146
      %v4281 = vpop.f32.mrf.mxu0
      %v4282 = vadd.f32 0.0, %v4281
      %v4283 = vpop.f32.mrf.mxu0
      %4284 = vmatprep.mubr.f32.mxu0 0.0
      %4285 = vmatmul.mubr.f32.gmra.mxu0 %v4149
      %v4286 = vpop.f32.mrf.mxu0
      %v4287 = vadd.f32 0.0, %v4286
      %v4288 = vpop.f32.mrf.mxu0
      %4289 = vmatprep.mubr.f32.mxu0 0.0
      %4290 = vmatmul.mubr.f32.gmra.mxu0 %v4152
      %v4291 = vpop.f32.mrf.mxu0
      %v4292 = vadd.f32 0.0, %v4291
      %v4293 = vpop.f32.mrf.mxu0
      %4294 = vmatprep.mubr.f32.mxu0 0.0
      %4295 = vmatmul.mubr.f32.gmra.mxu0 %v4155
      %v4296 = vpop.f32.mrf.mxu0
      %v4297 = vadd.f32 0.0, %v4296
      %v4298 = vpop.f32.mrf.mxu0
      %4299 = vmatprep.mubr.f32.mxu0 0.0
      %4300 = vmatmul.mubr.f32.gmra.mxu0 %v4158
      %v4301 = vpop.f32.mrf.mxu0
      %v4302 = vadd.f32 0.0, %v4301
      %v4303 = vpop.f32.mrf.mxu0
      %4304 = vdwg.mxu0
      %v4306 = vsel %vm900, %v1879, 0
      %v4309 = vsel %vm900, %v1884, 0
      %v4312 = vsel %vm900, %v1966, 0
      %v4315 = vsel %vm900, %v1971, 0
      %v4318 = vsel %vm900, %v2053, 0
      %v4321 = vsel %vm900, %v2058, 0
      %v4324 = vsel %vm900, %v2140, 0
      %v4327 = vsel %vm900, %v2145, 0
      %v4330 = vsel %vm900, %v2227, 0
      %v4333 = vsel %vm900, %v2232, 0
      %v4336 = vsel %vm900, %v2314, 0
      %v4339 = vsel %vm900, %v2319, 0
      %v4342 = vsel %vm900, %v2401, 0
      %v4345 = vsel %vm900, %v2406, 0
      %v4348 = vsel %vm900, %v2488, 0
      %v4351 = vsel %vm900, %v2493, 0
      %4353 = vmatprep.subr.mxu0 0.0
      %4354 = vmatpush1.msra.mxu0 0.0
      %4355 = vmatprep.subr.mxu0 0.0
      %4356 = vmatpush1.msra.mxu0 0.0
      %4357 = vmatprep.subr.mxu0 0.0
      %4358 = vmatpush1.msra.mxu0 0.0
      %4359 = vmatprep.subr.mxu0 0.0
      %4360 = vmatpush1.msra.mxu0 0.0
      %4361 = vmatprep.subr.mxu0 0.0
      %4362 = vmatpush1.msra.mxu0 0.0
      %4363 = vmatprep.subr.mxu0 0.0
      %4364 = vmatpush1.msra.mxu0 0.0
      %4365 = vmatprep.subr.mxu0 0.0
      %4366 = vmatpush1.msra.mxu0 0.0
      %4367 = vmatprep.subr.mxu0 0.0
      %4368 = vmatpush1.msra.mxu0 0.0
      %4369 = vmatprep.subr.mxu0 0.0
      %4370 = vmatpush1.msra.mxu0 0.0
      %4371 = vmatprep.subr.mxu0 0.0
      %4372 = vmatpush1.msra.mxu0 0.0
      %4373 = vmatprep.subr.mxu0 0.0
      %4374 = vmatpush1.msra.mxu0 0.0
      %4375 = vmatprep.subr.mxu0 0.0
      %4376 = vmatpush1.msra.mxu0 0.0
      %4377 = vmatprep.subr.mxu0 0.0
      %4378 = vmatpush1.msra.mxu0 0.0
      %4379 = vmatprep.subr.mxu0 0.0
      %4380 = vmatpush1.msra.mxu0 0.0
      %4381 = vmatprep.subr.mxu0 0.0
      %4382 = vmatpush1.msra.mxu0 0.0
      %4383 = vmatprep.subr.mxu0 0.0
      %4384 = vmatpush1.msra.mxu0 %v245
      %4385 = vmatprep.subr.mxu0 0.0
      %4386 = vmatpush2.msra.mxu0 0.0
      %4387 = vmatprep.subr.mxu0 0.0
      %4388 = vmatpush2.msra.mxu0 0.0
      %4389 = vmatprep.subr.mxu0 0.0
      %4390 = vmatpush2.msra.mxu0 0.0
      %4391 = vmatprep.subr.mxu0 0.0
      %4392 = vmatpush2.msra.mxu0 0.0
      %4393 = vmatprep.subr.mxu0 0.0
      %4394 = vmatpush2.msra.mxu0 0.0
      %4395 = vmatprep.subr.mxu0 0.0
      %4396 = vmatpush2.msra.mxu0 0.0
      %4397 = vmatprep.subr.mxu0 0.0
      %4398 = vmatpush2.msra.mxu0 0.0
      %4399 = vmatprep.subr.mxu0 0.0
      %4400 = vmatpush2.msra.mxu0 0.0
      %4401 = vmatprep.subr.mxu0 0.0
      %4402 = vmatpush2.msra.mxu0 0.0
      %4403 = vmatprep.subr.mxu0 0.0
      %4404 = vmatpush2.msra.mxu0 0.0
      %4405 = vmatprep.subr.mxu0 0.0
      %4406 = vmatpush2.msra.mxu0 0.0
      %4407 = vmatprep.subr.mxu0 0.0
      %4408 = vmatpush2.msra.mxu0 0.0
      %4409 = vmatprep.subr.mxu0 0.0
      %4410 = vmatpush2.msra.mxu0 0.0
      %4411 = vmatprep.subr.mxu0 0.0
      %4412 = vmatpush2.msra.mxu0 0.0
      %4413 = vmatprep.subr.mxu0 0.0
      %4414 = vmatpush2.msra.mxu0 0.0
      %4415 = vmatprep.subr.mxu0 0.0
      %4416 = vmatpush2.msra.mxu0 0.0
      %4417 = vmatprep.mubr.f32.mxu0 0.0
      %4418 = vmatmul.mubr.f32.gmra.mxu0 %v4306
      %v4419 = vpop.f32.mrf.mxu0
      %v4420 = vadd.f32 %v4227, %v4419
      %v4421 = vpop.f32.mrf.mxu0
      %4422 = vmatprep.mubr.f32.mxu0 0.0
      %4423 = vmatmul.mubr.f32.gmra.mxu0 %v4309
      %v4424 = vpop.f32.mrf.mxu0
      %v4425 = vadd.f32 %v4232, %v4424
      %v4426 = vpop.f32.mrf.mxu0
      %4427 = vmatprep.mubr.f32.mxu0 0.0
      %4428 = vmatmul.mubr.f32.gmra.mxu0 %v4312
      %v4429 = vpop.f32.mrf.mxu0
      %v4430 = vadd.f32 %v4237, %v4429
      %v4431 = vpop.f32.mrf.mxu0
      %4432 = vmatprep.mubr.f32.mxu0 0.0
      %4433 = vmatmul.mubr.f32.gmra.mxu0 %v4315
      %v4434 = vpop.f32.mrf.mxu0
      %v4435 = vadd.f32 %v4242, %v4434
      %v4436 = vpop.f32.mrf.mxu0
      %4437 = vmatprep.mubr.f32.mxu0 0.0
      %4438 = vmatmul.mubr.f32.gmra.mxu0 %v4318
      %v4439 = vpop.f32.mrf.mxu0
      %v4440 = vadd.f32 %v4247, %v4439
      %v4441 = vpop.f32.mrf.mxu0
      %4442 = vmatprep.mubr.f32.mxu0 0.0
      %4443 = vmatmul.mubr.f32.gmra.mxu0 %v4321
      %v4444 = vpop.f32.mrf.mxu0
      %v4445 = vadd.f32 %v4252, %v4444
      %v4446 = vpop.f32.mrf.mxu0
      %4447 = vmatprep.mubr.f32.mxu0 0.0
      %4448 = vmatmul.mubr.f32.gmra.mxu0 %v4324
      %v4449 = vpop.f32.mrf.mxu0
      %v4450 = vadd.f32 %v4257, %v4449
      %v4451 = vpop.f32.mrf.mxu0
      %4452 = vmatprep.mubr.f32.mxu0 0.0
      %4453 = vmatmul.mubr.f32.gmra.mxu0 %v4327
      %v4454 = vpop.f32.mrf.mxu0
      %v4455 = vadd.f32 %v4262, %v4454
      %v4456 = vpop.f32.mrf.mxu0
      %4457 = vmatprep.mubr.f32.mxu0 0.0
      %4458 = vmatmul.mubr.f32.gmra.mxu0 %v4330
      %v4459 = vpop.f32.mrf.mxu0
      %v4460 = vadd.f32 %v4267, %v4459
      %v4461 = vpop.f32.mrf.mxu0
      %4462 = vmatprep.mubr.f32.mxu0 0.0
      %4463 = vmatmul.mubr.f32.gmra.mxu0 %v4333
      %v4464 = vpop.f32.mrf.mxu0
      %v4465 = vadd.f32 %v4272, %v4464
      %v4466 = vpop.f32.mrf.mxu0
      %4467 = vmatprep.mubr.f32.mxu0 0.0
      %4468 = vmatmul.mubr.f32.gmra.mxu0 %v4336
      %v4469 = vpop.f32.mrf.mxu0
      %v4470 = vadd.f32 %v4277, %v4469
      %v4471 = vpop.f32.mrf.mxu0
      %4472 = vmatprep.mubr.f32.mxu0 0.0
      %4473 = vmatmul.mubr.f32.gmra.mxu0 %v4339
      %v4474 = vpop.f32.mrf.mxu0
      %v4475 = vadd.f32 %v4282, %v4474
      %v4476 = vpop.f32.mrf.mxu0
      %4477 = vmatprep.mubr.f32.mxu0 0.0
      %4478 = vmatmul.mubr.f32.gmra.mxu0 %v4342
      %v4479 = vpop.f32.mrf.mxu0
      %v4480 = vadd.f32 %v4287, %v4479
      %v4481 = vpop.f32.mrf.mxu0
      %4482 = vmatprep.mubr.f32.mxu0 0.0
      %4483 = vmatmul.mubr.f32.gmra.mxu0 %v4345
      %v4484 = vpop.f32.mrf.mxu0
      %v4485 = vadd.f32 %v4292, %v4484
      %v4486 = vpop.f32.mrf.mxu0
      %4487 = vmatprep.mubr.f32.mxu0 0.0
      %4488 = vmatmul.mubr.f32.gmra.mxu0 %v4348
      %v4489 = vpop.f32.mrf.mxu0
      %v4490 = vadd.f32 %v4297, %v4489
      %v4491 = vpop.f32.mrf.mxu0
      %4492 = vmatprep.mubr.f32.mxu0 0.0
      %4493 = vmatmul.mubr.f32.gmra.mxu0 %v4351
      %v4494 = vpop.f32.mrf.mxu0
      %v4495 = vadd.f32 %v4302, %v4494
      %v4496 = vpop.f32.mrf.mxu0
      %4497 = vdwg.mxu0
      %4498 = vrot.lane.b32.xlu0 %v816, 112
      %v4499 = vpop.permute.xlu0 %4498
      %4500 = vrot.lane.b32.xlu0 %v821, 112
      %v4501 = vpop.permute.xlu0 %4500
      %4502 = vrot.lane.b32.xlu0 %v816, 80
      %v4503 = vpop.permute.xlu0 %4502
      %4504 = vrot.lane.b32.xlu0 %v821, 80
      %v4505 = vpop.permute.xlu0 %4504
      %v4506 = vsel %vm900, %v4499, 0
      %v4508 = vsel %vm900, %v4501, 0
      %v4510 = vsel %vm900, %v4503, 0
      %v4512 = vsel %vm900, %v4505, 0
      %4514 = vmatprep.subr.mxu0 0.0
      %4515 = vmatpush1.xpose.msra.mxu0 0.0
      %4516 = vmatprep.subr.mxu0 0.0
      %4517 = vmatpush1.xpose.msra.mxu0 0.0
      %4518 = vmatprep.subr.mxu0 0.0
      %4519 = vmatpush1.xpose.msra.mxu0 0.0
      %4520 = vmatprep.subr.mxu0 0.0
      %4521 = vmatpush1.xpose.msra.mxu0 0.0
      %4522 = vmatprep.subr.mxu0 0.0
      %4523 = vmatpush1.xpose.msra.mxu0 0.0
      %4524 = vmatprep.subr.mxu0 0.0
      %4525 = vmatpush1.xpose.msra.mxu0 0.0
      %4526 = vmatprep.subr.mxu0 0.0
      %4527 = vmatpush1.xpose.msra.mxu0 0.0
      %4528 = vmatprep.subr.mxu0 0.0
      %4529 = vmatpush1.xpose.msra.mxu0 0.0
      %4530 = vmatprep.subr.mxu0 0.0
      %4531 = vmatpush1.xpose.msra.mxu0 0.0
      %4532 = vmatprep.subr.mxu0 0.0
      %4533 = vmatpush1.xpose.msra.mxu0 0.0
      %4534 = vmatprep.subr.mxu0 0.0
      %4535 = vmatpush1.xpose.msra.mxu0 0.0
      %4536 = vmatprep.subr.mxu0 0.0
      %4537 = vmatpush1.xpose.msra.mxu0 0.0
      %4538 = vmatprep.subr.mxu0 0.0
      %4539 = vmatpush1.xpose.msra.mxu0 0.0
      %4540 = vmatprep.subr.mxu0 0.0
      %4541 = vmatpush1.xpose.msra.mxu0 0.0
      %4542 = vmatprep.subr.mxu0 0.0
      %4543 = vmatpush1.xpose.msra.mxu0 %v4512
      %4544 = vmatprep.subr.mxu0 0.0
      %4545 = vmatpush1.xpose.msra.mxu0 %v4510
      %4546 = vmatprep.subr.mxu0 0.0
      %4547 = vmatpush2.xpose.msra.mxu0 0.0
      %4548 = vmatprep.subr.mxu0 0.0
      %4549 = vmatpush2.xpose.msra.mxu0 0.0
      %4550 = vmatprep.subr.mxu0 0.0
      %4551 = vmatpush2.xpose.msra.mxu0 0.0
      %4552 = vmatprep.subr.mxu0 0.0
      %4553 = vmatpush2.xpose.msra.mxu0 0.0
      %4554 = vmatprep.subr.mxu0 0.0
      %4555 = vmatpush2.xpose.msra.mxu0 0.0
      %4556 = vmatprep.subr.mxu0 0.0
      %4557 = vmatpush2.xpose.msra.mxu0 0.0
      %4558 = vmatprep.subr.mxu0 0.0
      %4559 = vmatpush2.xpose.msra.mxu0 0.0
      %4560 = vmatprep.subr.mxu0 0.0
      %4561 = vmatpush2.xpose.msra.mxu0 0.0
      %4562 = vmatprep.subr.mxu0 0.0
      %4563 = vmatpush2.xpose.msra.mxu0 0.0
      %4564 = vmatprep.subr.mxu0 0.0
      %4565 = vmatpush2.xpose.msra.mxu0 0.0
      %4566 = vmatprep.subr.mxu0 0.0
      %4567 = vmatpush2.xpose.msra.mxu0 0.0
      %4568 = vmatprep.subr.mxu0 0.0
      %4569 = vmatpush2.xpose.msra.mxu0 0.0
      %4570 = vmatprep.subr.mxu0 0.0
      %4571 = vmatpush2.xpose.msra.mxu0 0.0
      %4572 = vmatprep.subr.mxu0 0.0
      %4573 = vmatpush2.xpose.msra.mxu0 0.0
      %4574 = vmatprep.subr.mxu0 0.0
      %4575 = vmatpush2.xpose.msra.mxu0 0.0
      %4576 = vmatprep.subr.mxu0 0.0
      %4577 = vmatpush2.xpose.msra.mxu0 0.0
      %4578 = vmatprep.mubr.f32.mxu0 0.0
      %4579 = vmatmul.mubr.f32.gmra.mxu0 %v4506
      %v4580 = vpop.f32.mrf.mxu0
      %v4581 = vadd.f32 0.0, %v4580
      %v4582 = vpop.f32.mrf.mxu0
      %4583 = vmatprep.mubr.f32.mxu0 0.0
      %4584 = vmatmul.mubr.f32.gmra.mxu0 %v4508
      %v4585 = vpop.f32.mrf.mxu0
      %v4586 = vadd.f32 0.0, %v4585
      %v4587 = vpop.f32.mrf.mxu0
      %4588 = vdwg.mxu0
      %4589 = vrot.lane.b32.xlu0 %v826, 112
      %v4590 = vpop.permute.xlu0 %4589
      %4591 = vrot.lane.b32.xlu0 %v831, 112
      %v4592 = vpop.permute.xlu0 %4591
      %4593 = vrot.lane.b32.xlu0 %v826, 80
      %v4594 = vpop.permute.xlu0 %4593
      %4595 = vrot.lane.b32.xlu0 %v831, 80
      %v4596 = vpop.permute.xlu0 %4595
      %v4597 = vsel %vm900, %v4590, 0
      %v4599 = vsel %vm900, %v4592, 0
      %v4601 = vsel %vm900, %v4594, 0
      %v4603 = vsel %vm900, %v4596, 0
      %4605 = vmatprep.subr.mxu0 0.0
      %4606 = vmatpush1.xpose.msra.mxu0 0.0
      %4607 = vmatprep.subr.mxu0 0.0
      %4608 = vmatpush1.xpose.msra.mxu0 0.0
      %4609 = vmatprep.subr.mxu0 0.0
      %4610 = vmatpush1.xpose.msra.mxu0 0.0
      %4611 = vmatprep.subr.mxu0 0.0
      %4612 = vmatpush1.xpose.msra.mxu0 0.0
      %4613 = vmatprep.subr.mxu0 0.0
      %4614 = vmatpush1.xpose.msra.mxu0 0.0
      %4615 = vmatprep.subr.mxu0 0.0
      %4616 = vmatpush1.xpose.msra.mxu0 0.0
      %4617 = vmatprep.subr.mxu0 0.0
      %4618 = vmatpush1.xpose.msra.mxu0 0.0
      %4619 = vmatprep.subr.mxu0 0.0
      %4620 = vmatpush1.xpose.msra.mxu0 0.0
      %4621 = vmatprep.subr.mxu0 0.0
      %4622 = vmatpush1.xpose.msra.mxu0 0.0
      %4623 = vmatprep.subr.mxu0 0.0
      %4624 = vmatpush1.xpose.msra.mxu0 0.0
      %4625 = vmatprep.subr.mxu0 0.0
      %4626 = vmatpush1.xpose.msra.mxu0 0.0
      %4627 = vmatprep.subr.mxu0 0.0
      %4628 = vmatpush1.xpose.msra.mxu0 0.0
      %4629 = vmatprep.subr.mxu0 0.0
      %4630 = vmatpush1.xpose.msra.mxu0 0.0
      %4631 = vmatprep.subr.mxu0 0.0
      %4632 = vmatpush1.xpose.msra.mxu0 0.0
      %4633 = vmatprep.subr.mxu0 0.0
      %4634 = vmatpush1.xpose.msra.mxu0 %v4603
      %4635 = vmatprep.subr.mxu0 0.0
      %4636 = vmatpush1.xpose.msra.mxu0 %v4601
      %4637 = vmatprep.subr.mxu0 0.0
      %4638 = vmatpush2.xpose.msra.mxu0 0.0
      %4639 = vmatprep.subr.mxu0 0.0
      %4640 = vmatpush2.xpose.msra.mxu0 0.0
      %4641 = vmatprep.subr.mxu0 0.0
      %4642 = vmatpush2.xpose.msra.mxu0 0.0
      %4643 = vmatprep.subr.mxu0 0.0
      %4644 = vmatpush2.xpose.msra.mxu0 0.0
      %4645 = vmatprep.subr.mxu0 0.0
      %4646 = vmatpush2.xpose.msra.mxu0 0.0
      %4647 = vmatprep.subr.mxu0 0.0
      %4648 = vmatpush2.xpose.msra.mxu0 0.0
      %4649 = vmatprep.subr.mxu0 0.0
      %4650 = vmatpush2.xpose.msra.mxu0 0.0
      %4651 = vmatprep.subr.mxu0 0.0
      %4652 = vmatpush2.xpose.msra.mxu0 0.0
      %4653 = vmatprep.subr.mxu0 0.0
      %4654 = vmatpush2.xpose.msra.mxu0 0.0
      %4655 = vmatprep.subr.mxu0 0.0
      %4656 = vmatpush2.xpose.msra.mxu0 0.0
      %4657 = vmatprep.subr.mxu0 0.0
      %4658 = vmatpush2.xpose.msra.mxu0 0.0
      %4659 = vmatprep.subr.mxu0 0.0
      %4660 = vmatpush2.xpose.msra.mxu0 0.0
      %4661 = vmatprep.subr.mxu0 0.0
      %4662 = vmatpush2.xpose.msra.mxu0 0.0
      %4663 = vmatprep.subr.mxu0 0.0
      %4664 = vmatpush2.xpose.msra.mxu0 0.0
      %4665 = vmatprep.subr.mxu0 0.0
      %4666 = vmatpush2.xpose.msra.mxu0 0.0
      %4667 = vmatprep.subr.mxu0 0.0
      %4668 = vmatpush2.xpose.msra.mxu0 0.0
      %4669 = vmatprep.mubr.f32.mxu0 0.0
      %4670 = vmatmul.mubr.f32.gmra.mxu0 %v4597
      %v4671 = vpop.f32.mrf.mxu0
      %v4672 = vadd.f32 0.0, %v4671
      %v4673 = vpop.f32.mrf.mxu0
      %4674 = vmatprep.mubr.f32.mxu0 0.0
      %4675 = vmatmul.mubr.f32.gmra.mxu0 %v4599
      %v4676 = vpop.f32.mrf.mxu0
      %v4677 = vadd.f32 0.0, %v4676
      %v4678 = vpop.f32.mrf.mxu0
      %4679 = vdwg.mxu0
      %4680 = vrot.lane.b32.xlu0 %v836, 112
      %v4681 = vpop.permute.xlu0 %4680
      %4682 = vrot.lane.b32.xlu0 %v841, 112
      %v4683 = vpop.permute.xlu0 %4682
      %4684 = vrot.lane.b32.xlu0 %v836, 80
      %v4685 = vpop.permute.xlu0 %4684
      %4686 = vrot.lane.b32.xlu0 %v841, 80
      %v4687 = vpop.permute.xlu0 %4686
      %v4688 = vsel %vm900, %v4681, 0
      %v4690 = vsel %vm900, %v4683, 0
      %v4692 = vsel %vm900, %v4685, 0
      %v4694 = vsel %vm900, %v4687, 0
      %4696 = vmatprep.subr.mxu0 0.0
      %4697 = vmatpush1.xpose.msra.mxu0 0.0
      %4698 = vmatprep.subr.mxu0 0.0
      %4699 = vmatpush1.xpose.msra.mxu0 0.0
      %4700 = vmatprep.subr.mxu0 0.0
      %4701 = vmatpush1.xpose.msra.mxu0 0.0
      %4702 = vmatprep.subr.mxu0 0.0
      %4703 = vmatpush1.xpose.msra.mxu0 0.0
      %4704 = vmatprep.subr.mxu0 0.0
      %4705 = vmatpush1.xpose.msra.mxu0 0.0
      %4706 = vmatprep.subr.mxu0 0.0
      %4707 = vmatpush1.xpose.msra.mxu0 0.0
      %4708 = vmatprep.subr.mxu0 0.0
      %4709 = vmatpush1.xpose.msra.mxu0 0.0
      %4710 = vmatprep.subr.mxu0 0.0
      %4711 = vmatpush1.xpose.msra.mxu0 0.0
      %4712 = vmatprep.subr.mxu0 0.0
      %4713 = vmatpush1.xpose.msra.mxu0 0.0
      %4714 = vmatprep.subr.mxu0 0.0
      %4715 = vmatpush1.xpose.msra.mxu0 0.0
      %4716 = vmatprep.subr.mxu0 0.0
      %4717 = vmatpush1.xpose.msra.mxu0 0.0
      %4718 = vmatprep.subr.mxu0 0.0
      %4719 = vmatpush1.xpose.msra.mxu0 0.0
      %4720 = vmatprep.subr.mxu0 0.0
      %4721 = vmatpush1.xpose.msra.mxu0 0.0
      %4722 = vmatprep.subr.mxu0 0.0
      %4723 = vmatpush1.xpose.msra.mxu0 0.0
      %4724 = vmatprep.subr.mxu0 0.0
      %4725 = vmatpush1.xpose.msra.mxu0 %v4694
      %4726 = vmatprep.subr.mxu0 0.0
      %4727 = vmatpush1.xpose.msra.mxu0 %v4692
      %4728 = vmatprep.subr.mxu0 0.0
      %4729 = vmatpush2.xpose.msra.mxu0 0.0
      %4730 = vmatprep.subr.mxu0 0.0
      %4731 = vmatpush2.xpose.msra.mxu0 0.0
      %4732 = vmatprep.subr.mxu0 0.0
      %4733 = vmatpush2.xpose.msra.mxu0 0.0
      %4734 = vmatprep.subr.mxu0 0.0
      %4735 = vmatpush2.xpose.msra.mxu0 0.0
      %4736 = vmatprep.subr.mxu0 0.0
      %4737 = vmatpush2.xpose.msra.mxu0 0.0
      %4738 = vmatprep.subr.mxu0 0.0
      %4739 = vmatpush2.xpose.msra.mxu0 0.0
      %4740 = vmatprep.subr.mxu0 0.0
      %4741 = vmatpush2.xpose.msra.mxu0 0.0
      %4742 = vmatprep.subr.mxu0 0.0
      %4743 = vmatpush2.xpose.msra.mxu0 0.0
      %4744 = vmatprep.subr.mxu0 0.0
      %4745 = vmatpush2.xpose.msra.mxu0 0.0
      %4746 = vmatprep.subr.mxu0 0.0
      %4747 = vmatpush2.xpose.msra.mxu0 0.0
      %4748 = vmatprep.subr.mxu0 0.0
      %4749 = vmatpush2.xpose.msra.mxu0 0.0
      %4750 = vmatprep.subr.mxu0 0.0
      %4751 = vmatpush2.xpose.msra.mxu0 0.0
      %4752 = vmatprep.subr.mxu0 0.0
      %4753 = vmatpush2.xpose.msra.mxu0 0.0
      %4754 = vmatprep.subr.mxu0 0.0
      %4755 = vmatpush2.xpose.msra.mxu0 0.0
      %4756 = vmatprep.subr.mxu0 0.0
      %4757 = vmatpush2.xpose.msra.mxu0 0.0
      %4758 = vmatprep.subr.mxu0 0.0
      %4759 = vmatpush2.xpose.msra.mxu0 0.0
      %4760 = vmatprep.mubr.f32.mxu0 0.0
      %4761 = vmatmul.mubr.f32.gmra.mxu0 %v4688
      %v4762 = vpop.f32.mrf.mxu0
      %v4763 = vadd.f32 0.0, %v4762
      %v4764 = vpop.f32.mrf.mxu0
      %4765 = vmatprep.mubr.f32.mxu0 0.0
      %4766 = vmatmul.mubr.f32.gmra.mxu0 %v4690
      %v4767 = vpop.f32.mrf.mxu0
      %v4768 = vadd.f32 0.0, %v4767
      %v4769 = vpop.f32.mrf.mxu0
      %4770 = vdwg.mxu0
      %4771 = vrot.lane.b32.xlu0 %v846, 112
      %v4772 = vpop.permute.xlu0 %4771
      %4773 = vrot.lane.b32.xlu0 %v851, 112
      %v4774 = vpop.permute.xlu0 %4773
      %4775 = vrot.lane.b32.xlu0 %v846, 80
      %v4776 = vpop.permute.xlu0 %4775
      %4777 = vrot.lane.b32.xlu0 %v851, 80
      %v4778 = vpop.permute.xlu0 %4777
      %v4779 = vsel %vm900, %v4772, 0
      %v4781 = vsel %vm900, %v4774, 0
      %v4783 = vsel %vm900, %v4776, 0
      %v4785 = vsel %vm900, %v4778, 0
      %4787 = vmatprep.subr.mxu0 0.0
      %4788 = vmatpush1.xpose.msra.mxu0 0.0
      %4789 = vmatprep.subr.mxu0 0.0
      %4790 = vmatpush1.xpose.msra.mxu0 0.0
      %4791 = vmatprep.subr.mxu0 0.0
      %4792 = vmatpush1.xpose.msra.mxu0 0.0
      %4793 = vmatprep.subr.mxu0 0.0
      %4794 = vmatpush1.xpose.msra.mxu0 0.0
      %4795 = vmatprep.subr.mxu0 0.0
      %4796 = vmatpush1.xpose.msra.mxu0 0.0
      %4797 = vmatprep.subr.mxu0 0.0
      %4798 = vmatpush1.xpose.msra.mxu0 0.0
      %4799 = vmatprep.subr.mxu0 0.0
      %4800 = vmatpush1.xpose.msra.mxu0 0.0
      %4801 = vmatprep.subr.mxu0 0.0
      %4802 = vmatpush1.xpose.msra.mxu0 0.0
      %4803 = vmatprep.subr.mxu0 0.0
      %4804 = vmatpush1.xpose.msra.mxu0 0.0
      %4805 = vmatprep.subr.mxu0 0.0
      %4806 = vmatpush1.xpose.msra.mxu0 0.0
      %4807 = vmatprep.subr.mxu0 0.0
      %4808 = vmatpush1.xpose.msra.mxu0 0.0
      %4809 = vmatprep.subr.mxu0 0.0
      %4810 = vmatpush1.xpose.msra.mxu0 0.0
      %4811 = vmatprep.subr.mxu0 0.0
      %4812 = vmatpush1.xpose.msra.mxu0 0.0
      %4813 = vmatprep.subr.mxu0 0.0
      %4814 = vmatpush1.xpose.msra.mxu0 0.0
      %4815 = vmatprep.subr.mxu0 0.0
      %4816 = vmatpush1.xpose.msra.mxu0 %v4785
      %4817 = vmatprep.subr.mxu0 0.0
      %4818 = vmatpush1.xpose.msra.mxu0 %v4783
      %4819 = vmatprep.subr.mxu0 0.0
      %4820 = vmatpush2.xpose.msra.mxu0 0.0
      %4821 = vmatprep.subr.mxu0 0.0
      %4822 = vmatpush2.xpose.msra.mxu0 0.0
      %4823 = vmatprep.subr.mxu0 0.0
      %4824 = vmatpush2.xpose.msra.mxu0 0.0
      %4825 = vmatprep.subr.mxu0 0.0
      %4826 = vmatpush2.xpose.msra.mxu0 0.0
      %4827 = vmatprep.subr.mxu0 0.0
      %4828 = vmatpush2.xpose.msra.mxu0 0.0
      %4829 = vmatprep.subr.mxu0 0.0
      %4830 = vmatpush2.xpose.msra.mxu0 0.0
      %4831 = vmatprep.subr.mxu0 0.0
      %4832 = vmatpush2.xpose.msra.mxu0 0.0
      %4833 = vmatprep.subr.mxu0 0.0
      %4834 = vmatpush2.xpose.msra.mxu0 0.0
      %4835 = vmatprep.subr.mxu0 0.0
      %4836 = vmatpush2.xpose.msra.mxu0 0.0
      %4837 = vmatprep.subr.mxu0 0.0
      %4838 = vmatpush2.xpose.msra.mxu0 0.0
      %4839 = vmatprep.subr.mxu0 0.0
      %4840 = vmatpush2.xpose.msra.mxu0 0.0
      %4841 = vmatprep.subr.mxu0 0.0
      %4842 = vmatpush2.xpose.msra.mxu0 0.0
      %4843 = vmatprep.subr.mxu0 0.0
      %4844 = vmatpush2.xpose.msra.mxu0 0.0
      %4845 = vmatprep.subr.mxu0 0.0
      %4846 = vmatpush2.xpose.msra.mxu0 0.0
      %4847 = vmatprep.subr.mxu0 0.0
      %4848 = vmatpush2.xpose.msra.mxu0 0.0
      %4849 = vmatprep.subr.mxu0 0.0
      %4850 = vmatpush2.xpose.msra.mxu0 0.0
      %4851 = vmatprep.mubr.f32.mxu0 0.0
      %4852 = vmatmul.mubr.f32.gmra.mxu0 %v4779
      %v4853 = vpop.f32.mrf.mxu0
      %v4854 = vadd.f32 0.0, %v4853
      %v4855 = vpop.f32.mrf.mxu0
      %4856 = vmatprep.mubr.f32.mxu0 0.0
      %4857 = vmatmul.mubr.f32.gmra.mxu0 %v4781
      %v4858 = vpop.f32.mrf.mxu0
      %v4859 = vadd.f32 0.0, %v4858
      %v4860 = vpop.f32.mrf.mxu0
      %4861 = vdwg.mxu0
      %4862 = vrot.lane.b32.xlu0 %v856, 112
      %v4863 = vpop.permute.xlu0 %4862
      %4864 = vrot.lane.b32.xlu0 %v861, 112
      %v4865 = vpop.permute.xlu0 %4864
      %4866 = vrot.lane.b32.xlu0 %v856, 80
      %v4867 = vpop.permute.xlu0 %4866
      %4868 = vrot.lane.b32.xlu0 %v861, 80
      %v4869 = vpop.permute.xlu0 %4868
      %v4870 = vsel %vm900, %v4863, 0
      %v4872 = vsel %vm900, %v4865, 0
      %v4874 = vsel %vm900, %v4867, 0
      %v4876 = vsel %vm900, %v4869, 0
      %4878 = vmatprep.subr.mxu0 0.0
      %4879 = vmatpush1.xpose.msra.mxu0 0.0
      %4880 = vmatprep.subr.mxu0 0.0
      %4881 = vmatpush1.xpose.msra.mxu0 0.0
      %4882 = vmatprep.subr.mxu0 0.0
      %4883 = vmatpush1.xpose.msra.mxu0 0.0
      %4884 = vmatprep.subr.mxu0 0.0
      %4885 = vmatpush1.xpose.msra.mxu0 0.0
      %4886 = vmatprep.subr.mxu0 0.0
      %4887 = vmatpush1.xpose.msra.mxu0 0.0
      %4888 = vmatprep.subr.mxu0 0.0
      %4889 = vmatpush1.xpose.msra.mxu0 0.0
      %4890 = vmatprep.subr.mxu0 0.0
      %4891 = vmatpush1.xpose.msra.mxu0 0.0
      %4892 = vmatprep.subr.mxu0 0.0
      %4893 = vmatpush1.xpose.msra.mxu0 0.0
      %4894 = vmatprep.subr.mxu0 0.0
      %4895 = vmatpush1.xpose.msra.mxu0 0.0
      %4896 = vmatprep.subr.mxu0 0.0
      %4897 = vmatpush1.xpose.msra.mxu0 0.0
      %4898 = vmatprep.subr.mxu0 0.0
      %4899 = vmatpush1.xpose.msra.mxu0 0.0
      %4900 = vmatprep.subr.mxu0 0.0
      %4901 = vmatpush1.xpose.msra.mxu0 0.0
      %4902 = vmatprep.subr.mxu0 0.0
      %4903 = vmatpush1.xpose.msra.mxu0 0.0
      %4904 = vmatprep.subr.mxu0 0.0
      %4905 = vmatpush1.xpose.msra.mxu0 0.0
      %4906 = vmatprep.subr.mxu0 0.0
      %4907 = vmatpush1.xpose.msra.mxu0 %v4876
      %4908 = vmatprep.subr.mxu0 0.0
      %4909 = vmatpush1.xpose.msra.mxu0 %v4874
      %4910 = vmatprep.subr.mxu0 0.0
      %4911 = vmatpush2.xpose.msra.mxu0 0.0
      %4912 = vmatprep.subr.mxu0 0.0
      %4913 = vmatpush2.xpose.msra.mxu0 0.0
      %4914 = vmatprep.subr.mxu0 0.0
      %4915 = vmatpush2.xpose.msra.mxu0 0.0
      %4916 = vmatprep.subr.mxu0 0.0
      %4917 = vmatpush2.xpose.msra.mxu0 0.0
      %4918 = vmatprep.subr.mxu0 0.0
      %4919 = vmatpush2.xpose.msra.mxu0 0.0
      %4920 = vmatprep.subr.mxu0 0.0
      %4921 = vmatpush2.xpose.msra.mxu0 0.0
      %4922 = vmatprep.subr.mxu0 0.0
      %4923 = vmatpush2.xpose.msra.mxu0 0.0
      %4924 = vmatprep.subr.mxu0 0.0
      %4925 = vmatpush2.xpose.msra.mxu0 0.0
      %4926 = vmatprep.subr.mxu0 0.0
      %4927 = vmatpush2.xpose.msra.mxu0 0.0
      %4928 = vmatprep.subr.mxu0 0.0
      %4929 = vmatpush2.xpose.msra.mxu0 0.0
      %4930 = vmatprep.subr.mxu0 0.0
      %4931 = vmatpush2.xpose.msra.mxu0 0.0
      %4932 = vmatprep.subr.mxu0 0.0
      %4933 = vmatpush2.xpose.msra.mxu0 0.0
      %4934 = vmatprep.subr.mxu0 0.0
      %4935 = vmatpush2.xpose.msra.mxu0 0.0
      %4936 = vmatprep.subr.mxu0 0.0
      %4937 = vmatpush2.xpose.msra.mxu0 0.0
      %4938 = vmatprep.subr.mxu0 0.0
      %4939 = vmatpush2.xpose.msra.mxu0 0.0
      %4940 = vmatprep.subr.mxu0 0.0
      %4941 = vmatpush2.xpose.msra.mxu0 0.0
      %4942 = vmatprep.mubr.f32.mxu0 0.0
      %4943 = vmatmul.mubr.f32.gmra.mxu0 %v4870
      %v4944 = vpop.f32.mrf.mxu0
      %v4945 = vadd.f32 0.0, %v4944
      %v4946 = vpop.f32.mrf.mxu0
      %4947 = vmatprep.mubr.f32.mxu0 0.0
      %4948 = vmatmul.mubr.f32.gmra.mxu0 %v4872
      %v4949 = vpop.f32.mrf.mxu0
      %v4950 = vadd.f32 0.0, %v4949
      %v4951 = vpop.f32.mrf.mxu0
      %4952 = vdwg.mxu0
      %4953 = vrot.lane.b32.xlu0 %v866, 112
      %v4954 = vpop.permute.xlu0 %4953
      %4955 = vrot.lane.b32.xlu0 %v871, 112
      %v4956 = vpop.permute.xlu0 %4955
      %4957 = vrot.lane.b32.xlu0 %v866, 80
      %v4958 = vpop.permute.xlu0 %4957
      %4959 = vrot.lane.b32.xlu0 %v871, 80
      %v4960 = vpop.permute.xlu0 %4959
      %v4961 = vsel %vm900, %v4954, 0
      %v4963 = vsel %vm900, %v4956, 0
      %v4965 = vsel %vm900, %v4958, 0
      %v4967 = vsel %vm900, %v4960, 0
      %4969 = vmatprep.subr.mxu0 0.0
      %4970 = vmatpush1.xpose.msra.mxu0 0.0
      %4971 = vmatprep.subr.mxu0 0.0
      %4972 = vmatpush1.xpose.msra.mxu0 0.0
      %4973 = vmatprep.subr.mxu0 0.0
      %4974 = vmatpush1.xpose.msra.mxu0 0.0
      %4975 = vmatprep.subr.mxu0 0.0
      %4976 = vmatpush1.xpose.msra.mxu0 0.0
      %4977 = vmatprep.subr.mxu0 0.0
      %4978 = vmatpush1.xpose.msra.mxu0 0.0
      %4979 = vmatprep.subr.mxu0 0.0
      %4980 = vmatpush1.xpose.msra.mxu0 0.0
      %4981 = vmatprep.subr.mxu0 0.0
      %4982 = vmatpush1.xpose.msra.mxu0 0.0
      %4983 = vmatprep.subr.mxu0 0.0
      %4984 = vmatpush1.xpose.msra.mxu0 0.0
      %4985 = vmatprep.subr.mxu0 0.0
      %4986 = vmatpush1.xpose.msra.mxu0 0.0
      %4987 = vmatprep.subr.mxu0 0.0
      %4988 = vmatpush1.xpose.msra.mxu0 0.0
      %4989 = vmatprep.subr.mxu0 0.0
      %4990 = vmatpush1.xpose.msra.mxu0 0.0
      %4991 = vmatprep.subr.mxu0 0.0
      %4992 = vmatpush1.xpose.msra.mxu0 0.0
      %4993 = vmatprep.subr.mxu0 0.0
      %4994 = vmatpush1.xpose.msra.mxu0 0.0
      %4995 = vmatprep.subr.mxu0 0.0
      %4996 = vmatpush1.xpose.msra.mxu0 0.0
      %4997 = vmatprep.subr.mxu0 0.0
      %4998 = vmatpush1.xpose.msra.mxu0 %v4967
      %4999 = vmatprep.subr.mxu0 0.0
      %5000 = vmatpush1.xpose.msra.mxu0 %v4965
      %5001 = vmatprep.subr.mxu0 0.0
      %5002 = vmatpush2.xpose.msra.mxu0 0.0
      %5003 = vmatprep.subr.mxu0 0.0
      %5004 = vmatpush2.xpose.msra.mxu0 0.0
      %5005 = vmatprep.subr.mxu0 0.0
      %5006 = vmatpush2.xpose.msra.mxu0 0.0
      %5007 = vmatprep.subr.mxu0 0.0
      %5008 = vmatpush2.xpose.msra.mxu0 0.0
      %5009 = vmatprep.subr.mxu0 0.0
      %5010 = vmatpush2.xpose.msra.mxu0 0.0
      %5011 = vmatprep.subr.mxu0 0.0
      %5012 = vmatpush2.xpose.msra.mxu0 0.0
      %5013 = vmatprep.subr.mxu0 0.0
      %5014 = vmatpush2.xpose.msra.mxu0 0.0
      %5015 = vmatprep.subr.mxu0 0.0
      %5016 = vmatpush2.xpose.msra.mxu0 0.0
      %5017 = vmatprep.subr.mxu0 0.0
      %5018 = vmatpush2.xpose.msra.mxu0 0.0
      %5019 = vmatprep.subr.mxu0 0.0
      %5020 = vmatpush2.xpose.msra.mxu0 0.0
      %5021 = vmatprep.subr.mxu0 0.0
      %5022 = vmatpush2.xpose.msra.mxu0 0.0
      %5023 = vmatprep.subr.mxu0 0.0
      %5024 = vmatpush2.xpose.msra.mxu0 0.0
      %5025 = vmatprep.subr.mxu0 0.0
      %5026 = vmatpush2.xpose.msra.mxu0 0.0
      %5027 = vmatprep.subr.mxu0 0.0
      %5028 = vmatpush2.xpose.msra.mxu0 0.0
      %5029 = vmatprep.subr.mxu0 0.0
      %5030 = vmatpush2.xpose.msra.mxu0 0.0
      %5031 = vmatprep.subr.mxu0 0.0
      %5032 = vmatpush2.xpose.msra.mxu0 0.0
      %5033 = vmatprep.mubr.f32.mxu0 0.0
      %5034 = vmatmul.mubr.f32.gmra.mxu0 %v4961
      %v5035 = vpop.f32.mrf.mxu0
      %v5036 = vadd.f32 0.0, %v5035
      %v5037 = vpop.f32.mrf.mxu0
      %5038 = vmatprep.mubr.f32.mxu0 0.0
      %5039 = vmatmul.mubr.f32.gmra.mxu0 %v4963
      %v5040 = vpop.f32.mrf.mxu0
      %v5041 = vadd.f32 0.0, %v5040
      %v5042 = vpop.f32.mrf.mxu0
      %5043 = vdwg.mxu0
      %5044 = vrot.lane.b32.xlu0 %v876, 112
      %v5045 = vpop.permute.xlu0 %5044
      %5046 = vrot.lane.b32.xlu0 %v881, 112
      %v5047 = vpop.permute.xlu0 %5046
      %5048 = vrot.lane.b32.xlu0 %v876, 80
      %v5049 = vpop.permute.xlu0 %5048
      %5050 = vrot.lane.b32.xlu0 %v881, 80
      %v5051 = vpop.permute.xlu0 %5050
      %v5052 = vsel %vm900, %v5045, 0
      %v5054 = vsel %vm900, %v5047, 0
      %v5056 = vsel %vm900, %v5049, 0
      %v5058 = vsel %vm900, %v5051, 0
      %5060 = vmatprep.subr.mxu0 0.0
      %5061 = vmatpush1.xpose.msra.mxu0 0.0
      %5062 = vmatprep.subr.mxu0 0.0
      %5063 = vmatpush1.xpose.msra.mxu0 0.0
      %5064 = vmatprep.subr.mxu0 0.0
      %5065 = vmatpush1.xpose.msra.mxu0 0.0
      %5066 = vmatprep.subr.mxu0 0.0
      %5067 = vmatpush1.xpose.msra.mxu0 0.0
      %5068 = vmatprep.subr.mxu0 0.0
      %5069 = vmatpush1.xpose.msra.mxu0 0.0
      %5070 = vmatprep.subr.mxu0 0.0
      %5071 = vmatpush1.xpose.msra.mxu0 0.0
      %5072 = vmatprep.subr.mxu0 0.0
      %5073 = vmatpush1.xpose.msra.mxu0 0.0
      %5074 = vmatprep.subr.mxu0 0.0
      %5075 = vmatpush1.xpose.msra.mxu0 0.0
      %5076 = vmatprep.subr.mxu0 0.0
      %5077 = vmatpush1.xpose.msra.mxu0 0.0
      %5078 = vmatprep.subr.mxu0 0.0
      %5079 = vmatpush1.xpose.msra.mxu0 0.0
      %5080 = vmatprep.subr.mxu0 0.0
      %5081 = vmatpush1.xpose.msra.mxu0 0.0
      %5082 = vmatprep.subr.mxu0 0.0
      %5083 = vmatpush1.xpose.msra.mxu0 0.0
      %5084 = vmatprep.subr.mxu0 0.0
      %5085 = vmatpush1.xpose.msra.mxu0 0.0
      %5086 = vmatprep.subr.mxu0 0.0
      %5087 = vmatpush1.xpose.msra.mxu0 0.0
      %5088 = vmatprep.subr.mxu0 0.0
      %5089 = vmatpush1.xpose.msra.mxu0 %v5058
      %5090 = vmatprep.subr.mxu0 0.0
      %5091 = vmatpush1.xpose.msra.mxu0 %v5056
      %5092 = vmatprep.subr.mxu0 0.0
      %5093 = vmatpush2.xpose.msra.mxu0 0.0
      %5094 = vmatprep.subr.mxu0 0.0
      %5095 = vmatpush2.xpose.msra.mxu0 0.0
      %5096 = vmatprep.subr.mxu0 0.0
      %5097 = vmatpush2.xpose.msra.mxu0 0.0
      %5098 = vmatprep.subr.mxu0 0.0
      %5099 = vmatpush2.xpose.msra.mxu0 0.0
      %5100 = vmatprep.subr.mxu0 0.0
      %5101 = vmatpush2.xpose.msra.mxu0 0.0
      %5102 = vmatprep.subr.mxu0 0.0
      %5103 = vmatpush2.xpose.msra.mxu0 0.0
      %5104 = vmatprep.subr.mxu0 0.0
      %5105 = vmatpush2.xpose.msra.mxu0 0.0
      %5106 = vmatprep.subr.mxu0 0.0
      %5107 = vmatpush2.xpose.msra.mxu0 0.0
      %5108 = vmatprep.subr.mxu0 0.0
      %5109 = vmatpush2.xpose.msra.mxu0 0.0
      %5110 = vmatprep.subr.mxu0 0.0
      %5111 = vmatpush2.xpose.msra.mxu0 0.0
      %5112 = vmatprep.subr.mxu0 0.0
      %5113 = vmatpush2.xpose.msra.mxu0 0.0
      %5114 = vmatprep.subr.mxu0 0.0
      %5115 = vmatpush2.xpose.msra.mxu0 0.0
      %5116 = vmatprep.subr.mxu0 0.0
      %5117 = vmatpush2.xpose.msra.mxu0 0.0
      %5118 = vmatprep.subr.mxu0 0.0
      %5119 = vmatpush2.xpose.msra.mxu0 0.0
      %5120 = vmatprep.subr.mxu0 0.0
      %5121 = vmatpush2.xpose.msra.mxu0 0.0
      %5122 = vmatprep.subr.mxu0 0.0
      %5123 = vmatpush2.xpose.msra.mxu0 0.0
      %5124 = vmatprep.mubr.f32.mxu0 0.0
      %5125 = vmatmul.mubr.f32.gmra.mxu0 %v5052
      %v5126 = vpop.f32.mrf.mxu0
      %v5127 = vadd.f32 0.0, %v5126
      %v5128 = vpop.f32.mrf.mxu0
      %5129 = vmatprep.mubr.f32.mxu0 0.0
      %5130 = vmatmul.mubr.f32.gmra.mxu0 %v5054
      %v5131 = vpop.f32.mrf.mxu0
      %v5132 = vadd.f32 0.0, %v5131
      %v5133 = vpop.f32.mrf.mxu0
      %5134 = vdwg.mxu0
      %5135 = vrot.lane.b32.xlu0 %v886, 112
      %v5136 = vpop.permute.xlu0 %5135
      %5137 = vrot.lane.b32.xlu0 %v891, 112
      %v5138 = vpop.permute.xlu0 %5137
      %5139 = vrot.lane.b32.xlu0 %v886, 80
      %v5140 = vpop.permute.xlu0 %5139
      %5141 = vrot.lane.b32.xlu0 %v891, 80
      %v5142 = vpop.permute.xlu0 %5141
      %v5143 = vsel %vm900, %v5136, 0
      %v5145 = vsel %vm900, %v5138, 0
      %v5147 = vsel %vm900, %v5140, 0
      %v5149 = vsel %vm900, %v5142, 0
      %5151 = vmatprep.subr.mxu0 0.0
      %5152 = vmatpush1.xpose.msra.mxu0 0.0
      %5153 = vmatprep.subr.mxu0 0.0
      %5154 = vmatpush1.xpose.msra.mxu0 0.0
      %5155 = vmatprep.subr.mxu0 0.0
      %5156 = vmatpush1.xpose.msra.mxu0 0.0
      %5157 = vmatprep.subr.mxu0 0.0
      %5158 = vmatpush1.xpose.msra.mxu0 0.0
      %5159 = vmatprep.subr.mxu0 0.0
      %5160 = vmatpush1.xpose.msra.mxu0 0.0
      %5161 = vmatprep.subr.mxu0 0.0
      %5162 = vmatpush1.xpose.msra.mxu0 0.0
      %5163 = vmatprep.subr.mxu0 0.0
      %5164 = vmatpush1.xpose.msra.mxu0 0.0
      %5165 = vmatprep.subr.mxu0 0.0
      %5166 = vmatpush1.xpose.msra.mxu0 0.0
      %5167 = vmatprep.subr.mxu0 0.0
      %5168 = vmatpush1.xpose.msra.mxu0 0.0
      %5169 = vmatprep.subr.mxu0 0.0
      %5170 = vmatpush1.xpose.msra.mxu0 0.0
      %5171 = vmatprep.subr.mxu0 0.0
      %5172 = vmatpush1.xpose.msra.mxu0 0.0
      %5173 = vmatprep.subr.mxu0 0.0
      %5174 = vmatpush1.xpose.msra.mxu0 0.0
      %5175 = vmatprep.subr.mxu0 0.0
      %5176 = vmatpush1.xpose.msra.mxu0 0.0
      %5177 = vmatprep.subr.mxu0 0.0
      %5178 = vmatpush1.xpose.msra.mxu0 0.0
      %5179 = vmatprep.subr.mxu0 0.0
      %5180 = vmatpush1.xpose.msra.mxu0 %v5149
      %5181 = vmatprep.subr.mxu0 0.0
      %5182 = vmatpush1.xpose.msra.mxu0 %v5147
      %5183 = vmatprep.subr.mxu0 0.0
      %5184 = vmatpush2.xpose.msra.mxu0 0.0
      %5185 = vmatprep.subr.mxu0 0.0
      %5186 = vmatpush2.xpose.msra.mxu0 0.0
      %5187 = vmatprep.subr.mxu0 0.0
      %5188 = vmatpush2.xpose.msra.mxu0 0.0
      %5189 = vmatprep.subr.mxu0 0.0
      %5190 = vmatpush2.xpose.msra.mxu0 0.0
      %5191 = vmatprep.subr.mxu0 0.0
      %5192 = vmatpush2.xpose.msra.mxu0 0.0
      %5193 = vmatprep.subr.mxu0 0.0
      %5194 = vmatpush2.xpose.msra.mxu0 0.0
      %5195 = vmatprep.subr.mxu0 0.0
      %5196 = vmatpush2.xpose.msra.mxu0 0.0
      %5197 = vmatprep.subr.mxu0 0.0
      %5198 = vmatpush2.xpose.msra.mxu0 0.0
      %5199 = vmatprep.subr.mxu0 0.0
      %5200 = vmatpush2.xpose.msra.mxu0 0.0
      %5201 = vmatprep.subr.mxu0 0.0
      %5202 = vmatpush2.xpose.msra.mxu0 0.0
      %5203 = vmatprep.subr.mxu0 0.0
      %5204 = vmatpush2.xpose.msra.mxu0 0.0
      %5205 = vmatprep.subr.mxu0 0.0
      %5206 = vmatpush2.xpose.msra.mxu0 0.0
      %5207 = vmatprep.subr.mxu0 0.0
      %5208 = vmatpush2.xpose.msra.mxu0 0.0
      %5209 = vmatprep.subr.mxu0 0.0
      %5210 = vmatpush2.xpose.msra.mxu0 0.0
      %5211 = vmatprep.subr.mxu0 0.0
      %5212 = vmatpush2.xpose.msra.mxu0 0.0
      %5213 = vmatprep.subr.mxu0 0.0
      %5214 = vmatpush2.xpose.msra.mxu0 0.0
      %5215 = vmatprep.mubr.f32.mxu0 0.0
      %5216 = vmatmul.mubr.f32.gmra.mxu0 %v5143
      %v5217 = vpop.f32.mrf.mxu0
      %v5218 = vadd.f32 0.0, %v5217
      %v5219 = vpop.f32.mrf.mxu0
      %5220 = vmatprep.mubr.f32.mxu0 0.0
      %5221 = vmatmul.mubr.f32.gmra.mxu0 %v5145
      %v5222 = vpop.f32.mrf.mxu0
      %v5223 = vadd.f32 0.0, %v5222
      %v5224 = vpop.f32.mrf.mxu0
      %5225 = vdwg.mxu0
      %v5226 = vmul.f32 %v4581, 0.35355338
      %v5227 = vmul.f32 %v4586, 0.35355338
      %v5228 = vmul.f32 %v4672, 0.35355338
      %v5229 = vmul.f32 %v4677, 0.35355338
      %v5230 = vmul.f32 %v4763, 0.35355338
      %v5231 = vmul.f32 %v4768, 0.35355338
      %v5232 = vmul.f32 %v4854, 0.35355338
      %v5233 = vmul.f32 %v4859, 0.35355338
      %v5234 = vmul.f32 %v4945, 0.35355338
      %v5235 = vmul.f32 %v4950, 0.35355338
      %v5236 = vmul.f32 %v5036, 0.35355338
      %v5237 = vmul.f32 %v5041, 0.35355338
      %v5238 = vmul.f32 %v5127, 0.35355338
      %v5239 = vmul.f32 %v5132, 0.35355338
      %v5240 = vmul.f32 %v5218, 0.35355338
      %v5241 = vmul.f32 %v5223, 0.35355338
      %v5242 = vsel %vm1623, %v5226, -inf
      %5243 = vmax.xlane.f32.xlu0 %v5242
      %v5244 = vpop.xlane.xlu0 %5243
      %v5245 = vsel %vm1623, %v5227, -inf
      %5246 = vmax.xlane.f32.xlu0 %v5245
      %v5247 = vpop.xlane.xlu0 %5246
      %v5248 = vsel %vm1623, %v5228, -inf
      %5249 = vmax.xlane.f32.xlu0 %v5248
      %v5250 = vpop.xlane.xlu0 %5249
      %v5251 = vsel %vm1623, %v5229, -inf
      %5252 = vmax.xlane.f32.xlu0 %v5251
      %v5253 = vpop.xlane.xlu0 %5252
      %v5254 = vsel %vm1623, %v5230, -inf
      %5255 = vmax.xlane.f32.xlu0 %v5254
      %v5256 = vpop.xlane.xlu0 %5255
      %v5257 = vsel %vm1623, %v5231, -inf
      %5258 = vmax.xlane.f32.xlu0 %v5257
      %v5259 = vpop.xlane.xlu0 %5258
      %v5260 = vsel %vm1623, %v5232, -inf
      %5261 = vmax.xlane.f32.xlu0 %v5260
      %v5262 = vpop.xlane.xlu0 %5261
      %v5263 = vsel %vm1623, %v5233, -inf
      %5264 = vmax.xlane.f32.xlu0 %v5263
      %v5265 = vpop.xlane.xlu0 %5264
      %v5266 = vsel %vm1623, %v5234, -inf
      %5267 = vmax.xlane.f32.xlu0 %v5266
      %v5268 = vpop.xlane.xlu0 %5267
      %v5269 = vsel %vm1623, %v5235, -inf
      %5270 = vmax.xlane.f32.xlu0 %v5269
      %v5271 = vpop.xlane.xlu0 %5270
      %v5272 = vsel %vm1623, %v5236, -inf
      %5273 = vmax.xlane.f32.xlu0 %v5272
      %v5274 = vpop.xlane.xlu0 %5273
      %v5275 = vsel %vm1623, %v5237, -inf
      %5276 = vmax.xlane.f32.xlu0 %v5275
      %v5277 = vpop.xlane.xlu0 %5276
      %v5278 = vsel %vm1623, %v5238, -inf
      %5279 = vmax.xlane.f32.xlu0 %v5278
      %v5280 = vpop.xlane.xlu0 %5279
      %v5281 = vsel %vm1623, %v5239, -inf
      %5282 = vmax.xlane.f32.xlu0 %v5281
      %v5283 = vpop.xlane.xlu0 %5282
      %v5284 = vsel %vm1623, %v5240, -inf
      %5285 = vmax.xlane.f32.xlu0 %v5284
      %v5286 = vpop.xlane.xlu0 %5285
      %v5287 = vsel %vm1623, %v5241, -inf
      %5288 = vmax.xlane.f32.xlu0 %v5287
      %v5289 = vpop.xlane.xlu0 %5288
      %v5290 = vsub.f32 %v5226, %v5244
      %v5291 = vsub.f32 %v5227, %v5247
      %v5292 = vsub.f32 %v5228, %v5250
      %v5293 = vsub.f32 %v5229, %v5253
      %v5294 = vsub.f32 %v5230, %v5256
      %v5295 = vsub.f32 %v5231, %v5259
      %v5296 = vsub.f32 %v5232, %v5262
      %v5297 = vsub.f32 %v5233, %v5265
      %v5298 = vsub.f32 %v5234, %v5268
      %v5299 = vsub.f32 %v5235, %v5271
      %v5300 = vsub.f32 %v5236, %v5274
      %v5301 = vsub.f32 %v5237, %v5277
      %v5302 = vsub.f32 %v5238, %v5280
      %v5303 = vsub.f32 %v5239, %v5283
      %v5304 = vsub.f32 %v5240, %v5286
      %v5305 = vsub.f32 %v5241, %v5289
      %v5306 = vmul.f32 %v5290, 1.442695
      %v5307 = vpow.pop %v5306
      %v5308 = vmul.f32 %v5291, 1.442695
      %v5309 = vpow.pop %v5308
      %v5310 = vmul.f32 %v5292, 1.442695
      %v5311 = vpow.pop %v5310
      %v5312 = vmul.f32 %v5293, 1.442695
      %v5313 = vpow.pop %v5312
      %v5314 = vmul.f32 %v5294, 1.442695
      %v5315 = vpow.pop %v5314
      %v5316 = vmul.f32 %v5295, 1.442695
      %v5317 = vpow.pop %v5316
      %v5318 = vmul.f32 %v5296, 1.442695
      %v5319 = vpow.pop %v5318
      %v5320 = vmul.f32 %v5297, 1.442695
      %v5321 = vpow.pop %v5320
      %v5322 = vmul.f32 %v5298, 1.442695
      %v5323 = vpow.pop %v5322
      %v5324 = vmul.f32 %v5299, 1.442695
      %v5325 = vpow.pop %v5324
      %v5326 = vmul.f32 %v5300, 1.442695
      %v5327 = vpow.pop %v5326
      %v5328 = vmul.f32 %v5301, 1.442695
      %v5329 = vpow.pop %v5328
      %v5330 = vmul.f32 %v5302, 1.442695
      %v5331 = vpow.pop %v5330
      %v5332 = vmul.f32 %v5303, 1.442695
      %v5333 = vpow.pop %v5332
      %v5334 = vmul.f32 %v5304, 1.442695
      %v5335 = vpow.pop %v5334
      %v5336 = vmul.f32 %v5305, 1.442695
      %v5337 = vpow.pop %v5336
      %v5338 = vsel %vm1623, %v5307, 0.0
      %5339 = vadd.xlane.f32.xlu0 %v5338
      %v5340 = vpop.xlane.xlu0 %5339
      %v5341 = vsel %vm1623, %v5309, 0.0
      %5342 = vadd.xlane.f32.xlu0 %v5341
      %v5343 = vpop.xlane.xlu0 %5342
      %v5344 = vsel %vm1623, %v5311, 0.0
      %5345 = vadd.xlane.f32.xlu0 %v5344
      %v5346 = vpop.xlane.xlu0 %5345
      %v5347 = vsel %vm1623, %v5313, 0.0
      %5348 = vadd.xlane.f32.xlu0 %v5347
      %v5349 = vpop.xlane.xlu0 %5348
      %v5350 = vsel %vm1623, %v5315, 0.0
      %5351 = vadd.xlane.f32.xlu0 %v5350
      %v5352 = vpop.xlane.xlu0 %5351
      %v5353 = vsel %vm1623, %v5317, 0.0
      %5354 = vadd.xlane.f32.xlu0 %v5353
      %v5355 = vpop.xlane.xlu0 %5354
      %v5356 = vsel %vm1623, %v5319, 0.0
      %5357 = vadd.xlane.f32.xlu0 %v5356
      %v5358 = vpop.xlane.xlu0 %5357
      %v5359 = vsel %vm1623, %v5321, 0.0
      %5360 = vadd.xlane.f32.xlu0 %v5359
      %v5361 = vpop.xlane.xlu0 %5360
      %v5362 = vsel %vm1623, %v5323, 0.0
      %5363 = vadd.xlane.f32.xlu0 %v5362
      %v5364 = vpop.xlane.xlu0 %5363
      %v5365 = vsel %vm1623, %v5325, 0.0
      %5366 = vadd.xlane.f32.xlu0 %v5365
      %v5367 = vpop.xlane.xlu0 %5366
      %v5368 = vsel %vm1623, %v5327, 0.0
      %5369 = vadd.xlane.f32.xlu0 %v5368
      %v5370 = vpop.xlane.xlu0 %5369
      %v5371 = vsel %vm1623, %v5329, 0.0
      %5372 = vadd.xlane.f32.xlu0 %v5371
      %v5373 = vpop.xlane.xlu0 %5372
      %v5374 = vsel %vm1623, %v5331, 0.0
      %5375 = vadd.xlane.f32.xlu0 %v5374
      %v5376 = vpop.xlane.xlu0 %5375
      %v5377 = vsel %vm1623, %v5333, 0.0
      %5378 = vadd.xlane.f32.xlu0 %v5377
      %v5379 = vpop.xlane.xlu0 %5378
      %v5380 = vsel %vm1623, %v5335, 0.0
      %5381 = vadd.xlane.f32.xlu0 %v5380
      %v5382 = vpop.xlane.xlu0 %5381
      %v5383 = vsel %vm1623, %v5337, 0.0
      %5384 = vadd.xlane.f32.xlu0 %v5383
      %v5385 = vpop.xlane.xlu0 %5384
      %v5386 = vrcp.pop %v5340
      %v5387 = vmul.f32 %v5307, %v5386
      %v5388 = vrcp.pop %v5343
      %v5389 = vmul.f32 %v5309, %v5388
      %v5390 = vrcp.pop %v5346
      %v5391 = vmul.f32 %v5311, %v5390
      %v5392 = vrcp.pop %v5349
      %v5393 = vmul.f32 %v5313, %v5392
      %v5394 = vrcp.pop %v5352
      %v5395 = vmul.f32 %v5315, %v5394
      %v5396 = vrcp.pop %v5355
      %v5397 = vmul.f32 %v5317, %v5396
      %v5398 = vrcp.pop %v5358
      %v5399 = vmul.f32 %v5319, %v5398
      %v5400 = vrcp.pop %v5361
      %v5401 = vmul.f32 %v5321, %v5400
      %v5402 = vrcp.pop %v5364
      %v5403 = vmul.f32 %v5323, %v5402
      %v5404 = vrcp.pop %v5367
      %v5405 = vmul.f32 %v5325, %v5404
      %v5406 = vrcp.pop %v5370
      %v5407 = vmul.f32 %v5327, %v5406
      %v5408 = vrcp.pop %v5373
      %v5409 = vmul.f32 %v5329, %v5408
      %v5410 = vrcp.pop %v5376
      %v5411 = vmul.f32 %v5331, %v5410
      %v5412 = vrcp.pop %v5379
      %v5413 = vmul.f32 %v5333, %v5412
      %v5414 = vrcp.pop %v5382
      %v5415 = vmul.f32 %v5335, %v5414
      %v5416 = vrcp.pop %v5385
      %v5417 = vmul.f32 %v5337, %v5416
      %5418 = vrot.lane.b32.xlu0 %v816, 48
      %v5419 = vpop.permute.xlu0 %5418
      %5420 = vrot.lane.b32.xlu0 %v821, 48
      %v5421 = vpop.permute.xlu0 %5420
      %v5425 = vsel %vm1623, %v5387, 0
      %v5428 = vsel %vm1623, %v5389, 0
      %5430 = vmatprep.subr.mxu0 0.0
      %5431 = vmatpush1.msra.mxu0 0.0
      %5432 = vmatprep.subr.mxu0 0.0
      %5433 = vmatpush1.msra.mxu0 0.0
      %5434 = vmatprep.subr.mxu0 0.0
      %5435 = vmatpush1.msra.mxu0 0.0
      %5436 = vmatprep.subr.mxu0 0.0
      %5437 = vmatpush1.msra.mxu0 0.0
      %5438 = vmatprep.subr.mxu0 0.0
      %5439 = vmatpush1.msra.mxu0 0.0
      %5440 = vmatprep.subr.mxu0 0.0
      %5441 = vmatpush1.msra.mxu0 0.0
      %5442 = vmatprep.subr.mxu0 0.0
      %5443 = vmatpush1.msra.mxu0 0.0
      %5444 = vmatprep.subr.mxu0 0.0
      %5445 = vmatpush1.msra.mxu0 0.0
      %5446 = vmatprep.subr.mxu0 0.0
      %5447 = vmatpush1.msra.mxu0 0.0
      %5448 = vmatprep.subr.mxu0 0.0
      %5449 = vmatpush1.msra.mxu0 0.0
      %5450 = vmatprep.subr.mxu0 0.0
      %5451 = vmatpush1.msra.mxu0 0.0
      %5452 = vmatprep.subr.mxu0 0.0
      %5453 = vmatpush1.msra.mxu0 0.0
      %5454 = vmatprep.subr.mxu0 0.0
      %5455 = vmatpush1.msra.mxu0 0.0
      %5456 = vmatprep.subr.mxu0 0.0
      %5457 = vmatpush1.msra.mxu0 0.0
      %5458 = vmatprep.subr.mxu0 0.0
      %5459 = vmatpush1.msra.mxu0 %v5421
      %5460 = vmatprep.subr.mxu0 0.0
      %5461 = vmatpush1.msra.mxu0 %v5419
      %5462 = vmatprep.subr.mxu0 0.0
      %5463 = vmatpush2.msra.mxu0 0.0
      %5464 = vmatprep.subr.mxu0 0.0
      %5465 = vmatpush2.msra.mxu0 0.0
      %5466 = vmatprep.subr.mxu0 0.0
      %5467 = vmatpush2.msra.mxu0 0.0
      %5468 = vmatprep.subr.mxu0 0.0
      %5469 = vmatpush2.msra.mxu0 0.0
      %5470 = vmatprep.subr.mxu0 0.0
      %5471 = vmatpush2.msra.mxu0 0.0
      %5472 = vmatprep.subr.mxu0 0.0
      %5473 = vmatpush2.msra.mxu0 0.0
      %5474 = vmatprep.subr.mxu0 0.0
      %5475 = vmatpush2.msra.mxu0 0.0
      %5476 = vmatprep.subr.mxu0 0.0
      %5477 = vmatpush2.msra.mxu0 0.0
      %5478 = vmatprep.subr.mxu0 0.0
      %5479 = vmatpush2.msra.mxu0 0.0
      %5480 = vmatprep.subr.mxu0 0.0
      %5481 = vmatpush2.msra.mxu0 0.0
      %5482 = vmatprep.subr.mxu0 0.0
      %5483 = vmatpush2.msra.mxu0 0.0
      %5484 = vmatprep.subr.mxu0 0.0
      %5485 = vmatpush2.msra.mxu0 0.0
      %5486 = vmatprep.subr.mxu0 0.0
      %5487 = vmatpush2.msra.mxu0 0.0
      %5488 = vmatprep.subr.mxu0 0.0
      %5489 = vmatpush2.msra.mxu0 0.0
      %5490 = vmatprep.subr.mxu0 0.0
      %5491 = vmatpush2.msra.mxu0 0.0
      %5492 = vmatprep.subr.mxu0 0.0
      %5493 = vmatpush2.msra.mxu0 0.0
      %5494 = vmatprep.mubr.f32.mxu0 0.0
      %5495 = vmatmul.mubr.f32.gmra.mxu0 %v5425
      %v5496 = vpop.f32.mrf.mxu0
      %v5497 = vadd.f32 0.0, %v5496
      %v5498 = vpop.f32.mrf.mxu0
      %5499 = vmatprep.mubr.f32.mxu0 0.0
      %5500 = vmatmul.mubr.f32.gmra.mxu0 %v5428
      %v5501 = vpop.f32.mrf.mxu0
      %v5502 = vadd.f32 0.0, %v5501
      %v5503 = vpop.f32.mrf.mxu0
      %5504 = vdwg.mxu0
      %5505 = vrot.lane.b32.xlu0 %v826, 48
      %v5506 = vpop.permute.xlu0 %5505
      %5507 = vrot.lane.b32.xlu0 %v831, 48
      %v5508 = vpop.permute.xlu0 %5507
      %v5512 = vsel %vm1623, %v5391, 0
      %v5515 = vsel %vm1623, %v5393, 0
      %5517 = vmatprep.subr.mxu0 0.0
      %5518 = vmatpush1.msra.mxu0 0.0
      %5519 = vmatprep.subr.mxu0 0.0
      %5520 = vmatpush1.msra.mxu0 0.0
      %5521 = vmatprep.subr.mxu0 0.0
      %5522 = vmatpush1.msra.mxu0 0.0
      %5523 = vmatprep.subr.mxu0 0.0
      %5524 = vmatpush1.msra.mxu0 0.0
      %5525 = vmatprep.subr.mxu0 0.0
      %5526 = vmatpush1.msra.mxu0 0.0
      %5527 = vmatprep.subr.mxu0 0.0
      %5528 = vmatpush1.msra.mxu0 0.0
      %5529 = vmatprep.subr.mxu0 0.0
      %5530 = vmatpush1.msra.mxu0 0.0
      %5531 = vmatprep.subr.mxu0 0.0
      %5532 = vmatpush1.msra.mxu0 0.0
      %5533 = vmatprep.subr.mxu0 0.0
      %5534 = vmatpush1.msra.mxu0 0.0
      %5535 = vmatprep.subr.mxu0 0.0
      %5536 = vmatpush1.msra.mxu0 0.0
      %5537 = vmatprep.subr.mxu0 0.0
      %5538 = vmatpush1.msra.mxu0 0.0
      %5539 = vmatprep.subr.mxu0 0.0
      %5540 = vmatpush1.msra.mxu0 0.0
      %5541 = vmatprep.subr.mxu0 0.0
      %5542 = vmatpush1.msra.mxu0 0.0
      %5543 = vmatprep.subr.mxu0 0.0
      %5544 = vmatpush1.msra.mxu0 0.0
      %5545 = vmatprep.subr.mxu0 0.0
      %5546 = vmatpush1.msra.mxu0 %v5508
      %5547 = vmatprep.subr.mxu0 0.0
      %5548 = vmatpush1.msra.mxu0 %v5506
      %5549 = vmatprep.subr.mxu0 0.0
      %5550 = vmatpush2.msra.mxu0 0.0
      %5551 = vmatprep.subr.mxu0 0.0
      %5552 = vmatpush2.msra.mxu0 0.0
      %5553 = vmatprep.subr.mxu0 0.0
      %5554 = vmatpush2.msra.mxu0 0.0
      %5555 = vmatprep.subr.mxu0 0.0
      %5556 = vmatpush2.msra.mxu0 0.0
      %5557 = vmatprep.subr.mxu0 0.0
      %5558 = vmatpush2.msra.mxu0 0.0
      %5559 = vmatprep.subr.mxu0 0.0
      %5560 = vmatpush2.msra.mxu0 0.0
      %5561 = vmatprep.subr.mxu0 0.0
      %5562 = vmatpush2.msra.mxu0 0.0
      %5563 = vmatprep.subr.mxu0 0.0
      %5564 = vmatpush2.msra.mxu0 0.0
      %5565 = vmatprep.subr.mxu0 0.0
      %5566 = vmatpush2.msra.mxu0 0.0
      %5567 = vmatprep.subr.mxu0 0.0
      %5568 = vmatpush2.msra.mxu0 0.0
      %5569 = vmatprep.subr.mxu0 0.0
      %5570 = vmatpush2.msra.mxu0 0.0
      %5571 = vmatprep.subr.mxu0 0.0
      %5572 = vmatpush2.msra.mxu0 0.0
      %5573 = vmatprep.subr.mxu0 0.0
      %5574 = vmatpush2.msra.mxu0 0.0
      %5575 = vmatprep.subr.mxu0 0.0
      %5576 = vmatpush2.msra.mxu0 0.0
      %5577 = vmatprep.subr.mxu0 0.0
      %5578 = vmatpush2.msra.mxu0 0.0
      %5579 = vmatprep.subr.mxu0 0.0
      %5580 = vmatpush2.msra.mxu0 0.0
      %5581 = vmatprep.mubr.f32.mxu0 0.0
      %5582 = vmatmul.mubr.f32.gmra.mxu0 %v5512
      %v5583 = vpop.f32.mrf.mxu0
      %v5584 = vadd.f32 0.0, %v5583
      %v5585 = vpop.f32.mrf.mxu0
      %5586 = vmatprep.mubr.f32.mxu0 0.0
      %5587 = vmatmul.mubr.f32.gmra.mxu0 %v5515
      %v5588 = vpop.f32.mrf.mxu0
      %v5589 = vadd.f32 0.0, %v5588
      %v5590 = vpop.f32.mrf.mxu0
      %5591 = vdwg.mxu0
      %5592 = vrot.lane.b32.xlu0 %v836, 48
      %v5593 = vpop.permute.xlu0 %5592
      %5594 = vrot.lane.b32.xlu0 %v841, 48
      %v5595 = vpop.permute.xlu0 %5594
      %v5599 = vsel %vm1623, %v5395, 0
      %v5602 = vsel %vm1623, %v5397, 0
      %5604 = vmatprep.subr.mxu0 0.0
      %5605 = vmatpush1.msra.mxu0 0.0
      %5606 = vmatprep.subr.mxu0 0.0
      %5607 = vmatpush1.msra.mxu0 0.0
      %5608 = vmatprep.subr.mxu0 0.0
      %5609 = vmatpush1.msra.mxu0 0.0
      %5610 = vmatprep.subr.mxu0 0.0
      %5611 = vmatpush1.msra.mxu0 0.0
      %5612 = vmatprep.subr.mxu0 0.0
      %5613 = vmatpush1.msra.mxu0 0.0
      %5614 = vmatprep.subr.mxu0 0.0
      %5615 = vmatpush1.msra.mxu0 0.0
      %5616 = vmatprep.subr.mxu0 0.0
      %5617 = vmatpush1.msra.mxu0 0.0
      %5618 = vmatprep.subr.mxu0 0.0
      %5619 = vmatpush1.msra.mxu0 0.0
      %5620 = vmatprep.subr.mxu0 0.0
      %5621 = vmatpush1.msra.mxu0 0.0
      %5622 = vmatprep.subr.mxu0 0.0
      %5623 = vmatpush1.msra.mxu0 0.0
      %5624 = vmatprep.subr.mxu0 0.0
      %5625 = vmatpush1.msra.mxu0 0.0
      %5626 = vmatprep.subr.mxu0 0.0
      %5627 = vmatpush1.msra.mxu0 0.0
      %5628 = vmatprep.subr.mxu0 0.0
      %5629 = vmatpush1.msra.mxu0 0.0
      %5630 = vmatprep.subr.mxu0 0.0
      %5631 = vmatpush1.msra.mxu0 0.0
      %5632 = vmatprep.subr.mxu0 0.0
      %5633 = vmatpush1.msra.mxu0 %v5595
      %5634 = vmatprep.subr.mxu0 0.0
      %5635 = vmatpush1.msra.mxu0 %v5593
      %5636 = vmatprep.subr.mxu0 0.0
      %5637 = vmatpush2.msra.mxu0 0.0
      %5638 = vmatprep.subr.mxu0 0.0
      %5639 = vmatpush2.msra.mxu0 0.0
      %5640 = vmatprep.subr.mxu0 0.0
      %5641 = vmatpush2.msra.mxu0 0.0
      %5642 = vmatprep.subr.mxu0 0.0
      %5643 = vmatpush2.msra.mxu0 0.0
      %5644 = vmatprep.subr.mxu0 0.0
      %5645 = vmatpush2.msra.mxu0 0.0
      %5646 = vmatprep.subr.mxu0 0.0
      %5647 = vmatpush2.msra.mxu0 0.0
      %5648 = vmatprep.subr.mxu0 0.0
      %5649 = vmatpush2.msra.mxu0 0.0
      %5650 = vmatprep.subr.mxu0 0.0
      %5651 = vmatpush2.msra.mxu0 0.0
      %5652 = vmatprep.subr.mxu0 0.0
      %5653 = vmatpush2.msra.mxu0 0.0
      %5654 = vmatprep.subr.mxu0 0.0
      %5655 = vmatpush2.msra.mxu0 0.0
      %5656 = vmatprep.subr.mxu0 0.0
      %5657 = vmatpush2.msra.mxu0 0.0
      %5658 = vmatprep.subr.mxu0 0.0
      %5659 = vmatpush2.msra.mxu0 0.0
      %5660 = vmatprep.subr.mxu0 0.0
      %5661 = vmatpush2.msra.mxu0 0.0
      %5662 = vmatprep.subr.mxu0 0.0
      %5663 = vmatpush2.msra.mxu0 0.0
      %5664 = vmatprep.subr.mxu0 0.0
      %5665 = vmatpush2.msra.mxu0 0.0
      %5666 = vmatprep.subr.mxu0 0.0
      %5667 = vmatpush2.msra.mxu0 0.0
      %5668 = vmatprep.mubr.f32.mxu0 0.0
      %5669 = vmatmul.mubr.f32.gmra.mxu0 %v5599
      %v5670 = vpop.f32.mrf.mxu0
      %v5671 = vadd.f32 0.0, %v5670
      %v5672 = vpop.f32.mrf.mxu0
      %5673 = vmatprep.mubr.f32.mxu0 0.0
      %5674 = vmatmul.mubr.f32.gmra.mxu0 %v5602
      %v5675 = vpop.f32.mrf.mxu0
      %v5676 = vadd.f32 0.0, %v5675
      %v5677 = vpop.f32.mrf.mxu0
      %5678 = vdwg.mxu0
      %5679 = vrot.lane.b32.xlu0 %v846, 48
      %v5680 = vpop.permute.xlu0 %5679
      %5681 = vrot.lane.b32.xlu0 %v851, 48
      %v5682 = vpop.permute.xlu0 %5681
      %v5686 = vsel %vm1623, %v5399, 0
      %v5689 = vsel %vm1623, %v5401, 0
      %5691 = vmatprep.subr.mxu0 0.0
      %5692 = vmatpush1.msra.mxu0 0.0
      %5693 = vmatprep.subr.mxu0 0.0
      %5694 = vmatpush1.msra.mxu0 0.0
      %5695 = vmatprep.subr.mxu0 0.0
      %5696 = vmatpush1.msra.mxu0 0.0
      %5697 = vmatprep.subr.mxu0 0.0
      %5698 = vmatpush1.msra.mxu0 0.0
      %5699 = vmatprep.subr.mxu0 0.0
      %5700 = vmatpush1.msra.mxu0 0.0
      %5701 = vmatprep.subr.mxu0 0.0
      %5702 = vmatpush1.msra.mxu0 0.0
      %5703 = vmatprep.subr.mxu0 0.0
      %5704 = vmatpush1.msra.mxu0 0.0
      %5705 = vmatprep.subr.mxu0 0.0
      %5706 = vmatpush1.msra.mxu0 0.0
      %5707 = vmatprep.subr.mxu0 0.0
      %5708 = vmatpush1.msra.mxu0 0.0
      %5709 = vmatprep.subr.mxu0 0.0
      %5710 = vmatpush1.msra.mxu0 0.0
      %5711 = vmatprep.subr.mxu0 0.0
      %5712 = vmatpush1.msra.mxu0 0.0
      %5713 = vmatprep.subr.mxu0 0.0
      %5714 = vmatpush1.msra.mxu0 0.0
      %5715 = vmatprep.subr.mxu0 0.0
      %5716 = vmatpush1.msra.mxu0 0.0
      %5717 = vmatprep.subr.mxu0 0.0
      %5718 = vmatpush1.msra.mxu0 0.0
      %5719 = vmatprep.subr.mxu0 0.0
      %5720 = vmatpush1.msra.mxu0 %v5682
      %5721 = vmatprep.subr.mxu0 0.0
      %5722 = vmatpush1.msra.mxu0 %v5680
      %5723 = vmatprep.subr.mxu0 0.0
      %5724 = vmatpush2.msra.mxu0 0.0
      %5725 = vmatprep.subr.mxu0 0.0
      %5726 = vmatpush2.msra.mxu0 0.0
      %5727 = vmatprep.subr.mxu0 0.0
      %5728 = vmatpush2.msra.mxu0 0.0
      %5729 = vmatprep.subr.mxu0 0.0
      %5730 = vmatpush2.msra.mxu0 0.0
      %5731 = vmatprep.subr.mxu0 0.0
      %5732 = vmatpush2.msra.mxu0 0.0
      %5733 = vmatprep.subr.mxu0 0.0
      %5734 = vmatpush2.msra.mxu0 0.0
      %5735 = vmatprep.subr.mxu0 0.0
      %5736 = vmatpush2.msra.mxu0 0.0
      %5737 = vmatprep.subr.mxu0 0.0
      %5738 = vmatpush2.msra.mxu0 0.0
      %5739 = vmatprep.subr.mxu0 0.0
      %5740 = vmatpush2.msra.mxu0 0.0
      %5741 = vmatprep.subr.mxu0 0.0
      %5742 = vmatpush2.msra.mxu0 0.0
      %5743 = vmatprep.subr.mxu0 0.0
      %5744 = vmatpush2.msra.mxu0 0.0
      %5745 = vmatprep.subr.mxu0 0.0
      %5746 = vmatpush2.msra.mxu0 0.0
      %5747 = vmatprep.subr.mxu0 0.0
      %5748 = vmatpush2.msra.mxu0 0.0
      %5749 = vmatprep.subr.mxu0 0.0
      %5750 = vmatpush2.msra.mxu0 0.0
      %5751 = vmatprep.subr.mxu0 0.0
      %5752 = vmatpush2.msra.mxu0 0.0
      %5753 = vmatprep.subr.mxu0 0.0
      %5754 = vmatpush2.msra.mxu0 0.0
      %5755 = vmatprep.mubr.f32.mxu0 0.0
      %5756 = vmatmul.mubr.f32.gmra.mxu0 %v5686
      %v5757 = vpop.f32.mrf.mxu0
      %v5758 = vadd.f32 0.0, %v5757
      %v5759 = vpop.f32.mrf.mxu0
      %5760 = vmatprep.mubr.f32.mxu0 0.0
      %5761 = vmatmul.mubr.f32.gmra.mxu0 %v5689
      %v5762 = vpop.f32.mrf.mxu0
      %v5763 = vadd.f32 0.0, %v5762
      %v5764 = vpop.f32.mrf.mxu0
      %5765 = vdwg.mxu0
      %5766 = vrot.lane.b32.xlu0 %v856, 48
      %v5767 = vpop.permute.xlu0 %5766
      %5768 = vrot.lane.b32.xlu0 %v861, 48
      %v5769 = vpop.permute.xlu0 %5768
      %v5773 = vsel %vm1623, %v5403, 0
      %v5776 = vsel %vm1623, %v5405, 0
      %5778 = vmatprep.subr.mxu0 0.0
      %5779 = vmatpush1.msra.mxu0 0.0
      %5780 = vmatprep.subr.mxu0 0.0
      %5781 = vmatpush1.msra.mxu0 0.0
      %5782 = vmatprep.subr.mxu0 0.0
      %5783 = vmatpush1.msra.mxu0 0.0
      %5784 = vmatprep.subr.mxu0 0.0
      %5785 = vmatpush1.msra.mxu0 0.0
      %5786 = vmatprep.subr.mxu0 0.0
      %5787 = vmatpush1.msra.mxu0 0.0
      %5788 = vmatprep.subr.mxu0 0.0
      %5789 = vmatpush1.msra.mxu0 0.0
      %5790 = vmatprep.subr.mxu0 0.0
      %5791 = vmatpush1.msra.mxu0 0.0
      %5792 = vmatprep.subr.mxu0 0.0
      %5793 = vmatpush1.msra.mxu0 0.0
      %5794 = vmatprep.subr.mxu0 0.0
      %5795 = vmatpush1.msra.mxu0 0.0
      %5796 = vmatprep.subr.mxu0 0.0
      %5797 = vmatpush1.msra.mxu0 0.0
      %5798 = vmatprep.subr.mxu0 0.0
      %5799 = vmatpush1.msra.mxu0 0.0
      %5800 = vmatprep.subr.mxu0 0.0
      %5801 = vmatpush1.msra.mxu0 0.0
      %5802 = vmatprep.subr.mxu0 0.0
      %5803 = vmatpush1.msra.mxu0 0.0
      %5804 = vmatprep.subr.mxu0 0.0
      %5805 = vmatpush1.msra.mxu0 0.0
      %5806 = vmatprep.subr.mxu0 0.0
      %5807 = vmatpush1.msra.mxu0 %v5769
      %5808 = vmatprep.subr.mxu0 0.0
      %5809 = vmatpush1.msra.mxu0 %v5767
      %5810 = vmatprep.subr.mxu0 0.0
      %5811 = vmatpush2.msra.mxu0 0.0
      %5812 = vmatprep.subr.mxu0 0.0
      %5813 = vmatpush2.msra.mxu0 0.0
      %5814 = vmatprep.subr.mxu0 0.0
      %5815 = vmatpush2.msra.mxu0 0.0
      %5816 = vmatprep.subr.mxu0 0.0
      %5817 = vmatpush2.msra.mxu0 0.0
      %5818 = vmatprep.subr.mxu0 0.0
      %5819 = vmatpush2.msra.mxu0 0.0
      %5820 = vmatprep.subr.mxu0 0.0
      %5821 = vmatpush2.msra.mxu0 0.0
      %5822 = vmatprep.subr.mxu0 0.0
      %5823 = vmatpush2.msra.mxu0 0.0
      %5824 = vmatprep.subr.mxu0 0.0
      %5825 = vmatpush2.msra.mxu0 0.0
      %5826 = vmatprep.subr.mxu0 0.0
      %5827 = vmatpush2.msra.mxu0 0.0
      %5828 = vmatprep.subr.mxu0 0.0
      %5829 = vmatpush2.msra.mxu0 0.0
      %5830 = vmatprep.subr.mxu0 0.0
      %5831 = vmatpush2.msra.mxu0 0.0
      %5832 = vmatprep.subr.mxu0 0.0
      %5833 = vmatpush2.msra.mxu0 0.0
      %5834 = vmatprep.subr.mxu0 0.0
      %5835 = vmatpush2.msra.mxu0 0.0
      %5836 = vmatprep.subr.mxu0 0.0
      %5837 = vmatpush2.msra.mxu0 0.0
      %5838 = vmatprep.subr.mxu0 0.0
      %5839 = vmatpush2.msra.mxu0 0.0
      %5840 = vmatprep.subr.mxu0 0.0
      %5841 = vmatpush2.msra.mxu0 0.0
      %5842 = vmatprep.mubr.f32.mxu0 0.0
      %5843 = vmatmul.mubr.f32.gmra.mxu0 %v5773
      %v5844 = vpop.f32.mrf.mxu0
      %v5845 = vadd.f32 0.0, %v5844
      %v5846 = vpop.f32.mrf.mxu0
      %5847 = vmatprep.mubr.f32.mxu0 0.0
      %5848 = vmatmul.mubr.f32.gmra.mxu0 %v5776
      %v5849 = vpop.f32.mrf.mxu0
      %v5850 = vadd.f32 0.0, %v5849
      %v5851 = vpop.f32.mrf.mxu0
      %5852 = vdwg.mxu0
      %5853 = vrot.lane.b32.xlu0 %v866, 48
      %v5854 = vpop.permute.xlu0 %5853
      %5855 = vrot.lane.b32.xlu0 %v871, 48
      %v5856 = vpop.permute.xlu0 %5855
      %v5860 = vsel %vm1623, %v5407, 0
      %v5863 = vsel %vm1623, %v5409, 0
      %5865 = vmatprep.subr.mxu0 0.0
      %5866 = vmatpush1.msra.mxu0 0.0
      %5867 = vmatprep.subr.mxu0 0.0
      %5868 = vmatpush1.msra.mxu0 0.0
      %5869 = vmatprep.subr.mxu0 0.0
      %5870 = vmatpush1.msra.mxu0 0.0
      %5871 = vmatprep.subr.mxu0 0.0
      %5872 = vmatpush1.msra.mxu0 0.0
      %5873 = vmatprep.subr.mxu0 0.0
      %5874 = vmatpush1.msra.mxu0 0.0
      %5875 = vmatprep.subr.mxu0 0.0
      %5876 = vmatpush1.msra.mxu0 0.0
      %5877 = vmatprep.subr.mxu0 0.0
      %5878 = vmatpush1.msra.mxu0 0.0
      %5879 = vmatprep.subr.mxu0 0.0
      %5880 = vmatpush1.msra.mxu0 0.0
      %5881 = vmatprep.subr.mxu0 0.0
      %5882 = vmatpush1.msra.mxu0 0.0
      %5883 = vmatprep.subr.mxu0 0.0
      %5884 = vmatpush1.msra.mxu0 0.0
      %5885 = vmatprep.subr.mxu0 0.0
      %5886 = vmatpush1.msra.mxu0 0.0
      %5887 = vmatprep.subr.mxu0 0.0
      %5888 = vmatpush1.msra.mxu0 0.0
      %5889 = vmatprep.subr.mxu0 0.0
      %5890 = vmatpush1.msra.mxu0 0.0
      %5891 = vmatprep.subr.mxu0 0.0
      %5892 = vmatpush1.msra.mxu0 0.0
      %5893 = vmatprep.subr.mxu0 0.0
      %5894 = vmatpush1.msra.mxu0 %v5856
      %5895 = vmatprep.subr.mxu0 0.0
      %5896 = vmatpush1.msra.mxu0 %v5854
      %5897 = vmatprep.subr.mxu0 0.0
      %5898 = vmatpush2.msra.mxu0 0.0
      %5899 = vmatprep.subr.mxu0 0.0
      %5900 = vmatpush2.msra.mxu0 0.0
      %5901 = vmatprep.subr.mxu0 0.0
      %5902 = vmatpush2.msra.mxu0 0.0
      %5903 = vmatprep.subr.mxu0 0.0
      %5904 = vmatpush2.msra.mxu0 0.0
      %5905 = vmatprep.subr.mxu0 0.0
      %5906 = vmatpush2.msra.mxu0 0.0
      %5907 = vmatprep.subr.mxu0 0.0
      %5908 = vmatpush2.msra.mxu0 0.0
      %5909 = vmatprep.subr.mxu0 0.0
      %5910 = vmatpush2.msra.mxu0 0.0
      %5911 = vmatprep.subr.mxu0 0.0
      %5912 = vmatpush2.msra.mxu0 0.0
      %5913 = vmatprep.subr.mxu0 0.0
      %5914 = vmatpush2.msra.mxu0 0.0
      %5915 = vmatprep.subr.mxu0 0.0
      %5916 = vmatpush2.msra.mxu0 0.0
      %5917 = vmatprep.subr.mxu0 0.0
      %5918 = vmatpush2.msra.mxu0 0.0
      %5919 = vmatprep.subr.mxu0 0.0
      %5920 = vmatpush2.msra.mxu0 0.0
      %5921 = vmatprep.subr.mxu0 0.0
      %5922 = vmatpush2.msra.mxu0 0.0
      %5923 = vmatprep.subr.mxu0 0.0
      %5924 = vmatpush2.msra.mxu0 0.0
      %5925 = vmatprep.subr.mxu0 0.0
      %5926 = vmatpush2.msra.mxu0 0.0
      %5927 = vmatprep.subr.mxu0 0.0
      %5928 = vmatpush2.msra.mxu0 0.0
      %5929 = vmatprep.mubr.f32.mxu0 0.0
      %5930 = vmatmul.mubr.f32.gmra.mxu0 %v5860
      %v5931 = vpop.f32.mrf.mxu0
      %v5932 = vadd.f32 0.0, %v5931
      %v5933 = vpop.f32.mrf.mxu0
      %5934 = vmatprep.mubr.f32.mxu0 0.0
      %5935 = vmatmul.mubr.f32.gmra.mxu0 %v5863
      %v5936 = vpop.f32.mrf.mxu0
      %v5937 = vadd.f32 0.0, %v5936
      %v5938 = vpop.f32.mrf.mxu0
      %5939 = vdwg.mxu0
      %5940 = vrot.lane.b32.xlu0 %v876, 48
      %v5941 = vpop.permute.xlu0 %5940
      %5942 = vrot.lane.b32.xlu0 %v881, 48
      %v5943 = vpop.permute.xlu0 %5942
      %v5947 = vsel %vm1623, %v5411, 0
      %v5950 = vsel %vm1623, %v5413, 0
      %5952 = vmatprep.subr.mxu0 0.0
      %5953 = vmatpush1.msra.mxu0 0.0
      %5954 = vmatprep.subr.mxu0 0.0
      %5955 = vmatpush1.msra.mxu0 0.0
      %5956 = vmatprep.subr.mxu0 0.0
      %5957 = vmatpush1.msra.mxu0 0.0
      %5958 = vmatprep.subr.mxu0 0.0
      %5959 = vmatpush1.msra.mxu0 0.0
      %5960 = vmatprep.subr.mxu0 0.0
      %5961 = vmatpush1.msra.mxu0 0.0
      %5962 = vmatprep.subr.mxu0 0.0
      %5963 = vmatpush1.msra.mxu0 0.0
      %5964 = vmatprep.subr.mxu0 0.0
      %5965 = vmatpush1.msra.mxu0 0.0
      %5966 = vmatprep.subr.mxu0 0.0
      %5967 = vmatpush1.msra.mxu0 0.0
      %5968 = vmatprep.subr.mxu0 0.0
      %5969 = vmatpush1.msra.mxu0 0.0
      %5970 = vmatprep.subr.mxu0 0.0
      %5971 = vmatpush1.msra.mxu0 0.0
      %5972 = vmatprep.subr.mxu0 0.0
      %5973 = vmatpush1.msra.mxu0 0.0
      %5974 = vmatprep.subr.mxu0 0.0
      %5975 = vmatpush1.msra.mxu0 0.0
      %5976 = vmatprep.subr.mxu0 0.0
      %5977 = vmatpush1.msra.mxu0 0.0
      %5978 = vmatprep.subr.mxu0 0.0
      %5979 = vmatpush1.msra.mxu0 0.0
      %5980 = vmatprep.subr.mxu0 0.0
      %5981 = vmatpush1.msra.mxu0 %v5943
      %5982 = vmatprep.subr.mxu0 0.0
      %5983 = vmatpush1.msra.mxu0 %v5941
      %5984 = vmatprep.subr.mxu0 0.0
      %5985 = vmatpush2.msra.mxu0 0.0
      %5986 = vmatprep.subr.mxu0 0.0
      %5987 = vmatpush2.msra.mxu0 0.0
      %5988 = vmatprep.subr.mxu0 0.0
      %5989 = vmatpush2.msra.mxu0 0.0
      %5990 = vmatprep.subr.mxu0 0.0
      %5991 = vmatpush2.msra.mxu0 0.0
      %5992 = vmatprep.subr.mxu0 0.0
      %5993 = vmatpush2.msra.mxu0 0.0
      %5994 = vmatprep.subr.mxu0 0.0
      %5995 = vmatpush2.msra.mxu0 0.0
      %5996 = vmatprep.subr.mxu0 0.0
      %5997 = vmatpush2.msra.mxu0 0.0
      %5998 = vmatprep.subr.mxu0 0.0
      %5999 = vmatpush2.msra.mxu0 0.0
      %6000 = vmatprep.subr.mxu0 0.0
      %6001 = vmatpush2.msra.mxu0 0.0
      %6002 = vmatprep.subr.mxu0 0.0
      %6003 = vmatpush2.msra.mxu0 0.0
      %6004 = vmatprep.subr.mxu0 0.0
      %6005 = vmatpush2.msra.mxu0 0.0
      %6006 = vmatprep.subr.mxu0 0.0
      %6007 = vmatpush2.msra.mxu0 0.0
      %6008 = vmatprep.subr.mxu0 0.0
      %6009 = vmatpush2.msra.mxu0 0.0
      %6010 = vmatprep.subr.mxu0 0.0
      %6011 = vmatpush2.msra.mxu0 0.0
      %6012 = vmatprep.subr.mxu0 0.0
      %6013 = vmatpush2.msra.mxu0 0.0
      %6014 = vmatprep.subr.mxu0 0.0
      %6015 = vmatpush2.msra.mxu0 0.0
      %6016 = vmatprep.mubr.f32.mxu0 0.0
      %6017 = vmatmul.mubr.f32.gmra.mxu0 %v5947
      %v6018 = vpop.f32.mrf.mxu0
      %v6019 = vadd.f32 0.0, %v6018
      %v6020 = vpop.f32.mrf.mxu0
      %6021 = vmatprep.mubr.f32.mxu0 0.0
      %6022 = vmatmul.mubr.f32.gmra.mxu0 %v5950
      %v6023 = vpop.f32.mrf.mxu0
      %v6024 = vadd.f32 0.0, %v6023
      %v6025 = vpop.f32.mrf.mxu0
      %6026 = vdwg.mxu0
      %6027 = vrot.lane.b32.xlu0 %v886, 48
      %v6028 = vpop.permute.xlu0 %6027
      %6029 = vrot.lane.b32.xlu0 %v891, 48
      %v6030 = vpop.permute.xlu0 %6029
      %v6034 = vsel %vm1623, %v5415, 0
      %v6037 = vsel %vm1623, %v5417, 0
      %6039 = vmatprep.subr.mxu0 0.0
      %6040 = vmatpush1.msra.mxu0 0.0
      %6041 = vmatprep.subr.mxu0 0.0
      %6042 = vmatpush1.msra.mxu0 0.0
      %6043 = vmatprep.subr.mxu0 0.0
      %6044 = vmatpush1.msra.mxu0 0.0
      %6045 = vmatprep.subr.mxu0 0.0
      %6046 = vmatpush1.msra.mxu0 0.0
      %6047 = vmatprep.subr.mxu0 0.0
      %6048 = vmatpush1.msra.mxu0 0.0
      %6049 = vmatprep.subr.mxu0 0.0
      %6050 = vmatpush1.msra.mxu0 0.0
      %6051 = vmatprep.subr.mxu0 0.0
      %6052 = vmatpush1.msra.mxu0 0.0
      %6053 = vmatprep.subr.mxu0 0.0
      %6054 = vmatpush1.msra.mxu0 0.0
      %6055 = vmatprep.subr.mxu0 0.0
      %6056 = vmatpush1.msra.mxu0 0.0
      %6057 = vmatprep.subr.mxu0 0.0
      %6058 = vmatpush1.msra.mxu0 0.0
      %6059 = vmatprep.subr.mxu0 0.0
      %6060 = vmatpush1.msra.mxu0 0.0
      %6061 = vmatprep.subr.mxu0 0.0
      %6062 = vmatpush1.msra.mxu0 0.0
      %6063 = vmatprep.subr.mxu0 0.0
      %6064 = vmatpush1.msra.mxu0 0.0
      %6065 = vmatprep.subr.mxu0 0.0
      %6066 = vmatpush1.msra.mxu0 0.0
      %6067 = vmatprep.subr.mxu0 0.0
      %6068 = vmatpush1.msra.mxu0 %v6030
      %6069 = vmatprep.subr.mxu0 0.0
      %6070 = vmatpush1.msra.mxu0 %v6028
      %6071 = vmatprep.subr.mxu0 0.0
      %6072 = vmatpush2.msra.mxu0 0.0
      %6073 = vmatprep.subr.mxu0 0.0
      %6074 = vmatpush2.msra.mxu0 0.0
      %6075 = vmatprep.subr.mxu0 0.0
      %6076 = vmatpush2.msra.mxu0 0.0
      %6077 = vmatprep.subr.mxu0 0.0
      %6078 = vmatpush2.msra.mxu0 0.0
      %6079 = vmatprep.subr.mxu0 0.0
      %6080 = vmatpush2.msra.mxu0 0.0
      %6081 = vmatprep.subr.mxu0 0.0
      %6082 = vmatpush2.msra.mxu0 0.0
      %6083 = vmatprep.subr.mxu0 0.0
      %6084 = vmatpush2.msra.mxu0 0.0
      %6085 = vmatprep.subr.mxu0 0.0
      %6086 = vmatpush2.msra.mxu0 0.0
      %6087 = vmatprep.subr.mxu0 0.0
      %6088 = vmatpush2.msra.mxu0 0.0
      %6089 = vmatprep.subr.mxu0 0.0
      %6090 = vmatpush2.msra.mxu0 0.0
      %6091 = vmatprep.subr.mxu0 0.0
      %6092 = vmatpush2.msra.mxu0 0.0
      %6093 = vmatprep.subr.mxu0 0.0
      %6094 = vmatpush2.msra.mxu0 0.0
      %6095 = vmatprep.subr.mxu0 0.0
      %6096 = vmatpush2.msra.mxu0 0.0
      %6097 = vmatprep.subr.mxu0 0.0
      %6098 = vmatpush2.msra.mxu0 0.0
      %6099 = vmatprep.subr.mxu0 0.0
      %6100 = vmatpush2.msra.mxu0 0.0
      %6101 = vmatprep.subr.mxu0 0.0
      %6102 = vmatpush2.msra.mxu0 0.0
      %6103 = vmatprep.mubr.f32.mxu0 0.0
      %6104 = vmatmul.mubr.f32.gmra.mxu0 %v6034
      %v6105 = vpop.f32.mrf.mxu0
      %v6106 = vadd.f32 0.0, %v6105
      %v6107 = vpop.f32.mrf.mxu0
      %6108 = vmatprep.mubr.f32.mxu0 0.0
      %6109 = vmatmul.mubr.f32.gmra.mxu0 %v6037
      %v6110 = vpop.f32.mrf.mxu0
      %v6111 = vadd.f32 0.0, %v6110
      %v6112 = vpop.f32.mrf.mxu0
      %6113 = vdwg.mxu0
      %v6115 = vsel %vm900, %v5497, 0
      %v6118 = vsel %vm900, %v5502, 0
      %v6121 = vsel %vm900, %v5584, 0
      %v6124 = vsel %vm900, %v5589, 0
      %v6127 = vsel %vm900, %v5671, 0
      %v6130 = vsel %vm900, %v5676, 0
      %v6133 = vsel %vm900, %v5758, 0
      %v6136 = vsel %vm900, %v5763, 0
      %v6139 = vsel %vm900, %v5845, 0
      %v6142 = vsel %vm900, %v5850, 0
      %v6145 = vsel %vm900, %v5932, 0
      %v6148 = vsel %vm900, %v5937, 0
      %v6151 = vsel %vm900, %v6019, 0
      %v6154 = vsel %vm900, %v6024, 0
      %v6157 = vsel %vm900, %v6106, 0
      %v6160 = vsel %vm900, %v6111, 0
      %6162 = vmatprep.subr.mxu0 0.0
      %6163 = vmatpush1.msra.mxu0 0.0
      %6164 = vmatprep.subr.mxu0 0.0
      %6165 = vmatpush1.msra.mxu0 0.0
      %6166 = vmatprep.subr.mxu0 0.0
      %6167 = vmatpush1.msra.mxu0 0.0
      %6168 = vmatprep.subr.mxu0 0.0
      %6169 = vmatpush1.msra.mxu0 0.0
      %6170 = vmatprep.subr.mxu0 0.0
      %6171 = vmatpush1.msra.mxu0 0.0
      %6172 = vmatprep.subr.mxu0 0.0
      %6173 = vmatpush1.msra.mxu0 0.0
      %6174 = vmatprep.subr.mxu0 0.0
      %6175 = vmatpush1.msra.mxu0 0.0
      %6176 = vmatprep.subr.mxu0 0.0
      %6177 = vmatpush1.msra.mxu0 0.0
      %6178 = vmatprep.subr.mxu0 0.0
      %6179 = vmatpush1.msra.mxu0 0.0
      %6180 = vmatprep.subr.mxu0 0.0
      %6181 = vmatpush1.msra.mxu0 0.0
      %6182 = vmatprep.subr.mxu0 0.0
      %6183 = vmatpush1.msra.mxu0 0.0
      %6184 = vmatprep.subr.mxu0 0.0
      %6185 = vmatpush1.msra.mxu0 0.0
      %6186 = vmatprep.subr.mxu0 0.0
      %6187 = vmatpush1.msra.mxu0 0.0
      %6188 = vmatprep.subr.mxu0 0.0
      %6189 = vmatpush1.msra.mxu0 0.0
      %6190 = vmatprep.subr.mxu0 0.0
      %6191 = vmatpush1.msra.mxu0 0.0
      %6192 = vmatprep.subr.mxu0 0.0
      %6193 = vmatpush1.msra.mxu0 %v247
      %6194 = vmatprep.subr.mxu0 0.0
      %6195 = vmatpush2.msra.mxu0 0.0
      %6196 = vmatprep.subr.mxu0 0.0
      %6197 = vmatpush2.msra.mxu0 0.0
      %6198 = vmatprep.subr.mxu0 0.0
      %6199 = vmatpush2.msra.mxu0 0.0
      %6200 = vmatprep.subr.mxu0 0.0
      %6201 = vmatpush2.msra.mxu0 0.0
      %6202 = vmatprep.subr.mxu0 0.0
      %6203 = vmatpush2.msra.mxu0 0.0
      %6204 = vmatprep.subr.mxu0 0.0
      %6205 = vmatpush2.msra.mxu0 0.0
      %6206 = vmatprep.subr.mxu0 0.0
      %6207 = vmatpush2.msra.mxu0 0.0
      %6208 = vmatprep.subr.mxu0 0.0
      %6209 = vmatpush2.msra.mxu0 0.0
      %6210 = vmatprep.subr.mxu0 0.0
      %6211 = vmatpush2.msra.mxu0 0.0
      %6212 = vmatprep.subr.mxu0 0.0
      %6213 = vmatpush2.msra.mxu0 0.0
      %6214 = vmatprep.subr.mxu0 0.0
      %6215 = vmatpush2.msra.mxu0 0.0
      %6216 = vmatprep.subr.mxu0 0.0
      %6217 = vmatpush2.msra.mxu0 0.0
      %6218 = vmatprep.subr.mxu0 0.0
      %6219 = vmatpush2.msra.mxu0 0.0
      %6220 = vmatprep.subr.mxu0 0.0
      %6221 = vmatpush2.msra.mxu0 0.0
      %6222 = vmatprep.subr.mxu0 0.0
      %6223 = vmatpush2.msra.mxu0 0.0
      %6224 = vmatprep.subr.mxu0 0.0
      %6225 = vmatpush2.msra.mxu0 0.0
      %6226 = vmatprep.mubr.f32.mxu0 0.0
      %6227 = vmatmul.mubr.f32.gmra.mxu0 %v6115
      %v6228 = vpop.f32.mrf.mxu0
      %v6229 = vadd.f32 0.0, %v6228
      %v6230 = vpop.f32.mrf.mxu0
      %6231 = vmatprep.mubr.f32.mxu0 0.0
      %6232 = vmatmul.mubr.f32.gmra.mxu0 %v6118
      %v6233 = vpop.f32.mrf.mxu0
      %v6234 = vadd.f32 0.0, %v6233
      %v6235 = vpop.f32.mrf.mxu0
      %6236 = vmatprep.mubr.f32.mxu0 0.0
      %6237 = vmatmul.mubr.f32.gmra.mxu0 %v6121
      %v6238 = vpop.f32.mrf.mxu0
      %v6239 = vadd.f32 0.0, %v6238
      %v6240 = vpop.f32.mrf.mxu0
      %6241 = vmatprep.mubr.f32.mxu0 0.0
      %6242 = vmatmul.mubr.f32.gmra.mxu0 %v6124
      %v6243 = vpop.f32.mrf.mxu0
      %v6244 = vadd.f32 0.0, %v6243
      %v6245 = vpop.f32.mrf.mxu0
      %6246 = vmatprep.mubr.f32.mxu0 0.0
      %6247 = vmatmul.mubr.f32.gmra.mxu0 %v6127
      %v6248 = vpop.f32.mrf.mxu0
      %v6249 = vadd.f32 0.0, %v6248
      %v6250 = vpop.f32.mrf.mxu0
      %6251 = vmatprep.mubr.f32.mxu0 0.0
      %6252 = vmatmul.mubr.f32.gmra.mxu0 %v6130
      %v6253 = vpop.f32.mrf.mxu0
      %v6254 = vadd.f32 0.0, %v6253
      %v6255 = vpop.f32.mrf.mxu0
      %6256 = vmatprep.mubr.f32.mxu0 0.0
      %6257 = vmatmul.mubr.f32.gmra.mxu0 %v6133
      %v6258 = vpop.f32.mrf.mxu0
      %v6259 = vadd.f32 0.0, %v6258
      %v6260 = vpop.f32.mrf.mxu0
      %6261 = vmatprep.mubr.f32.mxu0 0.0
      %6262 = vmatmul.mubr.f32.gmra.mxu0 %v6136
      %v6263 = vpop.f32.mrf.mxu0
      %v6264 = vadd.f32 0.0, %v6263
      %v6265 = vpop.f32.mrf.mxu0
      %6266 = vmatprep.mubr.f32.mxu0 0.0
      %6267 = vmatmul.mubr.f32.gmra.mxu0 %v6139
      %v6268 = vpop.f32.mrf.mxu0
      %v6269 = vadd.f32 0.0, %v6268
      %v6270 = vpop.f32.mrf.mxu0
      %6271 = vmatprep.mubr.f32.mxu0 0.0
      %6272 = vmatmul.mubr.f32.gmra.mxu0 %v6142
      %v6273 = vpop.f32.mrf.mxu0
      %v6274 = vadd.f32 0.0, %v6273
      %v6275 = vpop.f32.mrf.mxu0
      %6276 = vmatprep.mubr.f32.mxu0 0.0
      %6277 = vmatmul.mubr.f32.gmra.mxu0 %v6145
      %v6278 = vpop.f32.mrf.mxu0
      %v6279 = vadd.f32 0.0, %v6278
      %v6280 = vpop.f32.mrf.mxu0
      %6281 = vmatprep.mubr.f32.mxu0 0.0
      %6282 = vmatmul.mubr.f32.gmra.mxu0 %v6148
      %v6283 = vpop.f32.mrf.mxu0
      %v6284 = vadd.f32 0.0, %v6283
      %v6285 = vpop.f32.mrf.mxu0
      %6286 = vmatprep.mubr.f32.mxu0 0.0
      %6287 = vmatmul.mubr.f32.gmra.mxu0 %v6151
      %v6288 = vpop.f32.mrf.mxu0
      %v6289 = vadd.f32 0.0, %v6288
      %v6290 = vpop.f32.mrf.mxu0
      %6291 = vmatprep.mubr.f32.mxu0 0.0
      %6292 = vmatmul.mubr.f32.gmra.mxu0 %v6154
      %v6293 = vpop.f32.mrf.mxu0
      %v6294 = vadd.f32 0.0, %v6293
      %v6295 = vpop.f32.mrf.mxu0
      %6296 = vmatprep.mubr.f32.mxu0 0.0
      %6297 = vmatmul.mubr.f32.gmra.mxu0 %v6157
      %v6298 = vpop.f32.mrf.mxu0
      %v6299 = vadd.f32 0.0, %v6298
      %v6300 = vpop.f32.mrf.mxu0
      %6301 = vmatprep.mubr.f32.mxu0 0.0
      %6302 = vmatmul.mubr.f32.gmra.mxu0 %v6160
      %v6303 = vpop.f32.mrf.mxu0
      %v6304 = vadd.f32 0.0, %v6303
      %v6305 = vpop.f32.mrf.mxu0
      %6306 = vdwg.mxu0
      %v6307 = vadd.f32 %v4420, %v6229
      %v6308 = vadd.f32 %v4425, %v6234
      %v6309 = vadd.f32 %v4430, %v6239
      %v6310 = vadd.f32 %v4435, %v6244
      %v6311 = vadd.f32 %v4440, %v6249
      %v6312 = vadd.f32 %v4445, %v6254
      %v6313 = vadd.f32 %v4450, %v6259
      %v6314 = vadd.f32 %v4455, %v6264
      %v6315 = vadd.f32 %v4460, %v6269
      %v6316 = vadd.f32 %v4465, %v6274
      %v6317 = vadd.f32 %v4470, %v6279
      %v6318 = vadd.f32 %v4475, %v6284
      %v6319 = vadd.f32 %v4480, %v6289
      %v6320 = vadd.f32 %v4485, %v6294
      %v6321 = vadd.f32 %v4490, %v6299
      %v6322 = vadd.f32 %v4495, %v6304
      %6323 = vrot.lane.b32.xlu0 %v816, 104
      %v6324 = vpop.permute.xlu0 %6323
      %6325 = vrot.lane.b32.xlu0 %v821, 104
      %v6326 = vpop.permute.xlu0 %6325
      %6327 = vrot.lane.b32.xlu0 %v816, 72
      %v6328 = vpop.permute.xlu0 %6327
      %6329 = vrot.lane.b32.xlu0 %v821, 72
      %v6330 = vpop.permute.xlu0 %6329
      %v6331 = vsel %vm900, %v6324, 0
      %v6333 = vsel %vm900, %v6326, 0
      %v6335 = vsel %vm900, %v6328, 0
      %v6337 = vsel %vm900, %v6330, 0
      %6339 = vmatprep.subr.mxu0 0.0
      %6340 = vmatpush1.xpose.msra.mxu0 0.0
      %6341 = vmatprep.subr.mxu0 0.0
      %6342 = vmatpush1.xpose.msra.mxu0 0.0
      %6343 = vmatprep.subr.mxu0 0.0
      %6344 = vmatpush1.xpose.msra.mxu0 0.0
      %6345 = vmatprep.subr.mxu0 0.0
      %6346 = vmatpush1.xpose.msra.mxu0 0.0
      %6347 = vmatprep.subr.mxu0 0.0
      %6348 = vmatpush1.xpose.msra.mxu0 0.0
      %6349 = vmatprep.subr.mxu0 0.0
      %6350 = vmatpush1.xpose.msra.mxu0 0.0
      %6351 = vmatprep.subr.mxu0 0.0
      %6352 = vmatpush1.xpose.msra.mxu0 0.0
      %6353 = vmatprep.subr.mxu0 0.0
      %6354 = vmatpush1.xpose.msra.mxu0 0.0
      %6355 = vmatprep.subr.mxu0 0.0
      %6356 = vmatpush1.xpose.msra.mxu0 0.0
      %6357 = vmatprep.subr.mxu0 0.0
      %6358 = vmatpush1.xpose.msra.mxu0 0.0
      %6359 = vmatprep.subr.mxu0 0.0
      %6360 = vmatpush1.xpose.msra.mxu0 0.0
      %6361 = vmatprep.subr.mxu0 0.0
      %6362 = vmatpush1.xpose.msra.mxu0 0.0
      %6363 = vmatprep.subr.mxu0 0.0
      %6364 = vmatpush1.xpose.msra.mxu0 0.0
      %6365 = vmatprep.subr.mxu0 0.0
      %6366 = vmatpush1.xpose.msra.mxu0 0.0
      %6367 = vmatprep.subr.mxu0 0.0
      %6368 = vmatpush1.xpose.msra.mxu0 %v6337
      %6369 = vmatprep.subr.mxu0 0.0
      %6370 = vmatpush1.xpose.msra.mxu0 %v6335
      %6371 = vmatprep.subr.mxu0 0.0
      %6372 = vmatpush2.xpose.msra.mxu0 0.0
      %6373 = vmatprep.subr.mxu0 0.0
      %6374 = vmatpush2.xpose.msra.mxu0 0.0
      %6375 = vmatprep.subr.mxu0 0.0
      %6376 = vmatpush2.xpose.msra.mxu0 0.0
      %6377 = vmatprep.subr.mxu0 0.0
      %6378 = vmatpush2.xpose.msra.mxu0 0.0
      %6379 = vmatprep.subr.mxu0 0.0
      %6380 = vmatpush2.xpose.msra.mxu0 0.0
      %6381 = vmatprep.subr.mxu0 0.0
      %6382 = vmatpush2.xpose.msra.mxu0 0.0
      %6383 = vmatprep.subr.mxu0 0.0
      %6384 = vmatpush2.xpose.msra.mxu0 0.0
      %6385 = vmatprep.subr.mxu0 0.0
      %6386 = vmatpush2.xpose.msra.mxu0 0.0
      %6387 = vmatprep.subr.mxu0 0.0
      %6388 = vmatpush2.xpose.msra.mxu0 0.0
      %6389 = vmatprep.subr.mxu0 0.0
      %6390 = vmatpush2.xpose.msra.mxu0 0.0
      %6391 = vmatprep.subr.mxu0 0.0
      %6392 = vmatpush2.xpose.msra.mxu0 0.0
      %6393 = vmatprep.subr.mxu0 0.0
      %6394 = vmatpush2.xpose.msra.mxu0 0.0
      %6395 = vmatprep.subr.mxu0 0.0
      %6396 = vmatpush2.xpose.msra.mxu0 0.0
      %6397 = vmatprep.subr.mxu0 0.0
      %6398 = vmatpush2.xpose.msra.mxu0 0.0
      %6399 = vmatprep.subr.mxu0 0.0
      %6400 = vmatpush2.xpose.msra.mxu0 0.0
      %6401 = vmatprep.subr.mxu0 0.0
      %6402 = vmatpush2.xpose.msra.mxu0 0.0
      %6403 = vmatprep.mubr.f32.mxu0 0.0
      %6404 = vmatmul.mubr.f32.gmra.mxu0 %v6331
      %v6405 = vpop.f32.mrf.mxu0
      %v6406 = vadd.f32 0.0, %v6405
      %v6407 = vpop.f32.mrf.mxu0
      %6408 = vmatprep.mubr.f32.mxu0 0.0
      %6409 = vmatmul.mubr.f32.gmra.mxu0 %v6333
      %v6410 = vpop.f32.mrf.mxu0
      %v6411 = vadd.f32 0.0, %v6410
      %v6412 = vpop.f32.mrf.mxu0
      %6413 = vdwg.mxu0
      %6414 = vrot.lane.b32.xlu0 %v826, 104
      %v6415 = vpop.permute.xlu0 %6414
      %6416 = vrot.lane.b32.xlu0 %v831, 104
      %v6417 = vpop.permute.xlu0 %6416
      %6418 = vrot.lane.b32.xlu0 %v826, 72
      %v6419 = vpop.permute.xlu0 %6418
      %6420 = vrot.lane.b32.xlu0 %v831, 72
      %v6421 = vpop.permute.xlu0 %6420
      %v6422 = vsel %vm900, %v6415, 0
      %v6424 = vsel %vm900, %v6417, 0
      %v6426 = vsel %vm900, %v6419, 0
      %v6428 = vsel %vm900, %v6421, 0
      %6430 = vmatprep.subr.mxu0 0.0
      %6431 = vmatpush1.xpose.msra.mxu0 0.0
      %6432 = vmatprep.subr.mxu0 0.0
      %6433 = vmatpush1.xpose.msra.mxu0 0.0
      %6434 = vmatprep.subr.mxu0 0.0
      %6435 = vmatpush1.xpose.msra.mxu0 0.0
      %6436 = vmatprep.subr.mxu0 0.0
      %6437 = vmatpush1.xpose.msra.mxu0 0.0
      %6438 = vmatprep.subr.mxu0 0.0
      %6439 = vmatpush1.xpose.msra.mxu0 0.0
      %6440 = vmatprep.subr.mxu0 0.0
      %6441 = vmatpush1.xpose.msra.mxu0 0.0
      %6442 = vmatprep.subr.mxu0 0.0
      %6443 = vmatpush1.xpose.msra.mxu0 0.0
      %6444 = vmatprep.subr.mxu0 0.0
      %6445 = vmatpush1.xpose.msra.mxu0 0.0
      %6446 = vmatprep.subr.mxu0 0.0
      %6447 = vmatpush1.xpose.msra.mxu0 0.0
      %6448 = vmatprep.subr.mxu0 0.0
      %6449 = vmatpush1.xpose.msra.mxu0 0.0
      %6450 = vmatprep.subr.mxu0 0.0
      %6451 = vmatpush1.xpose.msra.mxu0 0.0
      %6452 = vmatprep.subr.mxu0 0.0
      %6453 = vmatpush1.xpose.msra.mxu0 0.0
      %6454 = vmatprep.subr.mxu0 0.0
      %6455 = vmatpush1.xpose.msra.mxu0 0.0
      %6456 = vmatprep.subr.mxu0 0.0
      %6457 = vmatpush1.xpose.msra.mxu0 0.0
      %6458 = vmatprep.subr.mxu0 0.0
      %6459 = vmatpush1.xpose.msra.mxu0 %v6428
      %6460 = vmatprep.subr.mxu0 0.0
      %6461 = vmatpush1.xpose.msra.mxu0 %v6426
      %6462 = vmatprep.subr.mxu0 0.0
      %6463 = vmatpush2.xpose.msra.mxu0 0.0
      %6464 = vmatprep.subr.mxu0 0.0
      %6465 = vmatpush2.xpose.msra.mxu0 0.0
      %6466 = vmatprep.subr.mxu0 0.0
      %6467 = vmatpush2.xpose.msra.mxu0 0.0
      %6468 = vmatprep.subr.mxu0 0.0
      %6469 = vmatpush2.xpose.msra.mxu0 0.0
      %6470 = vmatprep.subr.mxu0 0.0
      %6471 = vmatpush2.xpose.msra.mxu0 0.0
      %6472 = vmatprep.subr.mxu0 0.0
      %6473 = vmatpush2.xpose.msra.mxu0 0.0
      %6474 = vmatprep.subr.mxu0 0.0
      %6475 = vmatpush2.xpose.msra.mxu0 0.0
      %6476 = vmatprep.subr.mxu0 0.0
      %6477 = vmatpush2.xpose.msra.mxu0 0.0
      %6478 = vmatprep.subr.mxu0 0.0
      %6479 = vmatpush2.xpose.msra.mxu0 0.0
      %6480 = vmatprep.subr.mxu0 0.0
      %6481 = vmatpush2.xpose.msra.mxu0 0.0
      %6482 = vmatprep.subr.mxu0 0.0
      %6483 = vmatpush2.xpose.msra.mxu0 0.0
      %6484 = vmatprep.subr.mxu0 0.0
      %6485 = vmatpush2.xpose.msra.mxu0 0.0
      %6486 = vmatprep.subr.mxu0 0.0
      %6487 = vmatpush2.xpose.msra.mxu0 0.0
      %6488 = vmatprep.subr.mxu0 0.0
      %6489 = vmatpush2.xpose.msra.mxu0 0.0
      %6490 = vmatprep.subr.mxu0 0.0
      %6491 = vmatpush2.xpose.msra.mxu0 0.0
      %6492 = vmatprep.subr.mxu0 0.0
      %6493 = vmatpush2.xpose.msra.mxu0 0.0
      %6494 = vmatprep.mubr.f32.mxu0 0.0
      %6495 = vmatmul.mubr.f32.gmra.mxu0 %v6422
      %v6496 = vpop.f32.mrf.mxu0
      %v6497 = vadd.f32 0.0, %v6496
      %v6498 = vpop.f32.mrf.mxu0
      %6499 = vmatprep.mubr.f32.mxu0 0.0
      %6500 = vmatmul.mubr.f32.gmra.mxu0 %v6424
      %v6501 = vpop.f32.mrf.mxu0
      %v6502 = vadd.f32 0.0, %v6501
      %v6503 = vpop.f32.mrf.mxu0
      %6504 = vdwg.mxu0
      %6505 = vrot.lane.b32.xlu0 %v836, 104
      %v6506 = vpop.permute.xlu0 %6505
      %6507 = vrot.lane.b32.xlu0 %v841, 104
      %v6508 = vpop.permute.xlu0 %6507
      %6509 = vrot.lane.b32.xlu0 %v836, 72
      %v6510 = vpop.permute.xlu0 %6509
      %6511 = vrot.lane.b32.xlu0 %v841, 72
      %v6512 = vpop.permute.xlu0 %6511
      %v6513 = vsel %vm900, %v6506, 0
      %v6515 = vsel %vm900, %v6508, 0
      %v6517 = vsel %vm900, %v6510, 0
      %v6519 = vsel %vm900, %v6512, 0
      %6521 = vmatprep.subr.mxu0 0.0
      %6522 = vmatpush1.xpose.msra.mxu0 0.0
      %6523 = vmatprep.subr.mxu0 0.0
      %6524 = vmatpush1.xpose.msra.mxu0 0.0
      %6525 = vmatprep.subr.mxu0 0.0
      %6526 = vmatpush1.xpose.msra.mxu0 0.0
      %6527 = vmatprep.subr.mxu0 0.0
      %6528 = vmatpush1.xpose.msra.mxu0 0.0
      %6529 = vmatprep.subr.mxu0 0.0
      %6530 = vmatpush1.xpose.msra.mxu0 0.0
      %6531 = vmatprep.subr.mxu0 0.0
      %6532 = vmatpush1.xpose.msra.mxu0 0.0
      %6533 = vmatprep.subr.mxu0 0.0
      %6534 = vmatpush1.xpose.msra.mxu0 0.0
      %6535 = vmatprep.subr.mxu0 0.0
      %6536 = vmatpush1.xpose.msra.mxu0 0.0
      %6537 = vmatprep.subr.mxu0 0.0
      %6538 = vmatpush1.xpose.msra.mxu0 0.0
      %6539 = vmatprep.subr.mxu0 0.0
      %6540 = vmatpush1.xpose.msra.mxu0 0.0
      %6541 = vmatprep.subr.mxu0 0.0
      %6542 = vmatpush1.xpose.msra.mxu0 0.0
      %6543 = vmatprep.subr.mxu0 0.0
      %6544 = vmatpush1.xpose.msra.mxu0 0.0
      %6545 = vmatprep.subr.mxu0 0.0
      %6546 = vmatpush1.xpose.msra.mxu0 0.0
      %6547 = vmatprep.subr.mxu0 0.0
      %6548 = vmatpush1.xpose.msra.mxu0 0.0
      %6549 = vmatprep.subr.mxu0 0.0
      %6550 = vmatpush1.xpose.msra.mxu0 %v6519
      %6551 = vmatprep.subr.mxu0 0.0
      %6552 = vmatpush1.xpose.msra.mxu0 %v6517
      %6553 = vmatprep.subr.mxu0 0.0
      %6554 = vmatpush2.xpose.msra.mxu0 0.0
      %6555 = vmatprep.subr.mxu0 0.0
      %6556 = vmatpush2.xpose.msra.mxu0 0.0
      %6557 = vmatprep.subr.mxu0 0.0
      %6558 = vmatpush2.xpose.msra.mxu0 0.0
      %6559 = vmatprep.subr.mxu0 0.0
      %6560 = vmatpush2.xpose.msra.mxu0 0.0
      %6561 = vmatprep.subr.mxu0 0.0
      %6562 = vmatpush2.xpose.msra.mxu0 0.0
      %6563 = vmatprep.subr.mxu0 0.0
      %6564 = vmatpush2.xpose.msra.mxu0 0.0
      %6565 = vmatprep.subr.mxu0 0.0
      %6566 = vmatpush2.xpose.msra.mxu0 0.0
      %6567 = vmatprep.subr.mxu0 0.0
      %6568 = vmatpush2.xpose.msra.mxu0 0.0
      %6569 = vmatprep.subr.mxu0 0.0
      %6570 = vmatpush2.xpose.msra.mxu0 0.0
      %6571 = vmatprep.subr.mxu0 0.0
      %6572 = vmatpush2.xpose.msra.mxu0 0.0
      %6573 = vmatprep.subr.mxu0 0.0
      %6574 = vmatpush2.xpose.msra.mxu0 0.0
      %6575 = vmatprep.subr.mxu0 0.0
      %6576 = vmatpush2.xpose.msra.mxu0 0.0
      %6577 = vmatprep.subr.mxu0 0.0
      %6578 = vmatpush2.xpose.msra.mxu0 0.0
      %6579 = vmatprep.subr.mxu0 0.0
      %6580 = vmatpush2.xpose.msra.mxu0 0.0
      %6581 = vmatprep.subr.mxu0 0.0
      %6582 = vmatpush2.xpose.msra.mxu0 0.0
      %6583 = vmatprep.subr.mxu0 0.0
      %6584 = vmatpush2.xpose.msra.mxu0 0.0
      %6585 = vmatprep.mubr.f32.mxu0 0.0
      %6586 = vmatmul.mubr.f32.gmra.mxu0 %v6513
      %v6587 = vpop.f32.mrf.mxu0
      %v6588 = vadd.f32 0.0, %v6587
      %v6589 = vpop.f32.mrf.mxu0
      %6590 = vmatprep.mubr.f32.mxu0 0.0
      %6591 = vmatmul.mubr.f32.gmra.mxu0 %v6515
      %v6592 = vpop.f32.mrf.mxu0
      %v6593 = vadd.f32 0.0, %v6592
      %v6594 = vpop.f32.mrf.mxu0
      %6595 = vdwg.mxu0
      %6596 = vrot.lane.b32.xlu0 %v846, 104
      %v6597 = vpop.permute.xlu0 %6596
      %6598 = vrot.lane.b32.xlu0 %v851, 104
      %v6599 = vpop.permute.xlu0 %6598
      %6600 = vrot.lane.b32.xlu0 %v846, 72
      %v6601 = vpop.permute.xlu0 %6600
      %6602 = vrot.lane.b32.xlu0 %v851, 72
      %v6603 = vpop.permute.xlu0 %6602
      %v6604 = vsel %vm900, %v6597, 0
      %v6606 = vsel %vm900, %v6599, 0
      %v6608 = vsel %vm900, %v6601, 0
      %v6610 = vsel %vm900, %v6603, 0
      %6612 = vmatprep.subr.mxu0 0.0
      %6613 = vmatpush1.xpose.msra.mxu0 0.0
      %6614 = vmatprep.subr.mxu0 0.0
      %6615 = vmatpush1.xpose.msra.mxu0 0.0
      %6616 = vmatprep.subr.mxu0 0.0
      %6617 = vmatpush1.xpose.msra.mxu0 0.0
      %6618 = vmatprep.subr.mxu0 0.0
      %6619 = vmatpush1.xpose.msra.mxu0 0.0
      %6620 = vmatprep.subr.mxu0 0.0
      %6621 = vmatpush1.xpose.msra.mxu0 0.0
      %6622 = vmatprep.subr.mxu0 0.0
      %6623 = vmatpush1.xpose.msra.mxu0 0.0
      %6624 = vmatprep.subr.mxu0 0.0
      %6625 = vmatpush1.xpose.msra.mxu0 0.0
      %6626 = vmatprep.subr.mxu0 0.0
      %6627 = vmatpush1.xpose.msra.mxu0 0.0
      %6628 = vmatprep.subr.mxu0 0.0
      %6629 = vmatpush1.xpose.msra.mxu0 0.0
      %6630 = vmatprep.subr.mxu0 0.0
      %6631 = vmatpush1.xpose.msra.mxu0 0.0
      %6632 = vmatprep.subr.mxu0 0.0
      %6633 = vmatpush1.xpose.msra.mxu0 0.0
      %6634 = vmatprep.subr.mxu0 0.0
      %6635 = vmatpush1.xpose.msra.mxu0 0.0
      %6636 = vmatprep.subr.mxu0 0.0
      %6637 = vmatpush1.xpose.msra.mxu0 0.0
      %6638 = vmatprep.subr.mxu0 0.0
      %6639 = vmatpush1.xpose.msra.mxu0 0.0
      %6640 = vmatprep.subr.mxu0 0.0
      %6641 = vmatpush1.xpose.msra.mxu0 %v6610
      %6642 = vmatprep.subr.mxu0 0.0
      %6643 = vmatpush1.xpose.msra.mxu0 %v6608
      %6644 = vmatprep.subr.mxu0 0.0
      %6645 = vmatpush2.xpose.msra.mxu0 0.0
      %6646 = vmatprep.subr.mxu0 0.0
      %6647 = vmatpush2.xpose.msra.mxu0 0.0
      %6648 = vmatprep.subr.mxu0 0.0
      %6649 = vmatpush2.xpose.msra.mxu0 0.0
      %6650 = vmatprep.subr.mxu0 0.0
      %6651 = vmatpush2.xpose.msra.mxu0 0.0
      %6652 = vmatprep.subr.mxu0 0.0
      %6653 = vmatpush2.xpose.msra.mxu0 0.0
      %6654 = vmatprep.subr.mxu0 0.0
      %6655 = vmatpush2.xpose.msra.mxu0 0.0
      %6656 = vmatprep.subr.mxu0 0.0
      %6657 = vmatpush2.xpose.msra.mxu0 0.0
      %6658 = vmatprep.subr.mxu0 0.0
      %6659 = vmatpush2.xpose.msra.mxu0 0.0
      %6660 = vmatprep.subr.mxu0 0.0
      %6661 = vmatpush2.xpose.msra.mxu0 0.0
      %6662 = vmatprep.subr.mxu0 0.0
      %6663 = vmatpush2.xpose.msra.mxu0 0.0
      %6664 = vmatprep.subr.mxu0 0.0
      %6665 = vmatpush2.xpose.msra.mxu0 0.0
      %6666 = vmatprep.subr.mxu0 0.0
      %6667 = vmatpush2.xpose.msra.mxu0 0.0
      %6668 = vmatprep.subr.mxu0 0.0
      %6669 = vmatpush2.xpose.msra.mxu0 0.0
      %6670 = vmatprep.subr.mxu0 0.0
      %6671 = vmatpush2.xpose.msra.mxu0 0.0
      %6672 = vmatprep.subr.mxu0 0.0
      %6673 = vmatpush2.xpose.msra.mxu0 0.0
      %6674 = vmatprep.subr.mxu0 0.0
      %6675 = vmatpush2.xpose.msra.mxu0 0.0
      %6676 = vmatprep.mubr.f32.mxu0 0.0
      %6677 = vmatmul.mubr.f32.gmra.mxu0 %v6604
      %v6678 = vpop.f32.mrf.mxu0
      %v6679 = vadd.f32 0.0, %v6678
      %v6680 = vpop.f32.mrf.mxu0
      %6681 = vmatprep.mubr.f32.mxu0 0.0
      %6682 = vmatmul.mubr.f32.gmra.mxu0 %v6606
      %v6683 = vpop.f32.mrf.mxu0
      %v6684 = vadd.f32 0.0, %v6683
      %v6685 = vpop.f32.mrf.mxu0
      %6686 = vdwg.mxu0
      %6687 = vrot.lane.b32.xlu0 %v856, 104
      %v6688 = vpop.permute.xlu0 %6687
      %6689 = vrot.lane.b32.xlu0 %v861, 104
      %v6690 = vpop.permute.xlu0 %6689
      %6691 = vrot.lane.b32.xlu0 %v856, 72
      %v6692 = vpop.permute.xlu0 %6691
      %6693 = vrot.lane.b32.xlu0 %v861, 72
      %v6694 = vpop.permute.xlu0 %6693
      %v6695 = vsel %vm900, %v6688, 0
      %v6697 = vsel %vm900, %v6690, 0
      %v6699 = vsel %vm900, %v6692, 0
      %v6701 = vsel %vm900, %v6694, 0
      %6703 = vmatprep.subr.mxu0 0.0
      %6704 = vmatpush1.xpose.msra.mxu0 0.0
      %6705 = vmatprep.subr.mxu0 0.0
      %6706 = vmatpush1.xpose.msra.mxu0 0.0
      %6707 = vmatprep.subr.mxu0 0.0
      %6708 = vmatpush1.xpose.msra.mxu0 0.0
      %6709 = vmatprep.subr.mxu0 0.0
      %6710 = vmatpush1.xpose.msra.mxu0 0.0
      %6711 = vmatprep.subr.mxu0 0.0
      %6712 = vmatpush1.xpose.msra.mxu0 0.0
      %6713 = vmatprep.subr.mxu0 0.0
      %6714 = vmatpush1.xpose.msra.mxu0 0.0
      %6715 = vmatprep.subr.mxu0 0.0
      %6716 = vmatpush1.xpose.msra.mxu0 0.0
      %6717 = vmatprep.subr.mxu0 0.0
      %6718 = vmatpush1.xpose.msra.mxu0 0.0
      %6719 = vmatprep.subr.mxu0 0.0
      %6720 = vmatpush1.xpose.msra.mxu0 0.0
      %6721 = vmatprep.subr.mxu0 0.0
      %6722 = vmatpush1.xpose.msra.mxu0 0.0
      %6723 = vmatprep.subr.mxu0 0.0
      %6724 = vmatpush1.xpose.msra.mxu0 0.0
      %6725 = vmatprep.subr.mxu0 0.0
      %6726 = vmatpush1.xpose.msra.mxu0 0.0
      %6727 = vmatprep.subr.mxu0 0.0
      %6728 = vmatpush1.xpose.msra.mxu0 0.0
      %6729 = vmatprep.subr.mxu0 0.0
      %6730 = vmatpush1.xpose.msra.mxu0 0.0
      %6731 = vmatprep.subr.mxu0 0.0
      %6732 = vmatpush1.xpose.msra.mxu0 %v6701
      %6733 = vmatprep.subr.mxu0 0.0
      %6734 = vmatpush1.xpose.msra.mxu0 %v6699
      %6735 = vmatprep.subr.mxu0 0.0
      %6736 = vmatpush2.xpose.msra.mxu0 0.0
      %6737 = vmatprep.subr.mxu0 0.0
      %6738 = vmatpush2.xpose.msra.mxu0 0.0
      %6739 = vmatprep.subr.mxu0 0.0
      %6740 = vmatpush2.xpose.msra.mxu0 0.0
      %6741 = vmatprep.subr.mxu0 0.0
      %6742 = vmatpush2.xpose.msra.mxu0 0.0
      %6743 = vmatprep.subr.mxu0 0.0
      %6744 = vmatpush2.xpose.msra.mxu0 0.0
      %6745 = vmatprep.subr.mxu0 0.0
      %6746 = vmatpush2.xpose.msra.mxu0 0.0
      %6747 = vmatprep.subr.mxu0 0.0
      %6748 = vmatpush2.xpose.msra.mxu0 0.0
      %6749 = vmatprep.subr.mxu0 0.0
      %6750 = vmatpush2.xpose.msra.mxu0 0.0
      %6751 = vmatprep.subr.mxu0 0.0
      %6752 = vmatpush2.xpose.msra.mxu0 0.0
      %6753 = vmatprep.subr.mxu0 0.0
      %6754 = vmatpush2.xpose.msra.mxu0 0.0
      %6755 = vmatprep.subr.mxu0 0.0
      %6756 = vmatpush2.xpose.msra.mxu0 0.0
      %6757 = vmatprep.subr.mxu0 0.0
      %6758 = vmatpush2.xpose.msra.mxu0 0.0
      %6759 = vmatprep.subr.mxu0 0.0
      %6760 = vmatpush2.xpose.msra.mxu0 0.0
      %6761 = vmatprep.subr.mxu0 0.0
      %6762 = vmatpush2.xpose.msra.mxu0 0.0
      %6763 = vmatprep.subr.mxu0 0.0
      %6764 = vmatpush2.xpose.msra.mxu0 0.0
      %6765 = vmatprep.subr.mxu0 0.0
      %6766 = vmatpush2.xpose.msra.mxu0 0.0
      %6767 = vmatprep.mubr.f32.mxu0 0.0
      %6768 = vmatmul.mubr.f32.gmra.mxu0 %v6695
      %v6769 = vpop.f32.mrf.mxu0
      %v6770 = vadd.f32 0.0, %v6769
      %v6771 = vpop.f32.mrf.mxu0
      %6772 = vmatprep.mubr.f32.mxu0 0.0
      %6773 = vmatmul.mubr.f32.gmra.mxu0 %v6697
      %v6774 = vpop.f32.mrf.mxu0
      %v6775 = vadd.f32 0.0, %v6774
      %v6776 = vpop.f32.mrf.mxu0
      %6777 = vdwg.mxu0
      %6778 = vrot.lane.b32.xlu0 %v866, 104
      %v6779 = vpop.permute.xlu0 %6778
      %6780 = vrot.lane.b32.xlu0 %v871, 104
      %v6781 = vpop.permute.xlu0 %6780
      %6782 = vrot.lane.b32.xlu0 %v866, 72
      %v6783 = vpop.permute.xlu0 %6782
      %6784 = vrot.lane.b32.xlu0 %v871, 72
      %v6785 = vpop.permute.xlu0 %6784
      %v6786 = vsel %vm900, %v6779, 0
      %v6788 = vsel %vm900, %v6781, 0
      %v6790 = vsel %vm900, %v6783, 0
      %v6792 = vsel %vm900, %v6785, 0
      %6794 = vmatprep.subr.mxu0 0.0
      %6795 = vmatpush1.xpose.msra.mxu0 0.0
      %6796 = vmatprep.subr.mxu0 0.0
      %6797 = vmatpush1.xpose.msra.mxu0 0.0
      %6798 = vmatprep.subr.mxu0 0.0
      %6799 = vmatpush1.xpose.msra.mxu0 0.0
      %6800 = vmatprep.subr.mxu0 0.0
      %6801 = vmatpush1.xpose.msra.mxu0 0.0
      %6802 = vmatprep.subr.mxu0 0.0
      %6803 = vmatpush1.xpose.msra.mxu0 0.0
      %6804 = vmatprep.subr.mxu0 0.0
      %6805 = vmatpush1.xpose.msra.mxu0 0.0
      %6806 = vmatprep.subr.mxu0 0.0
      %6807 = vmatpush1.xpose.msra.mxu0 0.0
      %6808 = vmatprep.subr.mxu0 0.0
      %6809 = vmatpush1.xpose.msra.mxu0 0.0
      %6810 = vmatprep.subr.mxu0 0.0
      %6811 = vmatpush1.xpose.msra.mxu0 0.0
      %6812 = vmatprep.subr.mxu0 0.0
      %6813 = vmatpush1.xpose.msra.mxu0 0.0
      %6814 = vmatprep.subr.mxu0 0.0
      %6815 = vmatpush1.xpose.msra.mxu0 0.0
      %6816 = vmatprep.subr.mxu0 0.0
      %6817 = vmatpush1.xpose.msra.mxu0 0.0
      %6818 = vmatprep.subr.mxu0 0.0
      %6819 = vmatpush1.xpose.msra.mxu0 0.0
      %6820 = vmatprep.subr.mxu0 0.0
      %6821 = vmatpush1.xpose.msra.mxu0 0.0
      %6822 = vmatprep.subr.mxu0 0.0
      %6823 = vmatpush1.xpose.msra.mxu0 %v6792
      %6824 = vmatprep.subr.mxu0 0.0
      %6825 = vmatpush1.xpose.msra.mxu0 %v6790
      %6826 = vmatprep.subr.mxu0 0.0
      %6827 = vmatpush2.xpose.msra.mxu0 0.0
      %6828 = vmatprep.subr.mxu0 0.0
      %6829 = vmatpush2.xpose.msra.mxu0 0.0
      %6830 = vmatprep.subr.mxu0 0.0
      %6831 = vmatpush2.xpose.msra.mxu0 0.0
      %6832 = vmatprep.subr.mxu0 0.0
      %6833 = vmatpush2.xpose.msra.mxu0 0.0
      %6834 = vmatprep.subr.mxu0 0.0
      %6835 = vmatpush2.xpose.msra.mxu0 0.0
      %6836 = vmatprep.subr.mxu0 0.0
      %6837 = vmatpush2.xpose.msra.mxu0 0.0
      %6838 = vmatprep.subr.mxu0 0.0
      %6839 = vmatpush2.xpose.msra.mxu0 0.0
      %6840 = vmatprep.subr.mxu0 0.0
      %6841 = vmatpush2.xpose.msra.mxu0 0.0
      %6842 = vmatprep.subr.mxu0 0.0
      %6843 = vmatpush2.xpose.msra.mxu0 0.0
      %6844 = vmatprep.subr.mxu0 0.0
      %6845 = vmatpush2.xpose.msra.mxu0 0.0
      %6846 = vmatprep.subr.mxu0 0.0
      %6847 = vmatpush2.xpose.msra.mxu0 0.0
      %6848 = vmatprep.subr.mxu0 0.0
      %6849 = vmatpush2.xpose.msra.mxu0 0.0
      %6850 = vmatprep.subr.mxu0 0.0
      %6851 = vmatpush2.xpose.msra.mxu0 0.0
      %6852 = vmatprep.subr.mxu0 0.0
      %6853 = vmatpush2.xpose.msra.mxu0 0.0
      %6854 = vmatprep.subr.mxu0 0.0
      %6855 = vmatpush2.xpose.msra.mxu0 0.0
      %6856 = vmatprep.subr.mxu0 0.0
      %6857 = vmatpush2.xpose.msra.mxu0 0.0
      %6858 = vmatprep.mubr.f32.mxu0 0.0
      %6859 = vmatmul.mubr.f32.gmra.mxu0 %v6786
      %v6860 = vpop.f32.mrf.mxu0
      %v6861 = vadd.f32 0.0, %v6860
      %v6862 = vpop.f32.mrf.mxu0
      %6863 = vmatprep.mubr.f32.mxu0 0.0
      %6864 = vmatmul.mubr.f32.gmra.mxu0 %v6788
      %v6865 = vpop.f32.mrf.mxu0
      %v6866 = vadd.f32 0.0, %v6865
      %v6867 = vpop.f32.mrf.mxu0
      %6868 = vdwg.mxu0
      %6869 = vrot.lane.b32.xlu0 %v876, 104
      %v6870 = vpop.permute.xlu0 %6869
      %6871 = vrot.lane.b32.xlu0 %v881, 104
      %v6872 = vpop.permute.xlu0 %6871
      %6873 = vrot.lane.b32.xlu0 %v876, 72
      %v6874 = vpop.permute.xlu0 %6873
      %6875 = vrot.lane.b32.xlu0 %v881, 72
      %v6876 = vpop.permute.xlu0 %6875
      %v6877 = vsel %vm900, %v6870, 0
      %v6879 = vsel %vm900, %v6872, 0
      %v6881 = vsel %vm900, %v6874, 0
      %v6883 = vsel %vm900, %v6876, 0
      %6885 = vmatprep.subr.mxu0 0.0
      %6886 = vmatpush1.xpose.msra.mxu0 0.0
      %6887 = vmatprep.subr.mxu0 0.0
      %6888 = vmatpush1.xpose.msra.mxu0 0.0
      %6889 = vmatprep.subr.mxu0 0.0
      %6890 = vmatpush1.xpose.msra.mxu0 0.0
      %6891 = vmatprep.subr.mxu0 0.0
      %6892 = vmatpush1.xpose.msra.mxu0 0.0
      %6893 = vmatprep.subr.mxu0 0.0
      %6894 = vmatpush1.xpose.msra.mxu0 0.0
      %6895 = vmatprep.subr.mxu0 0.0
      %6896 = vmatpush1.xpose.msra.mxu0 0.0
      %6897 = vmatprep.subr.mxu0 0.0
      %6898 = vmatpush1.xpose.msra.mxu0 0.0
      %6899 = vmatprep.subr.mxu0 0.0
      %6900 = vmatpush1.xpose.msra.mxu0 0.0
      %6901 = vmatprep.subr.mxu0 0.0
      %6902 = vmatpush1.xpose.msra.mxu0 0.0
      %6903 = vmatprep.subr.mxu0 0.0
      %6904 = vmatpush1.xpose.msra.mxu0 0.0
      %6905 = vmatprep.subr.mxu0 0.0
      %6906 = vmatpush1.xpose.msra.mxu0 0.0
      %6907 = vmatprep.subr.mxu0 0.0
      %6908 = vmatpush1.xpose.msra.mxu0 0.0
      %6909 = vmatprep.subr.mxu0 0.0
      %6910 = vmatpush1.xpose.msra.mxu0 0.0
      %6911 = vmatprep.subr.mxu0 0.0
      %6912 = vmatpush1.xpose.msra.mxu0 0.0
      %6913 = vmatprep.subr.mxu0 0.0
      %6914 = vmatpush1.xpose.msra.mxu0 %v6883
      %6915 = vmatprep.subr.mxu0 0.0
      %6916 = vmatpush1.xpose.msra.mxu0 %v6881
      %6917 = vmatprep.subr.mxu0 0.0
      %6918 = vmatpush2.xpose.msra.mxu0 0.0
      %6919 = vmatprep.subr.mxu0 0.0
      %6920 = vmatpush2.xpose.msra.mxu0 0.0
      %6921 = vmatprep.subr.mxu0 0.0
      %6922 = vmatpush2.xpose.msra.mxu0 0.0
      %6923 = vmatprep.subr.mxu0 0.0
      %6924 = vmatpush2.xpose.msra.mxu0 0.0
      %6925 = vmatprep.subr.mxu0 0.0
      %6926 = vmatpush2.xpose.msra.mxu0 0.0
      %6927 = vmatprep.subr.mxu0 0.0
      %6928 = vmatpush2.xpose.msra.mxu0 0.0
      %6929 = vmatprep.subr.mxu0 0.0
      %6930 = vmatpush2.xpose.msra.mxu0 0.0
      %6931 = vmatprep.subr.mxu0 0.0
      %6932 = vmatpush2.xpose.msra.mxu0 0.0
      %6933 = vmatprep.subr.mxu0 0.0
      %6934 = vmatpush2.xpose.msra.mxu0 0.0
      %6935 = vmatprep.subr.mxu0 0.0
      %6936 = vmatpush2.xpose.msra.mxu0 0.0
      %6937 = vmatprep.subr.mxu0 0.0
      %6938 = vmatpush2.xpose.msra.mxu0 0.0
      %6939 = vmatprep.subr.mxu0 0.0
      %6940 = vmatpush2.xpose.msra.mxu0 0.0
      %6941 = vmatprep.subr.mxu0 0.0
      %6942 = vmatpush2.xpose.msra.mxu0 0.0
      %6943 = vmatprep.subr.mxu0 0.0
      %6944 = vmatpush2.xpose.msra.mxu0 0.0
      %6945 = vmatprep.subr.mxu0 0.0
      %6946 = vmatpush2.xpose.msra.mxu0 0.0
      %6947 = vmatprep.subr.mxu0 0.0
      %6948 = vmatpush2.xpose.msra.mxu0 0.0
      %6949 = vmatprep.mubr.f32.mxu0 0.0
      %6950 = vmatmul.mubr.f32.gmra.mxu0 %v6877
      %v6951 = vpop.f32.mrf.mxu0
      %v6952 = vadd.f32 0.0, %v6951
      %v6953 = vpop.f32.mrf.mxu0
      %6954 = vmatprep.mubr.f32.mxu0 0.0
      %6955 = vmatmul.mubr.f32.gmra.mxu0 %v6879
      %v6956 = vpop.f32.mrf.mxu0
      %v6957 = vadd.f32 0.0, %v6956
      %v6958 = vpop.f32.mrf.mxu0
      %6959 = vdwg.mxu0
      %6960 = vrot.lane.b32.xlu0 %v886, 104
      %v6961 = vpop.permute.xlu0 %6960
      %6962 = vrot.lane.b32.xlu0 %v891, 104
      %v6963 = vpop.permute.xlu0 %6962
      %6964 = vrot.lane.b32.xlu0 %v886, 72
      %v6965 = vpop.permute.xlu0 %6964
      %6966 = vrot.lane.b32.xlu0 %v891, 72
      %v6967 = vpop.permute.xlu0 %6966
      %v6968 = vsel %vm900, %v6961, 0
      %v6970 = vsel %vm900, %v6963, 0
      %v6972 = vsel %vm900, %v6965, 0
      %v6974 = vsel %vm900, %v6967, 0
      %6976 = vmatprep.subr.mxu0 0.0
      %6977 = vmatpush1.xpose.msra.mxu0 0.0
      %6978 = vmatprep.subr.mxu0 0.0
      %6979 = vmatpush1.xpose.msra.mxu0 0.0
      %6980 = vmatprep.subr.mxu0 0.0
      %6981 = vmatpush1.xpose.msra.mxu0 0.0
      %6982 = vmatprep.subr.mxu0 0.0
      %6983 = vmatpush1.xpose.msra.mxu0 0.0
      %6984 = vmatprep.subr.mxu0 0.0
      %6985 = vmatpush1.xpose.msra.mxu0 0.0
      %6986 = vmatprep.subr.mxu0 0.0
      %6987 = vmatpush1.xpose.msra.mxu0 0.0
      %6988 = vmatprep.subr.mxu0 0.0
      %6989 = vmatpush1.xpose.msra.mxu0 0.0
      %6990 = vmatprep.subr.mxu0 0.0
      %6991 = vmatpush1.xpose.msra.mxu0 0.0
      %6992 = vmatprep.subr.mxu0 0.0
      %6993 = vmatpush1.xpose.msra.mxu0 0.0
      %6994 = vmatprep.subr.mxu0 0.0
      %6995 = vmatpush1.xpose.msra.mxu0 0.0
      %6996 = vmatprep.subr.mxu0 0.0
      %6997 = vmatpush1.xpose.msra.mxu0 0.0
      %6998 = vmatprep.subr.mxu0 0.0
      %6999 = vmatpush1.xpose.msra.mxu0 0.0
      %7000 = vmatprep.subr.mxu0 0.0
      %7001 = vmatpush1.xpose.msra.mxu0 0.0
      %7002 = vmatprep.subr.mxu0 0.0
      %7003 = vmatpush1.xpose.msra.mxu0 0.0
      %7004 = vmatprep.subr.mxu0 0.0
      %7005 = vmatpush1.xpose.msra.mxu0 %v6974
      %7006 = vmatprep.subr.mxu0 0.0
      %7007 = vmatpush1.xpose.msra.mxu0 %v6972
      %7008 = vmatprep.subr.mxu0 0.0
      %7009 = vmatpush2.xpose.msra.mxu0 0.0
      %7010 = vmatprep.subr.mxu0 0.0
      %7011 = vmatpush2.xpose.msra.mxu0 0.0
      %7012 = vmatprep.subr.mxu0 0.0
      %7013 = vmatpush2.xpose.msra.mxu0 0.0
      %7014 = vmatprep.subr.mxu0 0.0
      %7015 = vmatpush2.xpose.msra.mxu0 0.0
      %7016 = vmatprep.subr.mxu0 0.0
      %7017 = vmatpush2.xpose.msra.mxu0 0.0
      %7018 = vmatprep.subr.mxu0 0.0
      %7019 = vmatpush2.xpose.msra.mxu0 0.0
      %7020 = vmatprep.subr.mxu0 0.0
      %7021 = vmatpush2.xpose.msra.mxu0 0.0
      %7022 = vmatprep.subr.mxu0 0.0
      %7023 = vmatpush2.xpose.msra.mxu0 0.0
      %7024 = vmatprep.subr.mxu0 0.0
      %7025 = vmatpush2.xpose.msra.mxu0 0.0
      %7026 = vmatprep.subr.mxu0 0.0
      %7027 = vmatpush2.xpose.msra.mxu0 0.0
      %7028 = vmatprep.subr.mxu0 0.0
      %7029 = vmatpush2.xpose.msra.mxu0 0.0
      %7030 = vmatprep.subr.mxu0 0.0
      %7031 = vmatpush2.xpose.msra.mxu0 0.0
      %7032 = vmatprep.subr.mxu0 0.0
      %7033 = vmatpush2.xpose.msra.mxu0 0.0
      %7034 = vmatprep.subr.mxu0 0.0
      %7035 = vmatpush2.xpose.msra.mxu0 0.0
      %7036 = vmatprep.subr.mxu0 0.0
      %7037 = vmatpush2.xpose.msra.mxu0 0.0
      %7038 = vmatprep.subr.mxu0 0.0
      %7039 = vmatpush2.xpose.msra.mxu0 0.0
      %7040 = vmatprep.mubr.f32.mxu0 0.0
      %7041 = vmatmul.mubr.f32.gmra.mxu0 %v6968
      %v7042 = vpop.f32.mrf.mxu0
      %v7043 = vadd.f32 0.0, %v7042
      %v7044 = vpop.f32.mrf.mxu0
      %7045 = vmatprep.mubr.f32.mxu0 0.0
      %7046 = vmatmul.mubr.f32.gmra.mxu0 %v6970
      %v7047 = vpop.f32.mrf.mxu0
      %v7048 = vadd.f32 0.0, %v7047
      %v7049 = vpop.f32.mrf.mxu0
      %7050 = vdwg.mxu0
      %v7051 = vmul.f32 %v6406, 0.35355338
      %v7052 = vmul.f32 %v6411, 0.35355338
      %v7053 = vmul.f32 %v6497, 0.35355338
      %v7054 = vmul.f32 %v6502, 0.35355338
      %v7055 = vmul.f32 %v6588, 0.35355338
      %v7056 = vmul.f32 %v6593, 0.35355338
      %v7057 = vmul.f32 %v6679, 0.35355338
      %v7058 = vmul.f32 %v6684, 0.35355338
      %v7059 = vmul.f32 %v6770, 0.35355338
      %v7060 = vmul.f32 %v6775, 0.35355338
      %v7061 = vmul.f32 %v6861, 0.35355338
      %v7062 = vmul.f32 %v6866, 0.35355338
      %v7063 = vmul.f32 %v6952, 0.35355338
      %v7064 = vmul.f32 %v6957, 0.35355338
      %v7065 = vmul.f32 %v7043, 0.35355338
      %v7066 = vmul.f32 %v7048, 0.35355338
      %v7067 = vsel %vm1623, %v7051, -inf
      %7068 = vmax.xlane.f32.xlu0 %v7067
      %v7069 = vpop.xlane.xlu0 %7068
      %v7070 = vsel %vm1623, %v7052, -inf
      %7071 = vmax.xlane.f32.xlu0 %v7070
      %v7072 = vpop.xlane.xlu0 %7071
      %v7073 = vsel %vm1623, %v7053, -inf
      %7074 = vmax.xlane.f32.xlu0 %v7073
      %v7075 = vpop.xlane.xlu0 %7074
      %v7076 = vsel %vm1623, %v7054, -inf
      %7077 = vmax.xlane.f32.xlu0 %v7076
      %v7078 = vpop.xlane.xlu0 %7077
      %v7079 = vsel %vm1623, %v7055, -inf
      %7080 = vmax.xlane.f32.xlu0 %v7079
      %v7081 = vpop.xlane.xlu0 %7080
      %v7082 = vsel %vm1623, %v7056, -inf
      %7083 = vmax.xlane.f32.xlu0 %v7082
      %v7084 = vpop.xlane.xlu0 %7083
      %v7085 = vsel %vm1623, %v7057, -inf
      %7086 = vmax.xlane.f32.xlu0 %v7085
      %v7087 = vpop.xlane.xlu0 %7086
      %v7088 = vsel %vm1623, %v7058, -inf
      %7089 = vmax.xlane.f32.xlu0 %v7088
      %v7090 = vpop.xlane.xlu0 %7089
      %v7091 = vsel %vm1623, %v7059, -inf
      %7092 = vmax.xlane.f32.xlu0 %v7091
      %v7093 = vpop.xlane.xlu0 %7092
      %v7094 = vsel %vm1623, %v7060, -inf
      %7095 = vmax.xlane.f32.xlu0 %v7094
      %v7096 = vpop.xlane.xlu0 %7095
      %v7097 = vsel %vm1623, %v7061, -inf
      %7098 = vmax.xlane.f32.xlu0 %v7097
      %v7099 = vpop.xlane.xlu0 %7098
      %v7100 = vsel %vm1623, %v7062, -inf
      %7101 = vmax.xlane.f32.xlu0 %v7100
      %v7102 = vpop.xlane.xlu0 %7101
      %v7103 = vsel %vm1623, %v7063, -inf
      %7104 = vmax.xlane.f32.xlu0 %v7103
      %v7105 = vpop.xlane.xlu0 %7104
      %v7106 = vsel %vm1623, %v7064, -inf
      %7107 = vmax.xlane.f32.xlu0 %v7106
      %v7108 = vpop.xlane.xlu0 %7107
      %v7109 = vsel %vm1623, %v7065, -inf
      %7110 = vmax.xlane.f32.xlu0 %v7109
      %v7111 = vpop.xlane.xlu0 %7110
      %v7112 = vsel %vm1623, %v7066, -inf
      %7113 = vmax.xlane.f32.xlu0 %v7112
      %v7114 = vpop.xlane.xlu0 %7113
      %v7115 = vsub.f32 %v7051, %v7069
      %v7116 = vsub.f32 %v7052, %v7072
      %v7117 = vsub.f32 %v7053, %v7075
      %v7118 = vsub.f32 %v7054, %v7078
      %v7119 = vsub.f32 %v7055, %v7081
      %v7120 = vsub.f32 %v7056, %v7084
      %v7121 = vsub.f32 %v7057, %v7087
      %v7122 = vsub.f32 %v7058, %v7090
      %v7123 = vsub.f32 %v7059, %v7093
      %v7124 = vsub.f32 %v7060, %v7096
      %v7125 = vsub.f32 %v7061, %v7099
      %v7126 = vsub.f32 %v7062, %v7102
      %v7127 = vsub.f32 %v7063, %v7105
      %v7128 = vsub.f32 %v7064, %v7108
      %v7129 = vsub.f32 %v7065, %v7111
      %v7130 = vsub.f32 %v7066, %v7114
      %v7131 = vmul.f32 %v7115, 1.442695
      %v7132 = vpow.pop %v7131
      %v7133 = vmul.f32 %v7116, 1.442695
      %v7134 = vpow.pop %v7133
      %v7135 = vmul.f32 %v7117, 1.442695
      %v7136 = vpow.pop %v7135
      %v7137 = vmul.f32 %v7118, 1.442695
      %v7138 = vpow.pop %v7137
      %v7139 = vmul.f32 %v7119, 1.442695
      %v7140 = vpow.pop %v7139
      %v7141 = vmul.f32 %v7120, 1.442695
      %v7142 = vpow.pop %v7141
      %v7143 = vmul.f32 %v7121, 1.442695
      %v7144 = vpow.pop %v7143
      %v7145 = vmul.f32 %v7122, 1.442695
      %v7146 = vpow.pop %v7145
      %v7147 = vmul.f32 %v7123, 1.442695
      %v7148 = vpow.pop %v7147
      %v7149 = vmul.f32 %v7124, 1.442695
      %v7150 = vpow.pop %v7149
      %v7151 = vmul.f32 %v7125, 1.442695
      %v7152 = vpow.pop %v7151
      %v7153 = vmul.f32 %v7126, 1.442695
      %v7154 = vpow.pop %v7153
      %v7155 = vmul.f32 %v7127, 1.442695
      %v7156 = vpow.pop %v7155
      %v7157 = vmul.f32 %v7128, 1.442695
      %v7158 = vpow.pop %v7157
      %v7159 = vmul.f32 %v7129, 1.442695
      %v7160 = vpow.pop %v7159
      %v7161 = vmul.f32 %v7130, 1.442695
      %v7162 = vpow.pop %v7161
      %v7163 = vsel %vm1623, %v7132, 0.0
      %7164 = vadd.xlane.f32.xlu0 %v7163
      %v7165 = vpop.xlane.xlu0 %7164
      %v7166 = vsel %vm1623, %v7134, 0.0
      %7167 = vadd.xlane.f32.xlu0 %v7166
      %v7168 = vpop.xlane.xlu0 %7167
      %v7169 = vsel %vm1623, %v7136, 0.0
      %7170 = vadd.xlane.f32.xlu0 %v7169
      %v7171 = vpop.xlane.xlu0 %7170
      %v7172 = vsel %vm1623, %v7138, 0.0
      %7173 = vadd.xlane.f32.xlu0 %v7172
      %v7174 = vpop.xlane.xlu0 %7173
      %v7175 = vsel %vm1623, %v7140, 0.0
      %7176 = vadd.xlane.f32.xlu0 %v7175
      %v7177 = vpop.xlane.xlu0 %7176
      %v7178 = vsel %vm1623, %v7142, 0.0
      %7179 = vadd.xlane.f32.xlu0 %v7178
      %v7180 = vpop.xlane.xlu0 %7179
      %v7181 = vsel %vm1623, %v7144, 0.0
      %7182 = vadd.xlane.f32.xlu0 %v7181
      %v7183 = vpop.xlane.xlu0 %7182
      %v7184 = vsel %vm1623, %v7146, 0.0
      %7185 = vadd.xlane.f32.xlu0 %v7184
      %v7186 = vpop.xlane.xlu0 %7185
      %v7187 = vsel %vm1623, %v7148, 0.0
      %7188 = vadd.xlane.f32.xlu0 %v7187
      %v7189 = vpop.xlane.xlu0 %7188
      %v7190 = vsel %vm1623, %v7150, 0.0
      %7191 = vadd.xlane.f32.xlu0 %v7190
      %v7192 = vpop.xlane.xlu0 %7191
      %v7193 = vsel %vm1623, %v7152, 0.0
      %7194 = vadd.xlane.f32.xlu0 %v7193
      %v7195 = vpop.xlane.xlu0 %7194
      %v7196 = vsel %vm1623, %v7154, 0.0
      %7197 = vadd.xlane.f32.xlu0 %v7196
      %v7198 = vpop.xlane.xlu0 %7197
      %v7199 = vsel %vm1623, %v7156, 0.0
      %7200 = vadd.xlane.f32.xlu0 %v7199
      %v7201 = vpop.xlane.xlu0 %7200
      %v7202 = vsel %vm1623, %v7158, 0.0
      %7203 = vadd.xlane.f32.xlu0 %v7202
      %v7204 = vpop.xlane.xlu0 %7203
      %v7205 = vsel %vm1623, %v7160, 0.0
      %7206 = vadd.xlane.f32.xlu0 %v7205
      %v7207 = vpop.xlane.xlu0 %7206
      %v7208 = vsel %vm1623, %v7162, 0.0
      %7209 = vadd.xlane.f32.xlu0 %v7208
      %v7210 = vpop.xlane.xlu0 %7209
      %v7211 = vrcp.pop %v7165
      %v7212 = vmul.f32 %v7132, %v7211
      %v7213 = vrcp.pop %v7168
      %v7214 = vmul.f32 %v7134, %v7213
      %v7215 = vrcp.pop %v7171
      %v7216 = vmul.f32 %v7136, %v7215
      %v7217 = vrcp.pop %v7174
      %v7218 = vmul.f32 %v7138, %v7217
      %v7219 = vrcp.pop %v7177
      %v7220 = vmul.f32 %v7140, %v7219
      %v7221 = vrcp.pop %v7180
      %v7222 = vmul.f32 %v7142, %v7221
      %v7223 = vrcp.pop %v7183
      %v7224 = vmul.f32 %v7144, %v7223
      %v7225 = vrcp.pop %v7186
      %v7226 = vmul.f32 %v7146, %v7225
      %v7227 = vrcp.pop %v7189
      %v7228 = vmul.f32 %v7148, %v7227
      %v7229 = vrcp.pop %v7192
      %v7230 = vmul.f32 %v7150, %v7229
      %v7231 = vrcp.pop %v7195
      %v7232 = vmul.f32 %v7152, %v7231
      %v7233 = vrcp.pop %v7198
      %v7234 = vmul.f32 %v7154, %v7233
      %v7235 = vrcp.pop %v7201
      %v7236 = vmul.f32 %v7156, %v7235
      %v7237 = vrcp.pop %v7204
      %v7238 = vmul.f32 %v7158, %v7237
      %v7239 = vrcp.pop %v7207
      %v7240 = vmul.f32 %v7160, %v7239
      %v7241 = vrcp.pop %v7210
      %v7242 = vmul.f32 %v7162, %v7241
      %7243 = vrot.lane.b32.xlu0 %v816, 40
      %v7244 = vpop.permute.xlu0 %7243
      %7245 = vrot.lane.b32.xlu0 %v821, 40
      %v7246 = vpop.permute.xlu0 %7245
      %v7250 = vsel %vm1623, %v7212, 0
      %v7253 = vsel %vm1623, %v7214, 0
      %7255 = vmatprep.subr.mxu0 0.0
      %7256 = vmatpush1.msra.mxu0 0.0
      %7257 = vmatprep.subr.mxu0 0.0
      %7258 = vmatpush1.msra.mxu0 0.0
      %7259 = vmatprep.subr.mxu0 0.0
      %7260 = vmatpush1.msra.mxu0 0.0
      %7261 = vmatprep.subr.mxu0 0.0
      %7262 = vmatpush1.msra.mxu0 0.0
      %7263 = vmatprep.subr.mxu0 0.0
      %7264 = vmatpush1.msra.mxu0 0.0
      %7265 = vmatprep.subr.mxu0 0.0
      %7266 = vmatpush1.msra.mxu0 0.0
      %7267 = vmatprep.subr.mxu0 0.0
      %7268 = vmatpush1.msra.mxu0 0.0
      %7269 = vmatprep.subr.mxu0 0.0
      %7270 = vmatpush1.msra.mxu0 0.0
      %7271 = vmatprep.subr.mxu0 0.0
      %7272 = vmatpush1.msra.mxu0 0.0
      %7273 = vmatprep.subr.mxu0 0.0
      %7274 = vmatpush1.msra.mxu0 0.0
      %7275 = vmatprep.subr.mxu0 0.0
      %7276 = vmatpush1.msra.mxu0 0.0
      %7277 = vmatprep.subr.mxu0 0.0
      %7278 = vmatpush1.msra.mxu0 0.0
      %7279 = vmatprep.subr.mxu0 0.0
      %7280 = vmatpush1.msra.mxu0 0.0
      %7281 = vmatprep.subr.mxu0 0.0
      %7282 = vmatpush1.msra.mxu0 0.0
      %7283 = vmatprep.subr.mxu0 0.0
      %7284 = vmatpush1.msra.mxu0 %v7246
      %7285 = vmatprep.subr.mxu0 0.0
      %7286 = vmatpush1.msra.mxu0 %v7244
      %7287 = vmatprep.subr.mxu0 0.0
      %7288 = vmatpush2.msra.mxu0 0.0
      %7289 = vmatprep.subr.mxu0 0.0
      %7290 = vmatpush2.msra.mxu0 0.0
      %7291 = vmatprep.subr.mxu0 0.0
      %7292 = vmatpush2.msra.mxu0 0.0
      %7293 = vmatprep.subr.mxu0 0.0
      %7294 = vmatpush2.msra.mxu0 0.0
      %7295 = vmatprep.subr.mxu0 0.0
      %7296 = vmatpush2.msra.mxu0 0.0
      %7297 = vmatprep.subr.mxu0 0.0
      %7298 = vmatpush2.msra.mxu0 0.0
      %7299 = vmatprep.subr.mxu0 0.0
      %7300 = vmatpush2.msra.mxu0 0.0
      %7301 = vmatprep.subr.mxu0 0.0
      %7302 = vmatpush2.msra.mxu0 0.0
      %7303 = vmatprep.subr.mxu0 0.0
      %7304 = vmatpush2.msra.mxu0 0.0
      %7305 = vmatprep.subr.mxu0 0.0
      %7306 = vmatpush2.msra.mxu0 0.0
      %7307 = vmatprep.subr.mxu0 0.0
      %7308 = vmatpush2.msra.mxu0 0.0
      %7309 = vmatprep.subr.mxu0 0.0
      %7310 = vmatpush2.msra.mxu0 0.0
      %7311 = vmatprep.subr.mxu0 0.0
      %7312 = vmatpush2.msra.mxu0 0.0
      %7313 = vmatprep.subr.mxu0 0.0
      %7314 = vmatpush2.msra.mxu0 0.0
      %7315 = vmatprep.subr.mxu0 0.0
      %7316 = vmatpush2.msra.mxu0 0.0
      %7317 = vmatprep.subr.mxu0 0.0
      %7318 = vmatpush2.msra.mxu0 0.0
      %7319 = vmatprep.mubr.f32.mxu0 0.0
      %7320 = vmatmul.mubr.f32.gmra.mxu0 %v7250
      %v7321 = vpop.f32.mrf.mxu0
      %v7322 = vadd.f32 0.0, %v7321
      %v7323 = vpop.f32.mrf.mxu0
      %7324 = vmatprep.mubr.f32.mxu0 0.0
      %7325 = vmatmul.mubr.f32.gmra.mxu0 %v7253
      %v7326 = vpop.f32.mrf.mxu0
      %v7327 = vadd.f32 0.0, %v7326
      %v7328 = vpop.f32.mrf.mxu0
      %7329 = vdwg.mxu0
      %7330 = vrot.lane.b32.xlu0 %v826, 40
      %v7331 = vpop.permute.xlu0 %7330
      %7332 = vrot.lane.b32.xlu0 %v831, 40
      %v7333 = vpop.permute.xlu0 %7332
      %v7337 = vsel %vm1623, %v7216, 0
      %v7340 = vsel %vm1623, %v7218, 0
      %7342 = vmatprep.subr.mxu0 0.0
      %7343 = vmatpush1.msra.mxu0 0.0
      %7344 = vmatprep.subr.mxu0 0.0
      %7345 = vmatpush1.msra.mxu0 0.0
      %7346 = vmatprep.subr.mxu0 0.0
      %7347 = vmatpush1.msra.mxu0 0.0
      %7348 = vmatprep.subr.mxu0 0.0
      %7349 = vmatpush1.msra.mxu0 0.0
      %7350 = vmatprep.subr.mxu0 0.0
      %7351 = vmatpush1.msra.mxu0 0.0
      %7352 = vmatprep.subr.mxu0 0.0
      %7353 = vmatpush1.msra.mxu0 0.0
      %7354 = vmatprep.subr.mxu0 0.0
      %7355 = vmatpush1.msra.mxu0 0.0
      %7356 = vmatprep.subr.mxu0 0.0
      %7357 = vmatpush1.msra.mxu0 0.0
      %7358 = vmatprep.subr.mxu0 0.0
      %7359 = vmatpush1.msra.mxu0 0.0
      %7360 = vmatprep.subr.mxu0 0.0
      %7361 = vmatpush1.msra.mxu0 0.0
      %7362 = vmatprep.subr.mxu0 0.0
      %7363 = vmatpush1.msra.mxu0 0.0
      %7364 = vmatprep.subr.mxu0 0.0
      %7365 = vmatpush1.msra.mxu0 0.0
      %7366 = vmatprep.subr.mxu0 0.0
      %7367 = vmatpush1.msra.mxu0 0.0
      %7368 = vmatprep.subr.mxu0 0.0
      %7369 = vmatpush1.msra.mxu0 0.0
      %7370 = vmatprep.subr.mxu0 0.0
      %7371 = vmatpush1.msra.mxu0 %v7333
      %7372 = vmatprep.subr.mxu0 0.0
      %7373 = vmatpush1.msra.mxu0 %v7331
      %7374 = vmatprep.subr.mxu0 0.0
      %7375 = vmatpush2.msra.mxu0 0.0
      %7376 = vmatprep.subr.mxu0 0.0
      %7377 = vmatpush2.msra.mxu0 0.0
      %7378 = vmatprep.subr.mxu0 0.0
      %7379 = vmatpush2.msra.mxu0 0.0
      %7380 = vmatprep.subr.mxu0 0.0
      %7381 = vmatpush2.msra.mxu0 0.0
      %7382 = vmatprep.subr.mxu0 0.0
      %7383 = vmatpush2.msra.mxu0 0.0
      %7384 = vmatprep.subr.mxu0 0.0
      %7385 = vmatpush2.msra.mxu0 0.0
      %7386 = vmatprep.subr.mxu0 0.0
      %7387 = vmatpush2.msra.mxu0 0.0
      %7388 = vmatprep.subr.mxu0 0.0
      %7389 = vmatpush2.msra.mxu0 0.0
      %7390 = vmatprep.subr.mxu0 0.0
      %7391 = vmatpush2.msra.mxu0 0.0
      %7392 = vmatprep.subr.mxu0 0.0
      %7393 = vmatpush2.msra.mxu0 0.0
      %7394 = vmatprep.subr.mxu0 0.0
      %7395 = vmatpush2.msra.mxu0 0.0
      %7396 = vmatprep.subr.mxu0 0.0
      %7397 = vmatpush2.msra.mxu0 0.0
      %7398 = vmatprep.subr.mxu0 0.0
      %7399 = vmatpush2.msra.mxu0 0.0
      %7400 = vmatprep.subr.mxu0 0.0
      %7401 = vmatpush2.msra.mxu0 0.0
      %7402 = vmatprep.subr.mxu0 0.0
      %7403 = vmatpush2.msra.mxu0 0.0
      %7404 = vmatprep.subr.mxu0 0.0
      %7405 = vmatpush2.msra.mxu0 0.0
      %7406 = vmatprep.mubr.f32.mxu0 0.0
      %7407 = vmatmul.mubr.f32.gmra.mxu0 %v7337
      %v7408 = vpop.f32.mrf.mxu0
      %v7409 = vadd.f32 0.0, %v7408
      %v7410 = vpop.f32.mrf.mxu0
      %7411 = vmatprep.mubr.f32.mxu0 0.0
      %7412 = vmatmul.mubr.f32.gmra.mxu0 %v7340
      %v7413 = vpop.f32.mrf.mxu0
      %v7414 = vadd.f32 0.0, %v7413
      %v7415 = vpop.f32.mrf.mxu0
      %7416 = vdwg.mxu0
      %7417 = vrot.lane.b32.xlu0 %v836, 40
      %v7418 = vpop.permute.xlu0 %7417
      %7419 = vrot.lane.b32.xlu0 %v841, 40
      %v7420 = vpop.permute.xlu0 %7419
      %v7424 = vsel %vm1623, %v7220, 0
      %v7427 = vsel %vm1623, %v7222, 0
      %7429 = vmatprep.subr.mxu0 0.0
      %7430 = vmatpush1.msra.mxu0 0.0
      %7431 = vmatprep.subr.mxu0 0.0
      %7432 = vmatpush1.msra.mxu0 0.0
      %7433 = vmatprep.subr.mxu0 0.0
      %7434 = vmatpush1.msra.mxu0 0.0
      %7435 = vmatprep.subr.mxu0 0.0
      %7436 = vmatpush1.msra.mxu0 0.0
      %7437 = vmatprep.subr.mxu0 0.0
      %7438 = vmatpush1.msra.mxu0 0.0
      %7439 = vmatprep.subr.mxu0 0.0
      %7440 = vmatpush1.msra.mxu0 0.0
      %7441 = vmatprep.subr.mxu0 0.0
      %7442 = vmatpush1.msra.mxu0 0.0
      %7443 = vmatprep.subr.mxu0 0.0
      %7444 = vmatpush1.msra.mxu0 0.0
      %7445 = vmatprep.subr.mxu0 0.0
      %7446 = vmatpush1.msra.mxu0 0.0
      %7447 = vmatprep.subr.mxu0 0.0
      %7448 = vmatpush1.msra.mxu0 0.0
      %7449 = vmatprep.subr.mxu0 0.0
      %7450 = vmatpush1.msra.mxu0 0.0
      %7451 = vmatprep.subr.mxu0 0.0
      %7452 = vmatpush1.msra.mxu0 0.0
      %7453 = vmatprep.subr.mxu0 0.0
      %7454 = vmatpush1.msra.mxu0 0.0
      %7455 = vmatprep.subr.mxu0 0.0
      %7456 = vmatpush1.msra.mxu0 0.0
      %7457 = vmatprep.subr.mxu0 0.0
      %7458 = vmatpush1.msra.mxu0 %v7420
      %7459 = vmatprep.subr.mxu0 0.0
      %7460 = vmatpush1.msra.mxu0 %v7418
      %7461 = vmatprep.subr.mxu0 0.0
      %7462 = vmatpush2.msra.mxu0 0.0
      %7463 = vmatprep.subr.mxu0 0.0
      %7464 = vmatpush2.msra.mxu0 0.0
      %7465 = vmatprep.subr.mxu0 0.0
      %7466 = vmatpush2.msra.mxu0 0.0
      %7467 = vmatprep.subr.mxu0 0.0
      %7468 = vmatpush2.msra.mxu0 0.0
      %7469 = vmatprep.subr.mxu0 0.0
      %7470 = vmatpush2.msra.mxu0 0.0
      %7471 = vmatprep.subr.mxu0 0.0
      %7472 = vmatpush2.msra.mxu0 0.0
      %7473 = vmatprep.subr.mxu0 0.0
      %7474 = vmatpush2.msra.mxu0 0.0
      %7475 = vmatprep.subr.mxu0 0.0
      %7476 = vmatpush2.msra.mxu0 0.0
      %7477 = vmatprep.subr.mxu0 0.0
      %7478 = vmatpush2.msra.mxu0 0.0
      %7479 = vmatprep.subr.mxu0 0.0
      %7480 = vmatpush2.msra.mxu0 0.0
      %7481 = vmatprep.subr.mxu0 0.0
      %7482 = vmatpush2.msra.mxu0 0.0
      %7483 = vmatprep.subr.mxu0 0.0
      %7484 = vmatpush2.msra.mxu0 0.0
      %7485 = vmatprep.subr.mxu0 0.0
      %7486 = vmatpush2.msra.mxu0 0.0
      %7487 = vmatprep.subr.mxu0 0.0
      %7488 = vmatpush2.msra.mxu0 0.0
      %7489 = vmatprep.subr.mxu0 0.0
      %7490 = vmatpush2.msra.mxu0 0.0
      %7491 = vmatprep.subr.mxu0 0.0
      %7492 = vmatpush2.msra.mxu0 0.0
      %7493 = vmatprep.mubr.f32.mxu0 0.0
      %7494 = vmatmul.mubr.f32.gmra.mxu0 %v7424
      %v7495 = vpop.f32.mrf.mxu0
      %v7496 = vadd.f32 0.0, %v7495
      %v7497 = vpop.f32.mrf.mxu0
      %7498 = vmatprep.mubr.f32.mxu0 0.0
      %7499 = vmatmul.mubr.f32.gmra.mxu0 %v7427
      %v7500 = vpop.f32.mrf.mxu0
      %v7501 = vadd.f32 0.0, %v7500
      %v7502 = vpop.f32.mrf.mxu0
      %7503 = vdwg.mxu0
      %7504 = vrot.lane.b32.xlu0 %v846, 40
      %v7505 = vpop.permute.xlu0 %7504
      %7506 = vrot.lane.b32.xlu0 %v851, 40
      %v7507 = vpop.permute.xlu0 %7506
      %v7511 = vsel %vm1623, %v7224, 0
      %v7514 = vsel %vm1623, %v7226, 0
      %7516 = vmatprep.subr.mxu0 0.0
      %7517 = vmatpush1.msra.mxu0 0.0
      %7518 = vmatprep.subr.mxu0 0.0
      %7519 = vmatpush1.msra.mxu0 0.0
      %7520 = vmatprep.subr.mxu0 0.0
      %7521 = vmatpush1.msra.mxu0 0.0
      %7522 = vmatprep.subr.mxu0 0.0
      %7523 = vmatpush1.msra.mxu0 0.0
      %7524 = vmatprep.subr.mxu0 0.0
      %7525 = vmatpush1.msra.mxu0 0.0
      %7526 = vmatprep.subr.mxu0 0.0
      %7527 = vmatpush1.msra.mxu0 0.0
      %7528 = vmatprep.subr.mxu0 0.0
      %7529 = vmatpush1.msra.mxu0 0.0
      %7530 = vmatprep.subr.mxu0 0.0
      %7531 = vmatpush1.msra.mxu0 0.0
      %7532 = vmatprep.subr.mxu0 0.0
      %7533 = vmatpush1.msra.mxu0 0.0
      %7534 = vmatprep.subr.mxu0 0.0
      %7535 = vmatpush1.msra.mxu0 0.0
      %7536 = vmatprep.subr.mxu0 0.0
      %7537 = vmatpush1.msra.mxu0 0.0
      %7538 = vmatprep.subr.mxu0 0.0
      %7539 = vmatpush1.msra.mxu0 0.0
      %7540 = vmatprep.subr.mxu0 0.0
      %7541 = vmatpush1.msra.mxu0 0.0
      %7542 = vmatprep.subr.mxu0 0.0
      %7543 = vmatpush1.msra.mxu0 0.0
      %7544 = vmatprep.subr.mxu0 0.0
      %7545 = vmatpush1.msra.mxu0 %v7507
      %7546 = vmatprep.subr.mxu0 0.0
      %7547 = vmatpush1.msra.mxu0 %v7505
      %7548 = vmatprep.subr.mxu0 0.0
      %7549 = vmatpush2.msra.mxu0 0.0
      %7550 = vmatprep.subr.mxu0 0.0
      %7551 = vmatpush2.msra.mxu0 0.0
      %7552 = vmatprep.subr.mxu0 0.0
      %7553 = vmatpush2.msra.mxu0 0.0
      %7554 = vmatprep.subr.mxu0 0.0
      %7555 = vmatpush2.msra.mxu0 0.0
      %7556 = vmatprep.subr.mxu0 0.0
      %7557 = vmatpush2.msra.mxu0 0.0
      %7558 = vmatprep.subr.mxu0 0.0
      %7559 = vmatpush2.msra.mxu0 0.0
      %7560 = vmatprep.subr.mxu0 0.0
      %7561 = vmatpush2.msra.mxu0 0.0
      %7562 = vmatprep.subr.mxu0 0.0
      %7563 = vmatpush2.msra.mxu0 0.0
      %7564 = vmatprep.subr.mxu0 0.0
      %7565 = vmatpush2.msra.mxu0 0.0
      %7566 = vmatprep.subr.mxu0 0.0
      %7567 = vmatpush2.msra.mxu0 0.0
      %7568 = vmatprep.subr.mxu0 0.0
      %7569 = vmatpush2.msra.mxu0 0.0
      %7570 = vmatprep.subr.mxu0 0.0
      %7571 = vmatpush2.msra.mxu0 0.0
      %7572 = vmatprep.subr.mxu0 0.0
      %7573 = vmatpush2.msra.mxu0 0.0
      %7574 = vmatprep.subr.mxu0 0.0
      %7575 = vmatpush2.msra.mxu0 0.0
      %7576 = vmatprep.subr.mxu0 0.0
      %7577 = vmatpush2.msra.mxu0 0.0
      %7578 = vmatprep.subr.mxu0 0.0
      %7579 = vmatpush2.msra.mxu0 0.0
      %7580 = vmatprep.mubr.f32.mxu0 0.0
      %7581 = vmatmul.mubr.f32.gmra.mxu0 %v7511
      %v7582 = vpop.f32.mrf.mxu0
      %v7583 = vadd.f32 0.0, %v7582
      %v7584 = vpop.f32.mrf.mxu0
      %7585 = vmatprep.mubr.f32.mxu0 0.0
      %7586 = vmatmul.mubr.f32.gmra.mxu0 %v7514
      %v7587 = vpop.f32.mrf.mxu0
      %v7588 = vadd.f32 0.0, %v7587
      %v7589 = vpop.f32.mrf.mxu0
      %7590 = vdwg.mxu0
      %7591 = vrot.lane.b32.xlu0 %v856, 40
      %v7592 = vpop.permute.xlu0 %7591
      %7593 = vrot.lane.b32.xlu0 %v861, 40
      %v7594 = vpop.permute.xlu0 %7593
      %v7598 = vsel %vm1623, %v7228, 0
      %v7601 = vsel %vm1623, %v7230, 0
      %7603 = vmatprep.subr.mxu0 0.0
      %7604 = vmatpush1.msra.mxu0 0.0
      %7605 = vmatprep.subr.mxu0 0.0
      %7606 = vmatpush1.msra.mxu0 0.0
      %7607 = vmatprep.subr.mxu0 0.0
      %7608 = vmatpush1.msra.mxu0 0.0
      %7609 = vmatprep.subr.mxu0 0.0
      %7610 = vmatpush1.msra.mxu0 0.0
      %7611 = vmatprep.subr.mxu0 0.0
      %7612 = vmatpush1.msra.mxu0 0.0
      %7613 = vmatprep.subr.mxu0 0.0
      %7614 = vmatpush1.msra.mxu0 0.0
      %7615 = vmatprep.subr.mxu0 0.0
      %7616 = vmatpush1.msra.mxu0 0.0
      %7617 = vmatprep.subr.mxu0 0.0
      %7618 = vmatpush1.msra.mxu0 0.0
      %7619 = vmatprep.subr.mxu0 0.0
      %7620 = vmatpush1.msra.mxu0 0.0
      %7621 = vmatprep.subr.mxu0 0.0
      %7622 = vmatpush1.msra.mxu0 0.0
      %7623 = vmatprep.subr.mxu0 0.0
      %7624 = vmatpush1.msra.mxu0 0.0
      %7625 = vmatprep.subr.mxu0 0.0
      %7626 = vmatpush1.msra.mxu0 0.0
      %7627 = vmatprep.subr.mxu0 0.0
      %7628 = vmatpush1.msra.mxu0 0.0
      %7629 = vmatprep.subr.mxu0 0.0
      %7630 = vmatpush1.msra.mxu0 0.0
      %7631 = vmatprep.subr.mxu0 0.0
      %7632 = vmatpush1.msra.mxu0 %v7594
      %7633 = vmatprep.subr.mxu0 0.0
      %7634 = vmatpush1.msra.mxu0 %v7592
      %7635 = vmatprep.subr.mxu0 0.0
      %7636 = vmatpush2.msra.mxu0 0.0
      %7637 = vmatprep.subr.mxu0 0.0
      %7638 = vmatpush2.msra.mxu0 0.0
      %7639 = vmatprep.subr.mxu0 0.0
      %7640 = vmatpush2.msra.mxu0 0.0
      %7641 = vmatprep.subr.mxu0 0.0
      %7642 = vmatpush2.msra.mxu0 0.0
      %7643 = vmatprep.subr.mxu0 0.0
      %7644 = vmatpush2.msra.mxu0 0.0
      %7645 = vmatprep.subr.mxu0 0.0
      %7646 = vmatpush2.msra.mxu0 0.0
      %7647 = vmatprep.subr.mxu0 0.0
      %7648 = vmatpush2.msra.mxu0 0.0
      %7649 = vmatprep.subr.mxu0 0.0
      %7650 = vmatpush2.msra.mxu0 0.0
      %7651 = vmatprep.subr.mxu0 0.0
      %7652 = vmatpush2.msra.mxu0 0.0
      %7653 = vmatprep.subr.mxu0 0.0
      %7654 = vmatpush2.msra.mxu0 0.0
      %7655 = vmatprep.subr.mxu0 0.0
      %7656 = vmatpush2.msra.mxu0 0.0
      %7657 = vmatprep.subr.mxu0 0.0
      %7658 = vmatpush2.msra.mxu0 0.0
      %7659 = vmatprep.subr.mxu0 0.0
      %7660 = vmatpush2.msra.mxu0 0.0
      %7661 = vmatprep.subr.mxu0 0.0
      %7662 = vmatpush2.msra.mxu0 0.0
      %7663 = vmatprep.subr.mxu0 0.0
      %7664 = vmatpush2.msra.mxu0 0.0
      %7665 = vmatprep.subr.mxu0 0.0
      %7666 = vmatpush2.msra.mxu0 0.0
      %7667 = vmatprep.mubr.f32.mxu0 0.0
      %7668 = vmatmul.mubr.f32.gmra.mxu0 %v7598
      %v7669 = vpop.f32.mrf.mxu0
      %v7670 = vadd.f32 0.0, %v7669
      %v7671 = vpop.f32.mrf.mxu0
      %7672 = vmatprep.mubr.f32.mxu0 0.0
      %7673 = vmatmul.mubr.f32.gmra.mxu0 %v7601
      %v7674 = vpop.f32.mrf.mxu0
      %v7675 = vadd.f32 0.0, %v7674
      %v7676 = vpop.f32.mrf.mxu0
      %7677 = vdwg.mxu0
      %7678 = vrot.lane.b32.xlu0 %v866, 40
      %v7679 = vpop.permute.xlu0 %7678
      %7680 = vrot.lane.b32.xlu0 %v871, 40
      %v7681 = vpop.permute.xlu0 %7680
      %v7685 = vsel %vm1623, %v7232, 0
      %v7688 = vsel %vm1623, %v7234, 0
      %7690 = vmatprep.subr.mxu0 0.0
      %7691 = vmatpush1.msra.mxu0 0.0
      %7692 = vmatprep.subr.mxu0 0.0
      %7693 = vmatpush1.msra.mxu0 0.0
      %7694 = vmatprep.subr.mxu0 0.0
      %7695 = vmatpush1.msra.mxu0 0.0
      %7696 = vmatprep.subr.mxu0 0.0
      %7697 = vmatpush1.msra.mxu0 0.0
      %7698 = vmatprep.subr.mxu0 0.0
      %7699 = vmatpush1.msra.mxu0 0.0
      %7700 = vmatprep.subr.mxu0 0.0
      %7701 = vmatpush1.msra.mxu0 0.0
      %7702 = vmatprep.subr.mxu0 0.0
      %7703 = vmatpush1.msra.mxu0 0.0
      %7704 = vmatprep.subr.mxu0 0.0
      %7705 = vmatpush1.msra.mxu0 0.0
      %7706 = vmatprep.subr.mxu0 0.0
      %7707 = vmatpush1.msra.mxu0 0.0
      %7708 = vmatprep.subr.mxu0 0.0
      %7709 = vmatpush1.msra.mxu0 0.0
      %7710 = vmatprep.subr.mxu0 0.0
      %7711 = vmatpush1.msra.mxu0 0.0
      %7712 = vmatprep.subr.mxu0 0.0
      %7713 = vmatpush1.msra.mxu0 0.0
      %7714 = vmatprep.subr.mxu0 0.0
      %7715 = vmatpush1.msra.mxu0 0.0
      %7716 = vmatprep.subr.mxu0 0.0
      %7717 = vmatpush1.msra.mxu0 0.0
      %7718 = vmatprep.subr.mxu0 0.0
      %7719 = vmatpush1.msra.mxu0 %v7681
      %7720 = vmatprep.subr.mxu0 0.0
      %7721 = vmatpush1.msra.mxu0 %v7679
      %7722 = vmatprep.subr.mxu0 0.0
      %7723 = vmatpush2.msra.mxu0 0.0
      %7724 = vmatprep.subr.mxu0 0.0
      %7725 = vmatpush2.msra.mxu0 0.0
      %7726 = vmatprep.subr.mxu0 0.0
      %7727 = vmatpush2.msra.mxu0 0.0
      %7728 = vmatprep.subr.mxu0 0.0
      %7729 = vmatpush2.msra.mxu0 0.0
      %7730 = vmatprep.subr.mxu0 0.0
      %7731 = vmatpush2.msra.mxu0 0.0
      %7732 = vmatprep.subr.mxu0 0.0
      %7733 = vmatpush2.msra.mxu0 0.0
      %7734 = vmatprep.subr.mxu0 0.0
      %7735 = vmatpush2.msra.mxu0 0.0
      %7736 = vmatprep.subr.mxu0 0.0
      %7737 = vmatpush2.msra.mxu0 0.0
      %7738 = vmatprep.subr.mxu0 0.0
      %7739 = vmatpush2.msra.mxu0 0.0
      %7740 = vmatprep.subr.mxu0 0.0
      %7741 = vmatpush2.msra.mxu0 0.0
      %7742 = vmatprep.subr.mxu0 0.0
      %7743 = vmatpush2.msra.mxu0 0.0
      %7744 = vmatprep.subr.mxu0 0.0
      %7745 = vmatpush2.msra.mxu0 0.0
      %7746 = vmatprep.subr.mxu0 0.0
      %7747 = vmatpush2.msra.mxu0 0.0
      %7748 = vmatprep.subr.mxu0 0.0
      %7749 = vmatpush2.msra.mxu0 0.0
      %7750 = vmatprep.subr.mxu0 0.0
      %7751 = vmatpush2.msra.mxu0 0.0
      %7752 = vmatprep.subr.mxu0 0.0
      %7753 = vmatpush2.msra.mxu0 0.0
      %7754 = vmatprep.mubr.f32.mxu0 0.0
      %7755 = vmatmul.mubr.f32.gmra.mxu0 %v7685
      %v7756 = vpop.f32.mrf.mxu0
      %v7757 = vadd.f32 0.0, %v7756
      %v7758 = vpop.f32.mrf.mxu0
      %7759 = vmatprep.mubr.f32.mxu0 0.0
      %7760 = vmatmul.mubr.f32.gmra.mxu0 %v7688
      %v7761 = vpop.f32.mrf.mxu0
      %v7762 = vadd.f32 0.0, %v7761
      %v7763 = vpop.f32.mrf.mxu0
      %7764 = vdwg.mxu0
      %7765 = vrot.lane.b32.xlu0 %v876, 40
      %v7766 = vpop.permute.xlu0 %7765
      %7767 = vrot.lane.b32.xlu0 %v881, 40
      %v7768 = vpop.permute.xlu0 %7767
      %v7772 = vsel %vm1623, %v7236, 0
      %v7775 = vsel %vm1623, %v7238, 0
      %7777 = vmatprep.subr.mxu0 0.0
      %7778 = vmatpush1.msra.mxu0 0.0
      %7779 = vmatprep.subr.mxu0 0.0
      %7780 = vmatpush1.msra.mxu0 0.0
      %7781 = vmatprep.subr.mxu0 0.0
      %7782 = vmatpush1.msra.mxu0 0.0
      %7783 = vmatprep.subr.mxu0 0.0
      %7784 = vmatpush1.msra.mxu0 0.0
      %7785 = vmatprep.subr.mxu0 0.0
      %7786 = vmatpush1.msra.mxu0 0.0
      %7787 = vmatprep.subr.mxu0 0.0
      %7788 = vmatpush1.msra.mxu0 0.0
      %7789 = vmatprep.subr.mxu0 0.0
      %7790 = vmatpush1.msra.mxu0 0.0
      %7791 = vmatprep.subr.mxu0 0.0
      %7792 = vmatpush1.msra.mxu0 0.0
      %7793 = vmatprep.subr.mxu0 0.0
      %7794 = vmatpush1.msra.mxu0 0.0
      %7795 = vmatprep.subr.mxu0 0.0
      %7796 = vmatpush1.msra.mxu0 0.0
      %7797 = vmatprep.subr.mxu0 0.0
      %7798 = vmatpush1.msra.mxu0 0.0
      %7799 = vmatprep.subr.mxu0 0.0
      %7800 = vmatpush1.msra.mxu0 0.0
      %7801 = vmatprep.subr.mxu0 0.0
      %7802 = vmatpush1.msra.mxu0 0.0
      %7803 = vmatprep.subr.mxu0 0.0
      %7804 = vmatpush1.msra.mxu0 0.0
      %7805 = vmatprep.subr.mxu0 0.0
      %7806 = vmatpush1.msra.mxu0 %v7768
      %7807 = vmatprep.subr.mxu0 0.0
      %7808 = vmatpush1.msra.mxu0 %v7766
      %7809 = vmatprep.subr.mxu0 0.0
      %7810 = vmatpush2.msra.mxu0 0.0
      %7811 = vmatprep.subr.mxu0 0.0
      %7812 = vmatpush2.msra.mxu0 0.0
      %7813 = vmatprep.subr.mxu0 0.0
      %7814 = vmatpush2.msra.mxu0 0.0
      %7815 = vmatprep.subr.mxu0 0.0
      %7816 = vmatpush2.msra.mxu0 0.0
      %7817 = vmatprep.subr.mxu0 0.0
      %7818 = vmatpush2.msra.mxu0 0.0
      %7819 = vmatprep.subr.mxu0 0.0
      %7820 = vmatpush2.msra.mxu0 0.0
      %7821 = vmatprep.subr.mxu0 0.0
      %7822 = vmatpush2.msra.mxu0 0.0
      %7823 = vmatprep.subr.mxu0 0.0
      %7824 = vmatpush2.msra.mxu0 0.0
      %7825 = vmatprep.subr.mxu0 0.0
      %7826 = vmatpush2.msra.mxu0 0.0
      %7827 = vmatprep.subr.mxu0 0.0
      %7828 = vmatpush2.msra.mxu0 0.0
      %7829 = vmatprep.subr.mxu0 0.0
      %7830 = vmatpush2.msra.mxu0 0.0
      %7831 = vmatprep.subr.mxu0 0.0
      %7832 = vmatpush2.msra.mxu0 0.0
      %7833 = vmatprep.subr.mxu0 0.0
      %7834 = vmatpush2.msra.mxu0 0.0
      %7835 = vmatprep.subr.mxu0 0.0
      %7836 = vmatpush2.msra.mxu0 0.0
      %7837 = vmatprep.subr.mxu0 0.0
      %7838 = vmatpush2.msra.mxu0 0.0
      %7839 = vmatprep.subr.mxu0 0.0
      %7840 = vmatpush2.msra.mxu0 0.0
      %7841 = vmatprep.mubr.f32.mxu0 0.0
      %7842 = vmatmul.mubr.f32.gmra.mxu0 %v7772
      %v7843 = vpop.f32.mrf.mxu0
      %v7844 = vadd.f32 0.0, %v7843
      %v7845 = vpop.f32.mrf.mxu0
      %7846 = vmatprep.mubr.f32.mxu0 0.0
      %7847 = vmatmul.mubr.f32.gmra.mxu0 %v7775
      %v7848 = vpop.f32.mrf.mxu0
      %v7849 = vadd.f32 0.0, %v7848
      %v7850 = vpop.f32.mrf.mxu0
      %7851 = vdwg.mxu0
      %7852 = vrot.lane.b32.xlu0 %v886, 40
      %v7853 = vpop.permute.xlu0 %7852
      %7854 = vrot.lane.b32.xlu0 %v891, 40
      %v7855 = vpop.permute.xlu0 %7854
      %v7859 = vsel %vm1623, %v7240, 0
      %v7862 = vsel %vm1623, %v7242, 0
      %7864 = vmatprep.subr.mxu0 0.0
      %7865 = vmatpush1.msra.mxu0 0.0
      %7866 = vmatprep.subr.mxu0 0.0
      %7867 = vmatpush1.msra.mxu0 0.0
      %7868 = vmatprep.subr.mxu0 0.0
      %7869 = vmatpush1.msra.mxu0 0.0
      %7870 = vmatprep.subr.mxu0 0.0
      %7871 = vmatpush1.msra.mxu0 0.0
      %7872 = vmatprep.subr.mxu0 0.0
      %7873 = vmatpush1.msra.mxu0 0.0
      %7874 = vmatprep.subr.mxu0 0.0
      %7875 = vmatpush1.msra.mxu0 0.0
      %7876 = vmatprep.subr.mxu0 0.0
      %7877 = vmatpush1.msra.mxu0 0.0
      %7878 = vmatprep.subr.mxu0 0.0
      %7879 = vmatpush1.msra.mxu0 0.0
      %7880 = vmatprep.subr.mxu0 0.0
      %7881 = vmatpush1.msra.mxu0 0.0
      %7882 = vmatprep.subr.mxu0 0.0
      %7883 = vmatpush1.msra.mxu0 0.0
      %7884 = vmatprep.subr.mxu0 0.0
      %7885 = vmatpush1.msra.mxu0 0.0
      %7886 = vmatprep.subr.mxu0 0.0
      %7887 = vmatpush1.msra.mxu0 0.0
      %7888 = vmatprep.subr.mxu0 0.0
      %7889 = vmatpush1.msra.mxu0 0.0
      %7890 = vmatprep.subr.mxu0 0.0
      %7891 = vmatpush1.msra.mxu0 0.0
      %7892 = vmatprep.subr.mxu0 0.0
      %7893 = vmatpush1.msra.mxu0 %v7855
      %7894 = vmatprep.subr.mxu0 0.0
      %7895 = vmatpush1.msra.mxu0 %v7853
      %7896 = vmatprep.subr.mxu0 0.0
      %7897 = vmatpush2.msra.mxu0 0.0
      %7898 = vmatprep.subr.mxu0 0.0
      %7899 = vmatpush2.msra.mxu0 0.0
      %7900 = vmatprep.subr.mxu0 0.0
      %7901 = vmatpush2.msra.mxu0 0.0
      %7902 = vmatprep.subr.mxu0 0.0
      %7903 = vmatpush2.msra.mxu0 0.0
      %7904 = vmatprep.subr.mxu0 0.0
      %7905 = vmatpush2.msra.mxu0 0.0
      %7906 = vmatprep.subr.mxu0 0.0
      %7907 = vmatpush2.msra.mxu0 0.0
      %7908 = vmatprep.subr.mxu0 0.0
      %7909 = vmatpush2.msra.mxu0 0.0
      %7910 = vmatprep.subr.mxu0 0.0
      %7911 = vmatpush2.msra.mxu0 0.0
      %7912 = vmatprep.subr.mxu0 0.0
      %7913 = vmatpush2.msra.mxu0 0.0
      %7914 = vmatprep.subr.mxu0 0.0
      %7915 = vmatpush2.msra.mxu0 0.0
      %7916 = vmatprep.subr.mxu0 0.0
      %7917 = vmatpush2.msra.mxu0 0.0
      %7918 = vmatprep.subr.mxu0 0.0
      %7919 = vmatpush2.msra.mxu0 0.0
      %7920 = vmatprep.subr.mxu0 0.0
      %7921 = vmatpush2.msra.mxu0 0.0
      %7922 = vmatprep.subr.mxu0 0.0
      %7923 = vmatpush2.msra.mxu0 0.0
      %7924 = vmatprep.subr.mxu0 0.0
      %7925 = vmatpush2.msra.mxu0 0.0
      %7926 = vmatprep.subr.mxu0 0.0
      %7927 = vmatpush2.msra.mxu0 0.0
      %7928 = vmatprep.mubr.f32.mxu0 0.0
      %7929 = vmatmul.mubr.f32.gmra.mxu0 %v7859
      %v7930 = vpop.f32.mrf.mxu0
      %v7931 = vadd.f32 0.0, %v7930
      %v7932 = vpop.f32.mrf.mxu0
      %7933 = vmatprep.mubr.f32.mxu0 0.0
      %7934 = vmatmul.mubr.f32.gmra.mxu0 %v7862
      %v7935 = vpop.f32.mrf.mxu0
      %v7936 = vadd.f32 0.0, %v7935
      %v7937 = vpop.f32.mrf.mxu0
      %7938 = vdwg.mxu0
      %v7940 = vsel %vm900, %v7322, 0
      %v7943 = vsel %vm900, %v7327, 0
      %v7946 = vsel %vm900, %v7409, 0
      %v7949 = vsel %vm900, %v7414, 0
      %v7952 = vsel %vm900, %v7496, 0
      %v7955 = vsel %vm900, %v7501, 0
      %v7958 = vsel %vm900, %v7583, 0
      %v7961 = vsel %vm900, %v7588, 0
      %v7964 = vsel %vm900, %v7670, 0
      %v7967 = vsel %vm900, %v7675, 0
      %v7970 = vsel %vm900, %v7757, 0
      %v7973 = vsel %vm900, %v7762, 0
      %v7976 = vsel %vm900, %v7844, 0
      %v7979 = vsel %vm900, %v7849, 0
      %v7982 = vsel %vm900, %v7931, 0
      %v7985 = vsel %vm900, %v7936, 0
      %7987 = vmatprep.subr.mxu0 0.0
      %7988 = vmatpush1.msra.mxu0 0.0
      %7989 = vmatprep.subr.mxu0 0.0
      %7990 = vmatpush1.msra.mxu0 0.0
      %7991 = vmatprep.subr.mxu0 0.0
      %7992 = vmatpush1.msra.mxu0 0.0
      %7993 = vmatprep.subr.mxu0 0.0
      %7994 = vmatpush1.msra.mxu0 0.0
      %7995 = vmatprep.subr.mxu0 0.0
      %7996 = vmatpush1.msra.mxu0 0.0
      %7997 = vmatprep.subr.mxu0 0.0
      %7998 = vmatpush1.msra.mxu0 0.0
      %7999 = vmatprep.subr.mxu0 0.0
      %8000 = vmatpush1.msra.mxu0 0.0
      %8001 = vmatprep.subr.mxu0 0.0
      %8002 = vmatpush1.msra.mxu0 0.0
      %8003 = vmatprep.subr.mxu0 0.0
      %8004 = vmatpush1.msra.mxu0 0.0
      %8005 = vmatprep.subr.mxu0 0.0
      %8006 = vmatpush1.msra.mxu0 0.0
      %8007 = vmatprep.subr.mxu0 0.0
      %8008 = vmatpush1.msra.mxu0 0.0
      %8009 = vmatprep.subr.mxu0 0.0
      %8010 = vmatpush1.msra.mxu0 0.0
      %8011 = vmatprep.subr.mxu0 0.0
      %8012 = vmatpush1.msra.mxu0 0.0
      %8013 = vmatprep.subr.mxu0 0.0
      %8014 = vmatpush1.msra.mxu0 0.0
      %8015 = vmatprep.subr.mxu0 0.0
      %8016 = vmatpush1.msra.mxu0 0.0
      %8017 = vmatprep.subr.mxu0 0.0
      %8018 = vmatpush1.msra.mxu0 %v248
      %8019 = vmatprep.subr.mxu0 0.0
      %8020 = vmatpush2.msra.mxu0 0.0
      %8021 = vmatprep.subr.mxu0 0.0
      %8022 = vmatpush2.msra.mxu0 0.0
      %8023 = vmatprep.subr.mxu0 0.0
      %8024 = vmatpush2.msra.mxu0 0.0
      %8025 = vmatprep.subr.mxu0 0.0
      %8026 = vmatpush2.msra.mxu0 0.0
      %8027 = vmatprep.subr.mxu0 0.0
      %8028 = vmatpush2.msra.mxu0 0.0
      %8029 = vmatprep.subr.mxu0 0.0
      %8030 = vmatpush2.msra.mxu0 0.0
      %8031 = vmatprep.subr.mxu0 0.0
      %8032 = vmatpush2.msra.mxu0 0.0
      %8033 = vmatprep.subr.mxu0 0.0
      %8034 = vmatpush2.msra.mxu0 0.0
      %8035 = vmatprep.subr.mxu0 0.0
      %8036 = vmatpush2.msra.mxu0 0.0
      %8037 = vmatprep.subr.mxu0 0.0
      %8038 = vmatpush2.msra.mxu0 0.0
      %8039 = vmatprep.subr.mxu0 0.0
      %8040 = vmatpush2.msra.mxu0 0.0
      %8041 = vmatprep.subr.mxu0 0.0
      %8042 = vmatpush2.msra.mxu0 0.0
      %8043 = vmatprep.subr.mxu0 0.0
      %8044 = vmatpush2.msra.mxu0 0.0
      %8045 = vmatprep.subr.mxu0 0.0
      %8046 = vmatpush2.msra.mxu0 0.0
      %8047 = vmatprep.subr.mxu0 0.0
      %8048 = vmatpush2.msra.mxu0 0.0
      %8049 = vmatprep.subr.mxu0 0.0
      %8050 = vmatpush2.msra.mxu0 0.0
      %8051 = vmatprep.mubr.f32.mxu0 0.0
      %8052 = vmatmul.mubr.f32.gmra.mxu0 %v7940
      %v8053 = vpop.f32.mrf.mxu0
      %v8054 = vadd.f32 0.0, %v8053
      %v8055 = vpop.f32.mrf.mxu0
      %8056 = vmatprep.mubr.f32.mxu0 0.0
      %8057 = vmatmul.mubr.f32.gmra.mxu0 %v7943
      %v8058 = vpop.f32.mrf.mxu0
      %v8059 = vadd.f32 0.0, %v8058
      %v8060 = vpop.f32.mrf.mxu0
      %8061 = vmatprep.mubr.f32.mxu0 0.0
      %8062 = vmatmul.mubr.f32.gmra.mxu0 %v7946
      %v8063 = vpop.f32.mrf.mxu0
      %v8064 = vadd.f32 0.0, %v8063
      %v8065 = vpop.f32.mrf.mxu0
      %8066 = vmatprep.mubr.f32.mxu0 0.0
      %8067 = vmatmul.mubr.f32.gmra.mxu0 %v7949
      %v8068 = vpop.f32.mrf.mxu0
      %v8069 = vadd.f32 0.0, %v8068
      %v8070 = vpop.f32.mrf.mxu0
      %8071 = vmatprep.mubr.f32.mxu0 0.0
      %8072 = vmatmul.mubr.f32.gmra.mxu0 %v7952
      %v8073 = vpop.f32.mrf.mxu0
      %v8074 = vadd.f32 0.0, %v8073
      %v8075 = vpop.f32.mrf.mxu0
      %8076 = vmatprep.mubr.f32.mxu0 0.0
      %8077 = vmatmul.mubr.f32.gmra.mxu0 %v7955
      %v8078 = vpop.f32.mrf.mxu0
      %v8079 = vadd.f32 0.0, %v8078
      %v8080 = vpop.f32.mrf.mxu0
      %8081 = vmatprep.mubr.f32.mxu0 0.0
      %8082 = vmatmul.mubr.f32.gmra.mxu0 %v7958
      %v8083 = vpop.f32.mrf.mxu0
      %v8084 = vadd.f32 0.0, %v8083
      %v8085 = vpop.f32.mrf.mxu0
      %8086 = vmatprep.mubr.f32.mxu0 0.0
      %8087 = vmatmul.mubr.f32.gmra.mxu0 %v7961
      %v8088 = vpop.f32.mrf.mxu0
      %v8089 = vadd.f32 0.0, %v8088
      %v8090 = vpop.f32.mrf.mxu0
      %8091 = vmatprep.mubr.f32.mxu0 0.0
      %8092 = vmatmul.mubr.f32.gmra.mxu0 %v7964
      %v8093 = vpop.f32.mrf.mxu0
      %v8094 = vadd.f32 0.0, %v8093
      %v8095 = vpop.f32.mrf.mxu0
      %8096 = vmatprep.mubr.f32.mxu0 0.0
      %8097 = vmatmul.mubr.f32.gmra.mxu0 %v7967
      %v8098 = vpop.f32.mrf.mxu0
      %v8099 = vadd.f32 0.0, %v8098
      %v8100 = vpop.f32.mrf.mxu0
      %8101 = vmatprep.mubr.f32.mxu0 0.0
      %8102 = vmatmul.mubr.f32.gmra.mxu0 %v7970
      %v8103 = vpop.f32.mrf.mxu0
      %v8104 = vadd.f32 0.0, %v8103
      %v8105 = vpop.f32.mrf.mxu0
      %8106 = vmatprep.mubr.f32.mxu0 0.0
      %8107 = vmatmul.mubr.f32.gmra.mxu0 %v7973
      %v8108 = vpop.f32.mrf.mxu0
      %v8109 = vadd.f32 0.0, %v8108
      %v8110 = vpop.f32.mrf.mxu0
      %8111 = vmatprep.mubr.f32.mxu0 0.0
      %8112 = vmatmul.mubr.f32.gmra.mxu0 %v7976
      %v8113 = vpop.f32.mrf.mxu0
      %v8114 = vadd.f32 0.0, %v8113
      %v8115 = vpop.f32.mrf.mxu0
      %8116 = vmatprep.mubr.f32.mxu0 0.0
      %8117 = vmatmul.mubr.f32.gmra.mxu0 %v7979
      %v8118 = vpop.f32.mrf.mxu0
      %v8119 = vadd.f32 0.0, %v8118
      %v8120 = vpop.f32.mrf.mxu0
      %8121 = vmatprep.mubr.f32.mxu0 0.0
      %8122 = vmatmul.mubr.f32.gmra.mxu0 %v7982
      %v8123 = vpop.f32.mrf.mxu0
      %v8124 = vadd.f32 0.0, %v8123
      %v8125 = vpop.f32.mrf.mxu0
      %8126 = vmatprep.mubr.f32.mxu0 0.0
      %8127 = vmatmul.mubr.f32.gmra.mxu0 %v7985
      %v8128 = vpop.f32.mrf.mxu0
      %v8129 = vadd.f32 0.0, %v8128
      %v8130 = vpop.f32.mrf.mxu0
      %8131 = vdwg.mxu0
      %v8132 = vadd.f32 %v6307, %v8054
      %v8133 = vadd.f32 %v6308, %v8059
      %v8134 = vadd.f32 %v6309, %v8064
      %v8135 = vadd.f32 %v6310, %v8069
      %v8136 = vadd.f32 %v6311, %v8074
      %v8137 = vadd.f32 %v6312, %v8079
      %v8138 = vadd.f32 %v6313, %v8084
      %v8139 = vadd.f32 %v6314, %v8089
      %v8140 = vadd.f32 %v6315, %v8094
      %v8141 = vadd.f32 %v6316, %v8099
      %v8142 = vadd.f32 %v6317, %v8104
      %v8143 = vadd.f32 %v6318, %v8109
      %v8144 = vadd.f32 %v6319, %v8114
      %v8145 = vadd.f32 %v6320, %v8119
      %v8146 = vadd.f32 %v6321, %v8124
      %v8147 = vadd.f32 %v6322, %v8129
      %v8148 = vlaneseq
      %v8149 = vshrl.u32 %v8148, 7
      %v8150 = vsub.s32 0, %v8149
      %v8151 = vrot.slane %v268, %v8150
      %v8152 = vadd.f32 %v8132, %v8151
      %v8153 = vadd.f32 %v8133, %v8151
      %v8154 = vadd.f32 %v8134, %v8151
      %v8155 = vadd.f32 %v8135, %v8151
      %v8156 = vadd.f32 %v8136, %v8151
      %v8157 = vadd.f32 %v8137, %v8151
      %v8158 = vadd.f32 %v8138, %v8151
      %v8159 = vadd.f32 %v8139, %v8151
      %v8160 = vadd.f32 %v8140, %v8151
      %v8161 = vadd.f32 %v8141, %v8151
      %v8162 = vadd.f32 %v8142, %v8151
      %v8163 = vadd.f32 %v8143, %v8151
      %v8164 = vadd.f32 %v8144, %v8151
      %v8165 = vadd.f32 %v8145, %v8151
      %v8166 = vadd.f32 %v8146, %v8151
      %v8167 = vadd.f32 %v8147, %v8151
      %v8168 = vadd.f32 %v680, %v8152
      %v8169 = vadd.f32 %v681, %v8153
      %v8170 = vadd.f32 %v682, %v8154
      %v8171 = vadd.f32 %v683, %v8155
      %v8172 = vadd.f32 %v684, %v8156
      %v8173 = vadd.f32 %v685, %v8157
      %v8174 = vadd.f32 %v686, %v8158
      %v8175 = vadd.f32 %v687, %v8159
      %v8176 = vadd.f32 %v688, %v8160
      %v8177 = vadd.f32 %v689, %v8161
      %v8178 = vadd.f32 %v690, %v8162
      %v8179 = vadd.f32 %v691, %v8163
      %v8180 = vadd.f32 %v692, %v8164
      %v8181 = vadd.f32 %v693, %v8165
      %v8182 = vadd.f32 %v694, %v8166
      %v8183 = vadd.f32 %v695, %v8167
      %v8184 = vsel %vm700, %v8168, 0.0
      %8185 = vadd.xlane.f32.xlu0 %v8184
      %v8186 = vpop.xlane.xlu0 %8185
      %v8187 = vsel %vm700, %v8169, 0.0
      %8188 = vadd.xlane.f32.xlu0 %v8187
      %v8189 = vpop.xlane.xlu0 %8188
      %v8190 = vsel %vm700, %v8170, 0.0
      %8191 = vadd.xlane.f32.xlu0 %v8190
      %v8192 = vpop.xlane.xlu0 %8191
      %v8193 = vsel %vm700, %v8171, 0.0
      %8194 = vadd.xlane.f32.xlu0 %v8193
      %v8195 = vpop.xlane.xlu0 %8194
      %v8196 = vsel %vm700, %v8172, 0.0
      %8197 = vadd.xlane.f32.xlu0 %v8196
      %v8198 = vpop.xlane.xlu0 %8197
      %v8199 = vsel %vm700, %v8173, 0.0
      %8200 = vadd.xlane.f32.xlu0 %v8199
      %v8201 = vpop.xlane.xlu0 %8200
      %v8202 = vsel %vm700, %v8174, 0.0
      %8203 = vadd.xlane.f32.xlu0 %v8202
      %v8204 = vpop.xlane.xlu0 %8203
      %v8205 = vsel %vm700, %v8175, 0.0
      %8206 = vadd.xlane.f32.xlu0 %v8205
      %v8207 = vpop.xlane.xlu0 %8206
      %v8208 = vsel %vm700, %v8176, 0.0
      %8209 = vadd.xlane.f32.xlu0 %v8208
      %v8210 = vpop.xlane.xlu0 %8209
      %v8211 = vsel %vm700, %v8177, 0.0
      %8212 = vadd.xlane.f32.xlu0 %v8211
      %v8213 = vpop.xlane.xlu0 %8212
      %v8214 = vsel %vm700, %v8178, 0.0
      %8215 = vadd.xlane.f32.xlu0 %v8214
      %v8216 = vpop.xlane.xlu0 %8215
      %v8217 = vsel %vm700, %v8179, 0.0
      %8218 = vadd.xlane.f32.xlu0 %v8217
      %v8219 = vpop.xlane.xlu0 %8218
      %v8220 = vsel %vm700, %v8180, 0.0
      %8221 = vadd.xlane.f32.xlu0 %v8220
      %v8222 = vpop.xlane.xlu0 %8221
      %v8223 = vsel %vm700, %v8181, 0.0
      %8224 = vadd.xlane.f32.xlu0 %v8223
      %v8225 = vpop.xlane.xlu0 %8224
      %v8226 = vsel %vm700, %v8182, 0.0
      %8227 = vadd.xlane.f32.xlu0 %v8226
      %v8228 = vpop.xlane.xlu0 %8227
      %v8229 = vsel %vm700, %v8183, 0.0
      %8230 = vadd.xlane.f32.xlu0 %v8229
      %v8231 = vpop.xlane.xlu0 %8230
      %v8232 = vrcp.pop 32.0
      %v8233 = vmul.f32 %v8186, %v8232
      %v8234 = vmul.f32 %v8189, %v8232
      %v8235 = vmul.f32 %v8192, %v8232
      %v8236 = vmul.f32 %v8195, %v8232
      %v8237 = vmul.f32 %v8198, %v8232
      %v8238 = vmul.f32 %v8201, %v8232
      %v8239 = vmul.f32 %v8204, %v8232
      %v8240 = vmul.f32 %v8207, %v8232
      %v8241 = vmul.f32 %v8210, %v8232
      %v8242 = vmul.f32 %v8213, %v8232
      %v8243 = vmul.f32 %v8216, %v8232
      %v8244 = vmul.f32 %v8219, %v8232
      %v8245 = vmul.f32 %v8222, %v8232
      %v8246 = vmul.f32 %v8225, %v8232
      %v8247 = vmul.f32 %v8228, %v8232
      %v8248 = vmul.f32 %v8231, %v8232
      %v8249 = vsub.f32 %v8168, %v8233
      %v8250 = vsub.f32 %v8169, %v8234
      %v8251 = vsub.f32 %v8170, %v8235
      %v8252 = vsub.f32 %v8171, %v8236
      %v8253 = vsub.f32 %v8172, %v8237
      %v8254 = vsub.f32 %v8173, %v8238
      %v8255 = vsub.f32 %v8174, %v8239
      %v8256 = vsub.f32 %v8175, %v8240
      %v8257 = vsub.f32 %v8176, %v8241
      %v8258 = vsub.f32 %v8177, %v8242
      %v8259 = vsub.f32 %v8178, %v8243
      %v8260 = vsub.f32 %v8179, %v8244
      %v8261 = vsub.f32 %v8180, %v8245
      %v8262 = vsub.f32 %v8181, %v8246
      %v8263 = vsub.f32 %v8182, %v8247
      %v8264 = vsub.f32 %v8183, %v8248
      %v8265 = vmul.f32 %v8249, %v8249
      %v8266 = vmul.f32 %v8250, %v8250
      %v8267 = vmul.f32 %v8251, %v8251
      %v8268 = vmul.f32 %v8252, %v8252
      %v8269 = vmul.f32 %v8253, %v8253
      %v8270 = vmul.f32 %v8254, %v8254
      %v8271 = vmul.f32 %v8255, %v8255
      %v8272 = vmul.f32 %v8256, %v8256
      %v8273 = vmul.f32 %v8257, %v8257
      %v8274 = vmul.f32 %v8258, %v8258
      %v8275 = vmul.f32 %v8259, %v8259
      %v8276 = vmul.f32 %v8260, %v8260
      %v8277 = vmul.f32 %v8261, %v8261
      %v8278 = vmul.f32 %v8262, %v8262
      %v8279 = vmul.f32 %v8263, %v8263
      %v8280 = vmul.f32 %v8264, %v8264
      %v8281 = vsel %vm700, %v8265, 0.0
      %8282 = vadd.xlane.f32.xlu0 %v8281
      %v8283 = vpop.xlane.xlu0 %8282
      %v8284 = vsel %vm700, %v8266, 0.0
      %8285 = vadd.xlane.f32.xlu0 %v8284
      %v8286 = vpop.xlane.xlu0 %8285
      %v8287 = vsel %vm700, %v8267, 0.0
      %8288 = vadd.xlane.f32.xlu0 %v8287
      %v8289 = vpop.xlane.xlu0 %8288
      %v8290 = vsel %vm700, %v8268, 0.0
      %8291 = vadd.xlane.f32.xlu0 %v8290
      %v8292 = vpop.xlane.xlu0 %8291
      %v8293 = vsel %vm700, %v8269, 0.0
      %8294 = vadd.xlane.f32.xlu0 %v8293
      %v8295 = vpop.xlane.xlu0 %8294
      %v8296 = vsel %vm700, %v8270, 0.0
      %8297 = vadd.xlane.f32.xlu0 %v8296
      %v8298 = vpop.xlane.xlu0 %8297
      %v8299 = vsel %vm700, %v8271, 0.0
      %8300 = vadd.xlane.f32.xlu0 %v8299
      %v8301 = vpop.xlane.xlu0 %8300
      %v8302 = vsel %vm700, %v8272, 0.0
      %8303 = vadd.xlane.f32.xlu0 %v8302
      %v8304 = vpop.xlane.xlu0 %8303
      %v8305 = vsel %vm700, %v8273, 0.0
      %8306 = vadd.xlane.f32.xlu0 %v8305
      %v8307 = vpop.xlane.xlu0 %8306
      %v8308 = vsel %vm700, %v8274, 0.0
      %8309 = vadd.xlane.f32.xlu0 %v8308
      %v8310 = vpop.xlane.xlu0 %8309
      %v8311 = vsel %vm700, %v8275, 0.0
      %8312 = vadd.xlane.f32.xlu0 %v8311
      %v8313 = vpop.xlane.xlu0 %8312
      %v8314 = vsel %vm700, %v8276, 0.0
      %8315 = vadd.xlane.f32.xlu0 %v8314
      %v8316 = vpop.xlane.xlu0 %8315
      %v8317 = vsel %vm700, %v8277, 0.0
      %8318 = vadd.xlane.f32.xlu0 %v8317
      %v8319 = vpop.xlane.xlu0 %8318
      %v8320 = vsel %vm700, %v8278, 0.0
      %8321 = vadd.xlane.f32.xlu0 %v8320
      %v8322 = vpop.xlane.xlu0 %8321
      %v8323 = vsel %vm700, %v8279, 0.0
      %8324 = vadd.xlane.f32.xlu0 %v8323
      %v8325 = vpop.xlane.xlu0 %8324
      %v8326 = vsel %vm700, %v8280, 0.0
      %8327 = vadd.xlane.f32.xlu0 %v8326
      %v8328 = vpop.xlane.xlu0 %8327
      %v8329 = vmul.f32 %v8283, %v8232
      %v8330 = vmul.f32 %v8286, %v8232
      %v8331 = vmul.f32 %v8289, %v8232
      %v8332 = vmul.f32 %v8292, %v8232
      %v8333 = vmul.f32 %v8295, %v8232
      %v8334 = vmul.f32 %v8298, %v8232
      %v8335 = vmul.f32 %v8301, %v8232
      %v8336 = vmul.f32 %v8304, %v8232
      %v8337 = vmul.f32 %v8307, %v8232
      %v8338 = vmul.f32 %v8310, %v8232
      %v8339 = vmul.f32 %v8313, %v8232
      %v8340 = vmul.f32 %v8316, %v8232
      %v8341 = vmul.f32 %v8319, %v8232
      %v8342 = vmul.f32 %v8322, %v8232
      %v8343 = vmul.f32 %v8325, %v8232
      %v8344 = vmul.f32 %v8328, %v8232
      %v8345 = vadd.f32 %v8329, 1e-05
      %v8346 = vadd.f32 %v8330, 1e-05
      %v8347 = vadd.f32 %v8331, 1e-05
      %v8348 = vadd.f32 %v8332, 1e-05
      %v8349 = vadd.f32 %v8333, 1e-05
      %v8350 = vadd.f32 %v8334, 1e-05
      %v8351 = vadd.f32 %v8335, 1e-05
      %v8352 = vadd.f32 %v8336, 1e-05
      %v8353 = vadd.f32 %v8337, 1e-05
      %v8354 = vadd.f32 %v8338, 1e-05
      %v8355 = vadd.f32 %v8339, 1e-05
      %v8356 = vadd.f32 %v8340, 1e-05
      %v8357 = vadd.f32 %v8341, 1e-05
      %v8358 = vadd.f32 %v8342, 1e-05
      %v8359 = vadd.f32 %v8343, 1e-05
      %v8360 = vadd.f32 %v8344, 1e-05
      %v8361 = vrsqrt.pop %v8345
      %v8362 = vrsqrt.pop %v8346
      %v8363 = vrsqrt.pop %v8347
      %v8364 = vrsqrt.pop %v8348
      %v8365 = vrsqrt.pop %v8349
      %v8366 = vrsqrt.pop %v8350
      %v8367 = vrsqrt.pop %v8351
      %v8368 = vrsqrt.pop %v8352
      %v8369 = vrsqrt.pop %v8353
      %v8370 = vrsqrt.pop %v8354
      %v8371 = vrsqrt.pop %v8355
      %v8372 = vrsqrt.pop %v8356
      %v8373 = vrsqrt.pop %v8357
      %v8374 = vrsqrt.pop %v8358
      %v8375 = vrsqrt.pop %v8359
      %v8376 = vrsqrt.pop %v8360
      %v8377 = vmul.f32 %v8249, %v8361
      %v8378 = vmul.f32 %v8250, %v8362
      %v8379 = vmul.f32 %v8251, %v8363
      %v8380 = vmul.f32 %v8252, %v8364
      %v8381 = vmul.f32 %v8253, %v8365
      %v8382 = vmul.f32 %v8254, %v8366
      %v8383 = vmul.f32 %v8255, %v8367
      %v8384 = vmul.f32 %v8256, %v8368
      %v8385 = vmul.f32 %v8257, %v8369
      %v8386 = vmul.f32 %v8258, %v8370
      %v8387 = vmul.f32 %v8259, %v8371
      %v8388 = vmul.f32 %v8260, %v8372
      %v8389 = vmul.f32 %v8261, %v8373
      %v8390 = vmul.f32 %v8262, %v8374
      %v8391 = vmul.f32 %v8263, %v8375
      %v8392 = vmul.f32 %v8264, %v8376
      %v8393 = vlaneseq
      %v8394 = vshrl.u32 %v8393, 7
      %v8395 = vsub.s32 0, %v8394
      %v8396 = vrot.slane %v271, %v8395
      %v8397 = vmul.f32 %v8377, %v8396
      %v8398 = vmul.f32 %v8378, %v8396
      %v8399 = vmul.f32 %v8379, %v8396
      %v8400 = vmul.f32 %v8380, %v8396
      %v8401 = vmul.f32 %v8381, %v8396
      %v8402 = vmul.f32 %v8382, %v8396
      %v8403 = vmul.f32 %v8383, %v8396
      %v8404 = vmul.f32 %v8384, %v8396
      %v8405 = vmul.f32 %v8385, %v8396
      %v8406 = vmul.f32 %v8386, %v8396
      %v8407 = vmul.f32 %v8387, %v8396
      %v8408 = vmul.f32 %v8388, %v8396
      %v8409 = vmul.f32 %v8389, %v8396
      %v8410 = vmul.f32 %v8390, %v8396
      %v8411 = vmul.f32 %v8391, %v8396
      %v8412 = vmul.f32 %v8392, %v8396
      %v8413 = vlaneseq
      %v8414 = vshrl.u32 %v8413, 7
      %v8415 = vsub.s32 0, %v8414
      %v8416 = vrot.slane %v272, %v8415
      %v8417 = vadd.f32 %v8397, %v8416
      %v8418 = vadd.f32 %v8398, %v8416
      %v8419 = vadd.f32 %v8399, %v8416
      %v8420 = vadd.f32 %v8400, %v8416
      %v8421 = vadd.f32 %v8401, %v8416
      %v8422 = vadd.f32 %v8402, %v8416
      %v8423 = vadd.f32 %v8403, %v8416
      %v8424 = vadd.f32 %v8404, %v8416
      %v8425 = vadd.f32 %v8405, %v8416
      %v8426 = vadd.f32 %v8406, %v8416
      %v8427 = vadd.f32 %v8407, %v8416
      %v8428 = vadd.f32 %v8408, %v8416
      %v8429 = vadd.f32 %v8409, %v8416
      %v8430 = vadd.f32 %v8410, %v8416
      %v8431 = vadd.f32 %v8411, %v8416
      %v8432 = vadd.f32 %v8412, %v8416
      %v8433 = vlaneseq
      %v8434 = vshrl.u32 %v8433, 7
      %v8435 = vsub.s32 0, %v8434
      %v8436 = vrot.slane %v269, %v8435
      %v8438 = vsel %vm700, %v8417, 0
      %v8441 = vsel %vm700, %v8418, 0
      %v8444 = vsel %vm700, %v8419, 0
      %v8447 = vsel %vm700, %v8420, 0
      %v8450 = vsel %vm700, %v8421, 0
      %v8453 = vsel %vm700, %v8422, 0
      %v8456 = vsel %vm700, %v8423, 0
      %v8459 = vsel %vm700, %v8424, 0
      %v8462 = vsel %vm700, %v8425, 0
      %v8465 = vsel %vm700, %v8426, 0
      %v8468 = vsel %vm700, %v8427, 0
      %v8471 = vsel %vm700, %v8428, 0
      %v8474 = vsel %vm700, %v8429, 0
      %v8477 = vsel %vm700, %v8430, 0
      %v8480 = vsel %vm700, %v8431, 0
      %v8483 = vsel %vm700, %v8432, 0
      %8485 = vmatprep.subr.mxu0 0.0
      %8486 = vmatpush1.msra.mxu0 0.0
      %8487 = vmatprep.subr.mxu0 0.0
      %8488 = vmatpush1.msra.mxu0 0.0
      %8489 = vmatprep.subr.mxu0 0.0
      %8490 = vmatpush1.msra.mxu0 0.0
      %8491 = vmatprep.subr.mxu0 0.0
      %8492 = vmatpush1.msra.mxu0 0.0
      %8493 = vmatprep.subr.mxu0 0.0
      %8494 = vmatpush1.msra.mxu0 0.0
      %8495 = vmatprep.subr.mxu0 0.0
      %8496 = vmatpush1.msra.mxu0 0.0
      %8497 = vmatprep.subr.mxu0 0.0
      %8498 = vmatpush1.msra.mxu0 0.0
      %8499 = vmatprep.subr.mxu0 0.0
      %8500 = vmatpush1.msra.mxu0 0.0
      %8501 = vmatprep.subr.mxu0 0.0
      %8502 = vmatpush1.msra.mxu0 0.0
      %8503 = vmatprep.subr.mxu0 0.0
      %8504 = vmatpush1.msra.mxu0 0.0
      %8505 = vmatprep.subr.mxu0 0.0
      %8506 = vmatpush1.msra.mxu0 0.0
      %8507 = vmatprep.subr.mxu0 0.0
      %8508 = vmatpush1.msra.mxu0 0.0
      %8509 = vmatprep.subr.mxu0 0.0
      %8510 = vmatpush1.msra.mxu0 %v252
      %8511 = vmatprep.subr.mxu0 0.0
      %8512 = vmatpush1.msra.mxu0 %v251
      %8513 = vmatprep.subr.mxu0 0.0
      %8514 = vmatpush1.msra.mxu0 %v250
      %8515 = vmatprep.subr.mxu0 0.0
      %8516 = vmatpush1.msra.mxu0 %v249
      %8517 = vmatprep.subr.mxu0 0.0
      %8518 = vmatpush2.msra.mxu0 0.0
      %8519 = vmatprep.subr.mxu0 0.0
      %8520 = vmatpush2.msra.mxu0 0.0
      %8521 = vmatprep.subr.mxu0 0.0
      %8522 = vmatpush2.msra.mxu0 0.0
      %8523 = vmatprep.subr.mxu0 0.0
      %8524 = vmatpush2.msra.mxu0 0.0
      %8525 = vmatprep.subr.mxu0 0.0
      %8526 = vmatpush2.msra.mxu0 0.0
      %8527 = vmatprep.subr.mxu0 0.0
      %8528 = vmatpush2.msra.mxu0 0.0
      %8529 = vmatprep.subr.mxu0 0.0
      %8530 = vmatpush2.msra.mxu0 0.0
      %8531 = vmatprep.subr.mxu0 0.0
      %8532 = vmatpush2.msra.mxu0 0.0
      %8533 = vmatprep.subr.mxu0 0.0
      %8534 = vmatpush2.msra.mxu0 0.0
      %8535 = vmatprep.subr.mxu0 0.0
      %8536 = vmatpush2.msra.mxu0 0.0
      %8537 = vmatprep.subr.mxu0 0.0
      %8538 = vmatpush2.msra.mxu0 0.0
      %8539 = vmatprep.subr.mxu0 0.0
      %8540 = vmatpush2.msra.mxu0 0.0
      %8541 = vmatprep.subr.mxu0 0.0
      %8542 = vmatpush2.msra.mxu0 0.0
      %8543 = vmatprep.subr.mxu0 0.0
      %8544 = vmatpush2.msra.mxu0 0.0
      %8545 = vmatprep.subr.mxu0 0.0
      %8546 = vmatpush2.msra.mxu0 0.0
      %8547 = vmatprep.subr.mxu0 0.0
      %8548 = vmatpush2.msra.mxu0 0.0
      %8549 = vmatprep.mubr.f32.mxu0 0.0
      %8550 = vmatmul.mubr.f32.gmra.mxu0 %v8438
      %v8551 = vpop.f32.mrf.mxu0
      %v8552 = vadd.f32 %v8436, %v8551
      %v8553 = vpop.f32.mrf.mxu0
      %8554 = vmatprep.mubr.f32.mxu0 0.0
      %8555 = vmatmul.mubr.f32.gmra.mxu0 %v8441
      %v8556 = vpop.f32.mrf.mxu0
      %v8557 = vadd.f32 %v8436, %v8556
      %v8558 = vpop.f32.mrf.mxu0
      %8559 = vmatprep.mubr.f32.mxu0 0.0
      %8560 = vmatmul.mubr.f32.gmra.mxu0 %v8444
      %v8561 = vpop.f32.mrf.mxu0
      %v8562 = vadd.f32 %v8436, %v8561
      %v8563 = vpop.f32.mrf.mxu0
      %8564 = vmatprep.mubr.f32.mxu0 0.0
      %8565 = vmatmul.mubr.f32.gmra.mxu0 %v8447
      %v8566 = vpop.f32.mrf.mxu0
      %v8567 = vadd.f32 %v8436, %v8566
      %v8568 = vpop.f32.mrf.mxu0
      %8569 = vmatprep.mubr.f32.mxu0 0.0
      %8570 = vmatmul.mubr.f32.gmra.mxu0 %v8450
      %v8571 = vpop.f32.mrf.mxu0
      %v8572 = vadd.f32 %v8436, %v8571
      %v8573 = vpop.f32.mrf.mxu0
      %8574 = vmatprep.mubr.f32.mxu0 0.0
      %8575 = vmatmul.mubr.f32.gmra.mxu0 %v8453
      %v8576 = vpop.f32.mrf.mxu0
      %v8577 = vadd.f32 %v8436, %v8576
      %v8578 = vpop.f32.mrf.mxu0
      %8579 = vmatprep.mubr.f32.mxu0 0.0
      %8580 = vmatmul.mubr.f32.gmra.mxu0 %v8456
      %v8581 = vpop.f32.mrf.mxu0
      %v8582 = vadd.f32 %v8436, %v8581
      %v8583 = vpop.f32.mrf.mxu0
      %8584 = vmatprep.mubr.f32.mxu0 0.0
      %8585 = vmatmul.mubr.f32.gmra.mxu0 %v8459
      %v8586 = vpop.f32.mrf.mxu0
      %v8587 = vadd.f32 %v8436, %v8586
      %v8588 = vpop.f32.mrf.mxu0
      %8589 = vmatprep.mubr.f32.mxu0 0.0
      %8590 = vmatmul.mubr.f32.gmra.mxu0 %v8462
      %v8591 = vpop.f32.mrf.mxu0
      %v8592 = vadd.f32 %v8436, %v8591
      %v8593 = vpop.f32.mrf.mxu0
      %8594 = vmatprep.mubr.f32.mxu0 0.0
      %8595 = vmatmul.mubr.f32.gmra.mxu0 %v8465
      %v8596 = vpop.f32.mrf.mxu0
      %v8597 = vadd.f32 %v8436, %v8596
      %v8598 = vpop.f32.mrf.mxu0
      %8599 = vmatprep.mubr.f32.mxu0 0.0
      %8600 = vmatmul.mubr.f32.gmra.mxu0 %v8468
      %v8601 = vpop.f32.mrf.mxu0
      %v8602 = vadd.f32 %v8436, %v8601
      %v8603 = vpop.f32.mrf.mxu0
      %8604 = vmatprep.mubr.f32.mxu0 0.0
      %8605 = vmatmul.mubr.f32.gmra.mxu0 %v8471
      %v8606 = vpop.f32.mrf.mxu0
      %v8607 = vadd.f32 %v8436, %v8606
      %v8608 = vpop.f32.mrf.mxu0
      %8609 = vmatprep.mubr.f32.mxu0 0.0
      %8610 = vmatmul.mubr.f32.gmra.mxu0 %v8474
      %v8611 = vpop.f32.mrf.mxu0
      %v8612 = vadd.f32 %v8436, %v8611
      %v8613 = vpop.f32.mrf.mxu0
      %8614 = vmatprep.mubr.f32.mxu0 0.0
      %8615 = vmatmul.mubr.f32.gmra.mxu0 %v8477
      %v8616 = vpop.f32.mrf.mxu0
      %v8617 = vadd.f32 %v8436, %v8616
      %v8618 = vpop.f32.mrf.mxu0
      %8619 = vmatprep.mubr.f32.mxu0 0.0
      %8620 = vmatmul.mubr.f32.gmra.mxu0 %v8480
      %v8621 = vpop.f32.mrf.mxu0
      %v8622 = vadd.f32 %v8436, %v8621
      %v8623 = vpop.f32.mrf.mxu0
      %8624 = vmatprep.mubr.f32.mxu0 0.0
      %8625 = vmatmul.mubr.f32.gmra.mxu0 %v8483
      %v8626 = vpop.f32.mrf.mxu0
      %v8627 = vadd.f32 %v8436, %v8626
      %v8628 = vpop.f32.mrf.mxu0
      %8629 = vdwg.mxu0
      %v8630 = vmax.f32 %v8552, 0.0
      %v8631 = vmax.f32 %v8557, 0.0
      %v8632 = vmax.f32 %v8562, 0.0
      %v8633 = vmax.f32 %v8567, 0.0
      %v8634 = vmax.f32 %v8572, 0.0
      %v8635 = vmax.f32 %v8577, 0.0
      %v8636 = vmax.f32 %v8582, 0.0
      %v8637 = vmax.f32 %v8587, 0.0
      %v8638 = vmax.f32 %v8592, 0.0
      %v8639 = vmax.f32 %v8597, 0.0
      %v8640 = vmax.f32 %v8602, 0.0
      %v8641 = vmax.f32 %v8607, 0.0
      %v8642 = vmax.f32 %v8612, 0.0
      %v8643 = vmax.f32 %v8617, 0.0
      %v8644 = vmax.f32 %v8622, 0.0
      %v8645 = vmax.f32 %v8627, 0.0
      %v8646 = vlaneseq
      %v8647 = vshrl.u32 %v8646, 7
      %v8648 = vsub.s32 0, %v8647
      %v8649 = vrot.slane %v270, %v8648
      %vm8650 = vcmask 523264
      %v8652 = vsel %vm8650, %v8630, 0
      %v8655 = vsel %vm8650, %v8631, 0
      %v8658 = vsel %vm8650, %v8632, 0
      %v8661 = vsel %vm8650, %v8633, 0
      %v8664 = vsel %vm8650, %v8634, 0
      %v8667 = vsel %vm8650, %v8635, 0
      %v8670 = vsel %vm8650, %v8636, 0
      %v8673 = vsel %vm8650, %v8637, 0
      %v8676 = vsel %vm8650, %v8638, 0
      %v8679 = vsel %vm8650, %v8639, 0
      %v8682 = vsel %vm8650, %v8640, 0
      %v8685 = vsel %vm8650, %v8641, 0
      %v8688 = vsel %vm8650, %v8642, 0
      %v8691 = vsel %vm8650, %v8643, 0
      %v8694 = vsel %vm8650, %v8644, 0
      %v8697 = vsel %vm8650, %v8645, 0
      %8699 = vmatprep.subr.mxu0 0.0
      %8700 = vmatpush1.msra.mxu0 0.0
      %8701 = vmatprep.subr.mxu0 0.0
      %8702 = vmatpush1.msra.mxu0 0.0
      %8703 = vmatprep.subr.mxu0 0.0
      %8704 = vmatpush1.msra.mxu0 0.0
      %8705 = vmatprep.subr.mxu0 0.0
      %8706 = vmatpush1.msra.mxu0 0.0
      %8707 = vmatprep.subr.mxu0 0.0
      %8708 = vmatpush1.msra.mxu0 0.0
      %8709 = vmatprep.subr.mxu0 0.0
      %8710 = vmatpush1.msra.mxu0 0.0
      %8711 = vmatprep.subr.mxu0 0.0
      %8712 = vmatpush1.msra.mxu0 0.0
      %8713 = vmatprep.subr.mxu0 0.0
      %8714 = vmatpush1.msra.mxu0 0.0
      %8715 = vmatprep.subr.mxu0 0.0
      %8716 = vmatpush1.msra.mxu0 %v260
      %8717 = vmatprep.subr.mxu0 0.0
      %8718 = vmatpush1.msra.mxu0 %v259
      %8719 = vmatprep.subr.mxu0 0.0
      %8720 = vmatpush1.msra.mxu0 %v258
      %8721 = vmatprep.subr.mxu0 0.0
      %8722 = vmatpush1.msra.mxu0 %v257
      %8723 = vmatprep.subr.mxu0 0.0
      %8724 = vmatpush1.msra.mxu0 %v256
      %8725 = vmatprep.subr.mxu0 0.0
      %8726 = vmatpush1.msra.mxu0 %v255
      %8727 = vmatprep.subr.mxu0 0.0
      %8728 = vmatpush1.msra.mxu0 %v254
      %8729 = vmatprep.subr.mxu0 0.0
      %8730 = vmatpush1.msra.mxu0 %v253
      %8731 = vmatprep.subr.mxu0 0.0
      %8732 = vmatpush2.msra.mxu0 0.0
      %8733 = vmatprep.subr.mxu0 0.0
      %8734 = vmatpush2.msra.mxu0 0.0
      %8735 = vmatprep.subr.mxu0 0.0
      %8736 = vmatpush2.msra.mxu0 0.0
      %8737 = vmatprep.subr.mxu0 0.0
      %8738 = vmatpush2.msra.mxu0 0.0
      %8739 = vmatprep.subr.mxu0 0.0
      %8740 = vmatpush2.msra.mxu0 0.0
      %8741 = vmatprep.subr.mxu0 0.0
      %8742 = vmatpush2.msra.mxu0 0.0
      %8743 = vmatprep.subr.mxu0 0.0
      %8744 = vmatpush2.msra.mxu0 0.0
      %8745 = vmatprep.subr.mxu0 0.0
      %8746 = vmatpush2.msra.mxu0 0.0
      %8747 = vmatprep.subr.mxu0 0.0
      %8748 = vmatpush2.msra.mxu0 0.0
      %8749 = vmatprep.subr.mxu0 0.0
      %8750 = vmatpush2.msra.mxu0 0.0
      %8751 = vmatprep.subr.mxu0 0.0
      %8752 = vmatpush2.msra.mxu0 0.0
      %8753 = vmatprep.subr.mxu0 0.0
      %8754 = vmatpush2.msra.mxu0 0.0
      %8755 = vmatprep.subr.mxu0 0.0
      %8756 = vmatpush2.msra.mxu0 0.0
      %8757 = vmatprep.subr.mxu0 0.0
      %8758 = vmatpush2.msra.mxu0 0.0
      %8759 = vmatprep.subr.mxu0 0.0
      %8760 = vmatpush2.msra.mxu0 0.0
      %8761 = vmatprep.subr.mxu0 0.0
      %8762 = vmatpush2.msra.mxu0 0.0
      %8763 = vmatprep.mubr.f32.mxu0 0.0
      %8764 = vmatmul.mubr.f32.gmra.mxu0 %v8652
      %v8765 = vpop.f32.mrf.mxu0
      %v8766 = vadd.f32 %v8649, %v8765
      %v8767 = vpop.f32.mrf.mxu0
      %8768 = vmatprep.mubr.f32.mxu0 0.0
      %8769 = vmatmul.mubr.f32.gmra.mxu0 %v8655
      %v8770 = vpop.f32.mrf.mxu0
      %v8771 = vadd.f32 %v8649, %v8770
      %v8772 = vpop.f32.mrf.mxu0
      %8773 = vmatprep.mubr.f32.mxu0 0.0
      %8774 = vmatmul.mubr.f32.gmra.mxu0 %v8658
      %v8775 = vpop.f32.mrf.mxu0
      %v8776 = vadd.f32 %v8649, %v8775
      %v8777 = vpop.f32.mrf.mxu0
      %8778 = vmatprep.mubr.f32.mxu0 0.0
      %8779 = vmatmul.mubr.f32.gmra.mxu0 %v8661
      %v8780 = vpop.f32.mrf.mxu0
      %v8781 = vadd.f32 %v8649, %v8780
      %v8782 = vpop.f32.mrf.mxu0
      %8783 = vmatprep.mubr.f32.mxu0 0.0
      %8784 = vmatmul.mubr.f32.gmra.mxu0 %v8664
      %v8785 = vpop.f32.mrf.mxu0
      %v8786 = vadd.f32 %v8649, %v8785
      %v8787 = vpop.f32.mrf.mxu0
      %8788 = vmatprep.mubr.f32.mxu0 0.0
      %8789 = vmatmul.mubr.f32.gmra.mxu0 %v8667
      %v8790 = vpop.f32.mrf.mxu0
      %v8791 = vadd.f32 %v8649, %v8790
      %v8792 = vpop.f32.mrf.mxu0
      %8793 = vmatprep.mubr.f32.mxu0 0.0
      %8794 = vmatmul.mubr.f32.gmra.mxu0 %v8670
      %v8795 = vpop.f32.mrf.mxu0
      %v8796 = vadd.f32 %v8649, %v8795
      %v8797 = vpop.f32.mrf.mxu0
      %8798 = vmatprep.mubr.f32.mxu0 0.0
      %8799 = vmatmul.mubr.f32.gmra.mxu0 %v8673
      %v8800 = vpop.f32.mrf.mxu0
      %v8801 = vadd.f32 %v8649, %v8800
      %v8802 = vpop.f32.mrf.mxu0
      %8803 = vmatprep.mubr.f32.mxu0 0.0
      %8804 = vmatmul.mubr.f32.gmra.mxu0 %v8676
      %v8805 = vpop.f32.mrf.mxu0
      %v8806 = vadd.f32 %v8649, %v8805
      %v8807 = vpop.f32.mrf.mxu0
      %8808 = vmatprep.mubr.f32.mxu0 0.0
      %8809 = vmatmul.mubr.f32.gmra.mxu0 %v8679
      %v8810 = vpop.f32.mrf.mxu0
      %v8811 = vadd.f32 %v8649, %v8810
      %v8812 = vpop.f32.mrf.mxu0
      %8813 = vmatprep.mubr.f32.mxu0 0.0
      %8814 = vmatmul.mubr.f32.gmra.mxu0 %v8682
      %v8815 = vpop.f32.mrf.mxu0
      %v8816 = vadd.f32 %v8649, %v8815
      %v8817 = vpop.f32.mrf.mxu0
      %8818 = vmatprep.mubr.f32.mxu0 0.0
      %8819 = vmatmul.mubr.f32.gmra.mxu0 %v8685
      %v8820 = vpop.f32.mrf.mxu0
      %v8821 = vadd.f32 %v8649, %v8820
      %v8822 = vpop.f32.mrf.mxu0
      %8823 = vmatprep.mubr.f32.mxu0 0.0
      %8824 = vmatmul.mubr.f32.gmra.mxu0 %v8688
      %v8825 = vpop.f32.mrf.mxu0
      %v8826 = vadd.f32 %v8649, %v8825
      %v8827 = vpop.f32.mrf.mxu0
      %8828 = vmatprep.mubr.f32.mxu0 0.0
      %8829 = vmatmul.mubr.f32.gmra.mxu0 %v8691
      %v8830 = vpop.f32.mrf.mxu0
      %v8831 = vadd.f32 %v8649, %v8830
      %v8832 = vpop.f32.mrf.mxu0
      %8833 = vmatprep.mubr.f32.mxu0 0.0
      %8834 = vmatmul.mubr.f32.gmra.mxu0 %v8694
      %v8835 = vpop.f32.mrf.mxu0
      %v8836 = vadd.f32 %v8649, %v8835
      %v8837 = vpop.f32.mrf.mxu0
      %8838 = vmatprep.mubr.f32.mxu0 0.0
      %8839 = vmatmul.mubr.f32.gmra.mxu0 %v8697
      %v8840 = vpop.f32.mrf.mxu0
      %v8841 = vadd.f32 %v8649, %v8840
      %v8842 = vpop.f32.mrf.mxu0
      %8843 = vdwg.mxu0
      %v8844 = vadd.f32 %v8417, %v8766
      %v8845 = vadd.f32 %v8418, %v8771
      %v8846 = vadd.f32 %v8419, %v8776
      %v8847 = vadd.f32 %v8420, %v8781
      %v8848 = vadd.f32 %v8421, %v8786
      %v8849 = vadd.f32 %v8422, %v8791
      %v8850 = vadd.f32 %v8423, %v8796
      %v8851 = vadd.f32 %v8424, %v8801
      %v8852 = vadd.f32 %v8425, %v8806
      %v8853 = vadd.f32 %v8426, %v8811
      %v8854 = vadd.f32 %v8427, %v8816
      %v8855 = vadd.f32 %v8428, %v8821
      %v8856 = vadd.f32 %v8429, %v8826
      %v8857 = vadd.f32 %v8430, %v8831
      %v8858 = vadd.f32 %v8431, %v8836
      %v8859 = vadd.f32 %v8432, %v8841
      %v8860 = vsel %vm700, %v8844, 0.0
      %8861 = vadd.xlane.f32.xlu0 %v8860
      %v8862 = vpop.xlane.xlu0 %8861
      %v8863 = vsel %vm700, %v8845, 0.0
      %8864 = vadd.xlane.f32.xlu0 %v8863
      %v8865 = vpop.xlane.xlu0 %8864
      %v8866 = vsel %vm700, %v8846, 0.0
      %8867 = vadd.xlane.f32.xlu0 %v8866
      %v8868 = vpop.xlane.xlu0 %8867
      %v8869 = vsel %vm700, %v8847, 0.0
      %8870 = vadd.xlane.f32.xlu0 %v8869
      %v8871 = vpop.xlane.xlu0 %8870
      %v8872 = vsel %vm700, %v8848, 0.0
      %8873 = vadd.xlane.f32.xlu0 %v8872
      %v8874 = vpop.xlane.xlu0 %8873
      %v8875 = vsel %vm700, %v8849, 0.0
      %8876 = vadd.xlane.f32.xlu0 %v8875
      %v8877 = vpop.xlane.xlu0 %8876
      %v8878 = vsel %vm700, %v8850, 0.0
      %8879 = vadd.xlane.f32.xlu0 %v8878
      %v8880 = vpop.xlane.xlu0 %8879
      %v8881 = vsel %vm700, %v8851, 0.0
      %8882 = vadd.xlane.f32.xlu0 %v8881
      %v8883 = vpop.xlane.xlu0 %8882
      %v8884 = vsel %vm700, %v8852, 0.0
      %8885 = vadd.xlane.f32.xlu0 %v8884
      %v8886 = vpop.xlane.xlu0 %8885
      %v8887 = vsel %vm700, %v8853, 0.0
      %8888 = vadd.xlane.f32.xlu0 %v8887
      %v8889 = vpop.xlane.xlu0 %8888
      %v8890 = vsel %vm700, %v8854, 0.0
      %8891 = vadd.xlane.f32.xlu0 %v8890
      %v8892 = vpop.xlane.xlu0 %8891
      %v8893 = vsel %vm700, %v8855, 0.0
      %8894 = vadd.xlane.f32.xlu0 %v8893
      %v8895 = vpop.xlane.xlu0 %8894
      %v8896 = vsel %vm700, %v8856, 0.0
      %8897 = vadd.xlane.f32.xlu0 %v8896
      %v8898 = vpop.xlane.xlu0 %8897
      %v8899 = vsel %vm700, %v8857, 0.0
      %8900 = vadd.xlane.f32.xlu0 %v8899
      %v8901 = vpop.xlane.xlu0 %8900
      %v8902 = vsel %vm700, %v8858, 0.0
      %8903 = vadd.xlane.f32.xlu0 %v8902
      %v8904 = vpop.xlane.xlu0 %8903
      %v8905 = vsel %vm700, %v8859, 0.0
      %8906 = vadd.xlane.f32.xlu0 %v8905
      %v8907 = vpop.xlane.xlu0 %8906
      %v8908 = vmul.f32 %v8862, %v8232
      %v8909 = vmul.f32 %v8865, %v8232
      %v8910 = vmul.f32 %v8868, %v8232
      %v8911 = vmul.f32 %v8871, %v8232
      %v8912 = vmul.f32 %v8874, %v8232
      %v8913 = vmul.f32 %v8877, %v8232
      %v8914 = vmul.f32 %v8880, %v8232
      %v8915 = vmul.f32 %v8883, %v8232
      %v8916 = vmul.f32 %v8886, %v8232
      %v8917 = vmul.f32 %v8889, %v8232
      %v8918 = vmul.f32 %v8892, %v8232
      %v8919 = vmul.f32 %v8895, %v8232
      %v8920 = vmul.f32 %v8898, %v8232
      %v8921 = vmul.f32 %v8901, %v8232
      %v8922 = vmul.f32 %v8904, %v8232
      %v8923 = vmul.f32 %v8907, %v8232
      %v8924 = vsub.f32 %v8844, %v8908
      %v8925 = vsub.f32 %v8845, %v8909
      %v8926 = vsub.f32 %v8846, %v8910
      %v8927 = vsub.f32 %v8847, %v8911
      %v8928 = vsub.f32 %v8848, %v8912
      %v8929 = vsub.f32 %v8849, %v8913
      %v8930 = vsub.f32 %v8850, %v8914
      %v8931 = vsub.f32 %v8851, %v8915
      %v8932 = vsub.f32 %v8852, %v8916
      %v8933 = vsub.f32 %v8853, %v8917
      %v8934 = vsub.f32 %v8854, %v8918
      %v8935 = vsub.f32 %v8855, %v8919
      %v8936 = vsub.f32 %v8856, %v8920
      %v8937 = vsub.f32 %v8857, %v8921
      %v8938 = vsub.f32 %v8858, %v8922
      %v8939 = vsub.f32 %v8859, %v8923
      %v8940 = vmul.f32 %v8924, %v8924
      %v8941 = vmul.f32 %v8925, %v8925
      %v8942 = vmul.f32 %v8926, %v8926
      %v8943 = vmul.f32 %v8927, %v8927
      %v8944 = vmul.f32 %v8928, %v8928
      %v8945 = vmul.f32 %v8929, %v8929
      %v8946 = vmul.f32 %v8930, %v8930
      %v8947 = vmul.f32 %v8931, %v8931
      %v8948 = vmul.f32 %v8932, %v8932
      %v8949 = vmul.f32 %v8933, %v8933
      %v8950 = vmul.f32 %v8934, %v8934
      %v8951 = vmul.f32 %v8935, %v8935
      %v8952 = vmul.f32 %v8936, %v8936
      %v8953 = vmul.f32 %v8937, %v8937
      %v8954 = vmul.f32 %v8938, %v8938
      %v8955 = vmul.f32 %v8939, %v8939
      %v8956 = vsel %vm700, %v8940, 0.0
      %8957 = vadd.xlane.f32.xlu0 %v8956
      %v8958 = vpop.xlane.xlu0 %8957
      %v8959 = vsel %vm700, %v8941, 0.0
      %8960 = vadd.xlane.f32.xlu0 %v8959
      %v8961 = vpop.xlane.xlu0 %8960
      %v8962 = vsel %vm700, %v8942, 0.0
      %8963 = vadd.xlane.f32.xlu0 %v8962
      %v8964 = vpop.xlane.xlu0 %8963
      %v8965 = vsel %vm700, %v8943, 0.0
      %8966 = vadd.xlane.f32.xlu0 %v8965
      %v8967 = vpop.xlane.xlu0 %8966
      %v8968 = vsel %vm700, %v8944, 0.0
      %8969 = vadd.xlane.f32.xlu0 %v8968
      %v8970 = vpop.xlane.xlu0 %8969
      %v8971 = vsel %vm700, %v8945, 0.0
      %8972 = vadd.xlane.f32.xlu0 %v8971
      %v8973 = vpop.xlane.xlu0 %8972
      %v8974 = vsel %vm700, %v8946, 0.0
      %8975 = vadd.xlane.f32.xlu0 %v8974
      %v8976 = vpop.xlane.xlu0 %8975
      %v8977 = vsel %vm700, %v8947, 0.0
      %8978 = vadd.xlane.f32.xlu0 %v8977
      %v8979 = vpop.xlane.xlu0 %8978
      %v8980 = vsel %vm700, %v8948, 0.0
      %8981 = vadd.xlane.f32.xlu0 %v8980
      %v8982 = vpop.xlane.xlu0 %8981
      %v8983 = vsel %vm700, %v8949, 0.0
      %8984 = vadd.xlane.f32.xlu0 %v8983
      %v8985 = vpop.xlane.xlu0 %8984
      %v8986 = vsel %vm700, %v8950, 0.0
      %8987 = vadd.xlane.f32.xlu0 %v8986
      %v8988 = vpop.xlane.xlu0 %8987
      %v8989 = vsel %vm700, %v8951, 0.0
      %8990 = vadd.xlane.f32.xlu0 %v8989
      %v8991 = vpop.xlane.xlu0 %8990
      %v8992 = vsel %vm700, %v8952, 0.0
      %8993 = vadd.xlane.f32.xlu0 %v8992
      %v8994 = vpop.xlane.xlu0 %8993
      %v8995 = vsel %vm700, %v8953, 0.0
      %8996 = vadd.xlane.f32.xlu0 %v8995
      %v8997 = vpop.xlane.xlu0 %8996
      %v8998 = vsel %vm700, %v8954, 0.0
      %8999 = vadd.xlane.f32.xlu0 %v8998
      %v9000 = vpop.xlane.xlu0 %8999
      %v9001 = vsel %vm700, %v8955, 0.0
      %9002 = vadd.xlane.f32.xlu0 %v9001
      %v9003 = vpop.xlane.xlu0 %9002
      %v9004 = vmul.f32 %v8958, %v8232
      %v9005 = vmul.f32 %v8961, %v8232
      %v9006 = vmul.f32 %v8964, %v8232
      %v9007 = vmul.f32 %v8967, %v8232
      %v9008 = vmul.f32 %v8970, %v8232
      %v9009 = vmul.f32 %v8973, %v8232
      %v9010 = vmul.f32 %v8976, %v8232
      %v9011 = vmul.f32 %v8979, %v8232
      %v9012 = vmul.f32 %v8982, %v8232
      %v9013 = vmul.f32 %v8985, %v8232
      %v9014 = vmul.f32 %v8988, %v8232
      %v9015 = vmul.f32 %v8991, %v8232
      %v9016 = vmul.f32 %v8994, %v8232
      %v9017 = vmul.f32 %v8997, %v8232
      %v9018 = vmul.f32 %v9000, %v8232
      %v9019 = vmul.f32 %v9003, %v8232
      %v9020 = vadd.f32 %v9004, 1e-05
      %v9021 = vadd.f32 %v9005, 1e-05
      %v9022 = vadd.f32 %v9006, 1e-05
      %v9023 = vadd.f32 %v9007, 1e-05
      %v9024 = vadd.f32 %v9008, 1e-05
      %v9025 = vadd.f32 %v9009, 1e-05
      %v9026 = vadd.f32 %v9010, 1e-05
      %v9027 = vadd.f32 %v9011, 1e-05
      %v9028 = vadd.f32 %v9012, 1e-05
      %v9029 = vadd.f32 %v9013, 1e-05
      %v9030 = vadd.f32 %v9014, 1e-05
      %v9031 = vadd.f32 %v9015, 1e-05
      %v9032 = vadd.f32 %v9016, 1e-05
      %v9033 = vadd.f32 %v9017, 1e-05
      %v9034 = vadd.f32 %v9018, 1e-05
      %v9035 = vadd.f32 %v9019, 1e-05
      %v9036 = vrsqrt.pop %v9020
      %v9037 = vrsqrt.pop %v9021
      %v9038 = vrsqrt.pop %v9022
      %v9039 = vrsqrt.pop %v9023
      %v9040 = vrsqrt.pop %v9024
      %v9041 = vrsqrt.pop %v9025
      %v9042 = vrsqrt.pop %v9026
      %v9043 = vrsqrt.pop %v9027
      %v9044 = vrsqrt.pop %v9028
      %v9045 = vrsqrt.pop %v9029
      %v9046 = vrsqrt.pop %v9030
      %v9047 = vrsqrt.pop %v9031
      %v9048 = vrsqrt.pop %v9032
      %v9049 = vrsqrt.pop %v9033
      %v9050 = vrsqrt.pop %v9034
      %v9051 = vrsqrt.pop %v9035
      %v9052 = vmul.f32 %v8924, %v9036
      %v9053 = vmul.f32 %v8925, %v9037
      %v9054 = vmul.f32 %v8926, %v9038
      %v9055 = vmul.f32 %v8927, %v9039
      %v9056 = vmul.f32 %v8928, %v9040
      %v9057 = vmul.f32 %v8929, %v9041
      %v9058 = vmul.f32 %v8930, %v9042
      %v9059 = vmul.f32 %v8931, %v9043
      %v9060 = vmul.f32 %v8932, %v9044
      %v9061 = vmul.f32 %v8933, %v9045
      %v9062 = vmul.f32 %v8934, %v9046
      %v9063 = vmul.f32 %v8935, %v9047
      %v9064 = vmul.f32 %v8936, %v9048
      %v9065 = vmul.f32 %v8937, %v9049
      %v9066 = vmul.f32 %v8938, %v9050
      %v9067 = vmul.f32 %v8939, %v9051
      %v9068 = vlaneseq
      %v9069 = vshrl.u32 %v9068, 7
      %v9070 = vsub.s32 0, %v9069
      %v9071 = vrot.slane %v273, %v9070
      %v9072 = vmul.f32 %v9052, %v9071
      %v9073 = vmul.f32 %v9053, %v9071
      %v9074 = vmul.f32 %v9054, %v9071
      %v9075 = vmul.f32 %v9055, %v9071
      %v9076 = vmul.f32 %v9056, %v9071
      %v9077 = vmul.f32 %v9057, %v9071
      %v9078 = vmul.f32 %v9058, %v9071
      %v9079 = vmul.f32 %v9059, %v9071
      %v9080 = vmul.f32 %v9060, %v9071
      %v9081 = vmul.f32 %v9061, %v9071
      %v9082 = vmul.f32 %v9062, %v9071
      %v9083 = vmul.f32 %v9063, %v9071
      %v9084 = vmul.f32 %v9064, %v9071
      %v9085 = vmul.f32 %v9065, %v9071
      %v9086 = vmul.f32 %v9066, %v9071
      %v9087 = vmul.f32 %v9067, %v9071
      %v9088 = vlaneseq
      %v9089 = vshrl.u32 %v9088, 7
      %v9090 = vsub.s32 0, %v9089
      %v9091 = vrot.slane %v274, %v9090
      %v9092 = vadd.f32 %v9072, %v9091
      %v9093 = vadd.f32 %v9073, %v9091
      %v9094 = vadd.f32 %v9074, %v9091
      %v9095 = vadd.f32 %v9075, %v9091
      %v9096 = vadd.f32 %v9076, %v9091
      %v9097 = vadd.f32 %v9077, %v9091
      %v9098 = vadd.f32 %v9078, %v9091
      %v9099 = vadd.f32 %v9079, %v9091
      %v9100 = vadd.f32 %v9080, %v9091
      %v9101 = vadd.f32 %v9081, %v9091
      %v9102 = vadd.f32 %v9082, %v9091
      %v9103 = vadd.f32 %v9083, %v9091
      %v9104 = vadd.f32 %v9084, %v9091
      %v9105 = vadd.f32 %v9085, %v9091
      %v9106 = vadd.f32 %v9086, %v9091
      %v9107 = vadd.f32 %v9087, %v9091
      %v9108 = vsel %vm700, %v9092, 0.0
      %v9109 = vsel %vm700, %v9093, 0.0
      %v9110 = vadd.f32 %v9108, %v9109
      %v9111 = vrot.slane %v9110, 4
      %v9112 = vadd.f32 %v9110, %v9111
      %v9113 = vrot.slane %v9112, 2
      %v9114 = vadd.f32 %v9112, %v9113
      %v9115 = vrot.slane %v9114, 1
      %v9116 = vadd.f32 %v9114, %v9115
      %v9117 = vsel %vm700, %v9094, 0.0
      %v9118 = vsel %vm700, %v9095, 0.0
      %v9119 = vadd.f32 %v9117, %v9118
      %v9120 = vrot.slane %v9119, 4
      %v9121 = vadd.f32 %v9119, %v9120
      %v9122 = vrot.slane %v9121, 2
      %v9123 = vadd.f32 %v9121, %v9122
      %v9124 = vrot.slane %v9123, 1
      %v9125 = vadd.f32 %v9123, %v9124
      %v9126 = vsel %vm700, %v9096, 0.0
      %v9127 = vsel %vm700, %v9097, 0.0
      %v9128 = vadd.f32 %v9126, %v9127
      %v9129 = vrot.slane %v9128, 4
      %v9130 = vadd.f32 %v9128, %v9129
      %v9131 = vrot.slane %v9130, 2
      %v9132 = vadd.f32 %v9130, %v9131
      %v9133 = vrot.slane %v9132, 1
      %v9134 = vadd.f32 %v9132, %v9133
      %v9135 = vsel %vm700, %v9098, 0.0
      %v9136 = vsel %vm700, %v9099, 0.0
      %v9137 = vadd.f32 %v9135, %v9136
      %v9138 = vrot.slane %v9137, 4
      %v9139 = vadd.f32 %v9137, %v9138
      %v9140 = vrot.slane %v9139, 2
      %v9141 = vadd.f32 %v9139, %v9140
      %v9142 = vrot.slane %v9141, 1
      %v9143 = vadd.f32 %v9141, %v9142
      %v9144 = vsel %vm700, %v9100, 0.0
      %v9145 = vsel %vm700, %v9101, 0.0
      %v9146 = vadd.f32 %v9144, %v9145
      %v9147 = vrot.slane %v9146, 4
      %v9148 = vadd.f32 %v9146, %v9147
      %v9149 = vrot.slane %v9148, 2
      %v9150 = vadd.f32 %v9148, %v9149
      %v9151 = vrot.slane %v9150, 1
      %v9152 = vadd.f32 %v9150, %v9151
      %v9153 = vsel %vm700, %v9102, 0.0
      %v9154 = vsel %vm700, %v9103, 0.0
      %v9155 = vadd.f32 %v9153, %v9154
      %v9156 = vrot.slane %v9155, 4
      %v9157 = vadd.f32 %v9155, %v9156
      %v9158 = vrot.slane %v9157, 2
      %v9159 = vadd.f32 %v9157, %v9158
      %v9160 = vrot.slane %v9159, 1
      %v9161 = vadd.f32 %v9159, %v9160
      %v9162 = vsel %vm700, %v9104, 0.0
      %v9163 = vsel %vm700, %v9105, 0.0
      %v9164 = vadd.f32 %v9162, %v9163
      %v9165 = vrot.slane %v9164, 4
      %v9166 = vadd.f32 %v9164, %v9165
      %v9167 = vrot.slane %v9166, 2
      %v9168 = vadd.f32 %v9166, %v9167
      %v9169 = vrot.slane %v9168, 1
      %v9170 = vadd.f32 %v9168, %v9169
      %v9171 = vsel %vm700, %v9106, 0.0
      %v9172 = vsel %vm700, %v9107, 0.0
      %v9173 = vadd.f32 %v9171, %v9172
      %v9174 = vrot.slane %v9173, 4
      %v9175 = vadd.f32 %v9173, %v9174
      %v9176 = vrot.slane %v9175, 2
      %v9177 = vadd.f32 %v9175, %v9176
      %v9178 = vrot.slane %v9177, 1
      %v9179 = vadd.f32 %v9177, %v9178
      %v9180 = vrcp.pop 16.0
      %v9181 = vmul.f32 %v9116, %v9180
      %v9182 = vmul.f32 %v9125, %v9180
      %v9183 = vmul.f32 %v9134, %v9180
      %v9184 = vmul.f32 %v9143, %v9180
      %v9185 = vmul.f32 %v9152, %v9180
      %v9186 = vmul.f32 %v9161, %v9180
      %v9187 = vmul.f32 %v9170, %v9180
      %v9188 = vmul.f32 %v9179, %v9180
      %v9189 = vlaneseq
      %v9190 = vshrl.u32 %v9189, 7
      %v9191 = vsub.s32 0, %v9190
      %v9192 = vrot.slane %v275, %v9191
      %vm9201 = vcmask 1041409
      %v9202 = vsel %vm9201, %v9182, %v9181
      %vm9203 = vcmask 1042434
      %v9204 = vsel %vm9203, %v9183, %v9202
      %vm9205 = vcmask 1043459
      %v9206 = vsel %vm9205, %v9184, %v9204
      %vm9207 = vcmask 1044484
      %v9208 = vsel %vm9207, %v9185, %v9206
      %vm9209 = vcmask 1045509
      %v9210 = vsel %vm9209, %v9186, %v9208
      %vm9211 = vcmask 1046534
      %v9212 = vsel %vm9211, %v9187, %v9210
      %vm9213 = vcmask 1047559
      %v9214 = vsel %vm9213, %v9188, %v9212
      %v9215 = vsel %vm700, %v9214, 0
      %9217 = vmatprep.subr.mxu0 0.0
      %9218 = vmatpush1.msra.mxu0 0.0
      %9219 = vmatprep.subr.mxu0 0.0
      %9220 = vmatpush1.msra.mxu0 0.0
      %9221 = vmatprep.subr.mxu0 0.0
      %9222 = vmatpush1.msra.mxu0 0.0
      %9223 = vmatprep.subr.mxu0 0.0
      %9224 = vmatpush1.msra.mxu0 0.0
      %9225 = vmatprep.subr.mxu0 0.0
      %9226 = vmatpush1.msra.mxu0 0.0
      %9227 = vmatprep.subr.mxu0 0.0
      %9228 = vmatpush1.msra.mxu0 0.0
      %9229 = vmatprep.subr.mxu0 0.0
      %9230 = vmatpush1.msra.mxu0 0.0
      %9231 = vmatprep.subr.mxu0 0.0
      %9232 = vmatpush1.msra.mxu0 0.0
      %9233 = vmatprep.subr.mxu0 0.0
      %9234 = vmatpush1.msra.mxu0 0.0
      %9235 = vmatprep.subr.mxu0 0.0
      %9236 = vmatpush1.msra.mxu0 0.0
      %9237 = vmatprep.subr.mxu0 0.0
      %9238 = vmatpush1.msra.mxu0 0.0
      %9239 = vmatprep.subr.mxu0 0.0
      %9240 = vmatpush1.msra.mxu0 0.0
      %9241 = vmatprep.subr.mxu0 0.0
      %9242 = vmatpush1.msra.mxu0 %v264
      %9243 = vmatprep.subr.mxu0 0.0
      %9244 = vmatpush1.msra.mxu0 %v263
      %9245 = vmatprep.subr.mxu0 0.0
      %9246 = vmatpush1.msra.mxu0 %v262
      %9247 = vmatprep.subr.mxu0 0.0
      %9248 = vmatpush1.msra.mxu0 %v261
      %9249 = vmatprep.subr.mxu0 0.0
      %9250 = vmatpush2.msra.mxu0 0.0
      %9251 = vmatprep.subr.mxu0 0.0
      %9252 = vmatpush2.msra.mxu0 0.0
      %9253 = vmatprep.subr.mxu0 0.0
      %9254 = vmatpush2.msra.mxu0 0.0
      %9255 = vmatprep.subr.mxu0 0.0
      %9256 = vmatpush2.msra.mxu0 0.0
      %9257 = vmatprep.subr.mxu0 0.0
      %9258 = vmatpush2.msra.mxu0 0.0
      %9259 = vmatprep.subr.mxu0 0.0
      %9260 = vmatpush2.msra.mxu0 0.0
      %9261 = vmatprep.subr.mxu0 0.0
      %9262 = vmatpush2.msra.mxu0 0.0
      %9263 = vmatprep.subr.mxu0 0.0
      %9264 = vmatpush2.msra.mxu0 0.0
      %9265 = vmatprep.subr.mxu0 0.0
      %9266 = vmatpush2.msra.mxu0 0.0
      %9267 = vmatprep.subr.mxu0 0.0
      %9268 = vmatpush2.msra.mxu0 0.0
      %9269 = vmatprep.subr.mxu0 0.0
      %9270 = vmatpush2.msra.mxu0 0.0
      %9271 = vmatprep.subr.mxu0 0.0
      %9272 = vmatpush2.msra.mxu0 0.0
      %9273 = vmatprep.subr.mxu0 0.0
      %9274 = vmatpush2.msra.mxu0 0.0
      %9275 = vmatprep.subr.mxu0 0.0
      %9276 = vmatpush2.msra.mxu0 0.0
      %9277 = vmatprep.subr.mxu0 0.0
      %9278 = vmatpush2.msra.mxu0 0.0
      %9279 = vmatprep.subr.mxu0 0.0
      %9280 = vmatpush2.msra.mxu0 0.0
      %9281 = vmatprep.mubr.f32.mxu0 0.0
      %9282 = vmatmul.mubr.f32.gmra.mxu0 %v9215
      %v9283 = vpop.f32.mrf.mxu0
      %v9284 = vadd.f32 %v9192, %v9283
      %v9285 = vpop.f32.mrf.mxu0
      %9286 = vdwg.mxu0
      %v9287 = vtanh.pop %v9284
      %v9288 = vld [vmem:[%s227] sm:$0xff]
      %9290 = vrot.lane.b32.xlu0 %v9287, 125
      %v9291 = vpop.permute.xlu0 %9290
      %v9293 = vsub.f32 %v9288, %v9291
      %v9294 = vmul.f32 %v9293, %v9293
      %v9295 = vlaneseq
      %v9296 = vshrl.u32 %v9295, 7
      %v9297 = vsub.s32 0, %v9296
      %v9298 = vrot.slane %v276, %v9297
      %v9299 = vrcp.pop %v9298
      %v9300 = vmul.f32 %v9294, %v9299
      %v9301 = vlog2.pop %v276
      %v9302 = vmul.f32 %v9301, 0.6931472
      %v9303 = vlaneseq
      %v9304 = vshrl.u32 %v9303, 7
      %v9305 = vsub.s32 0, %v9304
      %v9306 = vrot.slane %v9302, %v9305
      %v9307 = vadd.f32 %v9300, %v9306
      %v9308 = vadd.f32 %v9307, 1.837877
      %vm9309 = vcmask 15360
      %v9310 = vsel %vm9309, %v9308, 0.0
      %9311 = vadd.xlane.f32.xlu0 %v9310
      %v9312 = vpop.xlane.xlu0 %9311
      %v9313 = vmul.f32 %v9312, -0.5
      %v9314 = vadd.f32 %v9302, 1.837877
      %v9315 = vadd.f32 %v9314, 1.0
      %vm9316 = vcmask 8192
      %v9317 = vsel %vm9316, %v9315, 0.0
      %9318 = vadd.xlane.f32.xlu0 %v9317
      %v9319 = vpop.xlane.xlu0 %9318
      %v9320 = vrot.slane %v9319, 4
      %v9321 = vadd.f32 %v9319, %v9320
      %v9322 = vrot.slane %v9321, 2
      %v9323 = vadd.f32 %v9321, %v9322
      %v9324 = vrot.slane %v9323, 1
      %v9325 = vadd.f32 %v9323, %v9324
      %s9326 = vtos %v9325
      %s9327 = smul.f32 %s9326, 0.5
      %v9328 = vlaneseq
      %v9329 = vand.u32 %v9328, 127
      %vm9330 = vcmp.ge.s32.totalorder %v9329, 3
      %vm9331 = vcmp.lt.s32.totalorder %v9329, 5
      %vm9332 = vmand %vm9330, %vm9331
      %v9333 = vsel %vm9332, %v9287, %v9284
      %vm9334 = vcmp.eq.s32.totalorder %v9329, 1
      %v9335 = vsel %vm9334, %v9313, %v9333
      %vm9336 = vcmp.eq.s32.totalorder %v9329, 2
      %v9337 = vstv %s9327
      %v9338 = vsel %vm9336, %v9337, %v9335
      %9339 = vst [vmem:[%s231] sm:$0xff] %v9338
      %p9340 = scmp.lt.s32.totalorder %s15, 1
      %s9341 = scalar_select %p9340, %s15, 1
      %s9342 = smul.addr %s9341, 8
      %s9343 = scalar_lea.vmem %s4, %s9342
      // Predicated region
      $region37: #{actor_critic_evaluate.1} parent=35 // pred_check
        %p9344 = pneg %p132
      $region38: #{actor_critic_evaluate.1} parent=35 // pred_check_branch
        %9346 = sbr.rel (%p9344) target = $region40
      $region39: #{actor_critic_evaluate.1} parent=35 // pred_region
        _
      $region40: #{actor_critic_evaluate.1} parent=35 // pred_fallthru
        _
    $region36: #{actor_critic_evaluate.1} parent=5 // pred_fallthru
      _
    %p9347 = scmp.le.s32.totalorder 2, %s10
    // Predicated region
    $region41: #{actor_critic_evaluate.1} parent=5 // pred_check
      %p9348 = pneg %p9347
    $region42: #{actor_critic_evaluate.1} parent=5 // pred_check_branch
      %9350 = sbr.rel (%p9348) target = $region44
    $region43: #{actor_critic_evaluate.1} parent=5 // pred_region
      %s9351 = ssub.s32 %s10, 2
      // Predicated region
      $region45: #{actor_critic_evaluate.1} parent=43 // pred_check
        %p9352 = pneg %p138
      $region46: #{actor_critic_evaluate.1} parent=43 // pred_check_branch
        %9354 = sbr.rel (%p9352) target = $region48
      $region47: #{actor_critic_evaluate.1} parent=43 // pred_region
        %p9355 = scmp.lt.s32.totalorder %s16, 1
        %s9356 = scalar_select %p9355, %s16, 1
        %s9357 = smul.addr %s9356, 8
        %s9358 = scalar_lea.vmem %s4, %s9357
      $region48: #{actor_critic_evaluate.1} parent=43 // pred_fallthru
        _
    $region44: #{actor_critic_evaluate.1} parent=5 // pred_fallthru
      _
  $region6: #{actor_critic_evaluate.1} parent=0 // loop_footer
    %s14 = sadd.s32 1, %s10
  $region7: #{actor_critic_evaluate.1} parent=0 // loop_footer_branch
    %9 = sbr.rel target = $region3
  $region8: #{actor_critic_evaluate.1} parent=0 // loop_exit
    _

</llo_original>
